<compile_context>
chip_gen: v6e
topology: v6e:2x2x1
jax: 0.10.0
libtpu: 0.0.40
codegen_flags: <defaults>
</compile_context>

<pallas_src>
import math
from functools import partial

import jax
import jax.numpy as jnp
from jax import lax
from jax.experimental import pallas as pl
from jax.experimental.pallas import tpu as pltpu


# ----------------------------- fused Pallas kernel -----------------------------

def _encoder_block_kernel(x_ref, wqkv_ref, bqkv_ref, wo_ref, bo_ref,
                          g1_ref, be1_ref, w1_ref, b1_ref, w2_ref, b2_ref,
                          g2_ref, be2_ref, o_ref, ycat_ref,
                          *, num_heads, seq_len, eps, approx_recip, matmul_dtype):
    R, E = x_ref.shape                       # R = batch_block * seq_len rows
    H, K = num_heads, seq_len
    NB = R // K
    Dh = E // H
    scale = 1.0 / math.sqrt(Dh)

    def recip(v):                            # EUP slot when approx, exact otherwise
        return pl.reciprocal(v, approx=True) if approx_recip else 1.0 / v

    def mm(a, b):                            # MXU matmul, f32 accumulation
        return jnp.dot(a.astype(matmul_dtype), b.astype(matmul_dtype),
                       preferred_element_type=jnp.float32)

    rows = x_ref[...].astype(jnp.float32)                       # (R, E)

    # ---- fused QKV projection over ALL rows in the block (fills MXU LHS rows) ----
    qkv = mm(rows, wqkv_ref[...]) + bqkv_ref[...]               # (R, 3E)

    # ---- multi-head attention (encoder: no mask); concat via VMEM scratch ----
    for b in range(NB):                                         # static, unrolled
        r0 = b * K
        qkv_b = qkv[r0:r0 + K, :]                               # sublane (row) slice
        for h in range(H):                                      # static, unrolled
            c = h * Dh
            q = qkv_b[:, c:c + Dh]
            k = qkv_b[:, E + c:E + c + Dh]
            v = qkv_b[:, 2 * E + c:2 * E + c + Dh]
            # q @ k^T without materializing k.T (contract last dims on the MXU)
            s = lax.dot_general(q.astype(matmul_dtype), k.astype(matmul_dtype),
                                (((1,), (1,)), ((), ())),
                                preferred_element_type=jnp.float32) * scale  # (K,K)
            s = s - jnp.max(s, axis=-1, keepdims=True)
            p = jnp.exp(s)
            p = p * recip(jnp.sum(p, axis=-1, keepdims=True))
            # "concatenate" this head's output by writing at its column offset
            ycat_ref[pl.ds(r0, K), pl.ds(c, Dh)] = mm(p, v)     # (K, Dh)

    # single output projection over all rows: concat(heads) @ Wo + bo
    attn = mm(ycat_ref[...], wo_ref[...]) + bo_ref[...]         # (R, E)

    # ---- residual + LayerNorm 1 (spec: (z - mean) / (std + eps), biased std) ----
    z1 = attn + rows
    m1 = jnp.mean(z1, axis=-1, keepdims=True)
    v1 = jnp.mean((z1 - m1) ** 2, axis=-1, keepdims=True)
    out1 = g1_ref[...] * ((z1 - m1) * recip(jnp.sqrt(v1) + eps)) + be1_ref[...]
    # (dropout = identity in eval mode)

    # ---- feed-forward: Linear -> ReLU -> Linear over all rows ----
    hdn = jnp.maximum(mm(out1, w1_ref[...]) + b1_ref[...], 0.0)
    ff = mm(hdn, w2_ref[...]) + b2_ref[...]

    # ---- residual + LayerNorm 2 ----
    z2 = ff + out1
    m2 = jnp.mean(z2, axis=-1, keepdims=True)
    v2 = jnp.mean((z2 - m2) ** 2, axis=-1, keepdims=True)
    out2 = g2_ref[...] * ((z2 - m2) * recip(jnp.sqrt(v2) + eps)) + be2_ref[...]

    o_ref[...] = out2.astype(o_ref.dtype)


def encoder_block_forward(x, p, num_heads, eps=1e-10, *, batch_block=None,
                          approx_recip=True, use_bf16=False):
    N, K, E = x.shape
    Fd = p["ff_w1"].shape[1]
    NB = N if batch_block is None else batch_block
    assert N % NB == 0, "batch_block must divide the batch size"
    R = NB * K
    # (8,128) rule: blocked rows must be a multiple of 8 unless the block spans all rows
    assert NB == N or R % 8 == 0, "blocked row count must be a multiple of 8"

    kernel = partial(_encoder_block_kernel, num_heads=num_heads, seq_len=K, eps=eps,
                     approx_recip=approx_recip,
                     matmul_dtype=jnp.bfloat16 if use_bf16 else jnp.float32)
    row2 = lambda a: a.reshape(1, -1)

    xr = x.reshape(N * K, E)                 # free: collapse leading dims to rows

    out = pl.pallas_call(
        kernel,
        grid=(N // NB,),
        out_shape=jax.ShapeDtypeStruct((N * K, E), x.dtype),
        in_specs=[
            pl.BlockSpec((R, E), lambda n: (n, 0)),          # x rows (batch block)
            pl.BlockSpec((E, 3 * E), lambda n: (0, 0)),      # fused Wqkv (resident)
            pl.BlockSpec((1, 3 * E), lambda n: (0, 0)),      # fused bqkv
            pl.BlockSpec((E, E), lambda n: (0, 0)),          # Wo
            pl.BlockSpec((1, E), lambda n: (0, 0)),          # bo
            pl.BlockSpec((1, E), lambda n: (0, 0)),          # ln1 gamma
            pl.BlockSpec((1, E), lambda n: (0, 0)),          # ln1 beta
            pl.BlockSpec((E, Fd), lambda n: (0, 0)),         # ff W1
            pl.BlockSpec((1, Fd), lambda n: (0, 0)),         # ff b1
            pl.BlockSpec((Fd, E), lambda n: (0, 0)),         # ff W2
            pl.BlockSpec((1, E), lambda n: (0, 0)),          # ff b2
            pl.BlockSpec((1, E), lambda n: (0, 0)),          # ln2 gamma
            pl.BlockSpec((1, E), lambda n: (0, 0)),          # ln2 beta
        ],
        out_specs=pl.BlockSpec((R, E), lambda n: (n, 0)),
        scratch_shapes=[pltpu.VMEM((R, E), jnp.float32)],    # head-concat buffer
        compiler_params=pltpu.CompilerParams(
            dimension_semantics=("parallel",),               # splits batch blocks on 2-TC chips
            vmem_limit_bytes=32 * 1024 * 1024),
    )(xr, p["wqkv"], row2(p["bqkv"]), p["wo"], row2(p["bo"]),
      row2(p["ln1_g"]), row2(p["ln1_b"]),
      p["ff_w1"], row2(p["ff_b1"]), p["ff_w2"], row2(p["ff_b2"]),
      row2(p["ln2_g"]), row2(p["ln2_b"]))
    return out.reshape(N, K, E)


# ------------------------------ pure-JAX reference ------------------------------

def encoder_block_ref(x, p, num_heads, eps=1e-10):
    N, K, E = x.shape
    Dh = E // num_heads
    qkv = x @ p["wqkv"] + p["bqkv"]
    q, k, v = qkv[..., :E], qkv[..., E:2 * E], qkv[..., 2 * E:]
    outs = []
    for h in range(num_heads):
        qh, kh, vh = (t[..., h * Dh:(h + 1) * Dh] for t in (q, k, v))
        s = jnp.einsum('nqd,nkd->nqk', qh, kh) / math.sqrt(Dh)
        w = jax.nn.softmax(s, axis=-1)
        outs.append(jnp.einsum('nqk,nkd->nqd', w, vh))
    attn = jnp.concatenate(outs, axis=-1) @ p["wo"] + p["bo"]

    def ln(z, g, b):
        m = z.mean(-1, keepdims=True)
        std = jnp.sqrt(((z - m) ** 2).mean(-1, keepdims=True))
        return g * (z - m) / (std + eps) + b

    out1 = ln(attn + x, p["ln1_g"], p["ln1_b"])
    hdn = jax.nn.relu(out1 @ p["ff_w1"] + p["ff_b1"])
    ff = hdn @ p["ff_w2"] + p["ff_b2"]
    return ln(ff + out1, p["ln2_g"], p["ln2_b"])


# ------------------------------ parameter init ------------------------------

def _xavier(key, fan_in, fan_out):
    c = math.sqrt(6.0 / (fan_in + fan_out))
    return jax.random.uniform(key, (fan_in, fan_out), jnp.float32, -c, c)


def _bias(key, fan_in, fan_out):
    b = 1.0 / math.sqrt(fan_in)
    return jax.random.uniform(key, (fan_out,), jnp.float32, -b, b)


def init_params(key, num_heads, emb_dim, ff_dim):
    E, Fd, Dh = emb_dim, ff_dim, emb_dim // num_heads
    keys = jax.random.split(key, 6 * num_heads + 6)
    wq, wk, wv, bq, bk, bv = [], [], [], [], [], []
    for h in range(num_heads):
        kq, kk, kv, kbq, kbk, kbv = keys[6 * h:6 * h + 6]
        wq.append(_xavier(kq, E, Dh)); bq.append(_bias(kbq, E, Dh))
        wk.append(_xavier(kk, E, Dh)); bk.append(_bias(kbk, E, Dh))
        wv.append(_xavier(kv, E, Dh)); bv.append(_bias(kbv, E, Dh))
    kwo, kbo, kw1, kb1, kw2, kb2 = keys[6 * num_heads:]
    return {
        # fused QKV: columns grouped [Q heads | K heads | V heads], head-major.
        # NOTE: the kernel's head slicing and Wo rows assume exactly this packing.
        "wqkv": jnp.concatenate(
            [jnp.concatenate(wq, axis=1),
             jnp.concatenate(wk, axis=1),
             jnp.concatenate(wv, axis=1)], axis=1),
        "bqkv": jnp.concatenate(bq + bk + bv, axis=0),
        "wo": _xavier(kwo, E, E), "bo": _bias(kbo, E, E),
        "ln1_g": jnp.ones((E,), jnp.float32), "ln1_b": jnp.zeros((E,), jnp.float32),
        "ln2_g": jnp.ones((E,), jnp.float32), "ln2_b": jnp.zeros((E,), jnp.float32),
        "ff_w1": _xavier(kw1, E, Fd), "ff_b1": _bias(kb1, E, Fd),
        "ff_w2": _xavier(kw2, Fd, E), "ff_b2": _bias(kb2, Fd, E),
    }


# ----------------------------------- main -----------------------------------

if __name__ == "__main__":
    # Full-precision f32 matmuls for the pure-JAX reference (and the in-kernel
    # dots), so the kernel can be validated with a tight tolerance.
    jax.config.update("jax_default_matmul_precision", "highest")

    num_heads = 4
    emb_dim = 32
    ff_dim = 64
    N, K = 2, 8

    root = jax.random.PRNGKey(0)
    k_par, k_x = jax.random.split(root, 2)

    params = init_params(k_par, num_heads, emb_dim, ff_dim)
    x = jax.random.normal(k_x, (N, K, emb_dim), jnp.float32)

    ref = encoder_block_ref(x, params, num_heads)

    # Exact-reciprocal path: tight tolerance catches real structural bugs.
    out = jax.block_until_ready(
        encoder_block_forward(x, params, num_heads, approx_recip=False))
    assert out.shape == (N, K, emb_dim)
    assert bool(jnp.all(jnp.isfinite(out)))
    err = float(jnp.max(jnp.abs(out - ref)))
    assert err < 5e-3, f"exact-path max abs error {err}"

    # EUP approximate-reciprocal path (production default): budget the ~1e-3-level
    # relative error of the approx reciprocal amplified through softmax, two
    # LayerNorms and the FFN.
    out_fast = jax.block_until_ready(
        encoder_block_forward(x, params, num_heads, approx_recip=True))
    assert bool(jnp.all(jnp.isfinite(out_fast)))
    err_fast = float(jnp.max(jnp.abs(out_fast - ref)))
    assert err_fast < 5e-2, f"approx-path max abs error {err_fast}"

    print("KERNEL_OK")
</pallas_src>

<mosaic_0001>
module attributes {stable_mosaic.version = 11 : i64} {
  func.func @_encoder_block_kernel(%arg0: i32, %arg1: memref<16x32xf32, #tpu.memory_space<vmem>>, %arg2: memref<32x96xf32, #tpu.memory_space<vmem>>, %arg3: memref<1x96xf32, #tpu.memory_space<vmem>>, %arg4: memref<32x32xf32, #tpu.memory_space<vmem>>, %arg5: memref<1x32xf32, #tpu.memory_space<vmem>>, %arg6: memref<1x32xf32, #tpu.memory_space<vmem>>, %arg7: memref<1x32xf32, #tpu.memory_space<vmem>>, %arg8: memref<32x64xf32, #tpu.memory_space<vmem>>, %arg9: memref<1x64xf32, #tpu.memory_space<vmem>>, %arg10: memref<64x32xf32, #tpu.memory_space<vmem>>, %arg11: memref<1x32xf32, #tpu.memory_space<vmem>>, %arg12: memref<1x32xf32, #tpu.memory_space<vmem>>, %arg13: memref<1x32xf32, #tpu.memory_space<vmem>>, %arg14: memref<16x32xf32, #tpu.memory_space<vmem>>, %arg15: memref<16x32xf32, #tpu.memory_space<vmem>>) attributes {dimension_semantics = [#tpu.dimension_semantics<parallel>], iteration_bounds = array<i64: 1>, scalar_prefetch = 0 : i64, scratch_operands = 1 : i64, tpu.core_type = #tpu.core_type<tc>, window_params = [{transform_indices = @transform_0, window_bounds = array<i64: 16, 32>}, {pipeline_mode = #tpu.pipeline_mode<synchronous>, transform_indices = @transform_1, window_bounds = array<i64: 32, 96>}, {pipeline_mode = #tpu.pipeline_mode<synchronous>, transform_indices = @transform_2, window_bounds = array<i64: 1, 96>}, {pipeline_mode = #tpu.pipeline_mode<synchronous>, transform_indices = @transform_3, window_bounds = array<i64: 32, 32>}, {pipeline_mode = #tpu.pipeline_mode<synchronous>, transform_indices = @transform_4, window_bounds = array<i64: 1, 32>}, {pipeline_mode = #tpu.pipeline_mode<synchronous>, transform_indices = @transform_5, window_bounds = array<i64: 1, 32>}, {pipeline_mode = #tpu.pipeline_mode<synchronous>, transform_indices = @transform_6, window_bounds = array<i64: 1, 32>}, {pipeline_mode = #tpu.pipeline_mode<synchronous>, transform_indices = @transform_7, window_bounds = array<i64: 32, 64>}, {pipeline_mode = #tpu.pipeline_mode<synchronous>, transform_indices = @transform_8, window_bounds = array<i64: 1, 64>}, {pipeline_mode = #tpu.pipeline_mode<synchronous>, transform_indices = @transform_9, window_bounds = array<i64: 64, 32>}, {pipeline_mode = #tpu.pipeline_mode<synchronous>, transform_indices = @transform_10, window_bounds = array<i64: 1, 32>}, {pipeline_mode = #tpu.pipeline_mode<synchronous>, transform_indices = @transform_11, window_bounds = array<i64: 1, 32>}, {pipeline_mode = #tpu.pipeline_mode<synchronous>, transform_indices = @transform_12, window_bounds = array<i64: 1, 32>}, {transform_indices = @transform_13, window_bounds = array<i64: 16, 32>}]} {
    %c0 = arith.constant 0 : index
    %c0_0 = arith.constant 0 : index
    %0 = vector.load %arg1[%c0, %c0_0] : memref<16x32xf32, #tpu.memory_space<vmem>>, vector<16x32xf32>
    %c0_1 = arith.constant 0 : index
    %c0_2 = arith.constant 0 : index
    %1 = vector.load %arg2[%c0_1, %c0_2] : memref<32x96xf32, #tpu.memory_space<vmem>>, vector<32x96xf32>
    %cst = arith.constant dense<0.000000e+00> : vector<16x96xf32>
    %2 = tpu.matmul %0, %1, %cst {dimension_numbers = #tpu.dot_dimension_numbers<[1], [0], [0], [1], [0, 0, 1, 1], [], []>, precision = #tpu.contract_precision<fp32>} : vector<16x32xf32>, vector<32x96xf32>, vector<16x96xf32> -> vector<16x96xf32>
    %c0_3 = arith.constant 0 : index
    %c0_4 = arith.constant 0 : index
    %3 = vector.load %arg3[%c0_3, %c0_4] : memref<1x96xf32, #tpu.memory_space<vmem>>, vector<1x96xf32>
    %4 = vector.broadcast %3 : vector<1x96xf32> to vector<16x96xf32>
    %5 = arith.addf %2, %4 : vector<16x96xf32>
    %6 = vector.extract_strided_slice %5 {offsets = [0, 0], sizes = [8, 96], strides = [1, 1]} : vector<16x96xf32> to vector<8x96xf32>
    %7 = vector.extract_strided_slice %6 {offsets = [0, 0], sizes = [8, 8], strides = [1, 1]} : vector<8x96xf32> to vector<8x8xf32>
    %8 = vector.extract_strided_slice %6 {offsets = [0, 32], sizes = [8, 8], strides = [1, 1]} : vector<8x96xf32> to vector<8x8xf32>
    %9 = vector.extract_strided_slice %6 {offsets = [0, 64], sizes = [8, 8], strides = [1, 1]} : vector<8x96xf32> to vector<8x8xf32>
    %cst_5 = arith.constant dense<0.000000e+00> : vector<8x8xf32>
    %10 = tpu.matmul %7, %8, %cst_5 {dimension_numbers = #tpu.dot_dimension_numbers<[1], [1], [0], [0], [0, 0, 1, 0], [], []>, precision = #tpu.contract_precision<fp32>} : vector<8x8xf32>, vector<8x8xf32>, vector<8x8xf32> -> vector<8x8xf32>
    %cst_6 = arith.constant 0.353553385 : f32
    %11 = vector.broadcast %cst_6 : f32 to vector<8x8xf32>
    %12 = arith.mulf %10, %11 : vector<8x8xf32>
    %cst_7 = arith.constant dense<0xFF800000> : vector<8xf32>
    %13 = vector.multi_reduction <maximumf>, %12, %cst_7 [1] : vector<8x8xf32> to vector<8xf32>
    %14 = vector.shape_cast %13 : vector<8xf32> to vector<8x1xf32>
    %15 = vector.broadcast %14 : vector<8x1xf32> to vector<8x8xf32>
    %16 = arith.subf %12, %15 : vector<8x8xf32>
    %17 = math.exp %16 : vector<8x8xf32>
    %cst_8 = arith.constant dense<0.000000e+00> : vector<8xf32>
    %18 = vector.multi_reduction <add>, %17, %cst_8 [1] : vector<8x8xf32> to vector<8xf32>
    %19 = vector.shape_cast %18 : vector<8xf32> to vector<8x1xf32>
    %cst_9 = arith.constant 1.000000e+00 : f32
    %20 = vector.broadcast %cst_9 : f32 to vector<8x1xf32>
    %21 = arith.divf %20, %19 : vector<8x1xf32>
    %22 = vector.broadcast %21 : vector<8x1xf32> to vector<8x8xf32>
    %23 = arith.mulf %17, %22 : vector<8x8xf32>
    %cst_10 = arith.constant dense<0.000000e+00> : vector<8x8xf32>
    %24 = tpu.matmul %23, %9, %cst_10 {dimension_numbers = #tpu.dot_dimension_numbers<[1], [0], [0], [1], [0, 0, 1, 1], [], []>, precision = #tpu.contract_precision<fp32>} : vector<8x8xf32>, vector<8x8xf32>, vector<8x8xf32> -> vector<8x8xf32>
    %c0_11 = arith.constant 0 : index
    %c0_12 = arith.constant 0 : index
    %25 = vector.load %arg15[%c0_11, %c0_12] : memref<16x32xf32, #tpu.memory_space<vmem>>, vector<8x8xf32>
    tpu.vector_store %arg15[%c0_11, %c0_12], %24 {strides = array<i32>} : memref<16x32xf32, #tpu.memory_space<vmem>>, vector<8x8xf32>,
    %26 = vector.extract_strided_slice %6 {offsets = [0, 8], sizes = [8, 8], strides = [1, 1]} : vector<8x96xf32> to vector<8x8xf32>
    %27 = vector.extract_strided_slice %6 {offsets = [0, 40], sizes = [8, 8], strides = [1, 1]} : vector<8x96xf32> to vector<8x8xf32>
    %28 = vector.extract_strided_slice %6 {offsets = [0, 72], sizes = [8, 8], strides = [1, 1]} : vector<8x96xf32> to vector<8x8xf32>
    %cst_13 = arith.constant dense<0.000000e+00> : vector<8x8xf32>
    %29 = tpu.matmul %26, %27, %cst_13 {dimension_numbers = #tpu.dot_dimension_numbers<[1], [1], [0], [0], [0, 0, 1, 0], [], []>, precision = #tpu.contract_precision<fp32>} : vector<8x8xf32>, vector<8x8xf32>, vector<8x8xf32> -> vector<8x8xf32>
    %cst_14 = arith.constant 0.353553385 : f32
    %30 = vector.broadcast %cst_14 : f32 to vector<8x8xf32>
    %31 = arith.mulf %29, %30 : vector<8x8xf32>
    %cst_15 = arith.constant dense<0xFF800000> : vector<8xf32>
    %32 = vector.multi_reduction <maximumf>, %31, %cst_15 [1] : vector<8x8xf32> to vector<8xf32>
    %33 = vector.shape_cast %32 : vector<8xf32> to vector<8x1xf32>
    %34 = vector.broadcast %33 : vector<8x1xf32> to vector<8x8xf32>
    %35 = arith.subf %31, %34 : vector<8x8xf32>
    %36 = math.exp %35 : vector<8x8xf32>
    %cst_16 = arith.constant dense<0.000000e+00> : vector<8xf32>
    %37 = vector.multi_reduction <add>, %36, %cst_16 [1] : vector<8x8xf32> to vector<8xf32>
    %38 = vector.shape_cast %37 : vector<8xf32> to vector<8x1xf32>
    %cst_17 = arith.constant 1.000000e+00 : f32
    %39 = vector.broadcast %cst_17 : f32 to vector<8x1xf32>
    %40 = arith.divf %39, %38 : vector<8x1xf32>
    %41 = vector.broadcast %40 : vector<8x1xf32> to vector<8x8xf32>
    %42 = arith.mulf %36, %41 : vector<8x8xf32>
    %cst_18 = arith.constant dense<0.000000e+00> : vector<8x8xf32>
    %43 = tpu.matmul %42, %28, %cst_18 {dimension_numbers = #tpu.dot_dimension_numbers<[1], [0], [0], [1], [0, 0, 1, 1], [], []>, precision = #tpu.contract_precision<fp32>} : vector<8x8xf32>, vector<8x8xf32>, vector<8x8xf32> -> vector<8x8xf32>
    %c0_19 = arith.constant 0 : index
    %c8 = arith.constant 8 : index
    %44 = vector.load %arg15[%c0_19, %c8] : memref<16x32xf32, #tpu.memory_space<vmem>>, vector<8x8xf32>
    tpu.vector_store %arg15[%c0_19, %c8], %43 {strides = array<i32>} : memref<16x32xf32, #tpu.memory_space<vmem>>, vector<8x8xf32>,
    %45 = vector.extract_strided_slice %6 {offsets = [0, 16], sizes = [8, 8], strides = [1, 1]} : vector<8x96xf32> to vector<8x8xf32>
    %46 = vector.extract_strided_slice %6 {offsets = [0, 48], sizes = [8, 8], strides = [1, 1]} : vector<8x96xf32> to vector<8x8xf32>
    %47 = vector.extract_strided_slice %6 {offsets = [0, 80], sizes = [8, 8], strides = [1, 1]} : vector<8x96xf32> to vector<8x8xf32>
    %cst_20 = arith.constant dense<0.000000e+00> : vector<8x8xf32>
    %48 = tpu.matmul %45, %46, %cst_20 {dimension_numbers = #tpu.dot_dimension_numbers<[1], [1], [0], [0], [0, 0, 1, 0], [], []>, precision = #tpu.contract_precision<fp32>} : vector<8x8xf32>, vector<8x8xf32>, vector<8x8xf32> -> vector<8x8xf32>
    %cst_21 = arith.constant 0.353553385 : f32
    %49 = vector.broadcast %cst_21 : f32 to vector<8x8xf32>
    %50 = arith.mulf %48, %49 : vector<8x8xf32>
    %cst_22 = arith.constant dense<0xFF800000> : vector<8xf32>
    %51 = vector.multi_reduction <maximumf>, %50, %cst_22 [1] : vector<8x8xf32> to vector<8xf32>
    %52 = vector.shape_cast %51 : vector<8xf32> to vector<8x1xf32>
    %53 = vector.broadcast %52 : vector<8x1xf32> to vector<8x8xf32>
    %54 = arith.subf %50, %53 : vector<8x8xf32>
    %55 = math.exp %54 : vector<8x8xf32>
    %cst_23 = arith.constant dense<0.000000e+00> : vector<8xf32>
    %56 = vector.multi_reduction <add>, %55, %cst_23 [1] : vector<8x8xf32> to vector<8xf32>
    %57 = vector.shape_cast %56 : vector<8xf32> to vector<8x1xf32>
    %cst_24 = arith.constant 1.000000e+00 : f32
    %58 = vector.broadcast %cst_24 : f32 to vector<8x1xf32>
    %59 = arith.divf %58, %57 : vector<8x1xf32>
    %60 = vector.broadcast %59 : vector<8x1xf32> to vector<8x8xf32>
    %61 = arith.mulf %55, %60 : vector<8x8xf32>
    %cst_25 = arith.constant dense<0.000000e+00> : vector<8x8xf32>
    %62 = tpu.matmul %61, %47, %cst_25 {dimension_numbers = #tpu.dot_dimension_numbers<[1], [0], [0], [1], [0, 0, 1, 1], [], []>, precision = #tpu.contract_precision<fp32>} : vector<8x8xf32>, vector<8x8xf32>, vector<8x8xf32> -> vector<8x8xf32>
    %c0_26 = arith.constant 0 : index
    %c16 = arith.constant 16 : index
    %63 = vector.load %arg15[%c0_26, %c16] : memref<16x32xf32, #tpu.memory_space<vmem>>, vector<8x8xf32>
    tpu.vector_store %arg15[%c0_26, %c16], %62 {strides = array<i32>} : memref<16x32xf32, #tpu.memory_space<vmem>>, vector<8x8xf32>,
    %64 = vector.extract_strided_slice %6 {offsets = [0, 24], sizes = [8, 8], strides = [1, 1]} : vector<8x96xf32> to vector<8x8xf32>
    %65 = vector.extract_strided_slice %6 {offsets = [0, 56], sizes = [8, 8], strides = [1, 1]} : vector<8x96xf32> to vector<8x8xf32>
    %66 = vector.extract_strided_slice %6 {offsets = [0, 88], sizes = [8, 8], strides = [1, 1]} : vector<8x96xf32> to vector<8x8xf32>
    %cst_27 = arith.constant dense<0.000000e+00> : vector<8x8xf32>
    %67 = tpu.matmul %64, %65, %cst_27 {dimension_numbers = #tpu.dot_dimension_numbers<[1], [1], [0], [0], [0, 0, 1, 0], [], []>, precision = #tpu.contract_precision<fp32>} : vector<8x8xf32>, vector<8x8xf32>, vector<8x8xf32> -> vector<8x8xf32>
    %cst_28 = arith.constant 0.353553385 : f32
    %68 = vector.broadcast %cst_28 : f32 to vector<8x8xf32>
    %69 = arith.mulf %67, %68 : vector<8x8xf32>
    %cst_29 = arith.constant dense<0xFF800000> : vector<8xf32>
    %70 = vector.multi_reduction <maximumf>, %69, %cst_29 [1] : vector<8x8xf32> to vector<8xf32>
    %71 = vector.shape_cast %70 : vector<8xf32> to vector<8x1xf32>
    %72 = vector.broadcast %71 : vector<8x1xf32> to vector<8x8xf32>
    %73 = arith.subf %69, %72 : vector<8x8xf32>
    %74 = math.exp %73 : vector<8x8xf32>
    %cst_30 = arith.constant dense<0.000000e+00> : vector<8xf32>
    %75 = vector.multi_reduction <add>, %74, %cst_30 [1] : vector<8x8xf32> to vector<8xf32>
    %76 = vector.shape_cast %75 : vector<8xf32> to vector<8x1xf32>
    %cst_31 = arith.constant 1.000000e+00 : f32
    %77 = vector.broadcast %cst_31 : f32 to vector<8x1xf32>
    %78 = arith.divf %77, %76 : vector<8x1xf32>
    %79 = vector.broadcast %78 : vector<8x1xf32> to vector<8x8xf32>
    %80 = arith.mulf %74, %79 : vector<8x8xf32>
    %cst_32 = arith.constant dense<0.000000e+00> : vector<8x8xf32>
    %81 = tpu.matmul %80, %66, %cst_32 {dimension_numbers = #tpu.dot_dimension_numbers<[1], [0], [0], [1], [0, 0, 1, 1], [], []>, precision = #tpu.contract_precision<fp32>} : vector<8x8xf32>, vector<8x8xf32>, vector<8x8xf32> -> vector<8x8xf32>
    %c0_33 = arith.constant 0 : index
    %c24 = arith.constant 24 : index
    %82 = vector.load %arg15[%c0_33, %c24] : memref<16x32xf32, #tpu.memory_space<vmem>>, vector<8x8xf32>
    tpu.vector_store %arg15[%c0_33, %c24], %81 {strides = array<i32>} : memref<16x32xf32, #tpu.memory_space<vmem>>, vector<8x8xf32>,
    %83 = vector.extract_strided_slice %5 {offsets = [8, 0], sizes = [8, 96], strides = [1, 1]} : vector<16x96xf32> to vector<8x96xf32>
    %84 = vector.extract_strided_slice %83 {offsets = [0, 0], sizes = [8, 8], strides = [1, 1]} : vector<8x96xf32> to vector<8x8xf32>
    %85 = vector.extract_strided_slice %83 {offsets = [0, 32], sizes = [8, 8], strides = [1, 1]} : vector<8x96xf32> to vector<8x8xf32>
    %86 = vector.extract_strided_slice %83 {offsets = [0, 64], sizes = [8, 8], strides = [1, 1]} : vector<8x96xf32> to vector<8x8xf32>
    %cst_34 = arith.constant dense<0.000000e+00> : vector<8x8xf32>
    %87 = tpu.matmul %84, %85, %cst_34 {dimension_numbers = #tpu.dot_dimension_numbers<[1], [1], [0], [0], [0, 0, 1, 0], [], []>, precision = #tpu.contract_precision<fp32>} : vector<8x8xf32>, vector<8x8xf32>, vector<8x8xf32> -> vector<8x8xf32>
    %cst_35 = arith.constant 0.353553385 : f32
    %88 = vector.broadcast %cst_35 : f32 to vector<8x8xf32>
    %89 = arith.mulf %87, %88 : vector<8x8xf32>
    %cst_36 = arith.constant dense<0xFF800000> : vector<8xf32>
    %90 = vector.multi_reduction <maximumf>, %89, %cst_36 [1] : vector<8x8xf32> to vector<8xf32>
    %91 = vector.shape_cast %90 : vector<8xf32> to vector<8x1xf32>
    %92 = vector.broadcast %91 : vector<8x1xf32> to vector<8x8xf32>
    %93 = arith.subf %89, %92 : vector<8x8xf32>
    %94 = math.exp %93 : vector<8x8xf32>
    %cst_37 = arith.constant dense<0.000000e+00> : vector<8xf32>
    %95 = vector.multi_reduction <add>, %94, %cst_37 [1] : vector<8x8xf32> to vector<8xf32>
    %96 = vector.shape_cast %95 : vector<8xf32> to vector<8x1xf32>
    %cst_38 = arith.constant 1.000000e+00 : f32
    %97 = vector.broadcast %cst_38 : f32 to vector<8x1xf32>
    %98 = arith.divf %97, %96 : vector<8x1xf32>
    %99 = vector.broadcast %98 : vector<8x1xf32> to vector<8x8xf32>
    %100 = arith.mulf %94, %99 : vector<8x8xf32>
    %cst_39 = arith.constant dense<0.000000e+00> : vector<8x8xf32>
    %101 = tpu.matmul %100, %86, %cst_39 {dimension_numbers = #tpu.dot_dimension_numbers<[1], [0], [0], [1], [0, 0, 1, 1], [], []>, precision = #tpu.contract_precision<fp32>} : vector<8x8xf32>, vector<8x8xf32>, vector<8x8xf32> -> vector<8x8xf32>
    %c8_40 = arith.constant 8 : index
    %c0_41 = arith.constant 0 : index
    %102 = vector.load %arg15[%c8_40, %c0_41] : memref<16x32xf32, #tpu.memory_space<vmem>>, vector<8x8xf32>
    tpu.vector_store %arg15[%c8_40, %c0_41], %101 {strides = array<i32>} : memref<16x32xf32, #tpu.memory_space<vmem>>, vector<8x8xf32>,
    %103 = vector.extract_strided_slice %83 {offsets = [0, 8], sizes = [8, 8], strides = [1, 1]} : vector<8x96xf32> to vector<8x8xf32>
    %104 = vector.extract_strided_slice %83 {offsets = [0, 40], sizes = [8, 8], strides = [1, 1]} : vector<8x96xf32> to vector<8x8xf32>
    %105 = vector.extract_strided_slice %83 {offsets = [0, 72], sizes = [8, 8], strides = [1, 1]} : vector<8x96xf32> to vector<8x8xf32>
    %cst_42 = arith.constant dense<0.000000e+00> : vector<8x8xf32>
    %106 = tpu.matmul %103, %104, %cst_42 {dimension_numbers = #tpu.dot_dimension_numbers<[1], [1], [0], [0], [0, 0, 1, 0], [], []>, precision = #tpu.contract_precision<fp32>} : vector<8x8xf32>, vector<8x8xf32>, vector<8x8xf32> -> vector<8x8xf32>
    %cst_43 = arith.constant 0.353553385 : f32
    %107 = vector.broadcast %cst_43 : f32 to vector<8x8xf32>
    %108 = arith.mulf %106, %107 : vector<8x8xf32>
    %cst_44 = arith.constant dense<0xFF800000> : vector<8xf32>
    %109 = vector.multi_reduction <maximumf>, %108, %cst_44 [1] : vector<8x8xf32> to vector<8xf32>
    %110 = vector.shape_cast %109 : vector<8xf32> to vector<8x1xf32>
    %111 = vector.broadcast %110 : vector<8x1xf32> to vector<8x8xf32>
    %112 = arith.subf %108, %111 : vector<8x8xf32>
    %113 = math.exp %112 : vector<8x8xf32>
    %cst_45 = arith.constant dense<0.000000e+00> : vector<8xf32>
    %114 = vector.multi_reduction <add>, %113, %cst_45 [1] : vector<8x8xf32> to vector<8xf32>
    %115 = vector.shape_cast %114 : vector<8xf32> to vector<8x1xf32>
    %cst_46 = arith.constant 1.000000e+00 : f32
    %116 = vector.broadcast %cst_46 : f32 to vector<8x1xf32>
    %117 = arith.divf %116, %115 : vector<8x1xf32>
    %118 = vector.broadcast %117 : vector<8x1xf32> to vector<8x8xf32>
    %119 = arith.mulf %113, %118 : vector<8x8xf32>
    %cst_47 = arith.constant dense<0.000000e+00> : vector<8x8xf32>
    %120 = tpu.matmul %119, %105, %cst_47 {dimension_numbers = #tpu.dot_dimension_numbers<[1], [0], [0], [1], [0, 0, 1, 1], [], []>, precision = #tpu.contract_precision<fp32>} : vector<8x8xf32>, vector<8x8xf32>, vector<8x8xf32> -> vector<8x8xf32>
    %c8_48 = arith.constant 8 : index
    %c8_49 = arith.constant 8 : index
    %121 = vector.load %arg15[%c8_48, %c8_49] : memref<16x32xf32, #tpu.memory_space<vmem>>, vector<8x8xf32>
    tpu.vector_store %arg15[%c8_48, %c8_49], %120 {strides = array<i32>} : memref<16x32xf32, #tpu.memory_space<vmem>>, vector<8x8xf32>,
    %122 = vector.extract_strided_slice %83 {offsets = [0, 16], sizes = [8, 8], strides = [1, 1]} : vector<8x96xf32> to vector<8x8xf32>
    %123 = vector.extract_strided_slice %83 {offsets = [0, 48], sizes = [8, 8], strides = [1, 1]} : vector<8x96xf32> to vector<8x8xf32>
    %124 = vector.extract_strided_slice %83 {offsets = [0, 80], sizes = [8, 8], strides = [1, 1]} : vector<8x96xf32> to vector<8x8xf32>
    %cst_50 = arith.constant dense<0.000000e+00> : vector<8x8xf32>
    %125 = tpu.matmul %122, %123, %cst_50 {dimension_numbers = #tpu.dot_dimension_numbers<[1], [1], [0], [0], [0, 0, 1, 0], [], []>, precision = #tpu.contract_precision<fp32>} : vector<8x8xf32>, vector<8x8xf32>, vector<8x8xf32> -> vector<8x8xf32>
    %cst_51 = arith.constant 0.353553385 : f32
    %126 = vector.broadcast %cst_51 : f32 to vector<8x8xf32>
    %127 = arith.mulf %125, %126 : vector<8x8xf32>
    %cst_52 = arith.constant dense<0xFF800000> : vector<8xf32>
    %128 = vector.multi_reduction <maximumf>, %127, %cst_52 [1] : vector<8x8xf32> to vector<8xf32>
    %129 = vector.shape_cast %128 : vector<8xf32> to vector<8x1xf32>
    %130 = vector.broadcast %129 : vector<8x1xf32> to vector<8x8xf32>
    %131 = arith.subf %127, %130 : vector<8x8xf32>
    %132 = math.exp %131 : vector<8x8xf32>
    %cst_53 = arith.constant dense<0.000000e+00> : vector<8xf32>
    %133 = vector.multi_reduction <add>, %132, %cst_53 [1] : vector<8x8xf32> to vector<8xf32>
    %134 = vector.shape_cast %133 : vector<8xf32> to vector<8x1xf32>
    %cst_54 = arith.constant 1.000000e+00 : f32
    %135 = vector.broadcast %cst_54 : f32 to vector<8x1xf32>
    %136 = arith.divf %135, %134 : vector<8x1xf32>
    %137 = vector.broadcast %136 : vector<8x1xf32> to vector<8x8xf32>
    %138 = arith.mulf %132, %137 : vector<8x8xf32>
    %cst_55 = arith.constant dense<0.000000e+00> : vector<8x8xf32>
    %139 = tpu.matmul %138, %124, %cst_55 {dimension_numbers = #tpu.dot_dimension_numbers<[1], [0], [0], [1], [0, 0, 1, 1], [], []>, precision = #tpu.contract_precision<fp32>} : vector<8x8xf32>, vector<8x8xf32>, vector<8x8xf32> -> vector<8x8xf32>
    %c8_56 = arith.constant 8 : index
    %c16_57 = arith.constant 16 : index
    %140 = vector.load %arg15[%c8_56, %c16_57] : memref<16x32xf32, #tpu.memory_space<vmem>>, vector<8x8xf32>
    tpu.vector_store %arg15[%c8_56, %c16_57], %139 {strides = array<i32>} : memref<16x32xf32, #tpu.memory_space<vmem>>, vector<8x8xf32>,
    %141 = vector.extract_strided_slice %83 {offsets = [0, 24], sizes = [8, 8], strides = [1, 1]} : vector<8x96xf32> to vector<8x8xf32>
    %142 = vector.extract_strided_slice %83 {offsets = [0, 56], sizes = [8, 8], strides = [1, 1]} : vector<8x96xf32> to vector<8x8xf32>
    %143 = vector.extract_strided_slice %83 {offsets = [0, 88], sizes = [8, 8], strides = [1, 1]} : vector<8x96xf32> to vector<8x8xf32>
    %cst_58 = arith.constant dense<0.000000e+00> : vector<8x8xf32>
    %144 = tpu.matmul %141, %142, %cst_58 {dimension_numbers = #tpu.dot_dimension_numbers<[1], [1], [0], [0], [0, 0, 1, 0], [], []>, precision = #tpu.contract_precision<fp32>} : vector<8x8xf32>, vector<8x8xf32>, vector<8x8xf32> -> vector<8x8xf32>
    %cst_59 = arith.constant 0.353553385 : f32
    %145 = vector.broadcast %cst_59 : f32 to vector<8x8xf32>
    %146 = arith.mulf %144, %145 : vector<8x8xf32>
    %cst_60 = arith.constant dense<0xFF800000> : vector<8xf32>
    %147 = vector.multi_reduction <maximumf>, %146, %cst_60 [1] : vector<8x8xf32> to vector<8xf32>
    %148 = vector.shape_cast %147 : vector<8xf32> to vector<8x1xf32>
    %149 = vector.broadcast %148 : vector<8x1xf32> to vector<8x8xf32>
    %150 = arith.subf %146, %149 : vector<8x8xf32>
    %151 = math.exp %150 : vector<8x8xf32>
    %cst_61 = arith.constant dense<0.000000e+00> : vector<8xf32>
    %152 = vector.multi_reduction <add>, %151, %cst_61 [1] : vector<8x8xf32> to vector<8xf32>
    %153 = vector.shape_cast %152 : vector<8xf32> to vector<8x1xf32>
    %cst_62 = arith.constant 1.000000e+00 : f32
    %154 = vector.broadcast %cst_62 : f32 to vector<8x1xf32>
    %155 = arith.divf %154, %153 : vector<8x1xf32>
    %156 = vector.broadcast %155 : vector<8x1xf32> to vector<8x8xf32>
    %157 = arith.mulf %151, %156 : vector<8x8xf32>
    %cst_63 = arith.constant dense<0.000000e+00> : vector<8x8xf32>
    %158 = tpu.matmul %157, %143, %cst_63 {dimension_numbers = #tpu.dot_dimension_numbers<[1], [0], [0], [1], [0, 0, 1, 1], [], []>, precision = #tpu.contract_precision<fp32>} : vector<8x8xf32>, vector<8x8xf32>, vector<8x8xf32> -> vector<8x8xf32>
    %c8_64 = arith.constant 8 : index
    %c24_65 = arith.constant 24 : index
    %159 = vector.load %arg15[%c8_64, %c24_65] : memref<16x32xf32, #tpu.memory_space<vmem>>, vector<8x8xf32>
    tpu.vector_store %arg15[%c8_64, %c24_65], %158 {strides = array<i32>} : memref<16x32xf32, #tpu.memory_space<vmem>>, vector<8x8xf32>,
    %c0_66 = arith.constant 0 : index
    %c0_67 = arith.constant 0 : index
    %160 = vector.load %arg15[%c0_66, %c0_67] : memref<16x32xf32, #tpu.memory_space<vmem>>, vector<16x32xf32>
    %c0_68 = arith.constant 0 : index
    %c0_69 = arith.constant 0 : index
    %161 = vector.load %arg4[%c0_68, %c0_69] : memref<32x32xf32, #tpu.memory_space<vmem>>, vector<32x32xf32>
    %cst_70 = arith.constant dense<0.000000e+00> : vector<16x32xf32>
    %162 = tpu.matmul %160, %161, %cst_70 {dimension_numbers = #tpu.dot_dimension_numbers<[1], [0], [0], [1], [0, 0, 1, 1], [], []>, precision = #tpu.contract_precision<fp32>} : vector<16x32xf32>, vector<32x32xf32>, vector<16x32xf32> -> vector<16x32xf32>
    %c0_71 = arith.constant 0 : index
    %c0_72 = arith.constant 0 : index
    %163 = vector.load %arg5[%c0_71, %c0_72] : memref<1x32xf32, #tpu.memory_space<vmem>>, vector<1x32xf32>
    %164 = vector.broadcast %163 : vector<1x32xf32> to vector<16x32xf32>
    %165 = arith.addf %162, %164 : vector<16x32xf32>
    %166 = arith.addf %165, %0 : vector<16x32xf32>
    %cst_73 = arith.constant dense<0.000000e+00> : vector<16xf32>
    %167 = vector.multi_reduction <add>, %166, %cst_73 [1] : vector<16x32xf32> to vector<16xf32>
    %168 = vector.shape_cast %167 : vector<16xf32> to vector<16x1xf32>
    %cst_74 = arith.constant 3.200000e+01 : f32
    %169 = vector.broadcast %cst_74 : f32 to vector<16x1xf32>
    %170 = arith.divf %168, %169 : vector<16x1xf32>
    %171 = vector.broadcast %170 : vector<16x1xf32> to vector<16x32xf32>
    %172 = arith.subf %166, %171 : vector<16x32xf32>
    %173 = arith.mulf %172, %172 : vector<16x32xf32>
    %cst_75 = arith.constant dense<0.000000e+00> : vector<16xf32>
    %174 = vector.multi_reduction <add>, %173, %cst_75 [1] : vector<16x32xf32> to vector<16xf32>
    %175 = vector.shape_cast %174 : vector<16xf32> to vector<16x1xf32>
    %cst_76 = arith.constant 3.200000e+01 : f32
    %176 = vector.broadcast %cst_76 : f32 to vector<16x1xf32>
    %177 = arith.divf %175, %176 : vector<16x1xf32>
    %c0_77 = arith.constant 0 : index
    %c0_78 = arith.constant 0 : index
    %178 = vector.load %arg6[%c0_77, %c0_78] : memref<1x32xf32, #tpu.memory_space<vmem>>, vector<1x32xf32>
    %179 = vector.broadcast %170 : vector<16x1xf32> to vector<16x32xf32>
    %180 = arith.subf %166, %179 : vector<16x32xf32>
    %181 = math.sqrt %177 : vector<16x1xf32>
    %cst_79 = arith.constant 1.000000e-10 : f32
    %182 = vector.broadcast %cst_79 : f32 to vector<16x1xf32>
    %183 = arith.addf %181, %182 : vector<16x1xf32>
    %cst_80 = arith.constant 1.000000e+00 : f32
    %184 = vector.broadcast %cst_80 : f32 to vector<16x1xf32>
    %185 = arith.divf %184, %183 : vector<16x1xf32>
    %186 = vector.broadcast %185 : vector<16x1xf32> to vector<16x32xf32>
    %187 = arith.mulf %180, %186 : vector<16x32xf32>
    %188 = vector.broadcast %178 : vector<1x32xf32> to vector<16x32xf32>
    %189 = arith.mulf %188, %187 : vector<16x32xf32>
    %c0_81 = arith.constant 0 : index
    %c0_82 = arith.constant 0 : index
    %190 = vector.load %arg7[%c0_81, %c0_82] : memref<1x32xf32, #tpu.memory_space<vmem>>, vector<1x32xf32>
    %191 = vector.broadcast %190 : vector<1x32xf32> to vector<16x32xf32>
    %192 = arith.addf %189, %191 : vector<16x32xf32>
    %c0_83 = arith.constant 0 : index
    %c0_84 = arith.constant 0 : index
    %193 = vector.load %arg8[%c0_83, %c0_84] : memref<32x64xf32, #tpu.memory_space<vmem>>, vector<32x64xf32>
    %cst_85 = arith.constant dense<0.000000e+00> : vector<16x64xf32>
    %194 = tpu.matmul %192, %193, %cst_85 {dimension_numbers = #tpu.dot_dimension_numbers<[1], [0], [0], [1], [0, 0, 1, 1], [], []>, precision = #tpu.contract_precision<fp32>} : vector<16x32xf32>, vector<32x64xf32>, vector<16x64xf32> -> vector<16x64xf32>
    %c0_86 = arith.constant 0 : index
    %c0_87 = arith.constant 0 : index
    %195 = vector.load %arg9[%c0_86, %c0_87] : memref<1x64xf32, #tpu.memory_space<vmem>>, vector<1x64xf32>
    %196 = vector.broadcast %195 : vector<1x64xf32> to vector<16x64xf32>
    %197 = arith.addf %194, %196 : vector<16x64xf32>
    %cst_88 = arith.constant 0.000000e+00 : f32
    %198 = vector.broadcast %cst_88 : f32 to vector<16x64xf32>
    %199 = arith.maximumf %197, %198 : vector<16x64xf32>
    %c0_89 = arith.constant 0 : index
    %c0_90 = arith.constant 0 : index
    %200 = vector.load %arg10[%c0_89, %c0_90] : memref<64x32xf32, #tpu.memory_space<vmem>>, vector<64x32xf32>
    %cst_91 = arith.constant dense<0.000000e+00> : vector<16x32xf32>
    %201 = tpu.matmul %199, %200, %cst_91 {dimension_numbers = #tpu.dot_dimension_numbers<[1], [0], [0], [1], [0, 0, 1, 1], [], []>, precision = #tpu.contract_precision<fp32>} : vector<16x64xf32>, vector<64x32xf32>, vector<16x32xf32> -> vector<16x32xf32>
    %c0_92 = arith.constant 0 : index
    %c0_93 = arith.constant 0 : index
    %202 = vector.load %arg11[%c0_92, %c0_93] : memref<1x32xf32, #tpu.memory_space<vmem>>, vector<1x32xf32>
    %203 = vector.broadcast %202 : vector<1x32xf32> to vector<16x32xf32>
    %204 = arith.addf %201, %203 : vector<16x32xf32>
    %205 = arith.addf %204, %192 : vector<16x32xf32>
    %cst_94 = arith.constant dense<0.000000e+00> : vector<16xf32>
    %206 = vector.multi_reduction <add>, %205, %cst_94 [1] : vector<16x32xf32> to vector<16xf32>
    %207 = vector.shape_cast %206 : vector<16xf32> to vector<16x1xf32>
    %cst_95 = arith.constant 3.200000e+01 : f32
    %208 = vector.broadcast %cst_95 : f32 to vector<16x1xf32>
    %209 = arith.divf %207, %208 : vector<16x1xf32>
    %210 = vector.broadcast %209 : vector<16x1xf32> to vector<16x32xf32>
    %211 = arith.subf %205, %210 : vector<16x32xf32>
    %212 = arith.mulf %211, %211 : vector<16x32xf32>
    %cst_96 = arith.constant dense<0.000000e+00> : vector<16xf32>
    %213 = vector.multi_reduction <add>, %212, %cst_96 [1] : vector<16x32xf32> to vector<16xf32>
    %214 = vector.shape_cast %213 : vector<16xf32> to vector<16x1xf32>
    %cst_97 = arith.constant 3.200000e+01 : f32
    %215 = vector.broadcast %cst_97 : f32 to vector<16x1xf32>
    %216 = arith.divf %214, %215 : vector<16x1xf32>
    %c0_98 = arith.constant 0 : index
    %c0_99 = arith.constant 0 : index
    %217 = vector.load %arg12[%c0_98, %c0_99] : memref<1x32xf32, #tpu.memory_space<vmem>>, vector<1x32xf32>
    %218 = vector.broadcast %209 : vector<16x1xf32> to vector<16x32xf32>
    %219 = arith.subf %205, %218 : vector<16x32xf32>
    %220 = math.sqrt %216 : vector<16x1xf32>
    %cst_100 = arith.constant 1.000000e-10 : f32
    %221 = vector.broadcast %cst_100 : f32 to vector<16x1xf32>
    %222 = arith.addf %220, %221 : vector<16x1xf32>
    %cst_101 = arith.constant 1.000000e+00 : f32
    %223 = vector.broadcast %cst_101 : f32 to vector<16x1xf32>
    %224 = arith.divf %223, %222 : vector<16x1xf32>
    %225 = vector.broadcast %224 : vector<16x1xf32> to vector<16x32xf32>
    %226 = arith.mulf %219, %225 : vector<16x32xf32>
    %227 = vector.broadcast %217 : vector<1x32xf32> to vector<16x32xf32>
    %228 = arith.mulf %227, %226 : vector<16x32xf32>
    %c0_102 = arith.constant 0 : index
    %c0_103 = arith.constant 0 : index
    %229 = vector.load %arg13[%c0_102, %c0_103] : memref<1x32xf32, #tpu.memory_space<vmem>>, vector<1x32xf32>
    %230 = vector.broadcast %229 : vector<1x32xf32> to vector<16x32xf32>
    %231 = arith.addf %228, %230 : vector<16x32xf32>
    %c0_104 = arith.constant 0 : index
    %c0_105 = arith.constant 0 : index
    %232 = vector.load %arg14[%c0_104, %c0_105] : memref<16x32xf32, #tpu.memory_space<vmem>>, vector<16x32xf32>
    tpu.vector_store %arg14[%c0_104, %c0_105], %231 {strides = array<i32>} : memref<16x32xf32, #tpu.memory_space<vmem>>, vector<16x32xf32>,
    return
  }
  func.func @transform_0(%arg0: i32) -> (i32, i32) {
    %c0_i32 = arith.constant 0 : i32
    %c0_i32_0 = arith.constant 0 : i32
    return %arg0, %c0_i32 : i32, i32
  }
  func.func @transform_1(%arg0: i32) -> (i32, i32) {
    %c0_i32 = arith.constant 0 : i32
    %c0_i32_0 = arith.constant 0 : i32
    %c0_i32_1 = arith.constant 0 : i32
    return %c0_i32, %c0_i32_0 : i32, i32
  }
  func.func @transform_2(%arg0: i32) -> (i32, i32) {
    %c0_i32 = arith.constant 0 : i32
    %c0_i32_0 = arith.constant 0 : i32
    %c0_i32_1 = arith.constant 0 : i32
    return %c0_i32, %c0_i32_0 : i32, i32
  }
  func.func @transform_3(%arg0: i32) -> (i32, i32) {
    %c0_i32 = arith.constant 0 : i32
    %c0_i32_0 = arith.constant 0 : i32
    %c0_i32_1 = arith.constant 0 : i32
    return %c0_i32, %c0_i32_0 : i32, i32
  }
  func.func @transform_4(%arg0: i32) -> (i32, i32) {
    %c0_i32 = arith.constant 0 : i32
    %c0_i32_0 = arith.constant 0 : i32
    %c0_i32_1 = arith.constant 0 : i32
    return %c0_i32, %c0_i32_0 : i32, i32
  }
  func.func @transform_5(%arg0: i32) -> (i32, i32) {
    %c0_i32 = arith.constant 0 : i32
    %c0_i32_0 = arith.constant 0 : i32
    %c0_i32_1 = arith.constant 0 : i32
    return %c0_i32, %c0_i32_0 : i32, i32
  }
  func.func @transform_6(%arg0: i32) -> (i32, i32) {
    %c0_i32 = arith.constant 0 : i32
    %c0_i32_0 = arith.constant 0 : i32
    %c0_i32_1 = arith.constant 0 : i32
    return %c0_i32, %c0_i32_0 : i32, i32
  }
  func.func @transform_7(%arg0: i32) -> (i32, i32) {
    %c0_i32 = arith.constant 0 : i32
    %c0_i32_0 = arith.constant 0 : i32
    %c0_i32_1 = arith.constant 0 : i32
    return %c0_i32, %c0_i32_0 : i32, i32
  }
  func.func @transform_8(%arg0: i32) -> (i32, i32) {
    %c0_i32 = arith.constant 0 : i32
    %c0_i32_0 = arith.constant 0 : i32
    %c0_i32_1 = arith.constant 0 : i32
    return %c0_i32, %c0_i32_0 : i32, i32
  }
  func.func @transform_9(%arg0: i32) -> (i32, i32) {
    %c0_i32 = arith.constant 0 : i32
    %c0_i32_0 = arith.constant 0 : i32
    %c0_i32_1 = arith.constant 0 : i32
    return %c0_i32, %c0_i32_0 : i32, i32
  }
  func.func @transform_10(%arg0: i32) -> (i32, i32) {
    %c0_i32 = arith.constant 0 : i32
    %c0_i32_0 = arith.constant 0 : i32
    %c0_i32_1 = arith.constant 0 : i32
    return %c0_i32, %c0_i32_0 : i32, i32
  }
  func.func @transform_11(%arg0: i32) -> (i32, i32) {
    %c0_i32 = arith.constant 0 : i32
    %c0_i32_0 = arith.constant 0 : i32
    %c0_i32_1 = arith.constant 0 : i32
    return %c0_i32, %c0_i32_0 : i32, i32
  }
  func.func @transform_12(%arg0: i32) -> (i32, i32) {
    %c0_i32 = arith.constant 0 : i32
    %c0_i32_0 = arith.constant 0 : i32
    %c0_i32_1 = arith.constant 0 : i32
    return %c0_i32, %c0_i32_0 : i32, i32
  }
  func.func @transform_13(%arg0: i32) -> (i32, i32) {
    %c0_i32 = arith.constant 0 : i32
    %c0_i32_0 = arith.constant 0 : i32
    return %arg0, %c0_i32 : i32, i32
  }
}

</mosaic_0001>

<llo_original>
// kernel: tpu_custom_call.1
$region0: #{tpu_custom_call.1}
  #allocation0 [shape = 'u32[]', space=smem, size = 0x4, offset = 0x4, fixed_abs, tag = 'smem constant byte address 0x4 - core index']
  #allocation1 [shape = 'u32[144,128]{1,0:T(1,128)}', space=vmem, size = 0x12000, scoped, tag = 'internal scratch']
  #allocation2 [shape = 'f32[16,32]{1,0:T(8,128)}', space=vmem, size = 0x2000, scoped, tag = 'scratch operand']
  %s0 = inlined_call_operand.hbm [shape: f32[16,32], index: 0, kind: input, shape index: {}]
  %s1 = inlined_call_operand.vmem [shape: f32[32,96], index: 1, kind: input, shape index: {}]
  %s2 = inlined_call_operand.vmem [shape: f32[1,96], index: 2, kind: input, shape index: {}]
  %s3 = inlined_call_operand.vmem [shape: f32[32,32], index: 3, kind: input, shape index: {}]
  %s4 = inlined_call_operand.vmem [shape: f32[1,32], index: 4, kind: input, shape index: {}]
  %s5 = inlined_call_operand.vmem [shape: f32[1,32], index: 5, kind: input, shape index: {}]
  %s6 = inlined_call_operand.vmem [shape: f32[1,32], index: 6, kind: input, shape index: {}]
  %s7 = inlined_call_operand.vmem [shape: f32[32,64], index: 7, kind: input, shape index: {}]
  %s8 = inlined_call_operand.vmem [shape: f32[1,64], index: 8, kind: input, shape index: {}]
  %s9 = inlined_call_operand.vmem [shape: f32[64,32], index: 9, kind: input, shape index: {}]
  %s10 = inlined_call_operand.vmem [shape: f32[1,32], index: 10, kind: input, shape index: {}]
  %s11 = inlined_call_operand.vmem [shape: f32[1,32], index: 11, kind: input, shape index: {}]
  %s12 = inlined_call_operand.vmem [shape: f32[1,32], index: 12, kind: input, shape index: {}]
  %s13 = inlined_call_operand.hbm [shape: f32[16,32], index: 13, kind: output, shape index: {}]
  %s14 = sld [smem:[#allocation0]]
  $region66: #{tpu_custom_call.1} parent=0
    _
  %s16 = ssub.s32 1, %s14
  %s17 = scalar_select 0, %s16, %s14
  $region1: #{tpu_custom_call.1} parent=0
    #allocation3 [shape = 'u8[8192]{0}', space=vmem, size = 0x2000, scoped, tag = 'input window, operand 0, single buffered']
    #allocation4 [shape = 's32[1]{0}', space=sflag, size = 0x4, scoped, tag = 'scoped memory for tpu_custom_call.1']
    #allocation5 [shape = 's32[1]{0}', space=sflag, size = 0x4, scoped, tag = 'scoped memory for tpu_custom_call.1']
    #allocation6 [shape = 'u8[8192]{0}', space=vmem, size = 0x2000, scoped, tag = 'output window, operand 0, single buffered']
    %18 = vsyncpa [#allocation4], 0
    %19 = vsyncpa [#allocation5], 0
    // Predicated region
    $region2: #{tpu_custom_call.1} parent=1 // pred_check
      _
    $region3: #{tpu_custom_call.1} parent=1 // pred_check_branch
      %21 = sbr.rel (0) target = $region5
    $region4: #{tpu_custom_call.1} parent=1 // pred_region
      %s23 = ssub.s32 256, 256
      %24 = vsyncadd [#allocation4], %s23
      %s25 = sshll.u32 [#allocation3], 4
      %s26 = int_to_ptr.vmem [resolvable:$true] %s25
      %31 = dma.hbm_to_vmem [thread:$0]  %s0, 256, %s26, [#allocation4], 128, 128, 8
    $region5: #{tpu_custom_call.1} parent=1 // pred_fallthru
      _
    // Predicated region
    $region6: #{tpu_custom_call.1} parent=1 // pred_check
      _
    $region7: #{tpu_custom_call.1} parent=1 // pred_check_branch
      %33 = sbr.rel (0) target = $region9
    $region8: #{tpu_custom_call.1} parent=1 // pred_region
      _
    $region9: #{tpu_custom_call.1} parent=1 // pred_fallthru
      _
    // Predicated region
    $region10: #{tpu_custom_call.1} parent=1 // pred_check
      _
    $region11: #{tpu_custom_call.1} parent=1 // pred_check_branch
      %35 = sbr.rel (0) target = $region13
    $region12: #{tpu_custom_call.1} parent=1 // pred_region
      _
    $region13: #{tpu_custom_call.1} parent=1 // pred_fallthru
      _
    // Predicated region
    $region14: #{tpu_custom_call.1} parent=1 // pred_check
      _
    $region15: #{tpu_custom_call.1} parent=1 // pred_check_branch
      %37 = sbr.rel (0) target = $region17
    $region16: #{tpu_custom_call.1} parent=1 // pred_region
      _
    $region17: #{tpu_custom_call.1} parent=1 // pred_fallthru
      _
    // Predicated region
    $region18: #{tpu_custom_call.1} parent=1 // pred_check
      _
    $region19: #{tpu_custom_call.1} parent=1 // pred_check_branch
      %39 = sbr.rel (0) target = $region21
    $region20: #{tpu_custom_call.1} parent=1 // pred_region
      _
    $region21: #{tpu_custom_call.1} parent=1 // pred_fallthru
      _
    // Predicated region
    $region22: #{tpu_custom_call.1} parent=1 // pred_check
      _
    $region23: #{tpu_custom_call.1} parent=1 // pred_check_branch
      %41 = sbr.rel (0) target = $region25
    $region24: #{tpu_custom_call.1} parent=1 // pred_region
      _
    $region25: #{tpu_custom_call.1} parent=1 // pred_fallthru
      _
    // Predicated region
    $region26: #{tpu_custom_call.1} parent=1 // pred_check
      _
    $region27: #{tpu_custom_call.1} parent=1 // pred_check_branch
      %43 = sbr.rel (0) target = $region29
    $region28: #{tpu_custom_call.1} parent=1 // pred_region
      _
    $region29: #{tpu_custom_call.1} parent=1 // pred_fallthru
      _
    // Predicated region
    $region30: #{tpu_custom_call.1} parent=1 // pred_check
      _
    $region31: #{tpu_custom_call.1} parent=1 // pred_check_branch
      %45 = sbr.rel (0) target = $region33
    $region32: #{tpu_custom_call.1} parent=1 // pred_region
      _
    $region33: #{tpu_custom_call.1} parent=1 // pred_fallthru
      _
    // Predicated region
    $region34: #{tpu_custom_call.1} parent=1 // pred_check
      _
    $region35: #{tpu_custom_call.1} parent=1 // pred_check_branch
      %47 = sbr.rel (0) target = $region37
    $region36: #{tpu_custom_call.1} parent=1 // pred_region
      _
    $region37: #{tpu_custom_call.1} parent=1 // pred_fallthru
      _
    // Predicated region
    $region38: #{tpu_custom_call.1} parent=1 // pred_check
      _
    $region39: #{tpu_custom_call.1} parent=1 // pred_check_branch
      %49 = sbr.rel (0) target = $region41
    $region40: #{tpu_custom_call.1} parent=1 // pred_region
      _
    $region41: #{tpu_custom_call.1} parent=1 // pred_fallthru
      _
    // Predicated region
    $region42: #{tpu_custom_call.1} parent=1 // pred_check
      _
    $region43: #{tpu_custom_call.1} parent=1 // pred_check_branch
      %51 = sbr.rel (0) target = $region45
    $region44: #{tpu_custom_call.1} parent=1 // pred_region
      _
    $region45: #{tpu_custom_call.1} parent=1 // pred_fallthru
      _
    // Predicated region
    $region46: #{tpu_custom_call.1} parent=1 // pred_check
      _
    $region47: #{tpu_custom_call.1} parent=1 // pred_check_branch
      %53 = sbr.rel (0) target = $region49
    $region48: #{tpu_custom_call.1} parent=1 // pred_region
      _
    $region49: #{tpu_custom_call.1} parent=1 // pred_fallthru
      _
    // Predicated region
    $region50: #{tpu_custom_call.1} parent=1 // pred_check
      _
    $region51: #{tpu_custom_call.1} parent=1 // pred_check_branch
      %55 = sbr.rel (0) target = $region53
    $region52: #{tpu_custom_call.1} parent=1 // pred_region
      _
    $region53: #{tpu_custom_call.1} parent=1 // pred_fallthru
      _
    // Predicated region
    $region54: #{tpu_custom_call.1} parent=1 // pred_check
      _
    $region55: #{tpu_custom_call.1} parent=1 // pred_check_branch
      %57 = sbr.rel (0) target = $region57
    $region56: #{tpu_custom_call.1} parent=1 // pred_region
      %58 = dma.done [#allocation4], 256
    $region57: #{tpu_custom_call.1} parent=1 // pred_fallthru
      _
    %v59 = vld [vmem:[#allocation3] sm:$0xff]
    %v60 = vld [vmem:[#allocation3 + $0x8] sm:$0xff]
    %v61 = vld [vmem:[%s1] sm:$0xff]
    %v62 = vld [vmem:[%s1 + $0x8] sm:$0xff]
    %v63 = vld [vmem:[%s1 + $0x10] sm:$0xff]
    %v64 = vld [vmem:[%s1 + $0x18] sm:$0xff]
    %v65 = vld [vmem:[%s2] sm:$0x1]
    %v67 = vlaneseq
    %v68 = vshrl.u32 %v67, 7
    %v69 = vsub.s32 0, %v68
    %v70 = vrot.slane %v65, %v69
    %vm72 = vcmask 261120
    %v74 = vsel %vm72, %v59, 0
    %v77 = vsel %vm72, %v60, 0
    %79 = vmatprep.subr.mxu0 0.0
    %80 = vmatpush1.msra.mxu0 0.0
    %81 = vmatprep.subr.mxu0 0.0
    %82 = vmatpush1.msra.mxu0 0.0
    %83 = vmatprep.subr.mxu0 0.0
    %84 = vmatpush1.msra.mxu0 0.0
    %85 = vmatprep.subr.mxu0 0.0
    %86 = vmatpush1.msra.mxu0 0.0
    %87 = vmatprep.subr.mxu0 0.0
    %88 = vmatpush1.msra.mxu0 0.0
    %89 = vmatprep.subr.mxu0 0.0
    %90 = vmatpush1.msra.mxu0 0.0
    %91 = vmatprep.subr.mxu0 0.0
    %92 = vmatpush1.msra.mxu0 0.0
    %93 = vmatprep.subr.mxu0 0.0
    %94 = vmatpush1.msra.mxu0 0.0
    %95 = vmatprep.subr.mxu0 0.0
    %96 = vmatpush1.msra.mxu0 0.0
    %97 = vmatprep.subr.mxu0 0.0
    %98 = vmatpush1.msra.mxu0 0.0
    %99 = vmatprep.subr.mxu0 0.0
    %100 = vmatpush1.msra.mxu0 0.0
    %101 = vmatprep.subr.mxu0 0.0
    %102 = vmatpush1.msra.mxu0 0.0
    %103 = vmatprep.subr.mxu0 0.0
    %v104 = vand.u32 %v64, 4294901760
    %105 = vmatpush1.msra.mxu0 %v104
    %106 = vmatprep.subr.mxu0 0.0
    %v107 = vand.u32 %v63, 4294901760
    %108 = vmatpush1.msra.mxu0 %v107
    %109 = vmatprep.subr.mxu0 0.0
    %v110 = vand.u32 %v62, 4294901760
    %111 = vmatpush1.msra.mxu0 %v110
    %112 = vmatprep.subr.mxu0 0.0
    %v113 = vand.u32 %v61, 4294901760
    %114 = vmatpush1.msra.mxu0 %v113
    %115 = vmatprep.subr.mxu0 0.0
    %116 = vmatpush2.msra.mxu0 0.0
    %117 = vmatprep.subr.mxu0 0.0
    %118 = vmatpush2.msra.mxu0 0.0
    %119 = vmatprep.subr.mxu0 0.0
    %120 = vmatpush2.msra.mxu0 0.0
    %121 = vmatprep.subr.mxu0 0.0
    %122 = vmatpush2.msra.mxu0 0.0
    %123 = vmatprep.subr.mxu0 0.0
    %124 = vmatpush2.msra.mxu0 0.0
    %125 = vmatprep.subr.mxu0 0.0
    %126 = vmatpush2.msra.mxu0 0.0
    %127 = vmatprep.subr.mxu0 0.0
    %128 = vmatpush2.msra.mxu0 0.0
    %129 = vmatprep.subr.mxu0 0.0
    %130 = vmatpush2.msra.mxu0 0.0
    %131 = vmatprep.subr.mxu0 0.0
    %132 = vmatpush2.msra.mxu0 0.0
    %133 = vmatprep.subr.mxu0 0.0
    %134 = vmatpush2.msra.mxu0 0.0
    %135 = vmatprep.subr.mxu0 0.0
    %136 = vmatpush2.msra.mxu0 0.0
    %137 = vmatprep.subr.mxu0 0.0
    %138 = vmatpush2.msra.mxu0 0.0
    %139 = vmatprep.subr.mxu0 0.0
    %140 = vmatpush2.msra.mxu0 0.0
    %141 = vmatprep.subr.mxu0 0.0
    %142 = vmatpush2.msra.mxu0 0.0
    %143 = vmatprep.subr.mxu0 0.0
    %144 = vmatpush2.msra.mxu0 0.0
    %145 = vmatprep.subr.mxu0 0.0
    %146 = vmatpush2.msra.mxu0 0.0
    %147 = vmatprep.mubr.f32.mxu0 0.0
    %v148 = vand.u32 %v74, 4294901760
    %v149 = vsub.f32 %v74, %v148
    %v150 = vand.u32 %v149, 4294901760
    %v151 = vsub.f32 %v149, %v150
    %v152 = vand.u32 %v151, 4294901760
    %153 = vmatmul.mubr.f32.gmra.mxu0 %v152
    %v154 = vpop.f32.mrf.mxu0
    %v155 = vadd.f32 %v70, %v154
    %v156 = vpop.f32.mrf.mxu0
    %157 = vmatprep.mubr.f32.mxu0 0.0
    %v158 = vand.u32 %v77, 4294901760
    %v159 = vsub.f32 %v77, %v158
    %v160 = vand.u32 %v159, 4294901760
    %v161 = vsub.f32 %v159, %v160
    %v162 = vand.u32 %v161, 4294901760
    %163 = vmatmul.mubr.f32.gmra.mxu0 %v162
    %v164 = vpop.f32.mrf.mxu0
    %v165 = vadd.f32 %v70, %v164
    %v166 = vpop.f32.mrf.mxu0
    %167 = vdwg.mxu0
    %168 = vmatprep.subr.mxu0 0.0
    %169 = vmatpush1.msra.mxu0 0.0
    %170 = vmatprep.subr.mxu0 0.0
    %171 = vmatpush1.msra.mxu0 0.0
    %172 = vmatprep.subr.mxu0 0.0
    %173 = vmatpush1.msra.mxu0 0.0
    %174 = vmatprep.subr.mxu0 0.0
    %175 = vmatpush1.msra.mxu0 0.0
    %176 = vmatprep.subr.mxu0 0.0
    %177 = vmatpush1.msra.mxu0 0.0
    %178 = vmatprep.subr.mxu0 0.0
    %179 = vmatpush1.msra.mxu0 0.0
    %180 = vmatprep.subr.mxu0 0.0
    %181 = vmatpush1.msra.mxu0 0.0
    %182 = vmatprep.subr.mxu0 0.0
    %183 = vmatpush1.msra.mxu0 0.0
    %184 = vmatprep.subr.mxu0 0.0
    %185 = vmatpush1.msra.mxu0 0.0
    %186 = vmatprep.subr.mxu0 0.0
    %187 = vmatpush1.msra.mxu0 0.0
    %188 = vmatprep.subr.mxu0 0.0
    %189 = vmatpush1.msra.mxu0 0.0
    %190 = vmatprep.subr.mxu0 0.0
    %191 = vmatpush1.msra.mxu0 0.0
    %192 = vmatprep.subr.mxu0 0.0
    %v193 = vand.u32 %v64, 4294901760
    %v194 = vsub.f32 %v64, %v193
    %v195 = vand.u32 %v194, 4294901760
    %v196 = vsub.f32 %v194, %v195
    %v197 = vand.u32 %v196, 4294901760
    %198 = vmatpush1.msra.mxu0 %v197
    %199 = vmatprep.subr.mxu0 0.0
    %v200 = vand.u32 %v63, 4294901760
    %v201 = vsub.f32 %v63, %v200
    %v202 = vand.u32 %v201, 4294901760
    %v203 = vsub.f32 %v201, %v202
    %v204 = vand.u32 %v203, 4294901760
    %205 = vmatpush1.msra.mxu0 %v204
    %206 = vmatprep.subr.mxu0 0.0
    %v207 = vand.u32 %v62, 4294901760
    %v208 = vsub.f32 %v62, %v207
    %v209 = vand.u32 %v208, 4294901760
    %v210 = vsub.f32 %v208, %v209
    %v211 = vand.u32 %v210, 4294901760
    %212 = vmatpush1.msra.mxu0 %v211
    %213 = vmatprep.subr.mxu0 0.0
    %v214 = vand.u32 %v61, 4294901760
    %v215 = vsub.f32 %v61, %v214
    %v216 = vand.u32 %v215, 4294901760
    %v217 = vsub.f32 %v215, %v216
    %v218 = vand.u32 %v217, 4294901760
    %219 = vmatpush1.msra.mxu0 %v218
    %220 = vmatprep.subr.mxu0 0.0
    %221 = vmatpush2.msra.mxu0 0.0
    %222 = vmatprep.subr.mxu0 0.0
    %223 = vmatpush2.msra.mxu0 0.0
    %224 = vmatprep.subr.mxu0 0.0
    %225 = vmatpush2.msra.mxu0 0.0
    %226 = vmatprep.subr.mxu0 0.0
    %227 = vmatpush2.msra.mxu0 0.0
    %228 = vmatprep.subr.mxu0 0.0
    %229 = vmatpush2.msra.mxu0 0.0
    %230 = vmatprep.subr.mxu0 0.0
    %231 = vmatpush2.msra.mxu0 0.0
    %232 = vmatprep.subr.mxu0 0.0
    %233 = vmatpush2.msra.mxu0 0.0
    %234 = vmatprep.subr.mxu0 0.0
    %235 = vmatpush2.msra.mxu0 0.0
    %236 = vmatprep.subr.mxu0 0.0
    %237 = vmatpush2.msra.mxu0 0.0
    %238 = vmatprep.subr.mxu0 0.0
    %239 = vmatpush2.msra.mxu0 0.0
    %240 = vmatprep.subr.mxu0 0.0
    %241 = vmatpush2.msra.mxu0 0.0
    %242 = vmatprep.subr.mxu0 0.0
    %243 = vmatpush2.msra.mxu0 0.0
    %244 = vmatprep.subr.mxu0 0.0
    %245 = vmatpush2.msra.mxu0 0.0
    %246 = vmatprep.subr.mxu0 0.0
    %247 = vmatpush2.msra.mxu0 0.0
    %248 = vmatprep.subr.mxu0 0.0
    %249 = vmatpush2.msra.mxu0 0.0
    %250 = vmatprep.subr.mxu0 0.0
    %251 = vmatpush2.msra.mxu0 0.0
    %252 = vmatprep.mubr.f32.mxu0 0.0
    %v253 = vand.u32 %v74, 4294901760
    %254 = vmatmul.mubr.f32.gmra.mxu0 %v253
    %v255 = vpop.f32.mrf.mxu0
    %v256 = vadd.f32 %v155, %v255
    %v257 = vpop.f32.mrf.mxu0
    %258 = vmatprep.mubr.f32.mxu0 0.0
    %v259 = vand.u32 %v77, 4294901760
    %260 = vmatmul.mubr.f32.gmra.mxu0 %v259
    %v261 = vpop.f32.mrf.mxu0
    %v262 = vadd.f32 %v165, %v261
    %v263 = vpop.f32.mrf.mxu0
    %264 = vdwg.mxu0
    %265 = vmatprep.subr.mxu0 0.0
    %266 = vmatpush1.msra.mxu0 0.0
    %267 = vmatprep.subr.mxu0 0.0
    %268 = vmatpush1.msra.mxu0 0.0
    %269 = vmatprep.subr.mxu0 0.0
    %270 = vmatpush1.msra.mxu0 0.0
    %271 = vmatprep.subr.mxu0 0.0
    %272 = vmatpush1.msra.mxu0 0.0
    %273 = vmatprep.subr.mxu0 0.0
    %274 = vmatpush1.msra.mxu0 0.0
    %275 = vmatprep.subr.mxu0 0.0
    %276 = vmatpush1.msra.mxu0 0.0
    %277 = vmatprep.subr.mxu0 0.0
    %278 = vmatpush1.msra.mxu0 0.0
    %279 = vmatprep.subr.mxu0 0.0
    %280 = vmatpush1.msra.mxu0 0.0
    %281 = vmatprep.subr.mxu0 0.0
    %282 = vmatpush1.msra.mxu0 0.0
    %283 = vmatprep.subr.mxu0 0.0
    %284 = vmatpush1.msra.mxu0 0.0
    %285 = vmatprep.subr.mxu0 0.0
    %286 = vmatpush1.msra.mxu0 0.0
    %287 = vmatprep.subr.mxu0 0.0
    %288 = vmatpush1.msra.mxu0 0.0
    %289 = vmatprep.subr.mxu0 0.0
    %v290 = vand.u32 %v64, 4294901760
    %v291 = vsub.f32 %v64, %v290
    %292 = vmatpush1.msra.mxu0 %v291
    %293 = vmatprep.subr.mxu0 0.0
    %v294 = vand.u32 %v63, 4294901760
    %v295 = vsub.f32 %v63, %v294
    %296 = vmatpush1.msra.mxu0 %v295
    %297 = vmatprep.subr.mxu0 0.0
    %v298 = vand.u32 %v62, 4294901760
    %v299 = vsub.f32 %v62, %v298
    %300 = vmatpush1.msra.mxu0 %v299
    %301 = vmatprep.subr.mxu0 0.0
    %v302 = vand.u32 %v61, 4294901760
    %v303 = vsub.f32 %v61, %v302
    %304 = vmatpush1.msra.mxu0 %v303
    %305 = vmatprep.subr.mxu0 0.0
    %306 = vmatpush2.msra.mxu0 0.0
    %307 = vmatprep.subr.mxu0 0.0
    %308 = vmatpush2.msra.mxu0 0.0
    %309 = vmatprep.subr.mxu0 0.0
    %310 = vmatpush2.msra.mxu0 0.0
    %311 = vmatprep.subr.mxu0 0.0
    %312 = vmatpush2.msra.mxu0 0.0
    %313 = vmatprep.subr.mxu0 0.0
    %314 = vmatpush2.msra.mxu0 0.0
    %315 = vmatprep.subr.mxu0 0.0
    %316 = vmatpush2.msra.mxu0 0.0
    %317 = vmatprep.subr.mxu0 0.0
    %318 = vmatpush2.msra.mxu0 0.0
    %319 = vmatprep.subr.mxu0 0.0
    %320 = vmatpush2.msra.mxu0 0.0
    %321 = vmatprep.subr.mxu0 0.0
    %322 = vmatpush2.msra.mxu0 0.0
    %323 = vmatprep.subr.mxu0 0.0
    %324 = vmatpush2.msra.mxu0 0.0
    %325 = vmatprep.subr.mxu0 0.0
    %326 = vmatpush2.msra.mxu0 0.0
    %327 = vmatprep.subr.mxu0 0.0
    %328 = vmatpush2.msra.mxu0 0.0
    %329 = vmatprep.subr.mxu0 0.0
    %330 = vmatpush2.msra.mxu0 0.0
    %331 = vmatprep.subr.mxu0 0.0
    %332 = vmatpush2.msra.mxu0 0.0
    %333 = vmatprep.subr.mxu0 0.0
    %334 = vmatpush2.msra.mxu0 0.0
    %335 = vmatprep.subr.mxu0 0.0
    %336 = vmatpush2.msra.mxu0 0.0
    %337 = vmatprep.mubr.f32.mxu0 0.0
    %v338 = vand.u32 %v74, 4294901760
    %v339 = vsub.f32 %v74, %v338
    %340 = vmatmul.mubr.f32.gmra.mxu0 %v339
    %v341 = vpop.f32.mrf.mxu0
    %v342 = vadd.f32 %v256, %v341
    %v343 = vpop.f32.mrf.mxu0
    %344 = vmatprep.mubr.f32.mxu0 0.0
    %v345 = vand.u32 %v77, 4294901760
    %v346 = vsub.f32 %v77, %v345
    %347 = vmatmul.mubr.f32.gmra.mxu0 %v346
    %v348 = vpop.f32.mrf.mxu0
    %v349 = vadd.f32 %v262, %v348
    %v350 = vpop.f32.mrf.mxu0
    %351 = vdwg.mxu0
    %352 = vmatprep.subr.mxu0 0.0
    %353 = vmatpush1.msra.mxu0 0.0
    %354 = vmatprep.subr.mxu0 0.0
    %355 = vmatpush1.msra.mxu0 0.0
    %356 = vmatprep.subr.mxu0 0.0
    %357 = vmatpush1.msra.mxu0 0.0
    %358 = vmatprep.subr.mxu0 0.0
    %359 = vmatpush1.msra.mxu0 0.0
    %360 = vmatprep.subr.mxu0 0.0
    %361 = vmatpush1.msra.mxu0 0.0
    %362 = vmatprep.subr.mxu0 0.0
    %363 = vmatpush1.msra.mxu0 0.0
    %364 = vmatprep.subr.mxu0 0.0
    %365 = vmatpush1.msra.mxu0 0.0
    %366 = vmatprep.subr.mxu0 0.0
    %367 = vmatpush1.msra.mxu0 0.0
    %368 = vmatprep.subr.mxu0 0.0
    %369 = vmatpush1.msra.mxu0 0.0
    %370 = vmatprep.subr.mxu0 0.0
    %371 = vmatpush1.msra.mxu0 0.0
    %372 = vmatprep.subr.mxu0 0.0
    %373 = vmatpush1.msra.mxu0 0.0
    %374 = vmatprep.subr.mxu0 0.0
    %375 = vmatpush1.msra.mxu0 0.0
    %376 = vmatprep.subr.mxu0 0.0
    %v377 = vand.u32 %v64, 4294901760
    %378 = vmatpush1.msra.mxu0 %v377
    %379 = vmatprep.subr.mxu0 0.0
    %v380 = vand.u32 %v63, 4294901760
    %381 = vmatpush1.msra.mxu0 %v380
    %382 = vmatprep.subr.mxu0 0.0
    %v383 = vand.u32 %v62, 4294901760
    %384 = vmatpush1.msra.mxu0 %v383
    %385 = vmatprep.subr.mxu0 0.0
    %v386 = vand.u32 %v61, 4294901760
    %387 = vmatpush1.msra.mxu0 %v386
    %388 = vmatprep.subr.mxu0 0.0
    %389 = vmatpush2.msra.mxu0 0.0
    %390 = vmatprep.subr.mxu0 0.0
    %391 = vmatpush2.msra.mxu0 0.0
    %392 = vmatprep.subr.mxu0 0.0
    %393 = vmatpush2.msra.mxu0 0.0
    %394 = vmatprep.subr.mxu0 0.0
    %395 = vmatpush2.msra.mxu0 0.0
    %396 = vmatprep.subr.mxu0 0.0
    %397 = vmatpush2.msra.mxu0 0.0
    %398 = vmatprep.subr.mxu0 0.0
    %399 = vmatpush2.msra.mxu0 0.0
    %400 = vmatprep.subr.mxu0 0.0
    %401 = vmatpush2.msra.mxu0 0.0
    %402 = vmatprep.subr.mxu0 0.0
    %403 = vmatpush2.msra.mxu0 0.0
    %404 = vmatprep.subr.mxu0 0.0
    %405 = vmatpush2.msra.mxu0 0.0
    %406 = vmatprep.subr.mxu0 0.0
    %407 = vmatpush2.msra.mxu0 0.0
    %408 = vmatprep.subr.mxu0 0.0
    %409 = vmatpush2.msra.mxu0 0.0
    %410 = vmatprep.subr.mxu0 0.0
    %411 = vmatpush2.msra.mxu0 0.0
    %412 = vmatprep.subr.mxu0 0.0
    %413 = vmatpush2.msra.mxu0 0.0
    %414 = vmatprep.subr.mxu0 0.0
    %415 = vmatpush2.msra.mxu0 0.0
    %416 = vmatprep.subr.mxu0 0.0
    %417 = vmatpush2.msra.mxu0 0.0
    %418 = vmatprep.subr.mxu0 0.0
    %419 = vmatpush2.msra.mxu0 0.0
    %420 = vmatprep.mubr.f32.mxu0 0.0
    %v421 = vand.u32 %v74, 4294901760
    %v422 = vsub.f32 %v74, %v421
    %v423 = vand.u32 %v422, 4294901760
    %424 = vmatmul.mubr.f32.gmra.mxu0 %v423
    %v425 = vpop.f32.mrf.mxu0
    %v426 = vadd.f32 %v342, %v425
    %v427 = vpop.f32.mrf.mxu0
    %428 = vmatprep.mubr.f32.mxu0 0.0
    %v429 = vand.u32 %v77, 4294901760
    %v430 = vsub.f32 %v77, %v429
    %v431 = vand.u32 %v430, 4294901760
    %432 = vmatmul.mubr.f32.gmra.mxu0 %v431
    %v433 = vpop.f32.mrf.mxu0
    %v434 = vadd.f32 %v349, %v433
    %v435 = vpop.f32.mrf.mxu0
    %436 = vdwg.mxu0
    %437 = vmatprep.subr.mxu0 0.0
    %438 = vmatpush1.msra.mxu0 0.0
    %439 = vmatprep.subr.mxu0 0.0
    %440 = vmatpush1.msra.mxu0 0.0
    %441 = vmatprep.subr.mxu0 0.0
    %442 = vmatpush1.msra.mxu0 0.0
    %443 = vmatprep.subr.mxu0 0.0
    %444 = vmatpush1.msra.mxu0 0.0
    %445 = vmatprep.subr.mxu0 0.0
    %446 = vmatpush1.msra.mxu0 0.0
    %447 = vmatprep.subr.mxu0 0.0
    %448 = vmatpush1.msra.mxu0 0.0
    %449 = vmatprep.subr.mxu0 0.0
    %450 = vmatpush1.msra.mxu0 0.0
    %451 = vmatprep.subr.mxu0 0.0
    %452 = vmatpush1.msra.mxu0 0.0
    %453 = vmatprep.subr.mxu0 0.0
    %454 = vmatpush1.msra.mxu0 0.0
    %455 = vmatprep.subr.mxu0 0.0
    %456 = vmatpush1.msra.mxu0 0.0
    %457 = vmatprep.subr.mxu0 0.0
    %458 = vmatpush1.msra.mxu0 0.0
    %459 = vmatprep.subr.mxu0 0.0
    %460 = vmatpush1.msra.mxu0 0.0
    %461 = vmatprep.subr.mxu0 0.0
    %v462 = vand.u32 %v64, 4294901760
    %v463 = vsub.f32 %v64, %v462
    %v464 = vand.u32 %v463, 4294901760
    %465 = vmatpush1.msra.mxu0 %v464
    %466 = vmatprep.subr.mxu0 0.0
    %v467 = vand.u32 %v63, 4294901760
    %v468 = vsub.f32 %v63, %v467
    %v469 = vand.u32 %v468, 4294901760
    %470 = vmatpush1.msra.mxu0 %v469
    %471 = vmatprep.subr.mxu0 0.0
    %v472 = vand.u32 %v62, 4294901760
    %v473 = vsub.f32 %v62, %v472
    %v474 = vand.u32 %v473, 4294901760
    %475 = vmatpush1.msra.mxu0 %v474
    %476 = vmatprep.subr.mxu0 0.0
    %v477 = vand.u32 %v61, 4294901760
    %v478 = vsub.f32 %v61, %v477
    %v479 = vand.u32 %v478, 4294901760
    %480 = vmatpush1.msra.mxu0 %v479
    %481 = vmatprep.subr.mxu0 0.0
    %482 = vmatpush2.msra.mxu0 0.0
    %483 = vmatprep.subr.mxu0 0.0
    %484 = vmatpush2.msra.mxu0 0.0
    %485 = vmatprep.subr.mxu0 0.0
    %486 = vmatpush2.msra.mxu0 0.0
    %487 = vmatprep.subr.mxu0 0.0
    %488 = vmatpush2.msra.mxu0 0.0
    %489 = vmatprep.subr.mxu0 0.0
    %490 = vmatpush2.msra.mxu0 0.0
    %491 = vmatprep.subr.mxu0 0.0
    %492 = vmatpush2.msra.mxu0 0.0
    %493 = vmatprep.subr.mxu0 0.0
    %494 = vmatpush2.msra.mxu0 0.0
    %495 = vmatprep.subr.mxu0 0.0
    %496 = vmatpush2.msra.mxu0 0.0
    %497 = vmatprep.subr.mxu0 0.0
    %498 = vmatpush2.msra.mxu0 0.0
    %499 = vmatprep.subr.mxu0 0.0
    %500 = vmatpush2.msra.mxu0 0.0
    %501 = vmatprep.subr.mxu0 0.0
    %502 = vmatpush2.msra.mxu0 0.0
    %503 = vmatprep.subr.mxu0 0.0
    %504 = vmatpush2.msra.mxu0 0.0
    %505 = vmatprep.subr.mxu0 0.0
    %506 = vmatpush2.msra.mxu0 0.0
    %507 = vmatprep.subr.mxu0 0.0
    %508 = vmatpush2.msra.mxu0 0.0
    %509 = vmatprep.subr.mxu0 0.0
    %510 = vmatpush2.msra.mxu0 0.0
    %511 = vmatprep.subr.mxu0 0.0
    %512 = vmatpush2.msra.mxu0 0.0
    %513 = vmatprep.mubr.f32.mxu0 0.0
    %v514 = vand.u32 %v74, 4294901760
    %515 = vmatmul.mubr.f32.gmra.mxu0 %v514
    %v516 = vpop.f32.mrf.mxu0
    %v517 = vadd.f32 %v426, %v516
    %v518 = vpop.f32.mrf.mxu0
    %519 = vmatprep.mubr.f32.mxu0 0.0
    %v520 = vand.u32 %v77, 4294901760
    %521 = vmatmul.mubr.f32.gmra.mxu0 %v520
    %v522 = vpop.f32.mrf.mxu0
    %v523 = vadd.f32 %v434, %v522
    %v524 = vpop.f32.mrf.mxu0
    %525 = vdwg.mxu0
    %526 = vmatprep.subr.mxu0 0.0
    %527 = vmatpush1.msra.mxu0 0.0
    %528 = vmatprep.subr.mxu0 0.0
    %529 = vmatpush1.msra.mxu0 0.0
    %530 = vmatprep.subr.mxu0 0.0
    %531 = vmatpush1.msra.mxu0 0.0
    %532 = vmatprep.subr.mxu0 0.0
    %533 = vmatpush1.msra.mxu0 0.0
    %534 = vmatprep.subr.mxu0 0.0
    %535 = vmatpush1.msra.mxu0 0.0
    %536 = vmatprep.subr.mxu0 0.0
    %537 = vmatpush1.msra.mxu0 0.0
    %538 = vmatprep.subr.mxu0 0.0
    %539 = vmatpush1.msra.mxu0 0.0
    %540 = vmatprep.subr.mxu0 0.0
    %541 = vmatpush1.msra.mxu0 0.0
    %542 = vmatprep.subr.mxu0 0.0
    %543 = vmatpush1.msra.mxu0 0.0
    %544 = vmatprep.subr.mxu0 0.0
    %545 = vmatpush1.msra.mxu0 0.0
    %546 = vmatprep.subr.mxu0 0.0
    %547 = vmatpush1.msra.mxu0 0.0
    %548 = vmatprep.subr.mxu0 0.0
    %549 = vmatpush1.msra.mxu0 0.0
    %550 = vmatprep.subr.mxu0 0.0
    %v551 = vand.u32 %v64, 4294901760
    %552 = vmatpush1.msra.mxu0 %v551
    %553 = vmatprep.subr.mxu0 0.0
    %v554 = vand.u32 %v63, 4294901760
    %555 = vmatpush1.msra.mxu0 %v554
    %556 = vmatprep.subr.mxu0 0.0
    %v557 = vand.u32 %v62, 4294901760
    %558 = vmatpush1.msra.mxu0 %v557
    %559 = vmatprep.subr.mxu0 0.0
    %v560 = vand.u32 %v61, 4294901760
    %561 = vmatpush1.msra.mxu0 %v560
    %562 = vmatprep.subr.mxu0 0.0
    %563 = vmatpush2.msra.mxu0 0.0
    %564 = vmatprep.subr.mxu0 0.0
    %565 = vmatpush2.msra.mxu0 0.0
    %566 = vmatprep.subr.mxu0 0.0
    %567 = vmatpush2.msra.mxu0 0.0
    %568 = vmatprep.subr.mxu0 0.0
    %569 = vmatpush2.msra.mxu0 0.0
    %570 = vmatprep.subr.mxu0 0.0
    %571 = vmatpush2.msra.mxu0 0.0
    %572 = vmatprep.subr.mxu0 0.0
    %573 = vmatpush2.msra.mxu0 0.0
    %574 = vmatprep.subr.mxu0 0.0
    %575 = vmatpush2.msra.mxu0 0.0
    %576 = vmatprep.subr.mxu0 0.0
    %577 = vmatpush2.msra.mxu0 0.0
    %578 = vmatprep.subr.mxu0 0.0
    %579 = vmatpush2.msra.mxu0 0.0
    %580 = vmatprep.subr.mxu0 0.0
    %581 = vmatpush2.msra.mxu0 0.0
    %582 = vmatprep.subr.mxu0 0.0
    %583 = vmatpush2.msra.mxu0 0.0
    %584 = vmatprep.subr.mxu0 0.0
    %585 = vmatpush2.msra.mxu0 0.0
    %586 = vmatprep.subr.mxu0 0.0
    %587 = vmatpush2.msra.mxu0 0.0
    %588 = vmatprep.subr.mxu0 0.0
    %589 = vmatpush2.msra.mxu0 0.0
    %590 = vmatprep.subr.mxu0 0.0
    %591 = vmatpush2.msra.mxu0 0.0
    %592 = vmatprep.subr.mxu0 0.0
    %593 = vmatpush2.msra.mxu0 0.0
    %594 = vmatprep.mubr.f32.mxu0 0.0
    %v595 = vand.u32 %v74, 4294901760
    %596 = vmatmul.mubr.f32.gmra.mxu0 %v595
    %v597 = vpop.f32.mrf.mxu0
    %v598 = vadd.f32 %v517, %v597
    %v599 = vpop.f32.mrf.mxu0
    %600 = vmatprep.mubr.f32.mxu0 0.0
    %v601 = vand.u32 %v77, 4294901760
    %602 = vmatmul.mubr.f32.gmra.mxu0 %v601
    %v603 = vpop.f32.mrf.mxu0
    %v604 = vadd.f32 %v523, %v603
    %v605 = vpop.f32.mrf.mxu0
    %606 = vdwg.mxu0
    %608 = vrot.lane.b32.xlu0 %v598, 96
    %v609 = vpop.permute.xlu0 %608
    %vm610 = vcmask 64512
    %v611 = vsel %vm610, %v598, 0
    %v613 = vsel %vm610, %v609, 0
    %615 = vmatprep.subr.mxu0 0.0
    %616 = vmatpush1.xpose.msra.mxu0 0.0
    %617 = vmatprep.subr.mxu0 0.0
    %618 = vmatpush1.xpose.msra.mxu0 0.0
    %619 = vmatprep.subr.mxu0 0.0
    %620 = vmatpush1.xpose.msra.mxu0 0.0
    %621 = vmatprep.subr.mxu0 0.0
    %622 = vmatpush1.xpose.msra.mxu0 0.0
    %623 = vmatprep.subr.mxu0 0.0
    %624 = vmatpush1.xpose.msra.mxu0 0.0
    %625 = vmatprep.subr.mxu0 0.0
    %626 = vmatpush1.xpose.msra.mxu0 0.0
    %627 = vmatprep.subr.mxu0 0.0
    %628 = vmatpush1.xpose.msra.mxu0 0.0
    %629 = vmatprep.subr.mxu0 0.0
    %630 = vmatpush1.xpose.msra.mxu0 0.0
    %631 = vmatprep.subr.mxu0 0.0
    %632 = vmatpush1.xpose.msra.mxu0 0.0
    %633 = vmatprep.subr.mxu0 0.0
    %634 = vmatpush1.xpose.msra.mxu0 0.0
    %635 = vmatprep.subr.mxu0 0.0
    %636 = vmatpush1.xpose.msra.mxu0 0.0
    %637 = vmatprep.subr.mxu0 0.0
    %638 = vmatpush1.xpose.msra.mxu0 0.0
    %639 = vmatprep.subr.mxu0 0.0
    %640 = vmatpush1.xpose.msra.mxu0 0.0
    %641 = vmatprep.subr.mxu0 0.0
    %642 = vmatpush1.xpose.msra.mxu0 0.0
    %643 = vmatprep.subr.mxu0 0.0
    %644 = vmatpush1.xpose.msra.mxu0 0.0
    %645 = vmatprep.subr.mxu0 0.0
    %v646 = vand.u32 %v613, 4294901760
    %647 = vmatpush1.xpose.msra.mxu0 %v646
    %648 = vmatprep.subr.mxu0 0.0
    %649 = vmatpush2.xpose.msra.mxu0 0.0
    %650 = vmatprep.subr.mxu0 0.0
    %651 = vmatpush2.xpose.msra.mxu0 0.0
    %652 = vmatprep.subr.mxu0 0.0
    %653 = vmatpush2.xpose.msra.mxu0 0.0
    %654 = vmatprep.subr.mxu0 0.0
    %655 = vmatpush2.xpose.msra.mxu0 0.0
    %656 = vmatprep.subr.mxu0 0.0
    %657 = vmatpush2.xpose.msra.mxu0 0.0
    %658 = vmatprep.subr.mxu0 0.0
    %659 = vmatpush2.xpose.msra.mxu0 0.0
    %660 = vmatprep.subr.mxu0 0.0
    %661 = vmatpush2.xpose.msra.mxu0 0.0
    %662 = vmatprep.subr.mxu0 0.0
    %663 = vmatpush2.xpose.msra.mxu0 0.0
    %664 = vmatprep.subr.mxu0 0.0
    %665 = vmatpush2.xpose.msra.mxu0 0.0
    %666 = vmatprep.subr.mxu0 0.0
    %667 = vmatpush2.xpose.msra.mxu0 0.0
    %668 = vmatprep.subr.mxu0 0.0
    %669 = vmatpush2.xpose.msra.mxu0 0.0
    %670 = vmatprep.subr.mxu0 0.0
    %671 = vmatpush2.xpose.msra.mxu0 0.0
    %672 = vmatprep.subr.mxu0 0.0
    %673 = vmatpush2.xpose.msra.mxu0 0.0
    %674 = vmatprep.subr.mxu0 0.0
    %675 = vmatpush2.xpose.msra.mxu0 0.0
    %676 = vmatprep.subr.mxu0 0.0
    %677 = vmatpush2.xpose.msra.mxu0 0.0
    %678 = vmatprep.subr.mxu0 0.0
    %679 = vmatpush2.xpose.msra.mxu0 0.0
    %680 = vmatprep.mubr.f32.mxu0 0.0
    %v681 = vand.u32 %v611, 4294901760
    %v682 = vsub.f32 %v611, %v681
    %v683 = vand.u32 %v682, 4294901760
    %v684 = vsub.f32 %v682, %v683
    %v685 = vand.u32 %v684, 4294901760
    %686 = vmatmul.mubr.f32.gmra.mxu0 %v685
    %v687 = vpop.f32.mrf.mxu0
    %v688 = vadd.f32 0.0, %v687
    %v689 = vpop.f32.mrf.mxu0
    %690 = vdwg.mxu0
    %691 = vmatprep.subr.mxu0 0.0
    %692 = vmatpush1.xpose.msra.mxu0 0.0
    %693 = vmatprep.subr.mxu0 0.0
    %694 = vmatpush1.xpose.msra.mxu0 0.0
    %695 = vmatprep.subr.mxu0 0.0
    %696 = vmatpush1.xpose.msra.mxu0 0.0
    %697 = vmatprep.subr.mxu0 0.0
    %698 = vmatpush1.xpose.msra.mxu0 0.0
    %699 = vmatprep.subr.mxu0 0.0
    %700 = vmatpush1.xpose.msra.mxu0 0.0
    %701 = vmatprep.subr.mxu0 0.0
    %702 = vmatpush1.xpose.msra.mxu0 0.0
    %703 = vmatprep.subr.mxu0 0.0
    %704 = vmatpush1.xpose.msra.mxu0 0.0
    %705 = vmatprep.subr.mxu0 0.0
    %706 = vmatpush1.xpose.msra.mxu0 0.0
    %707 = vmatprep.subr.mxu0 0.0
    %708 = vmatpush1.xpose.msra.mxu0 0.0
    %709 = vmatprep.subr.mxu0 0.0
    %710 = vmatpush1.xpose.msra.mxu0 0.0
    %711 = vmatprep.subr.mxu0 0.0
    %712 = vmatpush1.xpose.msra.mxu0 0.0
    %713 = vmatprep.subr.mxu0 0.0
    %714 = vmatpush1.xpose.msra.mxu0 0.0
    %715 = vmatprep.subr.mxu0 0.0
    %716 = vmatpush1.xpose.msra.mxu0 0.0
    %717 = vmatprep.subr.mxu0 0.0
    %718 = vmatpush1.xpose.msra.mxu0 0.0
    %719 = vmatprep.subr.mxu0 0.0
    %720 = vmatpush1.xpose.msra.mxu0 0.0
    %721 = vmatprep.subr.mxu0 0.0
    %v722 = vand.u32 %v613, 4294901760
    %v723 = vsub.f32 %v613, %v722
    %v724 = vand.u32 %v723, 4294901760
    %v725 = vsub.f32 %v723, %v724
    %v726 = vand.u32 %v725, 4294901760
    %727 = vmatpush1.xpose.msra.mxu0 %v726
    %728 = vmatprep.subr.mxu0 0.0
    %729 = vmatpush2.xpose.msra.mxu0 0.0
    %730 = vmatprep.subr.mxu0 0.0
    %731 = vmatpush2.xpose.msra.mxu0 0.0
    %732 = vmatprep.subr.mxu0 0.0
    %733 = vmatpush2.xpose.msra.mxu0 0.0
    %734 = vmatprep.subr.mxu0 0.0
    %735 = vmatpush2.xpose.msra.mxu0 0.0
    %736 = vmatprep.subr.mxu0 0.0
    %737 = vmatpush2.xpose.msra.mxu0 0.0
    %738 = vmatprep.subr.mxu0 0.0
    %739 = vmatpush2.xpose.msra.mxu0 0.0
    %740 = vmatprep.subr.mxu0 0.0
    %741 = vmatpush2.xpose.msra.mxu0 0.0
    %742 = vmatprep.subr.mxu0 0.0
    %743 = vmatpush2.xpose.msra.mxu0 0.0
    %744 = vmatprep.subr.mxu0 0.0
    %745 = vmatpush2.xpose.msra.mxu0 0.0
    %746 = vmatprep.subr.mxu0 0.0
    %747 = vmatpush2.xpose.msra.mxu0 0.0
    %748 = vmatprep.subr.mxu0 0.0
    %749 = vmatpush2.xpose.msra.mxu0 0.0
    %750 = vmatprep.subr.mxu0 0.0
    %751 = vmatpush2.xpose.msra.mxu0 0.0
    %752 = vmatprep.subr.mxu0 0.0
    %753 = vmatpush2.xpose.msra.mxu0 0.0
    %754 = vmatprep.subr.mxu0 0.0
    %755 = vmatpush2.xpose.msra.mxu0 0.0
    %756 = vmatprep.subr.mxu0 0.0
    %757 = vmatpush2.xpose.msra.mxu0 0.0
    %758 = vmatprep.subr.mxu0 0.0
    %759 = vmatpush2.xpose.msra.mxu0 0.0
    %760 = vmatprep.mubr.f32.mxu0 0.0
    %v761 = vand.u32 %v611, 4294901760
    %762 = vmatmul.mubr.f32.gmra.mxu0 %v761
    %v763 = vpop.f32.mrf.mxu0
    %v764 = vadd.f32 %v688, %v763
    %v765 = vpop.f32.mrf.mxu0
    %766 = vdwg.mxu0
    %767 = vmatprep.subr.mxu0 0.0
    %768 = vmatpush1.xpose.msra.mxu0 0.0
    %769 = vmatprep.subr.mxu0 0.0
    %770 = vmatpush1.xpose.msra.mxu0 0.0
    %771 = vmatprep.subr.mxu0 0.0
    %772 = vmatpush1.xpose.msra.mxu0 0.0
    %773 = vmatprep.subr.mxu0 0.0
    %774 = vmatpush1.xpose.msra.mxu0 0.0
    %775 = vmatprep.subr.mxu0 0.0
    %776 = vmatpush1.xpose.msra.mxu0 0.0
    %777 = vmatprep.subr.mxu0 0.0
    %778 = vmatpush1.xpose.msra.mxu0 0.0
    %779 = vmatprep.subr.mxu0 0.0
    %780 = vmatpush1.xpose.msra.mxu0 0.0
    %781 = vmatprep.subr.mxu0 0.0
    %782 = vmatpush1.xpose.msra.mxu0 0.0
    %783 = vmatprep.subr.mxu0 0.0
    %784 = vmatpush1.xpose.msra.mxu0 0.0
    %785 = vmatprep.subr.mxu0 0.0
    %786 = vmatpush1.xpose.msra.mxu0 0.0
    %787 = vmatprep.subr.mxu0 0.0
    %788 = vmatpush1.xpose.msra.mxu0 0.0
    %789 = vmatprep.subr.mxu0 0.0
    %790 = vmatpush1.xpose.msra.mxu0 0.0
    %791 = vmatprep.subr.mxu0 0.0
    %792 = vmatpush1.xpose.msra.mxu0 0.0
    %793 = vmatprep.subr.mxu0 0.0
    %794 = vmatpush1.xpose.msra.mxu0 0.0
    %795 = vmatprep.subr.mxu0 0.0
    %796 = vmatpush1.xpose.msra.mxu0 0.0
    %797 = vmatprep.subr.mxu0 0.0
    %v798 = vand.u32 %v613, 4294901760
    %v799 = vsub.f32 %v613, %v798
    %800 = vmatpush1.xpose.msra.mxu0 %v799
    %801 = vmatprep.subr.mxu0 0.0
    %802 = vmatpush2.xpose.msra.mxu0 0.0
    %803 = vmatprep.subr.mxu0 0.0
    %804 = vmatpush2.xpose.msra.mxu0 0.0
    %805 = vmatprep.subr.mxu0 0.0
    %806 = vmatpush2.xpose.msra.mxu0 0.0
    %807 = vmatprep.subr.mxu0 0.0
    %808 = vmatpush2.xpose.msra.mxu0 0.0
    %809 = vmatprep.subr.mxu0 0.0
    %810 = vmatpush2.xpose.msra.mxu0 0.0
    %811 = vmatprep.subr.mxu0 0.0
    %812 = vmatpush2.xpose.msra.mxu0 0.0
    %813 = vmatprep.subr.mxu0 0.0
    %814 = vmatpush2.xpose.msra.mxu0 0.0
    %815 = vmatprep.subr.mxu0 0.0
    %816 = vmatpush2.xpose.msra.mxu0 0.0
    %817 = vmatprep.subr.mxu0 0.0
    %818 = vmatpush2.xpose.msra.mxu0 0.0
    %819 = vmatprep.subr.mxu0 0.0
    %820 = vmatpush2.xpose.msra.mxu0 0.0
    %821 = vmatprep.subr.mxu0 0.0
    %822 = vmatpush2.xpose.msra.mxu0 0.0
    %823 = vmatprep.subr.mxu0 0.0
    %824 = vmatpush2.xpose.msra.mxu0 0.0
    %825 = vmatprep.subr.mxu0 0.0
    %826 = vmatpush2.xpose.msra.mxu0 0.0
    %827 = vmatprep.subr.mxu0 0.0
    %828 = vmatpush2.xpose.msra.mxu0 0.0
    %829 = vmatprep.subr.mxu0 0.0
    %830 = vmatpush2.xpose.msra.mxu0 0.0
    %831 = vmatprep.subr.mxu0 0.0
    %832 = vmatpush2.xpose.msra.mxu0 0.0
    %833 = vmatprep.mubr.f32.mxu0 0.0
    %v834 = vand.u32 %v611, 4294901760
    %v835 = vsub.f32 %v611, %v834
    %836 = vmatmul.mubr.f32.gmra.mxu0 %v835
    %v837 = vpop.f32.mrf.mxu0
    %v838 = vadd.f32 %v764, %v837
    %v839 = vpop.f32.mrf.mxu0
    %840 = vdwg.mxu0
    %841 = vmatprep.subr.mxu0 0.0
    %842 = vmatpush1.xpose.msra.mxu0 0.0
    %843 = vmatprep.subr.mxu0 0.0
    %844 = vmatpush1.xpose.msra.mxu0 0.0
    %845 = vmatprep.subr.mxu0 0.0
    %846 = vmatpush1.xpose.msra.mxu0 0.0
    %847 = vmatprep.subr.mxu0 0.0
    %848 = vmatpush1.xpose.msra.mxu0 0.0
    %849 = vmatprep.subr.mxu0 0.0
    %850 = vmatpush1.xpose.msra.mxu0 0.0
    %851 = vmatprep.subr.mxu0 0.0
    %852 = vmatpush1.xpose.msra.mxu0 0.0
    %853 = vmatprep.subr.mxu0 0.0
    %854 = vmatpush1.xpose.msra.mxu0 0.0
    %855 = vmatprep.subr.mxu0 0.0
    %856 = vmatpush1.xpose.msra.mxu0 0.0
    %857 = vmatprep.subr.mxu0 0.0
    %858 = vmatpush1.xpose.msra.mxu0 0.0
    %859 = vmatprep.subr.mxu0 0.0
    %860 = vmatpush1.xpose.msra.mxu0 0.0
    %861 = vmatprep.subr.mxu0 0.0
    %862 = vmatpush1.xpose.msra.mxu0 0.0
    %863 = vmatprep.subr.mxu0 0.0
    %864 = vmatpush1.xpose.msra.mxu0 0.0
    %865 = vmatprep.subr.mxu0 0.0
    %866 = vmatpush1.xpose.msra.mxu0 0.0
    %867 = vmatprep.subr.mxu0 0.0
    %868 = vmatpush1.xpose.msra.mxu0 0.0
    %869 = vmatprep.subr.mxu0 0.0
    %870 = vmatpush1.xpose.msra.mxu0 0.0
    %871 = vmatprep.subr.mxu0 0.0
    %v872 = vand.u32 %v613, 4294901760
    %873 = vmatpush1.xpose.msra.mxu0 %v872
    %874 = vmatprep.subr.mxu0 0.0
    %875 = vmatpush2.xpose.msra.mxu0 0.0
    %876 = vmatprep.subr.mxu0 0.0
    %877 = vmatpush2.xpose.msra.mxu0 0.0
    %878 = vmatprep.subr.mxu0 0.0
    %879 = vmatpush2.xpose.msra.mxu0 0.0
    %880 = vmatprep.subr.mxu0 0.0
    %881 = vmatpush2.xpose.msra.mxu0 0.0
    %882 = vmatprep.subr.mxu0 0.0
    %883 = vmatpush2.xpose.msra.mxu0 0.0
    %884 = vmatprep.subr.mxu0 0.0
    %885 = vmatpush2.xpose.msra.mxu0 0.0
    %886 = vmatprep.subr.mxu0 0.0
    %887 = vmatpush2.xpose.msra.mxu0 0.0
    %888 = vmatprep.subr.mxu0 0.0
    %889 = vmatpush2.xpose.msra.mxu0 0.0
    %890 = vmatprep.subr.mxu0 0.0
    %891 = vmatpush2.xpose.msra.mxu0 0.0
    %892 = vmatprep.subr.mxu0 0.0
    %893 = vmatpush2.xpose.msra.mxu0 0.0
    %894 = vmatprep.subr.mxu0 0.0
    %895 = vmatpush2.xpose.msra.mxu0 0.0
    %896 = vmatprep.subr.mxu0 0.0
    %897 = vmatpush2.xpose.msra.mxu0 0.0
    %898 = vmatprep.subr.mxu0 0.0
    %899 = vmatpush2.xpose.msra.mxu0 0.0
    %900 = vmatprep.subr.mxu0 0.0
    %901 = vmatpush2.xpose.msra.mxu0 0.0
    %902 = vmatprep.subr.mxu0 0.0
    %903 = vmatpush2.xpose.msra.mxu0 0.0
    %904 = vmatprep.subr.mxu0 0.0
    %905 = vmatpush2.xpose.msra.mxu0 0.0
    %906 = vmatprep.mubr.f32.mxu0 0.0
    %v907 = vand.u32 %v611, 4294901760
    %v908 = vsub.f32 %v611, %v907
    %v909 = vand.u32 %v908, 4294901760
    %910 = vmatmul.mubr.f32.gmra.mxu0 %v909
    %v911 = vpop.f32.mrf.mxu0
    %v912 = vadd.f32 %v838, %v911
    %v913 = vpop.f32.mrf.mxu0
    %914 = vdwg.mxu0
    %915 = vmatprep.subr.mxu0 0.0
    %916 = vmatpush1.xpose.msra.mxu0 0.0
    %917 = vmatprep.subr.mxu0 0.0
    %918 = vmatpush1.xpose.msra.mxu0 0.0
    %919 = vmatprep.subr.mxu0 0.0
    %920 = vmatpush1.xpose.msra.mxu0 0.0
    %921 = vmatprep.subr.mxu0 0.0
    %922 = vmatpush1.xpose.msra.mxu0 0.0
    %923 = vmatprep.subr.mxu0 0.0
    %924 = vmatpush1.xpose.msra.mxu0 0.0
    %925 = vmatprep.subr.mxu0 0.0
    %926 = vmatpush1.xpose.msra.mxu0 0.0
    %927 = vmatprep.subr.mxu0 0.0
    %928 = vmatpush1.xpose.msra.mxu0 0.0
    %929 = vmatprep.subr.mxu0 0.0
    %930 = vmatpush1.xpose.msra.mxu0 0.0
    %931 = vmatprep.subr.mxu0 0.0
    %932 = vmatpush1.xpose.msra.mxu0 0.0
    %933 = vmatprep.subr.mxu0 0.0
    %934 = vmatpush1.xpose.msra.mxu0 0.0
    %935 = vmatprep.subr.mxu0 0.0
    %936 = vmatpush1.xpose.msra.mxu0 0.0
    %937 = vmatprep.subr.mxu0 0.0
    %938 = vmatpush1.xpose.msra.mxu0 0.0
    %939 = vmatprep.subr.mxu0 0.0
    %940 = vmatpush1.xpose.msra.mxu0 0.0
    %941 = vmatprep.subr.mxu0 0.0
    %942 = vmatpush1.xpose.msra.mxu0 0.0
    %943 = vmatprep.subr.mxu0 0.0
    %944 = vmatpush1.xpose.msra.mxu0 0.0
    %945 = vmatprep.subr.mxu0 0.0
    %v946 = vand.u32 %v613, 4294901760
    %v947 = vsub.f32 %v613, %v946
    %v948 = vand.u32 %v947, 4294901760
    %949 = vmatpush1.xpose.msra.mxu0 %v948
    %950 = vmatprep.subr.mxu0 0.0
    %951 = vmatpush2.xpose.msra.mxu0 0.0
    %952 = vmatprep.subr.mxu0 0.0
    %953 = vmatpush2.xpose.msra.mxu0 0.0
    %954 = vmatprep.subr.mxu0 0.0
    %955 = vmatpush2.xpose.msra.mxu0 0.0
    %956 = vmatprep.subr.mxu0 0.0
    %957 = vmatpush2.xpose.msra.mxu0 0.0
    %958 = vmatprep.subr.mxu0 0.0
    %959 = vmatpush2.xpose.msra.mxu0 0.0
    %960 = vmatprep.subr.mxu0 0.0
    %961 = vmatpush2.xpose.msra.mxu0 0.0
    %962 = vmatprep.subr.mxu0 0.0
    %963 = vmatpush2.xpose.msra.mxu0 0.0
    %964 = vmatprep.subr.mxu0 0.0
    %965 = vmatpush2.xpose.msra.mxu0 0.0
    %966 = vmatprep.subr.mxu0 0.0
    %967 = vmatpush2.xpose.msra.mxu0 0.0
    %968 = vmatprep.subr.mxu0 0.0
    %969 = vmatpush2.xpose.msra.mxu0 0.0
    %970 = vmatprep.subr.mxu0 0.0
    %971 = vmatpush2.xpose.msra.mxu0 0.0
    %972 = vmatprep.subr.mxu0 0.0
    %973 = vmatpush2.xpose.msra.mxu0 0.0
    %974 = vmatprep.subr.mxu0 0.0
    %975 = vmatpush2.xpose.msra.mxu0 0.0
    %976 = vmatprep.subr.mxu0 0.0
    %977 = vmatpush2.xpose.msra.mxu0 0.0
    %978 = vmatprep.subr.mxu0 0.0
    %979 = vmatpush2.xpose.msra.mxu0 0.0
    %980 = vmatprep.subr.mxu0 0.0
    %981 = vmatpush2.xpose.msra.mxu0 0.0
    %982 = vmatprep.mubr.f32.mxu0 0.0
    %v983 = vand.u32 %v611, 4294901760
    %984 = vmatmul.mubr.f32.gmra.mxu0 %v983
    %v985 = vpop.f32.mrf.mxu0
    %v986 = vadd.f32 %v912, %v985
    %v987 = vpop.f32.mrf.mxu0
    %988 = vdwg.mxu0
    %989 = vmatprep.subr.mxu0 0.0
    %990 = vmatpush1.xpose.msra.mxu0 0.0
    %991 = vmatprep.subr.mxu0 0.0
    %992 = vmatpush1.xpose.msra.mxu0 0.0
    %993 = vmatprep.subr.mxu0 0.0
    %994 = vmatpush1.xpose.msra.mxu0 0.0
    %995 = vmatprep.subr.mxu0 0.0
    %996 = vmatpush1.xpose.msra.mxu0 0.0
    %997 = vmatprep.subr.mxu0 0.0
    %998 = vmatpush1.xpose.msra.mxu0 0.0
    %999 = vmatprep.subr.mxu0 0.0
    %1000 = vmatpush1.xpose.msra.mxu0 0.0
    %1001 = vmatprep.subr.mxu0 0.0
    %1002 = vmatpush1.xpose.msra.mxu0 0.0
    %1003 = vmatprep.subr.mxu0 0.0
    %1004 = vmatpush1.xpose.msra.mxu0 0.0
    %1005 = vmatprep.subr.mxu0 0.0
    %1006 = vmatpush1.xpose.msra.mxu0 0.0
    %1007 = vmatprep.subr.mxu0 0.0
    %1008 = vmatpush1.xpose.msra.mxu0 0.0
    %1009 = vmatprep.subr.mxu0 0.0
    %1010 = vmatpush1.xpose.msra.mxu0 0.0
    %1011 = vmatprep.subr.mxu0 0.0
    %1012 = vmatpush1.xpose.msra.mxu0 0.0
    %1013 = vmatprep.subr.mxu0 0.0
    %1014 = vmatpush1.xpose.msra.mxu0 0.0
    %1015 = vmatprep.subr.mxu0 0.0
    %1016 = vmatpush1.xpose.msra.mxu0 0.0
    %1017 = vmatprep.subr.mxu0 0.0
    %1018 = vmatpush1.xpose.msra.mxu0 0.0
    %1019 = vmatprep.subr.mxu0 0.0
    %v1020 = vand.u32 %v613, 4294901760
    %1021 = vmatpush1.xpose.msra.mxu0 %v1020
    %1022 = vmatprep.subr.mxu0 0.0
    %1023 = vmatpush2.xpose.msra.mxu0 0.0
    %1024 = vmatprep.subr.mxu0 0.0
    %1025 = vmatpush2.xpose.msra.mxu0 0.0
    %1026 = vmatprep.subr.mxu0 0.0
    %1027 = vmatpush2.xpose.msra.mxu0 0.0
    %1028 = vmatprep.subr.mxu0 0.0
    %1029 = vmatpush2.xpose.msra.mxu0 0.0
    %1030 = vmatprep.subr.mxu0 0.0
    %1031 = vmatpush2.xpose.msra.mxu0 0.0
    %1032 = vmatprep.subr.mxu0 0.0
    %1033 = vmatpush2.xpose.msra.mxu0 0.0
    %1034 = vmatprep.subr.mxu0 0.0
    %1035 = vmatpush2.xpose.msra.mxu0 0.0
    %1036 = vmatprep.subr.mxu0 0.0
    %1037 = vmatpush2.xpose.msra.mxu0 0.0
    %1038 = vmatprep.subr.mxu0 0.0
    %1039 = vmatpush2.xpose.msra.mxu0 0.0
    %1040 = vmatprep.subr.mxu0 0.0
    %1041 = vmatpush2.xpose.msra.mxu0 0.0
    %1042 = vmatprep.subr.mxu0 0.0
    %1043 = vmatpush2.xpose.msra.mxu0 0.0
    %1044 = vmatprep.subr.mxu0 0.0
    %1045 = vmatpush2.xpose.msra.mxu0 0.0
    %1046 = vmatprep.subr.mxu0 0.0
    %1047 = vmatpush2.xpose.msra.mxu0 0.0
    %1048 = vmatprep.subr.mxu0 0.0
    %1049 = vmatpush2.xpose.msra.mxu0 0.0
    %1050 = vmatprep.subr.mxu0 0.0
    %1051 = vmatpush2.xpose.msra.mxu0 0.0
    %1052 = vmatprep.subr.mxu0 0.0
    %1053 = vmatpush2.xpose.msra.mxu0 0.0
    %1054 = vmatprep.mubr.f32.mxu0 0.0
    %v1055 = vand.u32 %v611, 4294901760
    %1056 = vmatmul.mubr.f32.gmra.mxu0 %v1055
    %v1057 = vpop.f32.mrf.mxu0
    %v1058 = vadd.f32 %v986, %v1057
    %v1059 = vpop.f32.mrf.mxu0
    %1060 = vdwg.mxu0
    %v1061 = vmul.f32 %v1058, 0.35355338
    %v1062 = vsel %vm610, %v1061, -inf
    %1063 = vmax.xlane.f32.xlu0 %v1062
    %v1064 = vpop.xlane.xlu0 %1063
    %v1065 = vsub.f32 %v1061, %v1064
    %v1066 = vmul.f32 %v1065, 1.442695
    %v1067 = vpow.pop %v1066
    %v1068 = vsel %vm610, %v1067, 0.0
    %1069 = vadd.xlane.f32.xlu0 %v1068
    %v1070 = vpop.xlane.xlu0 %1069
    %v1071 = vrcp.pop %v1070
    %v1072 = vmul.f32 1.0, %v1071
    %v1073 = vmul.f32 %v1067, %v1072
    %1074 = vrot.lane.b32.xlu0 %v598, 64
    %v1075 = vpop.permute.xlu0 %1074
    %v1078 = vsel %vm610, %v1073, 0
    %1080 = vmatprep.subr.mxu0 0.0
    %1081 = vmatpush1.msra.mxu0 0.0
    %1082 = vmatprep.subr.mxu0 0.0
    %1083 = vmatpush1.msra.mxu0 0.0
    %1084 = vmatprep.subr.mxu0 0.0
    %1085 = vmatpush1.msra.mxu0 0.0
    %1086 = vmatprep.subr.mxu0 0.0
    %1087 = vmatpush1.msra.mxu0 0.0
    %1088 = vmatprep.subr.mxu0 0.0
    %1089 = vmatpush1.msra.mxu0 0.0
    %1090 = vmatprep.subr.mxu0 0.0
    %1091 = vmatpush1.msra.mxu0 0.0
    %1092 = vmatprep.subr.mxu0 0.0
    %1093 = vmatpush1.msra.mxu0 0.0
    %1094 = vmatprep.subr.mxu0 0.0
    %1095 = vmatpush1.msra.mxu0 0.0
    %1096 = vmatprep.subr.mxu0 0.0
    %1097 = vmatpush1.msra.mxu0 0.0
    %1098 = vmatprep.subr.mxu0 0.0
    %1099 = vmatpush1.msra.mxu0 0.0
    %1100 = vmatprep.subr.mxu0 0.0
    %1101 = vmatpush1.msra.mxu0 0.0
    %1102 = vmatprep.subr.mxu0 0.0
    %1103 = vmatpush1.msra.mxu0 0.0
    %1104 = vmatprep.subr.mxu0 0.0
    %1105 = vmatpush1.msra.mxu0 0.0
    %1106 = vmatprep.subr.mxu0 0.0
    %1107 = vmatpush1.msra.mxu0 0.0
    %1108 = vmatprep.subr.mxu0 0.0
    %1109 = vmatpush1.msra.mxu0 0.0
    %1110 = vmatprep.subr.mxu0 0.0
    %v1111 = vand.u32 %v1075, 4294901760
    %1112 = vmatpush1.msra.mxu0 %v1111
    %1113 = vmatprep.subr.mxu0 0.0
    %1114 = vmatpush2.msra.mxu0 0.0
    %1115 = vmatprep.subr.mxu0 0.0
    %1116 = vmatpush2.msra.mxu0 0.0
    %1117 = vmatprep.subr.mxu0 0.0
    %1118 = vmatpush2.msra.mxu0 0.0
    %1119 = vmatprep.subr.mxu0 0.0
    %1120 = vmatpush2.msra.mxu0 0.0
    %1121 = vmatprep.subr.mxu0 0.0
    %1122 = vmatpush2.msra.mxu0 0.0
    %1123 = vmatprep.subr.mxu0 0.0
    %1124 = vmatpush2.msra.mxu0 0.0
    %1125 = vmatprep.subr.mxu0 0.0
    %1126 = vmatpush2.msra.mxu0 0.0
    %1127 = vmatprep.subr.mxu0 0.0
    %1128 = vmatpush2.msra.mxu0 0.0
    %1129 = vmatprep.subr.mxu0 0.0
    %1130 = vmatpush2.msra.mxu0 0.0
    %1131 = vmatprep.subr.mxu0 0.0
    %1132 = vmatpush2.msra.mxu0 0.0
    %1133 = vmatprep.subr.mxu0 0.0
    %1134 = vmatpush2.msra.mxu0 0.0
    %1135 = vmatprep.subr.mxu0 0.0
    %1136 = vmatpush2.msra.mxu0 0.0
    %1137 = vmatprep.subr.mxu0 0.0
    %1138 = vmatpush2.msra.mxu0 0.0
    %1139 = vmatprep.subr.mxu0 0.0
    %1140 = vmatpush2.msra.mxu0 0.0
    %1141 = vmatprep.subr.mxu0 0.0
    %1142 = vmatpush2.msra.mxu0 0.0
    %1143 = vmatprep.subr.mxu0 0.0
    %1144 = vmatpush2.msra.mxu0 0.0
    %1145 = vmatprep.mubr.f32.mxu0 0.0
    %v1146 = vand.u32 %v1078, 4294901760
    %v1147 = vsub.f32 %v1078, %v1146
    %v1148 = vand.u32 %v1147, 4294901760
    %v1149 = vsub.f32 %v1147, %v1148
    %v1150 = vand.u32 %v1149, 4294901760
    %1151 = vmatmul.mubr.f32.gmra.mxu0 %v1150
    %v1152 = vpop.f32.mrf.mxu0
    %v1153 = vadd.f32 0.0, %v1152
    %v1154 = vpop.f32.mrf.mxu0
    %1155 = vdwg.mxu0
    %1156 = vmatprep.subr.mxu0 0.0
    %1157 = vmatpush1.msra.mxu0 0.0
    %1158 = vmatprep.subr.mxu0 0.0
    %1159 = vmatpush1.msra.mxu0 0.0
    %1160 = vmatprep.subr.mxu0 0.0
    %1161 = vmatpush1.msra.mxu0 0.0
    %1162 = vmatprep.subr.mxu0 0.0
    %1163 = vmatpush1.msra.mxu0 0.0
    %1164 = vmatprep.subr.mxu0 0.0
    %1165 = vmatpush1.msra.mxu0 0.0
    %1166 = vmatprep.subr.mxu0 0.0
    %1167 = vmatpush1.msra.mxu0 0.0
    %1168 = vmatprep.subr.mxu0 0.0
    %1169 = vmatpush1.msra.mxu0 0.0
    %1170 = vmatprep.subr.mxu0 0.0
    %1171 = vmatpush1.msra.mxu0 0.0
    %1172 = vmatprep.subr.mxu0 0.0
    %1173 = vmatpush1.msra.mxu0 0.0
    %1174 = vmatprep.subr.mxu0 0.0
    %1175 = vmatpush1.msra.mxu0 0.0
    %1176 = vmatprep.subr.mxu0 0.0
    %1177 = vmatpush1.msra.mxu0 0.0
    %1178 = vmatprep.subr.mxu0 0.0
    %1179 = vmatpush1.msra.mxu0 0.0
    %1180 = vmatprep.subr.mxu0 0.0
    %1181 = vmatpush1.msra.mxu0 0.0
    %1182 = vmatprep.subr.mxu0 0.0
    %1183 = vmatpush1.msra.mxu0 0.0
    %1184 = vmatprep.subr.mxu0 0.0
    %1185 = vmatpush1.msra.mxu0 0.0
    %1186 = vmatprep.subr.mxu0 0.0
    %v1187 = vand.u32 %v1075, 4294901760
    %v1188 = vsub.f32 %v1075, %v1187
    %v1189 = vand.u32 %v1188, 4294901760
    %v1190 = vsub.f32 %v1188, %v1189
    %v1191 = vand.u32 %v1190, 4294901760
    %1192 = vmatpush1.msra.mxu0 %v1191
    %1193 = vmatprep.subr.mxu0 0.0
    %1194 = vmatpush2.msra.mxu0 0.0
    %1195 = vmatprep.subr.mxu0 0.0
    %1196 = vmatpush2.msra.mxu0 0.0
    %1197 = vmatprep.subr.mxu0 0.0
    %1198 = vmatpush2.msra.mxu0 0.0
    %1199 = vmatprep.subr.mxu0 0.0
    %1200 = vmatpush2.msra.mxu0 0.0
    %1201 = vmatprep.subr.mxu0 0.0
    %1202 = vmatpush2.msra.mxu0 0.0
    %1203 = vmatprep.subr.mxu0 0.0
    %1204 = vmatpush2.msra.mxu0 0.0
    %1205 = vmatprep.subr.mxu0 0.0
    %1206 = vmatpush2.msra.mxu0 0.0
    %1207 = vmatprep.subr.mxu0 0.0
    %1208 = vmatpush2.msra.mxu0 0.0
    %1209 = vmatprep.subr.mxu0 0.0
    %1210 = vmatpush2.msra.mxu0 0.0
    %1211 = vmatprep.subr.mxu0 0.0
    %1212 = vmatpush2.msra.mxu0 0.0
    %1213 = vmatprep.subr.mxu0 0.0
    %1214 = vmatpush2.msra.mxu0 0.0
    %1215 = vmatprep.subr.mxu0 0.0
    %1216 = vmatpush2.msra.mxu0 0.0
    %1217 = vmatprep.subr.mxu0 0.0
    %1218 = vmatpush2.msra.mxu0 0.0
    %1219 = vmatprep.subr.mxu0 0.0
    %1220 = vmatpush2.msra.mxu0 0.0
    %1221 = vmatprep.subr.mxu0 0.0
    %1222 = vmatpush2.msra.mxu0 0.0
    %1223 = vmatprep.subr.mxu0 0.0
    %1224 = vmatpush2.msra.mxu0 0.0
    %1225 = vmatprep.mubr.f32.mxu0 0.0
    %v1226 = vand.u32 %v1078, 4294901760
    %1227 = vmatmul.mubr.f32.gmra.mxu0 %v1226
    %v1228 = vpop.f32.mrf.mxu0
    %v1229 = vadd.f32 %v1153, %v1228
    %v1230 = vpop.f32.mrf.mxu0
    %1231 = vdwg.mxu0
    %1232 = vmatprep.subr.mxu0 0.0
    %1233 = vmatpush1.msra.mxu0 0.0
    %1234 = vmatprep.subr.mxu0 0.0
    %1235 = vmatpush1.msra.mxu0 0.0
    %1236 = vmatprep.subr.mxu0 0.0
    %1237 = vmatpush1.msra.mxu0 0.0
    %1238 = vmatprep.subr.mxu0 0.0
    %1239 = vmatpush1.msra.mxu0 0.0
    %1240 = vmatprep.subr.mxu0 0.0
    %1241 = vmatpush1.msra.mxu0 0.0
    %1242 = vmatprep.subr.mxu0 0.0
    %1243 = vmatpush1.msra.mxu0 0.0
    %1244 = vmatprep.subr.mxu0 0.0
    %1245 = vmatpush1.msra.mxu0 0.0
    %1246 = vmatprep.subr.mxu0 0.0
    %1247 = vmatpush1.msra.mxu0 0.0
    %1248 = vmatprep.subr.mxu0 0.0
    %1249 = vmatpush1.msra.mxu0 0.0
    %1250 = vmatprep.subr.mxu0 0.0
    %1251 = vmatpush1.msra.mxu0 0.0
    %1252 = vmatprep.subr.mxu0 0.0
    %1253 = vmatpush1.msra.mxu0 0.0
    %1254 = vmatprep.subr.mxu0 0.0
    %1255 = vmatpush1.msra.mxu0 0.0
    %1256 = vmatprep.subr.mxu0 0.0
    %1257 = vmatpush1.msra.mxu0 0.0
    %1258 = vmatprep.subr.mxu0 0.0
    %1259 = vmatpush1.msra.mxu0 0.0
    %1260 = vmatprep.subr.mxu0 0.0
    %1261 = vmatpush1.msra.mxu0 0.0
    %1262 = vmatprep.subr.mxu0 0.0
    %v1263 = vand.u32 %v1075, 4294901760
    %v1264 = vsub.f32 %v1075, %v1263
    %1265 = vmatpush1.msra.mxu0 %v1264
    %1266 = vmatprep.subr.mxu0 0.0
    %1267 = vmatpush2.msra.mxu0 0.0
    %1268 = vmatprep.subr.mxu0 0.0
    %1269 = vmatpush2.msra.mxu0 0.0
    %1270 = vmatprep.subr.mxu0 0.0
    %1271 = vmatpush2.msra.mxu0 0.0
    %1272 = vmatprep.subr.mxu0 0.0
    %1273 = vmatpush2.msra.mxu0 0.0
    %1274 = vmatprep.subr.mxu0 0.0
    %1275 = vmatpush2.msra.mxu0 0.0
    %1276 = vmatprep.subr.mxu0 0.0
    %1277 = vmatpush2.msra.mxu0 0.0
    %1278 = vmatprep.subr.mxu0 0.0
    %1279 = vmatpush2.msra.mxu0 0.0
    %1280 = vmatprep.subr.mxu0 0.0
    %1281 = vmatpush2.msra.mxu0 0.0
    %1282 = vmatprep.subr.mxu0 0.0
    %1283 = vmatpush2.msra.mxu0 0.0
    %1284 = vmatprep.subr.mxu0 0.0
    %1285 = vmatpush2.msra.mxu0 0.0
    %1286 = vmatprep.subr.mxu0 0.0
    %1287 = vmatpush2.msra.mxu0 0.0
    %1288 = vmatprep.subr.mxu0 0.0
    %1289 = vmatpush2.msra.mxu0 0.0
    %1290 = vmatprep.subr.mxu0 0.0
    %1291 = vmatpush2.msra.mxu0 0.0
    %1292 = vmatprep.subr.mxu0 0.0
    %1293 = vmatpush2.msra.mxu0 0.0
    %1294 = vmatprep.subr.mxu0 0.0
    %1295 = vmatpush2.msra.mxu0 0.0
    %1296 = vmatprep.subr.mxu0 0.0
    %1297 = vmatpush2.msra.mxu0 0.0
    %1298 = vmatprep.mubr.f32.mxu0 0.0
    %v1299 = vand.u32 %v1078, 4294901760
    %v1300 = vsub.f32 %v1078, %v1299
    %1301 = vmatmul.mubr.f32.gmra.mxu0 %v1300
    %v1302 = vpop.f32.mrf.mxu0
    %v1303 = vadd.f32 %v1229, %v1302
    %v1304 = vpop.f32.mrf.mxu0
    %1305 = vdwg.mxu0
    %1306 = vmatprep.subr.mxu0 0.0
    %1307 = vmatpush1.msra.mxu0 0.0
    %1308 = vmatprep.subr.mxu0 0.0
    %1309 = vmatpush1.msra.mxu0 0.0
    %1310 = vmatprep.subr.mxu0 0.0
    %1311 = vmatpush1.msra.mxu0 0.0
    %1312 = vmatprep.subr.mxu0 0.0
    %1313 = vmatpush1.msra.mxu0 0.0
    %1314 = vmatprep.subr.mxu0 0.0
    %1315 = vmatpush1.msra.mxu0 0.0
    %1316 = vmatprep.subr.mxu0 0.0
    %1317 = vmatpush1.msra.mxu0 0.0
    %1318 = vmatprep.subr.mxu0 0.0
    %1319 = vmatpush1.msra.mxu0 0.0
    %1320 = vmatprep.subr.mxu0 0.0
    %1321 = vmatpush1.msra.mxu0 0.0
    %1322 = vmatprep.subr.mxu0 0.0
    %1323 = vmatpush1.msra.mxu0 0.0
    %1324 = vmatprep.subr.mxu0 0.0
    %1325 = vmatpush1.msra.mxu0 0.0
    %1326 = vmatprep.subr.mxu0 0.0
    %1327 = vmatpush1.msra.mxu0 0.0
    %1328 = vmatprep.subr.mxu0 0.0
    %1329 = vmatpush1.msra.mxu0 0.0
    %1330 = vmatprep.subr.mxu0 0.0
    %1331 = vmatpush1.msra.mxu0 0.0
    %1332 = vmatprep.subr.mxu0 0.0
    %1333 = vmatpush1.msra.mxu0 0.0
    %1334 = vmatprep.subr.mxu0 0.0
    %1335 = vmatpush1.msra.mxu0 0.0
    %1336 = vmatprep.subr.mxu0 0.0
    %v1337 = vand.u32 %v1075, 4294901760
    %1338 = vmatpush1.msra.mxu0 %v1337
    %1339 = vmatprep.subr.mxu0 0.0
    %1340 = vmatpush2.msra.mxu0 0.0
    %1341 = vmatprep.subr.mxu0 0.0
    %1342 = vmatpush2.msra.mxu0 0.0
    %1343 = vmatprep.subr.mxu0 0.0
    %1344 = vmatpush2.msra.mxu0 0.0
    %1345 = vmatprep.subr.mxu0 0.0
    %1346 = vmatpush2.msra.mxu0 0.0
    %1347 = vmatprep.subr.mxu0 0.0
    %1348 = vmatpush2.msra.mxu0 0.0
    %1349 = vmatprep.subr.mxu0 0.0
    %1350 = vmatpush2.msra.mxu0 0.0
    %1351 = vmatprep.subr.mxu0 0.0
    %1352 = vmatpush2.msra.mxu0 0.0
    %1353 = vmatprep.subr.mxu0 0.0
    %1354 = vmatpush2.msra.mxu0 0.0
    %1355 = vmatprep.subr.mxu0 0.0
    %1356 = vmatpush2.msra.mxu0 0.0
    %1357 = vmatprep.subr.mxu0 0.0
    %1358 = vmatpush2.msra.mxu0 0.0
    %1359 = vmatprep.subr.mxu0 0.0
    %1360 = vmatpush2.msra.mxu0 0.0
    %1361 = vmatprep.subr.mxu0 0.0
    %1362 = vmatpush2.msra.mxu0 0.0
    %1363 = vmatprep.subr.mxu0 0.0
    %1364 = vmatpush2.msra.mxu0 0.0
    %1365 = vmatprep.subr.mxu0 0.0
    %1366 = vmatpush2.msra.mxu0 0.0
    %1367 = vmatprep.subr.mxu0 0.0
    %1368 = vmatpush2.msra.mxu0 0.0
    %1369 = vmatprep.subr.mxu0 0.0
    %1370 = vmatpush2.msra.mxu0 0.0
    %1371 = vmatprep.mubr.f32.mxu0 0.0
    %v1372 = vand.u32 %v1078, 4294901760
    %v1373 = vsub.f32 %v1078, %v1372
    %v1374 = vand.u32 %v1373, 4294901760
    %1375 = vmatmul.mubr.f32.gmra.mxu0 %v1374
    %v1376 = vpop.f32.mrf.mxu0
    %v1377 = vadd.f32 %v1303, %v1376
    %v1378 = vpop.f32.mrf.mxu0
    %1379 = vdwg.mxu0
    %1380 = vmatprep.subr.mxu0 0.0
    %1381 = vmatpush1.msra.mxu0 0.0
    %1382 = vmatprep.subr.mxu0 0.0
    %1383 = vmatpush1.msra.mxu0 0.0
    %1384 = vmatprep.subr.mxu0 0.0
    %1385 = vmatpush1.msra.mxu0 0.0
    %1386 = vmatprep.subr.mxu0 0.0
    %1387 = vmatpush1.msra.mxu0 0.0
    %1388 = vmatprep.subr.mxu0 0.0
    %1389 = vmatpush1.msra.mxu0 0.0
    %1390 = vmatprep.subr.mxu0 0.0
    %1391 = vmatpush1.msra.mxu0 0.0
    %1392 = vmatprep.subr.mxu0 0.0
    %1393 = vmatpush1.msra.mxu0 0.0
    %1394 = vmatprep.subr.mxu0 0.0
    %1395 = vmatpush1.msra.mxu0 0.0
    %1396 = vmatprep.subr.mxu0 0.0
    %1397 = vmatpush1.msra.mxu0 0.0
    %1398 = vmatprep.subr.mxu0 0.0
    %1399 = vmatpush1.msra.mxu0 0.0
    %1400 = vmatprep.subr.mxu0 0.0
    %1401 = vmatpush1.msra.mxu0 0.0
    %1402 = vmatprep.subr.mxu0 0.0
    %1403 = vmatpush1.msra.mxu0 0.0
    %1404 = vmatprep.subr.mxu0 0.0
    %1405 = vmatpush1.msra.mxu0 0.0
    %1406 = vmatprep.subr.mxu0 0.0
    %1407 = vmatpush1.msra.mxu0 0.0
    %1408 = vmatprep.subr.mxu0 0.0
    %1409 = vmatpush1.msra.mxu0 0.0
    %1410 = vmatprep.subr.mxu0 0.0
    %v1411 = vand.u32 %v1075, 4294901760
    %v1412 = vsub.f32 %v1075, %v1411
    %v1413 = vand.u32 %v1412, 4294901760
    %1414 = vmatpush1.msra.mxu0 %v1413
    %1415 = vmatprep.subr.mxu0 0.0
    %1416 = vmatpush2.msra.mxu0 0.0
    %1417 = vmatprep.subr.mxu0 0.0
    %1418 = vmatpush2.msra.mxu0 0.0
    %1419 = vmatprep.subr.mxu0 0.0
    %1420 = vmatpush2.msra.mxu0 0.0
    %1421 = vmatprep.subr.mxu0 0.0
    %1422 = vmatpush2.msra.mxu0 0.0
    %1423 = vmatprep.subr.mxu0 0.0
    %1424 = vmatpush2.msra.mxu0 0.0
    %1425 = vmatprep.subr.mxu0 0.0
    %1426 = vmatpush2.msra.mxu0 0.0
    %1427 = vmatprep.subr.mxu0 0.0
    %1428 = vmatpush2.msra.mxu0 0.0
    %1429 = vmatprep.subr.mxu0 0.0
    %1430 = vmatpush2.msra.mxu0 0.0
    %1431 = vmatprep.subr.mxu0 0.0
    %1432 = vmatpush2.msra.mxu0 0.0
    %1433 = vmatprep.subr.mxu0 0.0
    %1434 = vmatpush2.msra.mxu0 0.0
    %1435 = vmatprep.subr.mxu0 0.0
    %1436 = vmatpush2.msra.mxu0 0.0
    %1437 = vmatprep.subr.mxu0 0.0
    %1438 = vmatpush2.msra.mxu0 0.0
    %1439 = vmatprep.subr.mxu0 0.0
    %1440 = vmatpush2.msra.mxu0 0.0
    %1441 = vmatprep.subr.mxu0 0.0
    %1442 = vmatpush2.msra.mxu0 0.0
    %1443 = vmatprep.subr.mxu0 0.0
    %1444 = vmatpush2.msra.mxu0 0.0
    %1445 = vmatprep.subr.mxu0 0.0
    %1446 = vmatpush2.msra.mxu0 0.0
    %1447 = vmatprep.mubr.f32.mxu0 0.0
    %v1448 = vand.u32 %v1078, 4294901760
    %1449 = vmatmul.mubr.f32.gmra.mxu0 %v1448
    %v1450 = vpop.f32.mrf.mxu0
    %v1451 = vadd.f32 %v1377, %v1450
    %v1452 = vpop.f32.mrf.mxu0
    %1453 = vdwg.mxu0
    %1454 = vmatprep.subr.mxu0 0.0
    %1455 = vmatpush1.msra.mxu0 0.0
    %1456 = vmatprep.subr.mxu0 0.0
    %1457 = vmatpush1.msra.mxu0 0.0
    %1458 = vmatprep.subr.mxu0 0.0
    %1459 = vmatpush1.msra.mxu0 0.0
    %1460 = vmatprep.subr.mxu0 0.0
    %1461 = vmatpush1.msra.mxu0 0.0
    %1462 = vmatprep.subr.mxu0 0.0
    %1463 = vmatpush1.msra.mxu0 0.0
    %1464 = vmatprep.subr.mxu0 0.0
    %1465 = vmatpush1.msra.mxu0 0.0
    %1466 = vmatprep.subr.mxu0 0.0
    %1467 = vmatpush1.msra.mxu0 0.0
    %1468 = vmatprep.subr.mxu0 0.0
    %1469 = vmatpush1.msra.mxu0 0.0
    %1470 = vmatprep.subr.mxu0 0.0
    %1471 = vmatpush1.msra.mxu0 0.0
    %1472 = vmatprep.subr.mxu0 0.0
    %1473 = vmatpush1.msra.mxu0 0.0
    %1474 = vmatprep.subr.mxu0 0.0
    %1475 = vmatpush1.msra.mxu0 0.0
    %1476 = vmatprep.subr.mxu0 0.0
    %1477 = vmatpush1.msra.mxu0 0.0
    %1478 = vmatprep.subr.mxu0 0.0
    %1479 = vmatpush1.msra.mxu0 0.0
    %1480 = vmatprep.subr.mxu0 0.0
    %1481 = vmatpush1.msra.mxu0 0.0
    %1482 = vmatprep.subr.mxu0 0.0
    %1483 = vmatpush1.msra.mxu0 0.0
    %1484 = vmatprep.subr.mxu0 0.0
    %v1485 = vand.u32 %v1075, 4294901760
    %1486 = vmatpush1.msra.mxu0 %v1485
    %1487 = vmatprep.subr.mxu0 0.0
    %1488 = vmatpush2.msra.mxu0 0.0
    %1489 = vmatprep.subr.mxu0 0.0
    %1490 = vmatpush2.msra.mxu0 0.0
    %1491 = vmatprep.subr.mxu0 0.0
    %1492 = vmatpush2.msra.mxu0 0.0
    %1493 = vmatprep.subr.mxu0 0.0
    %1494 = vmatpush2.msra.mxu0 0.0
    %1495 = vmatprep.subr.mxu0 0.0
    %1496 = vmatpush2.msra.mxu0 0.0
    %1497 = vmatprep.subr.mxu0 0.0
    %1498 = vmatpush2.msra.mxu0 0.0
    %1499 = vmatprep.subr.mxu0 0.0
    %1500 = vmatpush2.msra.mxu0 0.0
    %1501 = vmatprep.subr.mxu0 0.0
    %1502 = vmatpush2.msra.mxu0 0.0
    %1503 = vmatprep.subr.mxu0 0.0
    %1504 = vmatpush2.msra.mxu0 0.0
    %1505 = vmatprep.subr.mxu0 0.0
    %1506 = vmatpush2.msra.mxu0 0.0
    %1507 = vmatprep.subr.mxu0 0.0
    %1508 = vmatpush2.msra.mxu0 0.0
    %1509 = vmatprep.subr.mxu0 0.0
    %1510 = vmatpush2.msra.mxu0 0.0
    %1511 = vmatprep.subr.mxu0 0.0
    %1512 = vmatpush2.msra.mxu0 0.0
    %1513 = vmatprep.subr.mxu0 0.0
    %1514 = vmatpush2.msra.mxu0 0.0
    %1515 = vmatprep.subr.mxu0 0.0
    %1516 = vmatpush2.msra.mxu0 0.0
    %1517 = vmatprep.subr.mxu0 0.0
    %1518 = vmatpush2.msra.mxu0 0.0
    %1519 = vmatprep.mubr.f32.mxu0 0.0
    %v1520 = vand.u32 %v1078, 4294901760
    %1521 = vmatmul.mubr.f32.gmra.mxu0 %v1520
    %v1522 = vpop.f32.mrf.mxu0
    %v1523 = vadd.f32 %v1451, %v1522
    %v1524 = vpop.f32.mrf.mxu0
    %1525 = vdwg.mxu0
    %1526 = vst.msk [vmem:[#allocation2] sm:$0xff] %vm610, %v1523
    %1527 = vrot.lane.b32.xlu0 %v598, 120
    %v1528 = vpop.permute.xlu0 %1527
    %1529 = vrot.lane.b32.xlu0 %v598, 88
    %v1530 = vpop.permute.xlu0 %1529
    %v1531 = vsel %vm610, %v1528, 0
    %v1533 = vsel %vm610, %v1530, 0
    %1535 = vmatprep.subr.mxu0 0.0
    %1536 = vmatpush1.xpose.msra.mxu0 0.0
    %1537 = vmatprep.subr.mxu0 0.0
    %1538 = vmatpush1.xpose.msra.mxu0 0.0
    %1539 = vmatprep.subr.mxu0 0.0
    %1540 = vmatpush1.xpose.msra.mxu0 0.0
    %1541 = vmatprep.subr.mxu0 0.0
    %1542 = vmatpush1.xpose.msra.mxu0 0.0
    %1543 = vmatprep.subr.mxu0 0.0
    %1544 = vmatpush1.xpose.msra.mxu0 0.0
    %1545 = vmatprep.subr.mxu0 0.0
    %1546 = vmatpush1.xpose.msra.mxu0 0.0
    %1547 = vmatprep.subr.mxu0 0.0
    %1548 = vmatpush1.xpose.msra.mxu0 0.0
    %1549 = vmatprep.subr.mxu0 0.0
    %1550 = vmatpush1.xpose.msra.mxu0 0.0
    %1551 = vmatprep.subr.mxu0 0.0
    %1552 = vmatpush1.xpose.msra.mxu0 0.0
    %1553 = vmatprep.subr.mxu0 0.0
    %1554 = vmatpush1.xpose.msra.mxu0 0.0
    %1555 = vmatprep.subr.mxu0 0.0
    %1556 = vmatpush1.xpose.msra.mxu0 0.0
    %1557 = vmatprep.subr.mxu0 0.0
    %1558 = vmatpush1.xpose.msra.mxu0 0.0
    %1559 = vmatprep.subr.mxu0 0.0
    %1560 = vmatpush1.xpose.msra.mxu0 0.0
    %1561 = vmatprep.subr.mxu0 0.0
    %1562 = vmatpush1.xpose.msra.mxu0 0.0
    %1563 = vmatprep.subr.mxu0 0.0
    %1564 = vmatpush1.xpose.msra.mxu0 0.0
    %1565 = vmatprep.subr.mxu0 0.0
    %v1566 = vand.u32 %v1533, 4294901760
    %1567 = vmatpush1.xpose.msra.mxu0 %v1566
    %1568 = vmatprep.subr.mxu0 0.0
    %1569 = vmatpush2.xpose.msra.mxu0 0.0
    %1570 = vmatprep.subr.mxu0 0.0
    %1571 = vmatpush2.xpose.msra.mxu0 0.0
    %1572 = vmatprep.subr.mxu0 0.0
    %1573 = vmatpush2.xpose.msra.mxu0 0.0
    %1574 = vmatprep.subr.mxu0 0.0
    %1575 = vmatpush2.xpose.msra.mxu0 0.0
    %1576 = vmatprep.subr.mxu0 0.0
    %1577 = vmatpush2.xpose.msra.mxu0 0.0
    %1578 = vmatprep.subr.mxu0 0.0
    %1579 = vmatpush2.xpose.msra.mxu0 0.0
    %1580 = vmatprep.subr.mxu0 0.0
    %1581 = vmatpush2.xpose.msra.mxu0 0.0
    %1582 = vmatprep.subr.mxu0 0.0
    %1583 = vmatpush2.xpose.msra.mxu0 0.0
    %1584 = vmatprep.subr.mxu0 0.0
    %1585 = vmatpush2.xpose.msra.mxu0 0.0
    %1586 = vmatprep.subr.mxu0 0.0
    %1587 = vmatpush2.xpose.msra.mxu0 0.0
    %1588 = vmatprep.subr.mxu0 0.0
    %1589 = vmatpush2.xpose.msra.mxu0 0.0
    %1590 = vmatprep.subr.mxu0 0.0
    %1591 = vmatpush2.xpose.msra.mxu0 0.0
    %1592 = vmatprep.subr.mxu0 0.0
    %1593 = vmatpush2.xpose.msra.mxu0 0.0
    %1594 = vmatprep.subr.mxu0 0.0
    %1595 = vmatpush2.xpose.msra.mxu0 0.0
    %1596 = vmatprep.subr.mxu0 0.0
    %1597 = vmatpush2.xpose.msra.mxu0 0.0
    %1598 = vmatprep.subr.mxu0 0.0
    %1599 = vmatpush2.xpose.msra.mxu0 0.0
    %1600 = vmatprep.mubr.f32.mxu0 0.0
    %v1601 = vand.u32 %v1531, 4294901760
    %v1602 = vsub.f32 %v1531, %v1601
    %v1603 = vand.u32 %v1602, 4294901760
    %v1604 = vsub.f32 %v1602, %v1603
    %v1605 = vand.u32 %v1604, 4294901760
    %1606 = vmatmul.mubr.f32.gmra.mxu0 %v1605
    %v1607 = vpop.f32.mrf.mxu0
    %v1608 = vadd.f32 0.0, %v1607
    %v1609 = vpop.f32.mrf.mxu0
    %1610 = vdwg.mxu0
    %1611 = vmatprep.subr.mxu0 0.0
    %1612 = vmatpush1.xpose.msra.mxu0 0.0
    %1613 = vmatprep.subr.mxu0 0.0
    %1614 = vmatpush1.xpose.msra.mxu0 0.0
    %1615 = vmatprep.subr.mxu0 0.0
    %1616 = vmatpush1.xpose.msra.mxu0 0.0
    %1617 = vmatprep.subr.mxu0 0.0
    %1618 = vmatpush1.xpose.msra.mxu0 0.0
    %1619 = vmatprep.subr.mxu0 0.0
    %1620 = vmatpush1.xpose.msra.mxu0 0.0
    %1621 = vmatprep.subr.mxu0 0.0
    %1622 = vmatpush1.xpose.msra.mxu0 0.0
    %1623 = vmatprep.subr.mxu0 0.0
    %1624 = vmatpush1.xpose.msra.mxu0 0.0
    %1625 = vmatprep.subr.mxu0 0.0
    %1626 = vmatpush1.xpose.msra.mxu0 0.0
    %1627 = vmatprep.subr.mxu0 0.0
    %1628 = vmatpush1.xpose.msra.mxu0 0.0
    %1629 = vmatprep.subr.mxu0 0.0
    %1630 = vmatpush1.xpose.msra.mxu0 0.0
    %1631 = vmatprep.subr.mxu0 0.0
    %1632 = vmatpush1.xpose.msra.mxu0 0.0
    %1633 = vmatprep.subr.mxu0 0.0
    %1634 = vmatpush1.xpose.msra.mxu0 0.0
    %1635 = vmatprep.subr.mxu0 0.0
    %1636 = vmatpush1.xpose.msra.mxu0 0.0
    %1637 = vmatprep.subr.mxu0 0.0
    %1638 = vmatpush1.xpose.msra.mxu0 0.0
    %1639 = vmatprep.subr.mxu0 0.0
    %1640 = vmatpush1.xpose.msra.mxu0 0.0
    %1641 = vmatprep.subr.mxu0 0.0
    %v1642 = vand.u32 %v1533, 4294901760
    %v1643 = vsub.f32 %v1533, %v1642
    %v1644 = vand.u32 %v1643, 4294901760
    %v1645 = vsub.f32 %v1643, %v1644
    %v1646 = vand.u32 %v1645, 4294901760
    %1647 = vmatpush1.xpose.msra.mxu0 %v1646
    %1648 = vmatprep.subr.mxu0 0.0
    %1649 = vmatpush2.xpose.msra.mxu0 0.0
    %1650 = vmatprep.subr.mxu0 0.0
    %1651 = vmatpush2.xpose.msra.mxu0 0.0
    %1652 = vmatprep.subr.mxu0 0.0
    %1653 = vmatpush2.xpose.msra.mxu0 0.0
    %1654 = vmatprep.subr.mxu0 0.0
    %1655 = vmatpush2.xpose.msra.mxu0 0.0
    %1656 = vmatprep.subr.mxu0 0.0
    %1657 = vmatpush2.xpose.msra.mxu0 0.0
    %1658 = vmatprep.subr.mxu0 0.0
    %1659 = vmatpush2.xpose.msra.mxu0 0.0
    %1660 = vmatprep.subr.mxu0 0.0
    %1661 = vmatpush2.xpose.msra.mxu0 0.0
    %1662 = vmatprep.subr.mxu0 0.0
    %1663 = vmatpush2.xpose.msra.mxu0 0.0
    %1664 = vmatprep.subr.mxu0 0.0
    %1665 = vmatpush2.xpose.msra.mxu0 0.0
    %1666 = vmatprep.subr.mxu0 0.0
    %1667 = vmatpush2.xpose.msra.mxu0 0.0
    %1668 = vmatprep.subr.mxu0 0.0
    %1669 = vmatpush2.xpose.msra.mxu0 0.0
    %1670 = vmatprep.subr.mxu0 0.0
    %1671 = vmatpush2.xpose.msra.mxu0 0.0
    %1672 = vmatprep.subr.mxu0 0.0
    %1673 = vmatpush2.xpose.msra.mxu0 0.0
    %1674 = vmatprep.subr.mxu0 0.0
    %1675 = vmatpush2.xpose.msra.mxu0 0.0
    %1676 = vmatprep.subr.mxu0 0.0
    %1677 = vmatpush2.xpose.msra.mxu0 0.0
    %1678 = vmatprep.subr.mxu0 0.0
    %1679 = vmatpush2.xpose.msra.mxu0 0.0
    %1680 = vmatprep.mubr.f32.mxu0 0.0
    %v1681 = vand.u32 %v1531, 4294901760
    %1682 = vmatmul.mubr.f32.gmra.mxu0 %v1681
    %v1683 = vpop.f32.mrf.mxu0
    %v1684 = vadd.f32 %v1608, %v1683
    %v1685 = vpop.f32.mrf.mxu0
    %1686 = vdwg.mxu0
    %1687 = vmatprep.subr.mxu0 0.0
    %1688 = vmatpush1.xpose.msra.mxu0 0.0
    %1689 = vmatprep.subr.mxu0 0.0
    %1690 = vmatpush1.xpose.msra.mxu0 0.0
    %1691 = vmatprep.subr.mxu0 0.0
    %1692 = vmatpush1.xpose.msra.mxu0 0.0
    %1693 = vmatprep.subr.mxu0 0.0
    %1694 = vmatpush1.xpose.msra.mxu0 0.0
    %1695 = vmatprep.subr.mxu0 0.0
    %1696 = vmatpush1.xpose.msra.mxu0 0.0
    %1697 = vmatprep.subr.mxu0 0.0
    %1698 = vmatpush1.xpose.msra.mxu0 0.0
    %1699 = vmatprep.subr.mxu0 0.0
    %1700 = vmatpush1.xpose.msra.mxu0 0.0
    %1701 = vmatprep.subr.mxu0 0.0
    %1702 = vmatpush1.xpose.msra.mxu0 0.0
    %1703 = vmatprep.subr.mxu0 0.0
    %1704 = vmatpush1.xpose.msra.mxu0 0.0
    %1705 = vmatprep.subr.mxu0 0.0
    %1706 = vmatpush1.xpose.msra.mxu0 0.0
    %1707 = vmatprep.subr.mxu0 0.0
    %1708 = vmatpush1.xpose.msra.mxu0 0.0
    %1709 = vmatprep.subr.mxu0 0.0
    %1710 = vmatpush1.xpose.msra.mxu0 0.0
    %1711 = vmatprep.subr.mxu0 0.0
    %1712 = vmatpush1.xpose.msra.mxu0 0.0
    %1713 = vmatprep.subr.mxu0 0.0
    %1714 = vmatpush1.xpose.msra.mxu0 0.0
    %1715 = vmatprep.subr.mxu0 0.0
    %1716 = vmatpush1.xpose.msra.mxu0 0.0
    %1717 = vmatprep.subr.mxu0 0.0
    %v1718 = vand.u32 %v1533, 4294901760
    %v1719 = vsub.f32 %v1533, %v1718
    %1720 = vmatpush1.xpose.msra.mxu0 %v1719
    %1721 = vmatprep.subr.mxu0 0.0
    %1722 = vmatpush2.xpose.msra.mxu0 0.0
    %1723 = vmatprep.subr.mxu0 0.0
    %1724 = vmatpush2.xpose.msra.mxu0 0.0
    %1725 = vmatprep.subr.mxu0 0.0
    %1726 = vmatpush2.xpose.msra.mxu0 0.0
    %1727 = vmatprep.subr.mxu0 0.0
    %1728 = vmatpush2.xpose.msra.mxu0 0.0
    %1729 = vmatprep.subr.mxu0 0.0
    %1730 = vmatpush2.xpose.msra.mxu0 0.0
    %1731 = vmatprep.subr.mxu0 0.0
    %1732 = vmatpush2.xpose.msra.mxu0 0.0
    %1733 = vmatprep.subr.mxu0 0.0
    %1734 = vmatpush2.xpose.msra.mxu0 0.0
    %1735 = vmatprep.subr.mxu0 0.0
    %1736 = vmatpush2.xpose.msra.mxu0 0.0
    %1737 = vmatprep.subr.mxu0 0.0
    %1738 = vmatpush2.xpose.msra.mxu0 0.0
    %1739 = vmatprep.subr.mxu0 0.0
    %1740 = vmatpush2.xpose.msra.mxu0 0.0
    %1741 = vmatprep.subr.mxu0 0.0
    %1742 = vmatpush2.xpose.msra.mxu0 0.0
    %1743 = vmatprep.subr.mxu0 0.0
    %1744 = vmatpush2.xpose.msra.mxu0 0.0
    %1745 = vmatprep.subr.mxu0 0.0
    %1746 = vmatpush2.xpose.msra.mxu0 0.0
    %1747 = vmatprep.subr.mxu0 0.0
    %1748 = vmatpush2.xpose.msra.mxu0 0.0
    %1749 = vmatprep.subr.mxu0 0.0
    %1750 = vmatpush2.xpose.msra.mxu0 0.0
    %1751 = vmatprep.subr.mxu0 0.0
    %1752 = vmatpush2.xpose.msra.mxu0 0.0
    %1753 = vmatprep.mubr.f32.mxu0 0.0
    %v1754 = vand.u32 %v1531, 4294901760
    %v1755 = vsub.f32 %v1531, %v1754
    %1756 = vmatmul.mubr.f32.gmra.mxu0 %v1755
    %v1757 = vpop.f32.mrf.mxu0
    %v1758 = vadd.f32 %v1684, %v1757
    %v1759 = vpop.f32.mrf.mxu0
    %1760 = vdwg.mxu0
    %1761 = vmatprep.subr.mxu0 0.0
    %1762 = vmatpush1.xpose.msra.mxu0 0.0
    %1763 = vmatprep.subr.mxu0 0.0
    %1764 = vmatpush1.xpose.msra.mxu0 0.0
    %1765 = vmatprep.subr.mxu0 0.0
    %1766 = vmatpush1.xpose.msra.mxu0 0.0
    %1767 = vmatprep.subr.mxu0 0.0
    %1768 = vmatpush1.xpose.msra.mxu0 0.0
    %1769 = vmatprep.subr.mxu0 0.0
    %1770 = vmatpush1.xpose.msra.mxu0 0.0
    %1771 = vmatprep.subr.mxu0 0.0
    %1772 = vmatpush1.xpose.msra.mxu0 0.0
    %1773 = vmatprep.subr.mxu0 0.0
    %1774 = vmatpush1.xpose.msra.mxu0 0.0
    %1775 = vmatprep.subr.mxu0 0.0
    %1776 = vmatpush1.xpose.msra.mxu0 0.0
    %1777 = vmatprep.subr.mxu0 0.0
    %1778 = vmatpush1.xpose.msra.mxu0 0.0
    %1779 = vmatprep.subr.mxu0 0.0
    %1780 = vmatpush1.xpose.msra.mxu0 0.0
    %1781 = vmatprep.subr.mxu0 0.0
    %1782 = vmatpush1.xpose.msra.mxu0 0.0
    %1783 = vmatprep.subr.mxu0 0.0
    %1784 = vmatpush1.xpose.msra.mxu0 0.0
    %1785 = vmatprep.subr.mxu0 0.0
    %1786 = vmatpush1.xpose.msra.mxu0 0.0
    %1787 = vmatprep.subr.mxu0 0.0
    %1788 = vmatpush1.xpose.msra.mxu0 0.0
    %1789 = vmatprep.subr.mxu0 0.0
    %1790 = vmatpush1.xpose.msra.mxu0 0.0
    %1791 = vmatprep.subr.mxu0 0.0
    %v1792 = vand.u32 %v1533, 4294901760
    %1793 = vmatpush1.xpose.msra.mxu0 %v1792
    %1794 = vmatprep.subr.mxu0 0.0
    %1795 = vmatpush2.xpose.msra.mxu0 0.0
    %1796 = vmatprep.subr.mxu0 0.0
    %1797 = vmatpush2.xpose.msra.mxu0 0.0
    %1798 = vmatprep.subr.mxu0 0.0
    %1799 = vmatpush2.xpose.msra.mxu0 0.0
    %1800 = vmatprep.subr.mxu0 0.0
    %1801 = vmatpush2.xpose.msra.mxu0 0.0
    %1802 = vmatprep.subr.mxu0 0.0
    %1803 = vmatpush2.xpose.msra.mxu0 0.0
    %1804 = vmatprep.subr.mxu0 0.0
    %1805 = vmatpush2.xpose.msra.mxu0 0.0
    %1806 = vmatprep.subr.mxu0 0.0
    %1807 = vmatpush2.xpose.msra.mxu0 0.0
    %1808 = vmatprep.subr.mxu0 0.0
    %1809 = vmatpush2.xpose.msra.mxu0 0.0
    %1810 = vmatprep.subr.mxu0 0.0
    %1811 = vmatpush2.xpose.msra.mxu0 0.0
    %1812 = vmatprep.subr.mxu0 0.0
    %1813 = vmatpush2.xpose.msra.mxu0 0.0
    %1814 = vmatprep.subr.mxu0 0.0
    %1815 = vmatpush2.xpose.msra.mxu0 0.0
    %1816 = vmatprep.subr.mxu0 0.0
    %1817 = vmatpush2.xpose.msra.mxu0 0.0
    %1818 = vmatprep.subr.mxu0 0.0
    %1819 = vmatpush2.xpose.msra.mxu0 0.0
    %1820 = vmatprep.subr.mxu0 0.0
    %1821 = vmatpush2.xpose.msra.mxu0 0.0
    %1822 = vmatprep.subr.mxu0 0.0
    %1823 = vmatpush2.xpose.msra.mxu0 0.0
    %1824 = vmatprep.subr.mxu0 0.0
    %1825 = vmatpush2.xpose.msra.mxu0 0.0
    %1826 = vmatprep.mubr.f32.mxu0 0.0
    %v1827 = vand.u32 %v1531, 4294901760
    %v1828 = vsub.f32 %v1531, %v1827
    %v1829 = vand.u32 %v1828, 4294901760
    %1830 = vmatmul.mubr.f32.gmra.mxu0 %v1829
    %v1831 = vpop.f32.mrf.mxu0
    %v1832 = vadd.f32 %v1758, %v1831
    %v1833 = vpop.f32.mrf.mxu0
    %1834 = vdwg.mxu0
    %1835 = vmatprep.subr.mxu0 0.0
    %1836 = vmatpush1.xpose.msra.mxu0 0.0
    %1837 = vmatprep.subr.mxu0 0.0
    %1838 = vmatpush1.xpose.msra.mxu0 0.0
    %1839 = vmatprep.subr.mxu0 0.0
    %1840 = vmatpush1.xpose.msra.mxu0 0.0
    %1841 = vmatprep.subr.mxu0 0.0
    %1842 = vmatpush1.xpose.msra.mxu0 0.0
    %1843 = vmatprep.subr.mxu0 0.0
    %1844 = vmatpush1.xpose.msra.mxu0 0.0
    %1845 = vmatprep.subr.mxu0 0.0
    %1846 = vmatpush1.xpose.msra.mxu0 0.0
    %1847 = vmatprep.subr.mxu0 0.0
    %1848 = vmatpush1.xpose.msra.mxu0 0.0
    %1849 = vmatprep.subr.mxu0 0.0
    %1850 = vmatpush1.xpose.msra.mxu0 0.0
    %1851 = vmatprep.subr.mxu0 0.0
    %1852 = vmatpush1.xpose.msra.mxu0 0.0
    %1853 = vmatprep.subr.mxu0 0.0
    %1854 = vmatpush1.xpose.msra.mxu0 0.0
    %1855 = vmatprep.subr.mxu0 0.0
    %1856 = vmatpush1.xpose.msra.mxu0 0.0
    %1857 = vmatprep.subr.mxu0 0.0
    %1858 = vmatpush1.xpose.msra.mxu0 0.0
    %1859 = vmatprep.subr.mxu0 0.0
    %1860 = vmatpush1.xpose.msra.mxu0 0.0
    %1861 = vmatprep.subr.mxu0 0.0
    %1862 = vmatpush1.xpose.msra.mxu0 0.0
    %1863 = vmatprep.subr.mxu0 0.0
    %1864 = vmatpush1.xpose.msra.mxu0 0.0
    %1865 = vmatprep.subr.mxu0 0.0
    %v1866 = vand.u32 %v1533, 4294901760
    %v1867 = vsub.f32 %v1533, %v1866
    %v1868 = vand.u32 %v1867, 4294901760
    %1869 = vmatpush1.xpose.msra.mxu0 %v1868
    %1870 = vmatprep.subr.mxu0 0.0
    %1871 = vmatpush2.xpose.msra.mxu0 0.0
    %1872 = vmatprep.subr.mxu0 0.0
    %1873 = vmatpush2.xpose.msra.mxu0 0.0
    %1874 = vmatprep.subr.mxu0 0.0
    %1875 = vmatpush2.xpose.msra.mxu0 0.0
    %1876 = vmatprep.subr.mxu0 0.0
    %1877 = vmatpush2.xpose.msra.mxu0 0.0
    %1878 = vmatprep.subr.mxu0 0.0
    %1879 = vmatpush2.xpose.msra.mxu0 0.0
    %1880 = vmatprep.subr.mxu0 0.0
    %1881 = vmatpush2.xpose.msra.mxu0 0.0
    %1882 = vmatprep.subr.mxu0 0.0
    %1883 = vmatpush2.xpose.msra.mxu0 0.0
    %1884 = vmatprep.subr.mxu0 0.0
    %1885 = vmatpush2.xpose.msra.mxu0 0.0
    %1886 = vmatprep.subr.mxu0 0.0
    %1887 = vmatpush2.xpose.msra.mxu0 0.0
    %1888 = vmatprep.subr.mxu0 0.0
    %1889 = vmatpush2.xpose.msra.mxu0 0.0
    %1890 = vmatprep.subr.mxu0 0.0
    %1891 = vmatpush2.xpose.msra.mxu0 0.0
    %1892 = vmatprep.subr.mxu0 0.0
    %1893 = vmatpush2.xpose.msra.mxu0 0.0
    %1894 = vmatprep.subr.mxu0 0.0
    %1895 = vmatpush2.xpose.msra.mxu0 0.0
    %1896 = vmatprep.subr.mxu0 0.0
    %1897 = vmatpush2.xpose.msra.mxu0 0.0
    %1898 = vmatprep.subr.mxu0 0.0
    %1899 = vmatpush2.xpose.msra.mxu0 0.0
    %1900 = vmatprep.subr.mxu0 0.0
    %1901 = vmatpush2.xpose.msra.mxu0 0.0
    %1902 = vmatprep.mubr.f32.mxu0 0.0
    %v1903 = vand.u32 %v1531, 4294901760
    %1904 = vmatmul.mubr.f32.gmra.mxu0 %v1903
    %v1905 = vpop.f32.mrf.mxu0
    %v1906 = vadd.f32 %v1832, %v1905
    %v1907 = vpop.f32.mrf.mxu0
    %1908 = vdwg.mxu0
    %1909 = vmatprep.subr.mxu0 0.0
    %1910 = vmatpush1.xpose.msra.mxu0 0.0
    %1911 = vmatprep.subr.mxu0 0.0
    %1912 = vmatpush1.xpose.msra.mxu0 0.0
    %1913 = vmatprep.subr.mxu0 0.0
    %1914 = vmatpush1.xpose.msra.mxu0 0.0
    %1915 = vmatprep.subr.mxu0 0.0
    %1916 = vmatpush1.xpose.msra.mxu0 0.0
    %1917 = vmatprep.subr.mxu0 0.0
    %1918 = vmatpush1.xpose.msra.mxu0 0.0
    %1919 = vmatprep.subr.mxu0 0.0
    %1920 = vmatpush1.xpose.msra.mxu0 0.0
    %1921 = vmatprep.subr.mxu0 0.0
    %1922 = vmatpush1.xpose.msra.mxu0 0.0
    %1923 = vmatprep.subr.mxu0 0.0
    %1924 = vmatpush1.xpose.msra.mxu0 0.0
    %1925 = vmatprep.subr.mxu0 0.0
    %1926 = vmatpush1.xpose.msra.mxu0 0.0
    %1927 = vmatprep.subr.mxu0 0.0
    %1928 = vmatpush1.xpose.msra.mxu0 0.0
    %1929 = vmatprep.subr.mxu0 0.0
    %1930 = vmatpush1.xpose.msra.mxu0 0.0
    %1931 = vmatprep.subr.mxu0 0.0
    %1932 = vmatpush1.xpose.msra.mxu0 0.0
    %1933 = vmatprep.subr.mxu0 0.0
    %1934 = vmatpush1.xpose.msra.mxu0 0.0
    %1935 = vmatprep.subr.mxu0 0.0
    %1936 = vmatpush1.xpose.msra.mxu0 0.0
    %1937 = vmatprep.subr.mxu0 0.0
    %1938 = vmatpush1.xpose.msra.mxu0 0.0
    %1939 = vmatprep.subr.mxu0 0.0
    %v1940 = vand.u32 %v1533, 4294901760
    %1941 = vmatpush1.xpose.msra.mxu0 %v1940
    %1942 = vmatprep.subr.mxu0 0.0
    %1943 = vmatpush2.xpose.msra.mxu0 0.0
    %1944 = vmatprep.subr.mxu0 0.0
    %1945 = vmatpush2.xpose.msra.mxu0 0.0
    %1946 = vmatprep.subr.mxu0 0.0
    %1947 = vmatpush2.xpose.msra.mxu0 0.0
    %1948 = vmatprep.subr.mxu0 0.0
    %1949 = vmatpush2.xpose.msra.mxu0 0.0
    %1950 = vmatprep.subr.mxu0 0.0
    %1951 = vmatpush2.xpose.msra.mxu0 0.0
    %1952 = vmatprep.subr.mxu0 0.0
    %1953 = vmatpush2.xpose.msra.mxu0 0.0
    %1954 = vmatprep.subr.mxu0 0.0
    %1955 = vmatpush2.xpose.msra.mxu0 0.0
    %1956 = vmatprep.subr.mxu0 0.0
    %1957 = vmatpush2.xpose.msra.mxu0 0.0
    %1958 = vmatprep.subr.mxu0 0.0
    %1959 = vmatpush2.xpose.msra.mxu0 0.0
    %1960 = vmatprep.subr.mxu0 0.0
    %1961 = vmatpush2.xpose.msra.mxu0 0.0
    %1962 = vmatprep.subr.mxu0 0.0
    %1963 = vmatpush2.xpose.msra.mxu0 0.0
    %1964 = vmatprep.subr.mxu0 0.0
    %1965 = vmatpush2.xpose.msra.mxu0 0.0
    %1966 = vmatprep.subr.mxu0 0.0
    %1967 = vmatpush2.xpose.msra.mxu0 0.0
    %1968 = vmatprep.subr.mxu0 0.0
    %1969 = vmatpush2.xpose.msra.mxu0 0.0
    %1970 = vmatprep.subr.mxu0 0.0
    %1971 = vmatpush2.xpose.msra.mxu0 0.0
    %1972 = vmatprep.subr.mxu0 0.0
    %1973 = vmatpush2.xpose.msra.mxu0 0.0
    %1974 = vmatprep.mubr.f32.mxu0 0.0
    %v1975 = vand.u32 %v1531, 4294901760
    %1976 = vmatmul.mubr.f32.gmra.mxu0 %v1975
    %v1977 = vpop.f32.mrf.mxu0
    %v1978 = vadd.f32 %v1906, %v1977
    %v1979 = vpop.f32.mrf.mxu0
    %1980 = vdwg.mxu0
    %v1981 = vmul.f32 %v1978, 0.35355338
    %v1982 = vsel %vm610, %v1981, -inf
    %1983 = vmax.xlane.f32.xlu0 %v1982
    %v1984 = vpop.xlane.xlu0 %1983
    %v1985 = vsub.f32 %v1981, %v1984
    %v1986 = vmul.f32 %v1985, 1.442695
    %v1987 = vpow.pop %v1986
    %v1988 = vsel %vm610, %v1987, 0.0
    %1989 = vadd.xlane.f32.xlu0 %v1988
    %v1990 = vpop.xlane.xlu0 %1989
    %v1991 = vrcp.pop %v1990
    %v1992 = vmul.f32 1.0, %v1991
    %v1993 = vmul.f32 %v1987, %v1992
    %1994 = vrot.lane.b32.xlu0 %v598, 56
    %v1995 = vpop.permute.xlu0 %1994
    %v1998 = vsel %vm610, %v1993, 0
    %2000 = vmatprep.subr.mxu0 0.0
    %2001 = vmatpush1.msra.mxu0 0.0
    %2002 = vmatprep.subr.mxu0 0.0
    %2003 = vmatpush1.msra.mxu0 0.0
    %2004 = vmatprep.subr.mxu0 0.0
    %2005 = vmatpush1.msra.mxu0 0.0
    %2006 = vmatprep.subr.mxu0 0.0
    %2007 = vmatpush1.msra.mxu0 0.0
    %2008 = vmatprep.subr.mxu0 0.0
    %2009 = vmatpush1.msra.mxu0 0.0
    %2010 = vmatprep.subr.mxu0 0.0
    %2011 = vmatpush1.msra.mxu0 0.0
    %2012 = vmatprep.subr.mxu0 0.0
    %2013 = vmatpush1.msra.mxu0 0.0
    %2014 = vmatprep.subr.mxu0 0.0
    %2015 = vmatpush1.msra.mxu0 0.0
    %2016 = vmatprep.subr.mxu0 0.0
    %2017 = vmatpush1.msra.mxu0 0.0
    %2018 = vmatprep.subr.mxu0 0.0
    %2019 = vmatpush1.msra.mxu0 0.0
    %2020 = vmatprep.subr.mxu0 0.0
    %2021 = vmatpush1.msra.mxu0 0.0
    %2022 = vmatprep.subr.mxu0 0.0
    %2023 = vmatpush1.msra.mxu0 0.0
    %2024 = vmatprep.subr.mxu0 0.0
    %2025 = vmatpush1.msra.mxu0 0.0
    %2026 = vmatprep.subr.mxu0 0.0
    %2027 = vmatpush1.msra.mxu0 0.0
    %2028 = vmatprep.subr.mxu0 0.0
    %2029 = vmatpush1.msra.mxu0 0.0
    %2030 = vmatprep.subr.mxu0 0.0
    %v2031 = vand.u32 %v1995, 4294901760
    %2032 = vmatpush1.msra.mxu0 %v2031
    %2033 = vmatprep.subr.mxu0 0.0
    %2034 = vmatpush2.msra.mxu0 0.0
    %2035 = vmatprep.subr.mxu0 0.0
    %2036 = vmatpush2.msra.mxu0 0.0
    %2037 = vmatprep.subr.mxu0 0.0
    %2038 = vmatpush2.msra.mxu0 0.0
    %2039 = vmatprep.subr.mxu0 0.0
    %2040 = vmatpush2.msra.mxu0 0.0
    %2041 = vmatprep.subr.mxu0 0.0
    %2042 = vmatpush2.msra.mxu0 0.0
    %2043 = vmatprep.subr.mxu0 0.0
    %2044 = vmatpush2.msra.mxu0 0.0
    %2045 = vmatprep.subr.mxu0 0.0
    %2046 = vmatpush2.msra.mxu0 0.0
    %2047 = vmatprep.subr.mxu0 0.0
    %2048 = vmatpush2.msra.mxu0 0.0
    %2049 = vmatprep.subr.mxu0 0.0
    %2050 = vmatpush2.msra.mxu0 0.0
    %2051 = vmatprep.subr.mxu0 0.0
    %2052 = vmatpush2.msra.mxu0 0.0
    %2053 = vmatprep.subr.mxu0 0.0
    %2054 = vmatpush2.msra.mxu0 0.0
    %2055 = vmatprep.subr.mxu0 0.0
    %2056 = vmatpush2.msra.mxu0 0.0
    %2057 = vmatprep.subr.mxu0 0.0
    %2058 = vmatpush2.msra.mxu0 0.0
    %2059 = vmatprep.subr.mxu0 0.0
    %2060 = vmatpush2.msra.mxu0 0.0
    %2061 = vmatprep.subr.mxu0 0.0
    %2062 = vmatpush2.msra.mxu0 0.0
    %2063 = vmatprep.subr.mxu0 0.0
    %2064 = vmatpush2.msra.mxu0 0.0
    %2065 = vmatprep.mubr.f32.mxu0 0.0
    %v2066 = vand.u32 %v1998, 4294901760
    %v2067 = vsub.f32 %v1998, %v2066
    %v2068 = vand.u32 %v2067, 4294901760
    %v2069 = vsub.f32 %v2067, %v2068
    %v2070 = vand.u32 %v2069, 4294901760
    %2071 = vmatmul.mubr.f32.gmra.mxu0 %v2070
    %v2072 = vpop.f32.mrf.mxu0
    %v2073 = vadd.f32 0.0, %v2072
    %v2074 = vpop.f32.mrf.mxu0
    %2075 = vdwg.mxu0
    %2076 = vmatprep.subr.mxu0 0.0
    %2077 = vmatpush1.msra.mxu0 0.0
    %2078 = vmatprep.subr.mxu0 0.0
    %2079 = vmatpush1.msra.mxu0 0.0
    %2080 = vmatprep.subr.mxu0 0.0
    %2081 = vmatpush1.msra.mxu0 0.0
    %2082 = vmatprep.subr.mxu0 0.0
    %2083 = vmatpush1.msra.mxu0 0.0
    %2084 = vmatprep.subr.mxu0 0.0
    %2085 = vmatpush1.msra.mxu0 0.0
    %2086 = vmatprep.subr.mxu0 0.0
    %2087 = vmatpush1.msra.mxu0 0.0
    %2088 = vmatprep.subr.mxu0 0.0
    %2089 = vmatpush1.msra.mxu0 0.0
    %2090 = vmatprep.subr.mxu0 0.0
    %2091 = vmatpush1.msra.mxu0 0.0
    %2092 = vmatprep.subr.mxu0 0.0
    %2093 = vmatpush1.msra.mxu0 0.0
    %2094 = vmatprep.subr.mxu0 0.0
    %2095 = vmatpush1.msra.mxu0 0.0
    %2096 = vmatprep.subr.mxu0 0.0
    %2097 = vmatpush1.msra.mxu0 0.0
    %2098 = vmatprep.subr.mxu0 0.0
    %2099 = vmatpush1.msra.mxu0 0.0
    %2100 = vmatprep.subr.mxu0 0.0
    %2101 = vmatpush1.msra.mxu0 0.0
    %2102 = vmatprep.subr.mxu0 0.0
    %2103 = vmatpush1.msra.mxu0 0.0
    %2104 = vmatprep.subr.mxu0 0.0
    %2105 = vmatpush1.msra.mxu0 0.0
    %2106 = vmatprep.subr.mxu0 0.0
    %v2107 = vand.u32 %v1995, 4294901760
    %v2108 = vsub.f32 %v1995, %v2107
    %v2109 = vand.u32 %v2108, 4294901760
    %v2110 = vsub.f32 %v2108, %v2109
    %v2111 = vand.u32 %v2110, 4294901760
    %2112 = vmatpush1.msra.mxu0 %v2111
    %2113 = vmatprep.subr.mxu0 0.0
    %2114 = vmatpush2.msra.mxu0 0.0
    %2115 = vmatprep.subr.mxu0 0.0
    %2116 = vmatpush2.msra.mxu0 0.0
    %2117 = vmatprep.subr.mxu0 0.0
    %2118 = vmatpush2.msra.mxu0 0.0
    %2119 = vmatprep.subr.mxu0 0.0
    %2120 = vmatpush2.msra.mxu0 0.0
    %2121 = vmatprep.subr.mxu0 0.0
    %2122 = vmatpush2.msra.mxu0 0.0
    %2123 = vmatprep.subr.mxu0 0.0
    %2124 = vmatpush2.msra.mxu0 0.0
    %2125 = vmatprep.subr.mxu0 0.0
    %2126 = vmatpush2.msra.mxu0 0.0
    %2127 = vmatprep.subr.mxu0 0.0
    %2128 = vmatpush2.msra.mxu0 0.0
    %2129 = vmatprep.subr.mxu0 0.0
    %2130 = vmatpush2.msra.mxu0 0.0
    %2131 = vmatprep.subr.mxu0 0.0
    %2132 = vmatpush2.msra.mxu0 0.0
    %2133 = vmatprep.subr.mxu0 0.0
    %2134 = vmatpush2.msra.mxu0 0.0
    %2135 = vmatprep.subr.mxu0 0.0
    %2136 = vmatpush2.msra.mxu0 0.0
    %2137 = vmatprep.subr.mxu0 0.0
    %2138 = vmatpush2.msra.mxu0 0.0
    %2139 = vmatprep.subr.mxu0 0.0
    %2140 = vmatpush2.msra.mxu0 0.0
    %2141 = vmatprep.subr.mxu0 0.0
    %2142 = vmatpush2.msra.mxu0 0.0
    %2143 = vmatprep.subr.mxu0 0.0
    %2144 = vmatpush2.msra.mxu0 0.0
    %2145 = vmatprep.mubr.f32.mxu0 0.0
    %v2146 = vand.u32 %v1998, 4294901760
    %2147 = vmatmul.mubr.f32.gmra.mxu0 %v2146
    %v2148 = vpop.f32.mrf.mxu0
    %v2149 = vadd.f32 %v2073, %v2148
    %v2150 = vpop.f32.mrf.mxu0
    %2151 = vdwg.mxu0
    %2152 = vmatprep.subr.mxu0 0.0
    %2153 = vmatpush1.msra.mxu0 0.0
    %2154 = vmatprep.subr.mxu0 0.0
    %2155 = vmatpush1.msra.mxu0 0.0
    %2156 = vmatprep.subr.mxu0 0.0
    %2157 = vmatpush1.msra.mxu0 0.0
    %2158 = vmatprep.subr.mxu0 0.0
    %2159 = vmatpush1.msra.mxu0 0.0
    %2160 = vmatprep.subr.mxu0 0.0
    %2161 = vmatpush1.msra.mxu0 0.0
    %2162 = vmatprep.subr.mxu0 0.0
    %2163 = vmatpush1.msra.mxu0 0.0
    %2164 = vmatprep.subr.mxu0 0.0
    %2165 = vmatpush1.msra.mxu0 0.0
    %2166 = vmatprep.subr.mxu0 0.0
    %2167 = vmatpush1.msra.mxu0 0.0
    %2168 = vmatprep.subr.mxu0 0.0
    %2169 = vmatpush1.msra.mxu0 0.0
    %2170 = vmatprep.subr.mxu0 0.0
    %2171 = vmatpush1.msra.mxu0 0.0
    %2172 = vmatprep.subr.mxu0 0.0
    %2173 = vmatpush1.msra.mxu0 0.0
    %2174 = vmatprep.subr.mxu0 0.0
    %2175 = vmatpush1.msra.mxu0 0.0
    %2176 = vmatprep.subr.mxu0 0.0
    %2177 = vmatpush1.msra.mxu0 0.0
    %2178 = vmatprep.subr.mxu0 0.0
    %2179 = vmatpush1.msra.mxu0 0.0
    %2180 = vmatprep.subr.mxu0 0.0
    %2181 = vmatpush1.msra.mxu0 0.0
    %2182 = vmatprep.subr.mxu0 0.0
    %v2183 = vand.u32 %v1995, 4294901760
    %v2184 = vsub.f32 %v1995, %v2183
    %2185 = vmatpush1.msra.mxu0 %v2184
    %2186 = vmatprep.subr.mxu0 0.0
    %2187 = vmatpush2.msra.mxu0 0.0
    %2188 = vmatprep.subr.mxu0 0.0
    %2189 = vmatpush2.msra.mxu0 0.0
    %2190 = vmatprep.subr.mxu0 0.0
    %2191 = vmatpush2.msra.mxu0 0.0
    %2192 = vmatprep.subr.mxu0 0.0
    %2193 = vmatpush2.msra.mxu0 0.0
    %2194 = vmatprep.subr.mxu0 0.0
    %2195 = vmatpush2.msra.mxu0 0.0
    %2196 = vmatprep.subr.mxu0 0.0
    %2197 = vmatpush2.msra.mxu0 0.0
    %2198 = vmatprep.subr.mxu0 0.0
    %2199 = vmatpush2.msra.mxu0 0.0
    %2200 = vmatprep.subr.mxu0 0.0
    %2201 = vmatpush2.msra.mxu0 0.0
    %2202 = vmatprep.subr.mxu0 0.0
    %2203 = vmatpush2.msra.mxu0 0.0
    %2204 = vmatprep.subr.mxu0 0.0
    %2205 = vmatpush2.msra.mxu0 0.0
    %2206 = vmatprep.subr.mxu0 0.0
    %2207 = vmatpush2.msra.mxu0 0.0
    %2208 = vmatprep.subr.mxu0 0.0
    %2209 = vmatpush2.msra.mxu0 0.0
    %2210 = vmatprep.subr.mxu0 0.0
    %2211 = vmatpush2.msra.mxu0 0.0
    %2212 = vmatprep.subr.mxu0 0.0
    %2213 = vmatpush2.msra.mxu0 0.0
    %2214 = vmatprep.subr.mxu0 0.0
    %2215 = vmatpush2.msra.mxu0 0.0
    %2216 = vmatprep.subr.mxu0 0.0
    %2217 = vmatpush2.msra.mxu0 0.0
    %2218 = vmatprep.mubr.f32.mxu0 0.0
    %v2219 = vand.u32 %v1998, 4294901760
    %v2220 = vsub.f32 %v1998, %v2219
    %2221 = vmatmul.mubr.f32.gmra.mxu0 %v2220
    %v2222 = vpop.f32.mrf.mxu0
    %v2223 = vadd.f32 %v2149, %v2222
    %v2224 = vpop.f32.mrf.mxu0
    %2225 = vdwg.mxu0
    %2226 = vmatprep.subr.mxu0 0.0
    %2227 = vmatpush1.msra.mxu0 0.0
    %2228 = vmatprep.subr.mxu0 0.0
    %2229 = vmatpush1.msra.mxu0 0.0
    %2230 = vmatprep.subr.mxu0 0.0
    %2231 = vmatpush1.msra.mxu0 0.0
    %2232 = vmatprep.subr.mxu0 0.0
    %2233 = vmatpush1.msra.mxu0 0.0
    %2234 = vmatprep.subr.mxu0 0.0
    %2235 = vmatpush1.msra.mxu0 0.0
    %2236 = vmatprep.subr.mxu0 0.0
    %2237 = vmatpush1.msra.mxu0 0.0
    %2238 = vmatprep.subr.mxu0 0.0
    %2239 = vmatpush1.msra.mxu0 0.0
    %2240 = vmatprep.subr.mxu0 0.0
    %2241 = vmatpush1.msra.mxu0 0.0
    %2242 = vmatprep.subr.mxu0 0.0
    %2243 = vmatpush1.msra.mxu0 0.0
    %2244 = vmatprep.subr.mxu0 0.0
    %2245 = vmatpush1.msra.mxu0 0.0
    %2246 = vmatprep.subr.mxu0 0.0
    %2247 = vmatpush1.msra.mxu0 0.0
    %2248 = vmatprep.subr.mxu0 0.0
    %2249 = vmatpush1.msra.mxu0 0.0
    %2250 = vmatprep.subr.mxu0 0.0
    %2251 = vmatpush1.msra.mxu0 0.0
    %2252 = vmatprep.subr.mxu0 0.0
    %2253 = vmatpush1.msra.mxu0 0.0
    %2254 = vmatprep.subr.mxu0 0.0
    %2255 = vmatpush1.msra.mxu0 0.0
    %2256 = vmatprep.subr.mxu0 0.0
    %v2257 = vand.u32 %v1995, 4294901760
    %2258 = vmatpush1.msra.mxu0 %v2257
    %2259 = vmatprep.subr.mxu0 0.0
    %2260 = vmatpush2.msra.mxu0 0.0
    %2261 = vmatprep.subr.mxu0 0.0
    %2262 = vmatpush2.msra.mxu0 0.0
    %2263 = vmatprep.subr.mxu0 0.0
    %2264 = vmatpush2.msra.mxu0 0.0
    %2265 = vmatprep.subr.mxu0 0.0
    %2266 = vmatpush2.msra.mxu0 0.0
    %2267 = vmatprep.subr.mxu0 0.0
    %2268 = vmatpush2.msra.mxu0 0.0
    %2269 = vmatprep.subr.mxu0 0.0
    %2270 = vmatpush2.msra.mxu0 0.0
    %2271 = vmatprep.subr.mxu0 0.0
    %2272 = vmatpush2.msra.mxu0 0.0
    %2273 = vmatprep.subr.mxu0 0.0
    %2274 = vmatpush2.msra.mxu0 0.0
    %2275 = vmatprep.subr.mxu0 0.0
    %2276 = vmatpush2.msra.mxu0 0.0
    %2277 = vmatprep.subr.mxu0 0.0
    %2278 = vmatpush2.msra.mxu0 0.0
    %2279 = vmatprep.subr.mxu0 0.0
    %2280 = vmatpush2.msra.mxu0 0.0
    %2281 = vmatprep.subr.mxu0 0.0
    %2282 = vmatpush2.msra.mxu0 0.0
    %2283 = vmatprep.subr.mxu0 0.0
    %2284 = vmatpush2.msra.mxu0 0.0
    %2285 = vmatprep.subr.mxu0 0.0
    %2286 = vmatpush2.msra.mxu0 0.0
    %2287 = vmatprep.subr.mxu0 0.0
    %2288 = vmatpush2.msra.mxu0 0.0
    %2289 = vmatprep.subr.mxu0 0.0
    %2290 = vmatpush2.msra.mxu0 0.0
    %2291 = vmatprep.mubr.f32.mxu0 0.0
    %v2292 = vand.u32 %v1998, 4294901760
    %v2293 = vsub.f32 %v1998, %v2292
    %v2294 = vand.u32 %v2293, 4294901760
    %2295 = vmatmul.mubr.f32.gmra.mxu0 %v2294
    %v2296 = vpop.f32.mrf.mxu0
    %v2297 = vadd.f32 %v2223, %v2296
    %v2298 = vpop.f32.mrf.mxu0
    %2299 = vdwg.mxu0
    %2300 = vmatprep.subr.mxu0 0.0
    %2301 = vmatpush1.msra.mxu0 0.0
    %2302 = vmatprep.subr.mxu0 0.0
    %2303 = vmatpush1.msra.mxu0 0.0
    %2304 = vmatprep.subr.mxu0 0.0
    %2305 = vmatpush1.msra.mxu0 0.0
    %2306 = vmatprep.subr.mxu0 0.0
    %2307 = vmatpush1.msra.mxu0 0.0
    %2308 = vmatprep.subr.mxu0 0.0
    %2309 = vmatpush1.msra.mxu0 0.0
    %2310 = vmatprep.subr.mxu0 0.0
    %2311 = vmatpush1.msra.mxu0 0.0
    %2312 = vmatprep.subr.mxu0 0.0
    %2313 = vmatpush1.msra.mxu0 0.0
    %2314 = vmatprep.subr.mxu0 0.0
    %2315 = vmatpush1.msra.mxu0 0.0
    %2316 = vmatprep.subr.mxu0 0.0
    %2317 = vmatpush1.msra.mxu0 0.0
    %2318 = vmatprep.subr.mxu0 0.0
    %2319 = vmatpush1.msra.mxu0 0.0
    %2320 = vmatprep.subr.mxu0 0.0
    %2321 = vmatpush1.msra.mxu0 0.0
    %2322 = vmatprep.subr.mxu0 0.0
    %2323 = vmatpush1.msra.mxu0 0.0
    %2324 = vmatprep.subr.mxu0 0.0
    %2325 = vmatpush1.msra.mxu0 0.0
    %2326 = vmatprep.subr.mxu0 0.0
    %2327 = vmatpush1.msra.mxu0 0.0
    %2328 = vmatprep.subr.mxu0 0.0
    %2329 = vmatpush1.msra.mxu0 0.0
    %2330 = vmatprep.subr.mxu0 0.0
    %v2331 = vand.u32 %v1995, 4294901760
    %v2332 = vsub.f32 %v1995, %v2331
    %v2333 = vand.u32 %v2332, 4294901760
    %2334 = vmatpush1.msra.mxu0 %v2333
    %2335 = vmatprep.subr.mxu0 0.0
    %2336 = vmatpush2.msra.mxu0 0.0
    %2337 = vmatprep.subr.mxu0 0.0
    %2338 = vmatpush2.msra.mxu0 0.0
    %2339 = vmatprep.subr.mxu0 0.0
    %2340 = vmatpush2.msra.mxu0 0.0
    %2341 = vmatprep.subr.mxu0 0.0
    %2342 = vmatpush2.msra.mxu0 0.0
    %2343 = vmatprep.subr.mxu0 0.0
    %2344 = vmatpush2.msra.mxu0 0.0
    %2345 = vmatprep.subr.mxu0 0.0
    %2346 = vmatpush2.msra.mxu0 0.0
    %2347 = vmatprep.subr.mxu0 0.0
    %2348 = vmatpush2.msra.mxu0 0.0
    %2349 = vmatprep.subr.mxu0 0.0
    %2350 = vmatpush2.msra.mxu0 0.0
    %2351 = vmatprep.subr.mxu0 0.0
    %2352 = vmatpush2.msra.mxu0 0.0
    %2353 = vmatprep.subr.mxu0 0.0
    %2354 = vmatpush2.msra.mxu0 0.0
    %2355 = vmatprep.subr.mxu0 0.0
    %2356 = vmatpush2.msra.mxu0 0.0
    %2357 = vmatprep.subr.mxu0 0.0
    %2358 = vmatpush2.msra.mxu0 0.0
    %2359 = vmatprep.subr.mxu0 0.0
    %2360 = vmatpush2.msra.mxu0 0.0
    %2361 = vmatprep.subr.mxu0 0.0
    %2362 = vmatpush2.msra.mxu0 0.0
    %2363 = vmatprep.subr.mxu0 0.0
    %2364 = vmatpush2.msra.mxu0 0.0
    %2365 = vmatprep.subr.mxu0 0.0
    %2366 = vmatpush2.msra.mxu0 0.0
    %2367 = vmatprep.mubr.f32.mxu0 0.0
    %v2368 = vand.u32 %v1998, 4294901760
    %2369 = vmatmul.mubr.f32.gmra.mxu0 %v2368
    %v2370 = vpop.f32.mrf.mxu0
    %v2371 = vadd.f32 %v2297, %v2370
    %v2372 = vpop.f32.mrf.mxu0
    %2373 = vdwg.mxu0
    %2374 = vmatprep.subr.mxu0 0.0
    %2375 = vmatpush1.msra.mxu0 0.0
    %2376 = vmatprep.subr.mxu0 0.0
    %2377 = vmatpush1.msra.mxu0 0.0
    %2378 = vmatprep.subr.mxu0 0.0
    %2379 = vmatpush1.msra.mxu0 0.0
    %2380 = vmatprep.subr.mxu0 0.0
    %2381 = vmatpush1.msra.mxu0 0.0
    %2382 = vmatprep.subr.mxu0 0.0
    %2383 = vmatpush1.msra.mxu0 0.0
    %2384 = vmatprep.subr.mxu0 0.0
    %2385 = vmatpush1.msra.mxu0 0.0
    %2386 = vmatprep.subr.mxu0 0.0
    %2387 = vmatpush1.msra.mxu0 0.0
    %2388 = vmatprep.subr.mxu0 0.0
    %2389 = vmatpush1.msra.mxu0 0.0
    %2390 = vmatprep.subr.mxu0 0.0
    %2391 = vmatpush1.msra.mxu0 0.0
    %2392 = vmatprep.subr.mxu0 0.0
    %2393 = vmatpush1.msra.mxu0 0.0
    %2394 = vmatprep.subr.mxu0 0.0
    %2395 = vmatpush1.msra.mxu0 0.0
    %2396 = vmatprep.subr.mxu0 0.0
    %2397 = vmatpush1.msra.mxu0 0.0
    %2398 = vmatprep.subr.mxu0 0.0
    %2399 = vmatpush1.msra.mxu0 0.0
    %2400 = vmatprep.subr.mxu0 0.0
    %2401 = vmatpush1.msra.mxu0 0.0
    %2402 = vmatprep.subr.mxu0 0.0
    %2403 = vmatpush1.msra.mxu0 0.0
    %2404 = vmatprep.subr.mxu0 0.0
    %v2405 = vand.u32 %v1995, 4294901760
    %2406 = vmatpush1.msra.mxu0 %v2405
    %2407 = vmatprep.subr.mxu0 0.0
    %2408 = vmatpush2.msra.mxu0 0.0
    %2409 = vmatprep.subr.mxu0 0.0
    %2410 = vmatpush2.msra.mxu0 0.0
    %2411 = vmatprep.subr.mxu0 0.0
    %2412 = vmatpush2.msra.mxu0 0.0
    %2413 = vmatprep.subr.mxu0 0.0
    %2414 = vmatpush2.msra.mxu0 0.0
    %2415 = vmatprep.subr.mxu0 0.0
    %2416 = vmatpush2.msra.mxu0 0.0
    %2417 = vmatprep.subr.mxu0 0.0
    %2418 = vmatpush2.msra.mxu0 0.0
    %2419 = vmatprep.subr.mxu0 0.0
    %2420 = vmatpush2.msra.mxu0 0.0
    %2421 = vmatprep.subr.mxu0 0.0
    %2422 = vmatpush2.msra.mxu0 0.0
    %2423 = vmatprep.subr.mxu0 0.0
    %2424 = vmatpush2.msra.mxu0 0.0
    %2425 = vmatprep.subr.mxu0 0.0
    %2426 = vmatpush2.msra.mxu0 0.0
    %2427 = vmatprep.subr.mxu0 0.0
    %2428 = vmatpush2.msra.mxu0 0.0
    %2429 = vmatprep.subr.mxu0 0.0
    %2430 = vmatpush2.msra.mxu0 0.0
    %2431 = vmatprep.subr.mxu0 0.0
    %2432 = vmatpush2.msra.mxu0 0.0
    %2433 = vmatprep.subr.mxu0 0.0
    %2434 = vmatpush2.msra.mxu0 0.0
    %2435 = vmatprep.subr.mxu0 0.0
    %2436 = vmatpush2.msra.mxu0 0.0
    %2437 = vmatprep.subr.mxu0 0.0
    %2438 = vmatpush2.msra.mxu0 0.0
    %2439 = vmatprep.mubr.f32.mxu0 0.0
    %v2440 = vand.u32 %v1998, 4294901760
    %2441 = vmatmul.mubr.f32.gmra.mxu0 %v2440
    %v2442 = vpop.f32.mrf.mxu0
    %v2443 = vadd.f32 %v2371, %v2442
    %v2444 = vpop.f32.mrf.mxu0
    %2445 = vdwg.mxu0
    %2447 = vrot.lane.b32.xlu0 %v2443, 8
    %v2448 = vpop.permute.xlu0 %2447
    %vm2450 = vcmask 130112
    %2451 = vst.msk [vmem:[#allocation2] sm:$0xff] %vm2450, %v2448
    %2452 = vrot.lane.b32.xlu0 %v598, 112
    %v2453 = vpop.permute.xlu0 %2452
    %2454 = vrot.lane.b32.xlu0 %v598, 80
    %v2455 = vpop.permute.xlu0 %2454
    %v2456 = vsel %vm610, %v2453, 0
    %v2458 = vsel %vm610, %v2455, 0
    %2460 = vmatprep.subr.mxu0 0.0
    %2461 = vmatpush1.xpose.msra.mxu0 0.0
    %2462 = vmatprep.subr.mxu0 0.0
    %2463 = vmatpush1.xpose.msra.mxu0 0.0
    %2464 = vmatprep.subr.mxu0 0.0
    %2465 = vmatpush1.xpose.msra.mxu0 0.0
    %2466 = vmatprep.subr.mxu0 0.0
    %2467 = vmatpush1.xpose.msra.mxu0 0.0
    %2468 = vmatprep.subr.mxu0 0.0
    %2469 = vmatpush1.xpose.msra.mxu0 0.0
    %2470 = vmatprep.subr.mxu0 0.0
    %2471 = vmatpush1.xpose.msra.mxu0 0.0
    %2472 = vmatprep.subr.mxu0 0.0
    %2473 = vmatpush1.xpose.msra.mxu0 0.0
    %2474 = vmatprep.subr.mxu0 0.0
    %2475 = vmatpush1.xpose.msra.mxu0 0.0
    %2476 = vmatprep.subr.mxu0 0.0
    %2477 = vmatpush1.xpose.msra.mxu0 0.0
    %2478 = vmatprep.subr.mxu0 0.0
    %2479 = vmatpush1.xpose.msra.mxu0 0.0
    %2480 = vmatprep.subr.mxu0 0.0
    %2481 = vmatpush1.xpose.msra.mxu0 0.0
    %2482 = vmatprep.subr.mxu0 0.0
    %2483 = vmatpush1.xpose.msra.mxu0 0.0
    %2484 = vmatprep.subr.mxu0 0.0
    %2485 = vmatpush1.xpose.msra.mxu0 0.0
    %2486 = vmatprep.subr.mxu0 0.0
    %2487 = vmatpush1.xpose.msra.mxu0 0.0
    %2488 = vmatprep.subr.mxu0 0.0
    %2489 = vmatpush1.xpose.msra.mxu0 0.0
    %2490 = vmatprep.subr.mxu0 0.0
    %v2491 = vand.u32 %v2458, 4294901760
    %2492 = vmatpush1.xpose.msra.mxu0 %v2491
    %2493 = vmatprep.subr.mxu0 0.0
    %2494 = vmatpush2.xpose.msra.mxu0 0.0
    %2495 = vmatprep.subr.mxu0 0.0
    %2496 = vmatpush2.xpose.msra.mxu0 0.0
    %2497 = vmatprep.subr.mxu0 0.0
    %2498 = vmatpush2.xpose.msra.mxu0 0.0
    %2499 = vmatprep.subr.mxu0 0.0
    %2500 = vmatpush2.xpose.msra.mxu0 0.0
    %2501 = vmatprep.subr.mxu0 0.0
    %2502 = vmatpush2.xpose.msra.mxu0 0.0
    %2503 = vmatprep.subr.mxu0 0.0
    %2504 = vmatpush2.xpose.msra.mxu0 0.0
    %2505 = vmatprep.subr.mxu0 0.0
    %2506 = vmatpush2.xpose.msra.mxu0 0.0
    %2507 = vmatprep.subr.mxu0 0.0
    %2508 = vmatpush2.xpose.msra.mxu0 0.0
    %2509 = vmatprep.subr.mxu0 0.0
    %2510 = vmatpush2.xpose.msra.mxu0 0.0
    %2511 = vmatprep.subr.mxu0 0.0
    %2512 = vmatpush2.xpose.msra.mxu0 0.0
    %2513 = vmatprep.subr.mxu0 0.0
    %2514 = vmatpush2.xpose.msra.mxu0 0.0
    %2515 = vmatprep.subr.mxu0 0.0
    %2516 = vmatpush2.xpose.msra.mxu0 0.0
    %2517 = vmatprep.subr.mxu0 0.0
    %2518 = vmatpush2.xpose.msra.mxu0 0.0
    %2519 = vmatprep.subr.mxu0 0.0
    %2520 = vmatpush2.xpose.msra.mxu0 0.0
    %2521 = vmatprep.subr.mxu0 0.0
    %2522 = vmatpush2.xpose.msra.mxu0 0.0
    %2523 = vmatprep.subr.mxu0 0.0
    %2524 = vmatpush2.xpose.msra.mxu0 0.0
    %2525 = vmatprep.mubr.f32.mxu0 0.0
    %v2526 = vand.u32 %v2456, 4294901760
    %v2527 = vsub.f32 %v2456, %v2526
    %v2528 = vand.u32 %v2527, 4294901760
    %v2529 = vsub.f32 %v2527, %v2528
    %v2530 = vand.u32 %v2529, 4294901760
    %2531 = vmatmul.mubr.f32.gmra.mxu0 %v2530
    %v2532 = vpop.f32.mrf.mxu0
    %v2533 = vadd.f32 0.0, %v2532
    %v2534 = vpop.f32.mrf.mxu0
    %2535 = vdwg.mxu0
    %2536 = vmatprep.subr.mxu0 0.0
    %2537 = vmatpush1.xpose.msra.mxu0 0.0
    %2538 = vmatprep.subr.mxu0 0.0
    %2539 = vmatpush1.xpose.msra.mxu0 0.0
    %2540 = vmatprep.subr.mxu0 0.0
    %2541 = vmatpush1.xpose.msra.mxu0 0.0
    %2542 = vmatprep.subr.mxu0 0.0
    %2543 = vmatpush1.xpose.msra.mxu0 0.0
    %2544 = vmatprep.subr.mxu0 0.0
    %2545 = vmatpush1.xpose.msra.mxu0 0.0
    %2546 = vmatprep.subr.mxu0 0.0
    %2547 = vmatpush1.xpose.msra.mxu0 0.0
    %2548 = vmatprep.subr.mxu0 0.0
    %2549 = vmatpush1.xpose.msra.mxu0 0.0
    %2550 = vmatprep.subr.mxu0 0.0
    %2551 = vmatpush1.xpose.msra.mxu0 0.0
    %2552 = vmatprep.subr.mxu0 0.0
    %2553 = vmatpush1.xpose.msra.mxu0 0.0
    %2554 = vmatprep.subr.mxu0 0.0
    %2555 = vmatpush1.xpose.msra.mxu0 0.0
    %2556 = vmatprep.subr.mxu0 0.0
    %2557 = vmatpush1.xpose.msra.mxu0 0.0
    %2558 = vmatprep.subr.mxu0 0.0
    %2559 = vmatpush1.xpose.msra.mxu0 0.0
    %2560 = vmatprep.subr.mxu0 0.0
    %2561 = vmatpush1.xpose.msra.mxu0 0.0
    %2562 = vmatprep.subr.mxu0 0.0
    %2563 = vmatpush1.xpose.msra.mxu0 0.0
    %2564 = vmatprep.subr.mxu0 0.0
    %2565 = vmatpush1.xpose.msra.mxu0 0.0
    %2566 = vmatprep.subr.mxu0 0.0
    %v2567 = vand.u32 %v2458, 4294901760
    %v2568 = vsub.f32 %v2458, %v2567
    %v2569 = vand.u32 %v2568, 4294901760
    %v2570 = vsub.f32 %v2568, %v2569
    %v2571 = vand.u32 %v2570, 4294901760
    %2572 = vmatpush1.xpose.msra.mxu0 %v2571
    %2573 = vmatprep.subr.mxu0 0.0
    %2574 = vmatpush2.xpose.msra.mxu0 0.0
    %2575 = vmatprep.subr.mxu0 0.0
    %2576 = vmatpush2.xpose.msra.mxu0 0.0
    %2577 = vmatprep.subr.mxu0 0.0
    %2578 = vmatpush2.xpose.msra.mxu0 0.0
    %2579 = vmatprep.subr.mxu0 0.0
    %2580 = vmatpush2.xpose.msra.mxu0 0.0
    %2581 = vmatprep.subr.mxu0 0.0
    %2582 = vmatpush2.xpose.msra.mxu0 0.0
    %2583 = vmatprep.subr.mxu0 0.0
    %2584 = vmatpush2.xpose.msra.mxu0 0.0
    %2585 = vmatprep.subr.mxu0 0.0
    %2586 = vmatpush2.xpose.msra.mxu0 0.0
    %2587 = vmatprep.subr.mxu0 0.0
    %2588 = vmatpush2.xpose.msra.mxu0 0.0
    %2589 = vmatprep.subr.mxu0 0.0
    %2590 = vmatpush2.xpose.msra.mxu0 0.0
    %2591 = vmatprep.subr.mxu0 0.0
    %2592 = vmatpush2.xpose.msra.mxu0 0.0
    %2593 = vmatprep.subr.mxu0 0.0
    %2594 = vmatpush2.xpose.msra.mxu0 0.0
    %2595 = vmatprep.subr.mxu0 0.0
    %2596 = vmatpush2.xpose.msra.mxu0 0.0
    %2597 = vmatprep.subr.mxu0 0.0
    %2598 = vmatpush2.xpose.msra.mxu0 0.0
    %2599 = vmatprep.subr.mxu0 0.0
    %2600 = vmatpush2.xpose.msra.mxu0 0.0
    %2601 = vmatprep.subr.mxu0 0.0
    %2602 = vmatpush2.xpose.msra.mxu0 0.0
    %2603 = vmatprep.subr.mxu0 0.0
    %2604 = vmatpush2.xpose.msra.mxu0 0.0
    %2605 = vmatprep.mubr.f32.mxu0 0.0
    %v2606 = vand.u32 %v2456, 4294901760
    %2607 = vmatmul.mubr.f32.gmra.mxu0 %v2606
    %v2608 = vpop.f32.mrf.mxu0
    %v2609 = vadd.f32 %v2533, %v2608
    %v2610 = vpop.f32.mrf.mxu0
    %2611 = vdwg.mxu0
    %2612 = vmatprep.subr.mxu0 0.0
    %2613 = vmatpush1.xpose.msra.mxu0 0.0
    %2614 = vmatprep.subr.mxu0 0.0
    %2615 = vmatpush1.xpose.msra.mxu0 0.0
    %2616 = vmatprep.subr.mxu0 0.0
    %2617 = vmatpush1.xpose.msra.mxu0 0.0
    %2618 = vmatprep.subr.mxu0 0.0
    %2619 = vmatpush1.xpose.msra.mxu0 0.0
    %2620 = vmatprep.subr.mxu0 0.0
    %2621 = vmatpush1.xpose.msra.mxu0 0.0
    %2622 = vmatprep.subr.mxu0 0.0
    %2623 = vmatpush1.xpose.msra.mxu0 0.0
    %2624 = vmatprep.subr.mxu0 0.0
    %2625 = vmatpush1.xpose.msra.mxu0 0.0
    %2626 = vmatprep.subr.mxu0 0.0
    %2627 = vmatpush1.xpose.msra.mxu0 0.0
    %2628 = vmatprep.subr.mxu0 0.0
    %2629 = vmatpush1.xpose.msra.mxu0 0.0
    %2630 = vmatprep.subr.mxu0 0.0
    %2631 = vmatpush1.xpose.msra.mxu0 0.0
    %2632 = vmatprep.subr.mxu0 0.0
    %2633 = vmatpush1.xpose.msra.mxu0 0.0
    %2634 = vmatprep.subr.mxu0 0.0
    %2635 = vmatpush1.xpose.msra.mxu0 0.0
    %2636 = vmatprep.subr.mxu0 0.0
    %2637 = vmatpush1.xpose.msra.mxu0 0.0
    %2638 = vmatprep.subr.mxu0 0.0
    %2639 = vmatpush1.xpose.msra.mxu0 0.0
    %2640 = vmatprep.subr.mxu0 0.0
    %2641 = vmatpush1.xpose.msra.mxu0 0.0
    %2642 = vmatprep.subr.mxu0 0.0
    %v2643 = vand.u32 %v2458, 4294901760
    %v2644 = vsub.f32 %v2458, %v2643
    %2645 = vmatpush1.xpose.msra.mxu0 %v2644
    %2646 = vmatprep.subr.mxu0 0.0
    %2647 = vmatpush2.xpose.msra.mxu0 0.0
    %2648 = vmatprep.subr.mxu0 0.0
    %2649 = vmatpush2.xpose.msra.mxu0 0.0
    %2650 = vmatprep.subr.mxu0 0.0
    %2651 = vmatpush2.xpose.msra.mxu0 0.0
    %2652 = vmatprep.subr.mxu0 0.0
    %2653 = vmatpush2.xpose.msra.mxu0 0.0
    %2654 = vmatprep.subr.mxu0 0.0
    %2655 = vmatpush2.xpose.msra.mxu0 0.0
    %2656 = vmatprep.subr.mxu0 0.0
    %2657 = vmatpush2.xpose.msra.mxu0 0.0
    %2658 = vmatprep.subr.mxu0 0.0
    %2659 = vmatpush2.xpose.msra.mxu0 0.0
    %2660 = vmatprep.subr.mxu0 0.0
    %2661 = vmatpush2.xpose.msra.mxu0 0.0
    %2662 = vmatprep.subr.mxu0 0.0
    %2663 = vmatpush2.xpose.msra.mxu0 0.0
    %2664 = vmatprep.subr.mxu0 0.0
    %2665 = vmatpush2.xpose.msra.mxu0 0.0
    %2666 = vmatprep.subr.mxu0 0.0
    %2667 = vmatpush2.xpose.msra.mxu0 0.0
    %2668 = vmatprep.subr.mxu0 0.0
    %2669 = vmatpush2.xpose.msra.mxu0 0.0
    %2670 = vmatprep.subr.mxu0 0.0
    %2671 = vmatpush2.xpose.msra.mxu0 0.0
    %2672 = vmatprep.subr.mxu0 0.0
    %2673 = vmatpush2.xpose.msra.mxu0 0.0
    %2674 = vmatprep.subr.mxu0 0.0
    %2675 = vmatpush2.xpose.msra.mxu0 0.0
    %2676 = vmatprep.subr.mxu0 0.0
    %2677 = vmatpush2.xpose.msra.mxu0 0.0
    %2678 = vmatprep.mubr.f32.mxu0 0.0
    %v2679 = vand.u32 %v2456, 4294901760
    %v2680 = vsub.f32 %v2456, %v2679
    %2681 = vmatmul.mubr.f32.gmra.mxu0 %v2680
    %v2682 = vpop.f32.mrf.mxu0
    %v2683 = vadd.f32 %v2609, %v2682
    %v2684 = vpop.f32.mrf.mxu0
    %2685 = vdwg.mxu0
    %2686 = vmatprep.subr.mxu0 0.0
    %2687 = vmatpush1.xpose.msra.mxu0 0.0
    %2688 = vmatprep.subr.mxu0 0.0
    %2689 = vmatpush1.xpose.msra.mxu0 0.0
    %2690 = vmatprep.subr.mxu0 0.0
    %2691 = vmatpush1.xpose.msra.mxu0 0.0
    %2692 = vmatprep.subr.mxu0 0.0
    %2693 = vmatpush1.xpose.msra.mxu0 0.0
    %2694 = vmatprep.subr.mxu0 0.0
    %2695 = vmatpush1.xpose.msra.mxu0 0.0
    %2696 = vmatprep.subr.mxu0 0.0
    %2697 = vmatpush1.xpose.msra.mxu0 0.0
    %2698 = vmatprep.subr.mxu0 0.0
    %2699 = vmatpush1.xpose.msra.mxu0 0.0
    %2700 = vmatprep.subr.mxu0 0.0
    %2701 = vmatpush1.xpose.msra.mxu0 0.0
    %2702 = vmatprep.subr.mxu0 0.0
    %2703 = vmatpush1.xpose.msra.mxu0 0.0
    %2704 = vmatprep.subr.mxu0 0.0
    %2705 = vmatpush1.xpose.msra.mxu0 0.0
    %2706 = vmatprep.subr.mxu0 0.0
    %2707 = vmatpush1.xpose.msra.mxu0 0.0
    %2708 = vmatprep.subr.mxu0 0.0
    %2709 = vmatpush1.xpose.msra.mxu0 0.0
    %2710 = vmatprep.subr.mxu0 0.0
    %2711 = vmatpush1.xpose.msra.mxu0 0.0
    %2712 = vmatprep.subr.mxu0 0.0
    %2713 = vmatpush1.xpose.msra.mxu0 0.0
    %2714 = vmatprep.subr.mxu0 0.0
    %2715 = vmatpush1.xpose.msra.mxu0 0.0
    %2716 = vmatprep.subr.mxu0 0.0
    %v2717 = vand.u32 %v2458, 4294901760
    %2718 = vmatpush1.xpose.msra.mxu0 %v2717
    %2719 = vmatprep.subr.mxu0 0.0
    %2720 = vmatpush2.xpose.msra.mxu0 0.0
    %2721 = vmatprep.subr.mxu0 0.0
    %2722 = vmatpush2.xpose.msra.mxu0 0.0
    %2723 = vmatprep.subr.mxu0 0.0
    %2724 = vmatpush2.xpose.msra.mxu0 0.0
    %2725 = vmatprep.subr.mxu0 0.0
    %2726 = vmatpush2.xpose.msra.mxu0 0.0
    %2727 = vmatprep.subr.mxu0 0.0
    %2728 = vmatpush2.xpose.msra.mxu0 0.0
    %2729 = vmatprep.subr.mxu0 0.0
    %2730 = vmatpush2.xpose.msra.mxu0 0.0
    %2731 = vmatprep.subr.mxu0 0.0
    %2732 = vmatpush2.xpose.msra.mxu0 0.0
    %2733 = vmatprep.subr.mxu0 0.0
    %2734 = vmatpush2.xpose.msra.mxu0 0.0
    %2735 = vmatprep.subr.mxu0 0.0
    %2736 = vmatpush2.xpose.msra.mxu0 0.0
    %2737 = vmatprep.subr.mxu0 0.0
    %2738 = vmatpush2.xpose.msra.mxu0 0.0
    %2739 = vmatprep.subr.mxu0 0.0
    %2740 = vmatpush2.xpose.msra.mxu0 0.0
    %2741 = vmatprep.subr.mxu0 0.0
    %2742 = vmatpush2.xpose.msra.mxu0 0.0
    %2743 = vmatprep.subr.mxu0 0.0
    %2744 = vmatpush2.xpose.msra.mxu0 0.0
    %2745 = vmatprep.subr.mxu0 0.0
    %2746 = vmatpush2.xpose.msra.mxu0 0.0
    %2747 = vmatprep.subr.mxu0 0.0
    %2748 = vmatpush2.xpose.msra.mxu0 0.0
    %2749 = vmatprep.subr.mxu0 0.0
    %2750 = vmatpush2.xpose.msra.mxu0 0.0
    %2751 = vmatprep.mubr.f32.mxu0 0.0
    %v2752 = vand.u32 %v2456, 4294901760
    %v2753 = vsub.f32 %v2456, %v2752
    %v2754 = vand.u32 %v2753, 4294901760
    %2755 = vmatmul.mubr.f32.gmra.mxu0 %v2754
    %v2756 = vpop.f32.mrf.mxu0
    %v2757 = vadd.f32 %v2683, %v2756
    %v2758 = vpop.f32.mrf.mxu0
    %2759 = vdwg.mxu0
    %2760 = vmatprep.subr.mxu0 0.0
    %2761 = vmatpush1.xpose.msra.mxu0 0.0
    %2762 = vmatprep.subr.mxu0 0.0
    %2763 = vmatpush1.xpose.msra.mxu0 0.0
    %2764 = vmatprep.subr.mxu0 0.0
    %2765 = vmatpush1.xpose.msra.mxu0 0.0
    %2766 = vmatprep.subr.mxu0 0.0
    %2767 = vmatpush1.xpose.msra.mxu0 0.0
    %2768 = vmatprep.subr.mxu0 0.0
    %2769 = vmatpush1.xpose.msra.mxu0 0.0
    %2770 = vmatprep.subr.mxu0 0.0
    %2771 = vmatpush1.xpose.msra.mxu0 0.0
    %2772 = vmatprep.subr.mxu0 0.0
    %2773 = vmatpush1.xpose.msra.mxu0 0.0
    %2774 = vmatprep.subr.mxu0 0.0
    %2775 = vmatpush1.xpose.msra.mxu0 0.0
    %2776 = vmatprep.subr.mxu0 0.0
    %2777 = vmatpush1.xpose.msra.mxu0 0.0
    %2778 = vmatprep.subr.mxu0 0.0
    %2779 = vmatpush1.xpose.msra.mxu0 0.0
    %2780 = vmatprep.subr.mxu0 0.0
    %2781 = vmatpush1.xpose.msra.mxu0 0.0
    %2782 = vmatprep.subr.mxu0 0.0
    %2783 = vmatpush1.xpose.msra.mxu0 0.0
    %2784 = vmatprep.subr.mxu0 0.0
    %2785 = vmatpush1.xpose.msra.mxu0 0.0
    %2786 = vmatprep.subr.mxu0 0.0
    %2787 = vmatpush1.xpose.msra.mxu0 0.0
    %2788 = vmatprep.subr.mxu0 0.0
    %2789 = vmatpush1.xpose.msra.mxu0 0.0
    %2790 = vmatprep.subr.mxu0 0.0
    %v2791 = vand.u32 %v2458, 4294901760
    %v2792 = vsub.f32 %v2458, %v2791
    %v2793 = vand.u32 %v2792, 4294901760
    %2794 = vmatpush1.xpose.msra.mxu0 %v2793
    %2795 = vmatprep.subr.mxu0 0.0
    %2796 = vmatpush2.xpose.msra.mxu0 0.0
    %2797 = vmatprep.subr.mxu0 0.0
    %2798 = vmatpush2.xpose.msra.mxu0 0.0
    %2799 = vmatprep.subr.mxu0 0.0
    %2800 = vmatpush2.xpose.msra.mxu0 0.0
    %2801 = vmatprep.subr.mxu0 0.0
    %2802 = vmatpush2.xpose.msra.mxu0 0.0
    %2803 = vmatprep.subr.mxu0 0.0
    %2804 = vmatpush2.xpose.msra.mxu0 0.0
    %2805 = vmatprep.subr.mxu0 0.0
    %2806 = vmatpush2.xpose.msra.mxu0 0.0
    %2807 = vmatprep.subr.mxu0 0.0
    %2808 = vmatpush2.xpose.msra.mxu0 0.0
    %2809 = vmatprep.subr.mxu0 0.0
    %2810 = vmatpush2.xpose.msra.mxu0 0.0
    %2811 = vmatprep.subr.mxu0 0.0
    %2812 = vmatpush2.xpose.msra.mxu0 0.0
    %2813 = vmatprep.subr.mxu0 0.0
    %2814 = vmatpush2.xpose.msra.mxu0 0.0
    %2815 = vmatprep.subr.mxu0 0.0
    %2816 = vmatpush2.xpose.msra.mxu0 0.0
    %2817 = vmatprep.subr.mxu0 0.0
    %2818 = vmatpush2.xpose.msra.mxu0 0.0
    %2819 = vmatprep.subr.mxu0 0.0
    %2820 = vmatpush2.xpose.msra.mxu0 0.0
    %2821 = vmatprep.subr.mxu0 0.0
    %2822 = vmatpush2.xpose.msra.mxu0 0.0
    %2823 = vmatprep.subr.mxu0 0.0
    %2824 = vmatpush2.xpose.msra.mxu0 0.0
    %2825 = vmatprep.subr.mxu0 0.0
    %2826 = vmatpush2.xpose.msra.mxu0 0.0
    %2827 = vmatprep.mubr.f32.mxu0 0.0
    %v2828 = vand.u32 %v2456, 4294901760
    %2829 = vmatmul.mubr.f32.gmra.mxu0 %v2828
    %v2830 = vpop.f32.mrf.mxu0
    %v2831 = vadd.f32 %v2757, %v2830
    %v2832 = vpop.f32.mrf.mxu0
    %2833 = vdwg.mxu0
    %2834 = vmatprep.subr.mxu0 0.0
    %2835 = vmatpush1.xpose.msra.mxu0 0.0
    %2836 = vmatprep.subr.mxu0 0.0
    %2837 = vmatpush1.xpose.msra.mxu0 0.0
    %2838 = vmatprep.subr.mxu0 0.0
    %2839 = vmatpush1.xpose.msra.mxu0 0.0
    %2840 = vmatprep.subr.mxu0 0.0
    %2841 = vmatpush1.xpose.msra.mxu0 0.0
    %2842 = vmatprep.subr.mxu0 0.0
    %2843 = vmatpush1.xpose.msra.mxu0 0.0
    %2844 = vmatprep.subr.mxu0 0.0
    %2845 = vmatpush1.xpose.msra.mxu0 0.0
    %2846 = vmatprep.subr.mxu0 0.0
    %2847 = vmatpush1.xpose.msra.mxu0 0.0
    %2848 = vmatprep.subr.mxu0 0.0
    %2849 = vmatpush1.xpose.msra.mxu0 0.0
    %2850 = vmatprep.subr.mxu0 0.0
    %2851 = vmatpush1.xpose.msra.mxu0 0.0
    %2852 = vmatprep.subr.mxu0 0.0
    %2853 = vmatpush1.xpose.msra.mxu0 0.0
    %2854 = vmatprep.subr.mxu0 0.0
    %2855 = vmatpush1.xpose.msra.mxu0 0.0
    %2856 = vmatprep.subr.mxu0 0.0
    %2857 = vmatpush1.xpose.msra.mxu0 0.0
    %2858 = vmatprep.subr.mxu0 0.0
    %2859 = vmatpush1.xpose.msra.mxu0 0.0
    %2860 = vmatprep.subr.mxu0 0.0
    %2861 = vmatpush1.xpose.msra.mxu0 0.0
    %2862 = vmatprep.subr.mxu0 0.0
    %2863 = vmatpush1.xpose.msra.mxu0 0.0
    %2864 = vmatprep.subr.mxu0 0.0
    %v2865 = vand.u32 %v2458, 4294901760
    %2866 = vmatpush1.xpose.msra.mxu0 %v2865
    %2867 = vmatprep.subr.mxu0 0.0
    %2868 = vmatpush2.xpose.msra.mxu0 0.0
    %2869 = vmatprep.subr.mxu0 0.0
    %2870 = vmatpush2.xpose.msra.mxu0 0.0
    %2871 = vmatprep.subr.mxu0 0.0
    %2872 = vmatpush2.xpose.msra.mxu0 0.0
    %2873 = vmatprep.subr.mxu0 0.0
    %2874 = vmatpush2.xpose.msra.mxu0 0.0
    %2875 = vmatprep.subr.mxu0 0.0
    %2876 = vmatpush2.xpose.msra.mxu0 0.0
    %2877 = vmatprep.subr.mxu0 0.0
    %2878 = vmatpush2.xpose.msra.mxu0 0.0
    %2879 = vmatprep.subr.mxu0 0.0
    %2880 = vmatpush2.xpose.msra.mxu0 0.0
    %2881 = vmatprep.subr.mxu0 0.0
    %2882 = vmatpush2.xpose.msra.mxu0 0.0
    %2883 = vmatprep.subr.mxu0 0.0
    %2884 = vmatpush2.xpose.msra.mxu0 0.0
    %2885 = vmatprep.subr.mxu0 0.0
    %2886 = vmatpush2.xpose.msra.mxu0 0.0
    %2887 = vmatprep.subr.mxu0 0.0
    %2888 = vmatpush2.xpose.msra.mxu0 0.0
    %2889 = vmatprep.subr.mxu0 0.0
    %2890 = vmatpush2.xpose.msra.mxu0 0.0
    %2891 = vmatprep.subr.mxu0 0.0
    %2892 = vmatpush2.xpose.msra.mxu0 0.0
    %2893 = vmatprep.subr.mxu0 0.0
    %2894 = vmatpush2.xpose.msra.mxu0 0.0
    %2895 = vmatprep.subr.mxu0 0.0
    %2896 = vmatpush2.xpose.msra.mxu0 0.0
    %2897 = vmatprep.subr.mxu0 0.0
    %2898 = vmatpush2.xpose.msra.mxu0 0.0
    %2899 = vmatprep.mubr.f32.mxu0 0.0
    %v2900 = vand.u32 %v2456, 4294901760
    %2901 = vmatmul.mubr.f32.gmra.mxu0 %v2900
    %v2902 = vpop.f32.mrf.mxu0
    %v2903 = vadd.f32 %v2831, %v2902
    %v2904 = vpop.f32.mrf.mxu0
    %2905 = vdwg.mxu0
    %v2906 = vmul.f32 %v2903, 0.35355338
    %v2907 = vsel %vm610, %v2906, -inf
    %2908 = vmax.xlane.f32.xlu0 %v2907
    %v2909 = vpop.xlane.xlu0 %2908
    %v2910 = vsub.f32 %v2906, %v2909
    %v2911 = vmul.f32 %v2910, 1.442695
    %v2912 = vpow.pop %v2911
    %v2913 = vsel %vm610, %v2912, 0.0
    %2914 = vadd.xlane.f32.xlu0 %v2913
    %v2915 = vpop.xlane.xlu0 %2914
    %v2916 = vrcp.pop %v2915
    %v2917 = vmul.f32 1.0, %v2916
    %v2918 = vmul.f32 %v2912, %v2917
    %2919 = vrot.lane.b32.xlu0 %v598, 48
    %v2920 = vpop.permute.xlu0 %2919
    %v2923 = vsel %vm610, %v2918, 0
    %2925 = vmatprep.subr.mxu0 0.0
    %2926 = vmatpush1.msra.mxu0 0.0
    %2927 = vmatprep.subr.mxu0 0.0
    %2928 = vmatpush1.msra.mxu0 0.0
    %2929 = vmatprep.subr.mxu0 0.0
    %2930 = vmatpush1.msra.mxu0 0.0
    %2931 = vmatprep.subr.mxu0 0.0
    %2932 = vmatpush1.msra.mxu0 0.0
    %2933 = vmatprep.subr.mxu0 0.0
    %2934 = vmatpush1.msra.mxu0 0.0
    %2935 = vmatprep.subr.mxu0 0.0
    %2936 = vmatpush1.msra.mxu0 0.0
    %2937 = vmatprep.subr.mxu0 0.0
    %2938 = vmatpush1.msra.mxu0 0.0
    %2939 = vmatprep.subr.mxu0 0.0
    %2940 = vmatpush1.msra.mxu0 0.0
    %2941 = vmatprep.subr.mxu0 0.0
    %2942 = vmatpush1.msra.mxu0 0.0
    %2943 = vmatprep.subr.mxu0 0.0
    %2944 = vmatpush1.msra.mxu0 0.0
    %2945 = vmatprep.subr.mxu0 0.0
    %2946 = vmatpush1.msra.mxu0 0.0
    %2947 = vmatprep.subr.mxu0 0.0
    %2948 = vmatpush1.msra.mxu0 0.0
    %2949 = vmatprep.subr.mxu0 0.0
    %2950 = vmatpush1.msra.mxu0 0.0
    %2951 = vmatprep.subr.mxu0 0.0
    %2952 = vmatpush1.msra.mxu0 0.0
    %2953 = vmatprep.subr.mxu0 0.0
    %2954 = vmatpush1.msra.mxu0 0.0
    %2955 = vmatprep.subr.mxu0 0.0
    %v2956 = vand.u32 %v2920, 4294901760
    %2957 = vmatpush1.msra.mxu0 %v2956
    %2958 = vmatprep.subr.mxu0 0.0
    %2959 = vmatpush2.msra.mxu0 0.0
    %2960 = vmatprep.subr.mxu0 0.0
    %2961 = vmatpush2.msra.mxu0 0.0
    %2962 = vmatprep.subr.mxu0 0.0
    %2963 = vmatpush2.msra.mxu0 0.0
    %2964 = vmatprep.subr.mxu0 0.0
    %2965 = vmatpush2.msra.mxu0 0.0
    %2966 = vmatprep.subr.mxu0 0.0
    %2967 = vmatpush2.msra.mxu0 0.0
    %2968 = vmatprep.subr.mxu0 0.0
    %2969 = vmatpush2.msra.mxu0 0.0
    %2970 = vmatprep.subr.mxu0 0.0
    %2971 = vmatpush2.msra.mxu0 0.0
    %2972 = vmatprep.subr.mxu0 0.0
    %2973 = vmatpush2.msra.mxu0 0.0
    %2974 = vmatprep.subr.mxu0 0.0
    %2975 = vmatpush2.msra.mxu0 0.0
    %2976 = vmatprep.subr.mxu0 0.0
    %2977 = vmatpush2.msra.mxu0 0.0
    %2978 = vmatprep.subr.mxu0 0.0
    %2979 = vmatpush2.msra.mxu0 0.0
    %2980 = vmatprep.subr.mxu0 0.0
    %2981 = vmatpush2.msra.mxu0 0.0
    %2982 = vmatprep.subr.mxu0 0.0
    %2983 = vmatpush2.msra.mxu0 0.0
    %2984 = vmatprep.subr.mxu0 0.0
    %2985 = vmatpush2.msra.mxu0 0.0
    %2986 = vmatprep.subr.mxu0 0.0
    %2987 = vmatpush2.msra.mxu0 0.0
    %2988 = vmatprep.subr.mxu0 0.0
    %2989 = vmatpush2.msra.mxu0 0.0
    %2990 = vmatprep.mubr.f32.mxu0 0.0
    %v2991 = vand.u32 %v2923, 4294901760
    %v2992 = vsub.f32 %v2923, %v2991
    %v2993 = vand.u32 %v2992, 4294901760
    %v2994 = vsub.f32 %v2992, %v2993
    %v2995 = vand.u32 %v2994, 4294901760
    %2996 = vmatmul.mubr.f32.gmra.mxu0 %v2995
    %v2997 = vpop.f32.mrf.mxu0
    %v2998 = vadd.f32 0.0, %v2997
    %v2999 = vpop.f32.mrf.mxu0
    %3000 = vdwg.mxu0
    %3001 = vmatprep.subr.mxu0 0.0
    %3002 = vmatpush1.msra.mxu0 0.0
    %3003 = vmatprep.subr.mxu0 0.0
    %3004 = vmatpush1.msra.mxu0 0.0
    %3005 = vmatprep.subr.mxu0 0.0
    %3006 = vmatpush1.msra.mxu0 0.0
    %3007 = vmatprep.subr.mxu0 0.0
    %3008 = vmatpush1.msra.mxu0 0.0
    %3009 = vmatprep.subr.mxu0 0.0
    %3010 = vmatpush1.msra.mxu0 0.0
    %3011 = vmatprep.subr.mxu0 0.0
    %3012 = vmatpush1.msra.mxu0 0.0
    %3013 = vmatprep.subr.mxu0 0.0
    %3014 = vmatpush1.msra.mxu0 0.0
    %3015 = vmatprep.subr.mxu0 0.0
    %3016 = vmatpush1.msra.mxu0 0.0
    %3017 = vmatprep.subr.mxu0 0.0
    %3018 = vmatpush1.msra.mxu0 0.0
    %3019 = vmatprep.subr.mxu0 0.0
    %3020 = vmatpush1.msra.mxu0 0.0
    %3021 = vmatprep.subr.mxu0 0.0
    %3022 = vmatpush1.msra.mxu0 0.0
    %3023 = vmatprep.subr.mxu0 0.0
    %3024 = vmatpush1.msra.mxu0 0.0
    %3025 = vmatprep.subr.mxu0 0.0
    %3026 = vmatpush1.msra.mxu0 0.0
    %3027 = vmatprep.subr.mxu0 0.0
    %3028 = vmatpush1.msra.mxu0 0.0
    %3029 = vmatprep.subr.mxu0 0.0
    %3030 = vmatpush1.msra.mxu0 0.0
    %3031 = vmatprep.subr.mxu0 0.0
    %v3032 = vand.u32 %v2920, 4294901760
    %v3033 = vsub.f32 %v2920, %v3032
    %v3034 = vand.u32 %v3033, 4294901760
    %v3035 = vsub.f32 %v3033, %v3034
    %v3036 = vand.u32 %v3035, 4294901760
    %3037 = vmatpush1.msra.mxu0 %v3036
    %3038 = vmatprep.subr.mxu0 0.0
    %3039 = vmatpush2.msra.mxu0 0.0
    %3040 = vmatprep.subr.mxu0 0.0
    %3041 = vmatpush2.msra.mxu0 0.0
    %3042 = vmatprep.subr.mxu0 0.0
    %3043 = vmatpush2.msra.mxu0 0.0
    %3044 = vmatprep.subr.mxu0 0.0
    %3045 = vmatpush2.msra.mxu0 0.0
    %3046 = vmatprep.subr.mxu0 0.0
    %3047 = vmatpush2.msra.mxu0 0.0
    %3048 = vmatprep.subr.mxu0 0.0
    %3049 = vmatpush2.msra.mxu0 0.0
    %3050 = vmatprep.subr.mxu0 0.0
    %3051 = vmatpush2.msra.mxu0 0.0
    %3052 = vmatprep.subr.mxu0 0.0
    %3053 = vmatpush2.msra.mxu0 0.0
    %3054 = vmatprep.subr.mxu0 0.0
    %3055 = vmatpush2.msra.mxu0 0.0
    %3056 = vmatprep.subr.mxu0 0.0
    %3057 = vmatpush2.msra.mxu0 0.0
    %3058 = vmatprep.subr.mxu0 0.0
    %3059 = vmatpush2.msra.mxu0 0.0
    %3060 = vmatprep.subr.mxu0 0.0
    %3061 = vmatpush2.msra.mxu0 0.0
    %3062 = vmatprep.subr.mxu0 0.0
    %3063 = vmatpush2.msra.mxu0 0.0
    %3064 = vmatprep.subr.mxu0 0.0
    %3065 = vmatpush2.msra.mxu0 0.0
    %3066 = vmatprep.subr.mxu0 0.0
    %3067 = vmatpush2.msra.mxu0 0.0
    %3068 = vmatprep.subr.mxu0 0.0
    %3069 = vmatpush2.msra.mxu0 0.0
    %3070 = vmatprep.mubr.f32.mxu0 0.0
    %v3071 = vand.u32 %v2923, 4294901760
    %3072 = vmatmul.mubr.f32.gmra.mxu0 %v3071
    %v3073 = vpop.f32.mrf.mxu0
    %v3074 = vadd.f32 %v2998, %v3073
    %v3075 = vpop.f32.mrf.mxu0
    %3076 = vdwg.mxu0
    %3077 = vmatprep.subr.mxu0 0.0
    %3078 = vmatpush1.msra.mxu0 0.0
    %3079 = vmatprep.subr.mxu0 0.0
    %3080 = vmatpush1.msra.mxu0 0.0
    %3081 = vmatprep.subr.mxu0 0.0
    %3082 = vmatpush1.msra.mxu0 0.0
    %3083 = vmatprep.subr.mxu0 0.0
    %3084 = vmatpush1.msra.mxu0 0.0
    %3085 = vmatprep.subr.mxu0 0.0
    %3086 = vmatpush1.msra.mxu0 0.0
    %3087 = vmatprep.subr.mxu0 0.0
    %3088 = vmatpush1.msra.mxu0 0.0
    %3089 = vmatprep.subr.mxu0 0.0
    %3090 = vmatpush1.msra.mxu0 0.0
    %3091 = vmatprep.subr.mxu0 0.0
    %3092 = vmatpush1.msra.mxu0 0.0
    %3093 = vmatprep.subr.mxu0 0.0
    %3094 = vmatpush1.msra.mxu0 0.0
    %3095 = vmatprep.subr.mxu0 0.0
    %3096 = vmatpush1.msra.mxu0 0.0
    %3097 = vmatprep.subr.mxu0 0.0
    %3098 = vmatpush1.msra.mxu0 0.0
    %3099 = vmatprep.subr.mxu0 0.0
    %3100 = vmatpush1.msra.mxu0 0.0
    %3101 = vmatprep.subr.mxu0 0.0
    %3102 = vmatpush1.msra.mxu0 0.0
    %3103 = vmatprep.subr.mxu0 0.0
    %3104 = vmatpush1.msra.mxu0 0.0
    %3105 = vmatprep.subr.mxu0 0.0
    %3106 = vmatpush1.msra.mxu0 0.0
    %3107 = vmatprep.subr.mxu0 0.0
    %v3108 = vand.u32 %v2920, 4294901760
    %v3109 = vsub.f32 %v2920, %v3108
    %3110 = vmatpush1.msra.mxu0 %v3109
    %3111 = vmatprep.subr.mxu0 0.0
    %3112 = vmatpush2.msra.mxu0 0.0
    %3113 = vmatprep.subr.mxu0 0.0
    %3114 = vmatpush2.msra.mxu0 0.0
    %3115 = vmatprep.subr.mxu0 0.0
    %3116 = vmatpush2.msra.mxu0 0.0
    %3117 = vmatprep.subr.mxu0 0.0
    %3118 = vmatpush2.msra.mxu0 0.0
    %3119 = vmatprep.subr.mxu0 0.0
    %3120 = vmatpush2.msra.mxu0 0.0
    %3121 = vmatprep.subr.mxu0 0.0
    %3122 = vmatpush2.msra.mxu0 0.0
    %3123 = vmatprep.subr.mxu0 0.0
    %3124 = vmatpush2.msra.mxu0 0.0
    %3125 = vmatprep.subr.mxu0 0.0
    %3126 = vmatpush2.msra.mxu0 0.0
    %3127 = vmatprep.subr.mxu0 0.0
    %3128 = vmatpush2.msra.mxu0 0.0
    %3129 = vmatprep.subr.mxu0 0.0
    %3130 = vmatpush2.msra.mxu0 0.0
    %3131 = vmatprep.subr.mxu0 0.0
    %3132 = vmatpush2.msra.mxu0 0.0
    %3133 = vmatprep.subr.mxu0 0.0
    %3134 = vmatpush2.msra.mxu0 0.0
    %3135 = vmatprep.subr.mxu0 0.0
    %3136 = vmatpush2.msra.mxu0 0.0
    %3137 = vmatprep.subr.mxu0 0.0
    %3138 = vmatpush2.msra.mxu0 0.0
    %3139 = vmatprep.subr.mxu0 0.0
    %3140 = vmatpush2.msra.mxu0 0.0
    %3141 = vmatprep.subr.mxu0 0.0
    %3142 = vmatpush2.msra.mxu0 0.0
    %3143 = vmatprep.mubr.f32.mxu0 0.0
    %v3144 = vand.u32 %v2923, 4294901760
    %v3145 = vsub.f32 %v2923, %v3144
    %3146 = vmatmul.mubr.f32.gmra.mxu0 %v3145
    %v3147 = vpop.f32.mrf.mxu0
    %v3148 = vadd.f32 %v3074, %v3147
    %v3149 = vpop.f32.mrf.mxu0
    %3150 = vdwg.mxu0
    %3151 = vmatprep.subr.mxu0 0.0
    %3152 = vmatpush1.msra.mxu0 0.0
    %3153 = vmatprep.subr.mxu0 0.0
    %3154 = vmatpush1.msra.mxu0 0.0
    %3155 = vmatprep.subr.mxu0 0.0
    %3156 = vmatpush1.msra.mxu0 0.0
    %3157 = vmatprep.subr.mxu0 0.0
    %3158 = vmatpush1.msra.mxu0 0.0
    %3159 = vmatprep.subr.mxu0 0.0
    %3160 = vmatpush1.msra.mxu0 0.0
    %3161 = vmatprep.subr.mxu0 0.0
    %3162 = vmatpush1.msra.mxu0 0.0
    %3163 = vmatprep.subr.mxu0 0.0
    %3164 = vmatpush1.msra.mxu0 0.0
    %3165 = vmatprep.subr.mxu0 0.0
    %3166 = vmatpush1.msra.mxu0 0.0
    %3167 = vmatprep.subr.mxu0 0.0
    %3168 = vmatpush1.msra.mxu0 0.0
    %3169 = vmatprep.subr.mxu0 0.0
    %3170 = vmatpush1.msra.mxu0 0.0
    %3171 = vmatprep.subr.mxu0 0.0
    %3172 = vmatpush1.msra.mxu0 0.0
    %3173 = vmatprep.subr.mxu0 0.0
    %3174 = vmatpush1.msra.mxu0 0.0
    %3175 = vmatprep.subr.mxu0 0.0
    %3176 = vmatpush1.msra.mxu0 0.0
    %3177 = vmatprep.subr.mxu0 0.0
    %3178 = vmatpush1.msra.mxu0 0.0
    %3179 = vmatprep.subr.mxu0 0.0
    %3180 = vmatpush1.msra.mxu0 0.0
    %3181 = vmatprep.subr.mxu0 0.0
    %v3182 = vand.u32 %v2920, 4294901760
    %3183 = vmatpush1.msra.mxu0 %v3182
    %3184 = vmatprep.subr.mxu0 0.0
    %3185 = vmatpush2.msra.mxu0 0.0
    %3186 = vmatprep.subr.mxu0 0.0
    %3187 = vmatpush2.msra.mxu0 0.0
    %3188 = vmatprep.subr.mxu0 0.0
    %3189 = vmatpush2.msra.mxu0 0.0
    %3190 = vmatprep.subr.mxu0 0.0
    %3191 = vmatpush2.msra.mxu0 0.0
    %3192 = vmatprep.subr.mxu0 0.0
    %3193 = vmatpush2.msra.mxu0 0.0
    %3194 = vmatprep.subr.mxu0 0.0
    %3195 = vmatpush2.msra.mxu0 0.0
    %3196 = vmatprep.subr.mxu0 0.0
    %3197 = vmatpush2.msra.mxu0 0.0
    %3198 = vmatprep.subr.mxu0 0.0
    %3199 = vmatpush2.msra.mxu0 0.0
    %3200 = vmatprep.subr.mxu0 0.0
    %3201 = vmatpush2.msra.mxu0 0.0
    %3202 = vmatprep.subr.mxu0 0.0
    %3203 = vmatpush2.msra.mxu0 0.0
    %3204 = vmatprep.subr.mxu0 0.0
    %3205 = vmatpush2.msra.mxu0 0.0
    %3206 = vmatprep.subr.mxu0 0.0
    %3207 = vmatpush2.msra.mxu0 0.0
    %3208 = vmatprep.subr.mxu0 0.0
    %3209 = vmatpush2.msra.mxu0 0.0
    %3210 = vmatprep.subr.mxu0 0.0
    %3211 = vmatpush2.msra.mxu0 0.0
    %3212 = vmatprep.subr.mxu0 0.0
    %3213 = vmatpush2.msra.mxu0 0.0
    %3214 = vmatprep.subr.mxu0 0.0
    %3215 = vmatpush2.msra.mxu0 0.0
    %3216 = vmatprep.mubr.f32.mxu0 0.0
    %v3217 = vand.u32 %v2923, 4294901760
    %v3218 = vsub.f32 %v2923, %v3217
    %v3219 = vand.u32 %v3218, 4294901760
    %3220 = vmatmul.mubr.f32.gmra.mxu0 %v3219
    %v3221 = vpop.f32.mrf.mxu0
    %v3222 = vadd.f32 %v3148, %v3221
    %v3223 = vpop.f32.mrf.mxu0
    %3224 = vdwg.mxu0
    %3225 = vmatprep.subr.mxu0 0.0
    %3226 = vmatpush1.msra.mxu0 0.0
    %3227 = vmatprep.subr.mxu0 0.0
    %3228 = vmatpush1.msra.mxu0 0.0
    %3229 = vmatprep.subr.mxu0 0.0
    %3230 = vmatpush1.msra.mxu0 0.0
    %3231 = vmatprep.subr.mxu0 0.0
    %3232 = vmatpush1.msra.mxu0 0.0
    %3233 = vmatprep.subr.mxu0 0.0
    %3234 = vmatpush1.msra.mxu0 0.0
    %3235 = vmatprep.subr.mxu0 0.0
    %3236 = vmatpush1.msra.mxu0 0.0
    %3237 = vmatprep.subr.mxu0 0.0
    %3238 = vmatpush1.msra.mxu0 0.0
    %3239 = vmatprep.subr.mxu0 0.0
    %3240 = vmatpush1.msra.mxu0 0.0
    %3241 = vmatprep.subr.mxu0 0.0
    %3242 = vmatpush1.msra.mxu0 0.0
    %3243 = vmatprep.subr.mxu0 0.0
    %3244 = vmatpush1.msra.mxu0 0.0
    %3245 = vmatprep.subr.mxu0 0.0
    %3246 = vmatpush1.msra.mxu0 0.0
    %3247 = vmatprep.subr.mxu0 0.0
    %3248 = vmatpush1.msra.mxu0 0.0
    %3249 = vmatprep.subr.mxu0 0.0
    %3250 = vmatpush1.msra.mxu0 0.0
    %3251 = vmatprep.subr.mxu0 0.0
    %3252 = vmatpush1.msra.mxu0 0.0
    %3253 = vmatprep.subr.mxu0 0.0
    %3254 = vmatpush1.msra.mxu0 0.0
    %3255 = vmatprep.subr.mxu0 0.0
    %v3256 = vand.u32 %v2920, 4294901760
    %v3257 = vsub.f32 %v2920, %v3256
    %v3258 = vand.u32 %v3257, 4294901760
    %3259 = vmatpush1.msra.mxu0 %v3258
    %3260 = vmatprep.subr.mxu0 0.0
    %3261 = vmatpush2.msra.mxu0 0.0
    %3262 = vmatprep.subr.mxu0 0.0
    %3263 = vmatpush2.msra.mxu0 0.0
    %3264 = vmatprep.subr.mxu0 0.0
    %3265 = vmatpush2.msra.mxu0 0.0
    %3266 = vmatprep.subr.mxu0 0.0
    %3267 = vmatpush2.msra.mxu0 0.0
    %3268 = vmatprep.subr.mxu0 0.0
    %3269 = vmatpush2.msra.mxu0 0.0
    %3270 = vmatprep.subr.mxu0 0.0
    %3271 = vmatpush2.msra.mxu0 0.0
    %3272 = vmatprep.subr.mxu0 0.0
    %3273 = vmatpush2.msra.mxu0 0.0
    %3274 = vmatprep.subr.mxu0 0.0
    %3275 = vmatpush2.msra.mxu0 0.0
    %3276 = vmatprep.subr.mxu0 0.0
    %3277 = vmatpush2.msra.mxu0 0.0
    %3278 = vmatprep.subr.mxu0 0.0
    %3279 = vmatpush2.msra.mxu0 0.0
    %3280 = vmatprep.subr.mxu0 0.0
    %3281 = vmatpush2.msra.mxu0 0.0
    %3282 = vmatprep.subr.mxu0 0.0
    %3283 = vmatpush2.msra.mxu0 0.0
    %3284 = vmatprep.subr.mxu0 0.0
    %3285 = vmatpush2.msra.mxu0 0.0
    %3286 = vmatprep.subr.mxu0 0.0
    %3287 = vmatpush2.msra.mxu0 0.0
    %3288 = vmatprep.subr.mxu0 0.0
    %3289 = vmatpush2.msra.mxu0 0.0
    %3290 = vmatprep.subr.mxu0 0.0
    %3291 = vmatpush2.msra.mxu0 0.0
    %3292 = vmatprep.mubr.f32.mxu0 0.0
    %v3293 = vand.u32 %v2923, 4294901760
    %3294 = vmatmul.mubr.f32.gmra.mxu0 %v3293
    %v3295 = vpop.f32.mrf.mxu0
    %v3296 = vadd.f32 %v3222, %v3295
    %v3297 = vpop.f32.mrf.mxu0
    %3298 = vdwg.mxu0
    %3299 = vmatprep.subr.mxu0 0.0
    %3300 = vmatpush1.msra.mxu0 0.0
    %3301 = vmatprep.subr.mxu0 0.0
    %3302 = vmatpush1.msra.mxu0 0.0
    %3303 = vmatprep.subr.mxu0 0.0
    %3304 = vmatpush1.msra.mxu0 0.0
    %3305 = vmatprep.subr.mxu0 0.0
    %3306 = vmatpush1.msra.mxu0 0.0
    %3307 = vmatprep.subr.mxu0 0.0
    %3308 = vmatpush1.msra.mxu0 0.0
    %3309 = vmatprep.subr.mxu0 0.0
    %3310 = vmatpush1.msra.mxu0 0.0
    %3311 = vmatprep.subr.mxu0 0.0
    %3312 = vmatpush1.msra.mxu0 0.0
    %3313 = vmatprep.subr.mxu0 0.0
    %3314 = vmatpush1.msra.mxu0 0.0
    %3315 = vmatprep.subr.mxu0 0.0
    %3316 = vmatpush1.msra.mxu0 0.0
    %3317 = vmatprep.subr.mxu0 0.0
    %3318 = vmatpush1.msra.mxu0 0.0
    %3319 = vmatprep.subr.mxu0 0.0
    %3320 = vmatpush1.msra.mxu0 0.0
    %3321 = vmatprep.subr.mxu0 0.0
    %3322 = vmatpush1.msra.mxu0 0.0
    %3323 = vmatprep.subr.mxu0 0.0
    %3324 = vmatpush1.msra.mxu0 0.0
    %3325 = vmatprep.subr.mxu0 0.0
    %3326 = vmatpush1.msra.mxu0 0.0
    %3327 = vmatprep.subr.mxu0 0.0
    %3328 = vmatpush1.msra.mxu0 0.0
    %3329 = vmatprep.subr.mxu0 0.0
    %v3330 = vand.u32 %v2920, 4294901760
    %3331 = vmatpush1.msra.mxu0 %v3330
    %3332 = vmatprep.subr.mxu0 0.0
    %3333 = vmatpush2.msra.mxu0 0.0
    %3334 = vmatprep.subr.mxu0 0.0
    %3335 = vmatpush2.msra.mxu0 0.0
    %3336 = vmatprep.subr.mxu0 0.0
    %3337 = vmatpush2.msra.mxu0 0.0
    %3338 = vmatprep.subr.mxu0 0.0
    %3339 = vmatpush2.msra.mxu0 0.0
    %3340 = vmatprep.subr.mxu0 0.0
    %3341 = vmatpush2.msra.mxu0 0.0
    %3342 = vmatprep.subr.mxu0 0.0
    %3343 = vmatpush2.msra.mxu0 0.0
    %3344 = vmatprep.subr.mxu0 0.0
    %3345 = vmatpush2.msra.mxu0 0.0
    %3346 = vmatprep.subr.mxu0 0.0
    %3347 = vmatpush2.msra.mxu0 0.0
    %3348 = vmatprep.subr.mxu0 0.0
    %3349 = vmatpush2.msra.mxu0 0.0
    %3350 = vmatprep.subr.mxu0 0.0
    %3351 = vmatpush2.msra.mxu0 0.0
    %3352 = vmatprep.subr.mxu0 0.0
    %3353 = vmatpush2.msra.mxu0 0.0
    %3354 = vmatprep.subr.mxu0 0.0
    %3355 = vmatpush2.msra.mxu0 0.0
    %3356 = vmatprep.subr.mxu0 0.0
    %3357 = vmatpush2.msra.mxu0 0.0
    %3358 = vmatprep.subr.mxu0 0.0
    %3359 = vmatpush2.msra.mxu0 0.0
    %3360 = vmatprep.subr.mxu0 0.0
    %3361 = vmatpush2.msra.mxu0 0.0
    %3362 = vmatprep.subr.mxu0 0.0
    %3363 = vmatpush2.msra.mxu0 0.0
    %3364 = vmatprep.mubr.f32.mxu0 0.0
    %v3365 = vand.u32 %v2923, 4294901760
    %3366 = vmatmul.mubr.f32.gmra.mxu0 %v3365
    %v3367 = vpop.f32.mrf.mxu0
    %v3368 = vadd.f32 %v3296, %v3367
    %v3369 = vpop.f32.mrf.mxu0
    %3370 = vdwg.mxu0
    %3372 = vrot.lane.b32.xlu0 %v3368, 16
    %v3373 = vpop.permute.xlu0 %3372
    %vm3375 = vcmask 195712
    %3376 = vst.msk [vmem:[#allocation2] sm:$0xff] %vm3375, %v3373
    %3377 = vrot.lane.b32.xlu0 %v598, 104
    %v3378 = vpop.permute.xlu0 %3377
    %3379 = vrot.lane.b32.xlu0 %v598, 72
    %v3380 = vpop.permute.xlu0 %3379
    %v3381 = vsel %vm610, %v3378, 0
    %v3383 = vsel %vm610, %v3380, 0
    %3385 = vmatprep.subr.mxu0 0.0
    %3386 = vmatpush1.xpose.msra.mxu0 0.0
    %3387 = vmatprep.subr.mxu0 0.0
    %3388 = vmatpush1.xpose.msra.mxu0 0.0
    %3389 = vmatprep.subr.mxu0 0.0
    %3390 = vmatpush1.xpose.msra.mxu0 0.0
    %3391 = vmatprep.subr.mxu0 0.0
    %3392 = vmatpush1.xpose.msra.mxu0 0.0
    %3393 = vmatprep.subr.mxu0 0.0
    %3394 = vmatpush1.xpose.msra.mxu0 0.0
    %3395 = vmatprep.subr.mxu0 0.0
    %3396 = vmatpush1.xpose.msra.mxu0 0.0
    %3397 = vmatprep.subr.mxu0 0.0
    %3398 = vmatpush1.xpose.msra.mxu0 0.0
    %3399 = vmatprep.subr.mxu0 0.0
    %3400 = vmatpush1.xpose.msra.mxu0 0.0
    %3401 = vmatprep.subr.mxu0 0.0
    %3402 = vmatpush1.xpose.msra.mxu0 0.0
    %3403 = vmatprep.subr.mxu0 0.0
    %3404 = vmatpush1.xpose.msra.mxu0 0.0
    %3405 = vmatprep.subr.mxu0 0.0
    %3406 = vmatpush1.xpose.msra.mxu0 0.0
    %3407 = vmatprep.subr.mxu0 0.0
    %3408 = vmatpush1.xpose.msra.mxu0 0.0
    %3409 = vmatprep.subr.mxu0 0.0
    %3410 = vmatpush1.xpose.msra.mxu0 0.0
    %3411 = vmatprep.subr.mxu0 0.0
    %3412 = vmatpush1.xpose.msra.mxu0 0.0
    %3413 = vmatprep.subr.mxu0 0.0
    %3414 = vmatpush1.xpose.msra.mxu0 0.0
    %3415 = vmatprep.subr.mxu0 0.0
    %v3416 = vand.u32 %v3383, 4294901760
    %3417 = vmatpush1.xpose.msra.mxu0 %v3416
    %3418 = vmatprep.subr.mxu0 0.0
    %3419 = vmatpush2.xpose.msra.mxu0 0.0
    %3420 = vmatprep.subr.mxu0 0.0
    %3421 = vmatpush2.xpose.msra.mxu0 0.0
    %3422 = vmatprep.subr.mxu0 0.0
    %3423 = vmatpush2.xpose.msra.mxu0 0.0
    %3424 = vmatprep.subr.mxu0 0.0
    %3425 = vmatpush2.xpose.msra.mxu0 0.0
    %3426 = vmatprep.subr.mxu0 0.0
    %3427 = vmatpush2.xpose.msra.mxu0 0.0
    %3428 = vmatprep.subr.mxu0 0.0
    %3429 = vmatpush2.xpose.msra.mxu0 0.0
    %3430 = vmatprep.subr.mxu0 0.0
    %3431 = vmatpush2.xpose.msra.mxu0 0.0
    %3432 = vmatprep.subr.mxu0 0.0
    %3433 = vmatpush2.xpose.msra.mxu0 0.0
    %3434 = vmatprep.subr.mxu0 0.0
    %3435 = vmatpush2.xpose.msra.mxu0 0.0
    %3436 = vmatprep.subr.mxu0 0.0
    %3437 = vmatpush2.xpose.msra.mxu0 0.0
    %3438 = vmatprep.subr.mxu0 0.0
    %3439 = vmatpush2.xpose.msra.mxu0 0.0
    %3440 = vmatprep.subr.mxu0 0.0
    %3441 = vmatpush2.xpose.msra.mxu0 0.0
    %3442 = vmatprep.subr.mxu0 0.0
    %3443 = vmatpush2.xpose.msra.mxu0 0.0
    %3444 = vmatprep.subr.mxu0 0.0
    %3445 = vmatpush2.xpose.msra.mxu0 0.0
    %3446 = vmatprep.subr.mxu0 0.0
    %3447 = vmatpush2.xpose.msra.mxu0 0.0
    %3448 = vmatprep.subr.mxu0 0.0
    %3449 = vmatpush2.xpose.msra.mxu0 0.0
    %3450 = vmatprep.mubr.f32.mxu0 0.0
    %v3451 = vand.u32 %v3381, 4294901760
    %v3452 = vsub.f32 %v3381, %v3451
    %v3453 = vand.u32 %v3452, 4294901760
    %v3454 = vsub.f32 %v3452, %v3453
    %v3455 = vand.u32 %v3454, 4294901760
    %3456 = vmatmul.mubr.f32.gmra.mxu0 %v3455
    %v3457 = vpop.f32.mrf.mxu0
    %v3458 = vadd.f32 0.0, %v3457
    %v3459 = vpop.f32.mrf.mxu0
    %3460 = vdwg.mxu0
    %3461 = vmatprep.subr.mxu0 0.0
    %3462 = vmatpush1.xpose.msra.mxu0 0.0
    %3463 = vmatprep.subr.mxu0 0.0
    %3464 = vmatpush1.xpose.msra.mxu0 0.0
    %3465 = vmatprep.subr.mxu0 0.0
    %3466 = vmatpush1.xpose.msra.mxu0 0.0
    %3467 = vmatprep.subr.mxu0 0.0
    %3468 = vmatpush1.xpose.msra.mxu0 0.0
    %3469 = vmatprep.subr.mxu0 0.0
    %3470 = vmatpush1.xpose.msra.mxu0 0.0
    %3471 = vmatprep.subr.mxu0 0.0
    %3472 = vmatpush1.xpose.msra.mxu0 0.0
    %3473 = vmatprep.subr.mxu0 0.0
    %3474 = vmatpush1.xpose.msra.mxu0 0.0
    %3475 = vmatprep.subr.mxu0 0.0
    %3476 = vmatpush1.xpose.msra.mxu0 0.0
    %3477 = vmatprep.subr.mxu0 0.0
    %3478 = vmatpush1.xpose.msra.mxu0 0.0
    %3479 = vmatprep.subr.mxu0 0.0
    %3480 = vmatpush1.xpose.msra.mxu0 0.0
    %3481 = vmatprep.subr.mxu0 0.0
    %3482 = vmatpush1.xpose.msra.mxu0 0.0
    %3483 = vmatprep.subr.mxu0 0.0
    %3484 = vmatpush1.xpose.msra.mxu0 0.0
    %3485 = vmatprep.subr.mxu0 0.0
    %3486 = vmatpush1.xpose.msra.mxu0 0.0
    %3487 = vmatprep.subr.mxu0 0.0
    %3488 = vmatpush1.xpose.msra.mxu0 0.0
    %3489 = vmatprep.subr.mxu0 0.0
    %3490 = vmatpush1.xpose.msra.mxu0 0.0
    %3491 = vmatprep.subr.mxu0 0.0
    %v3492 = vand.u32 %v3383, 4294901760
    %v3493 = vsub.f32 %v3383, %v3492
    %v3494 = vand.u32 %v3493, 4294901760
    %v3495 = vsub.f32 %v3493, %v3494
    %v3496 = vand.u32 %v3495, 4294901760
    %3497 = vmatpush1.xpose.msra.mxu0 %v3496
    %3498 = vmatprep.subr.mxu0 0.0
    %3499 = vmatpush2.xpose.msra.mxu0 0.0
    %3500 = vmatprep.subr.mxu0 0.0
    %3501 = vmatpush2.xpose.msra.mxu0 0.0
    %3502 = vmatprep.subr.mxu0 0.0
    %3503 = vmatpush2.xpose.msra.mxu0 0.0
    %3504 = vmatprep.subr.mxu0 0.0
    %3505 = vmatpush2.xpose.msra.mxu0 0.0
    %3506 = vmatprep.subr.mxu0 0.0
    %3507 = vmatpush2.xpose.msra.mxu0 0.0
    %3508 = vmatprep.subr.mxu0 0.0
    %3509 = vmatpush2.xpose.msra.mxu0 0.0
    %3510 = vmatprep.subr.mxu0 0.0
    %3511 = vmatpush2.xpose.msra.mxu0 0.0
    %3512 = vmatprep.subr.mxu0 0.0
    %3513 = vmatpush2.xpose.msra.mxu0 0.0
    %3514 = vmatprep.subr.mxu0 0.0
    %3515 = vmatpush2.xpose.msra.mxu0 0.0
    %3516 = vmatprep.subr.mxu0 0.0
    %3517 = vmatpush2.xpose.msra.mxu0 0.0
    %3518 = vmatprep.subr.mxu0 0.0
    %3519 = vmatpush2.xpose.msra.mxu0 0.0
    %3520 = vmatprep.subr.mxu0 0.0
    %3521 = vmatpush2.xpose.msra.mxu0 0.0
    %3522 = vmatprep.subr.mxu0 0.0
    %3523 = vmatpush2.xpose.msra.mxu0 0.0
    %3524 = vmatprep.subr.mxu0 0.0
    %3525 = vmatpush2.xpose.msra.mxu0 0.0
    %3526 = vmatprep.subr.mxu0 0.0
    %3527 = vmatpush2.xpose.msra.mxu0 0.0
    %3528 = vmatprep.subr.mxu0 0.0
    %3529 = vmatpush2.xpose.msra.mxu0 0.0
    %3530 = vmatprep.mubr.f32.mxu0 0.0
    %v3531 = vand.u32 %v3381, 4294901760
    %3532 = vmatmul.mubr.f32.gmra.mxu0 %v3531
    %v3533 = vpop.f32.mrf.mxu0
    %v3534 = vadd.f32 %v3458, %v3533
    %v3535 = vpop.f32.mrf.mxu0
    %3536 = vdwg.mxu0
    %3537 = vmatprep.subr.mxu0 0.0
    %3538 = vmatpush1.xpose.msra.mxu0 0.0
    %3539 = vmatprep.subr.mxu0 0.0
    %3540 = vmatpush1.xpose.msra.mxu0 0.0
    %3541 = vmatprep.subr.mxu0 0.0
    %3542 = vmatpush1.xpose.msra.mxu0 0.0
    %3543 = vmatprep.subr.mxu0 0.0
    %3544 = vmatpush1.xpose.msra.mxu0 0.0
    %3545 = vmatprep.subr.mxu0 0.0
    %3546 = vmatpush1.xpose.msra.mxu0 0.0
    %3547 = vmatprep.subr.mxu0 0.0
    %3548 = vmatpush1.xpose.msra.mxu0 0.0
    %3549 = vmatprep.subr.mxu0 0.0
    %3550 = vmatpush1.xpose.msra.mxu0 0.0
    %3551 = vmatprep.subr.mxu0 0.0
    %3552 = vmatpush1.xpose.msra.mxu0 0.0
    %3553 = vmatprep.subr.mxu0 0.0
    %3554 = vmatpush1.xpose.msra.mxu0 0.0
    %3555 = vmatprep.subr.mxu0 0.0
    %3556 = vmatpush1.xpose.msra.mxu0 0.0
    %3557 = vmatprep.subr.mxu0 0.0
    %3558 = vmatpush1.xpose.msra.mxu0 0.0
    %3559 = vmatprep.subr.mxu0 0.0
    %3560 = vmatpush1.xpose.msra.mxu0 0.0
    %3561 = vmatprep.subr.mxu0 0.0
    %3562 = vmatpush1.xpose.msra.mxu0 0.0
    %3563 = vmatprep.subr.mxu0 0.0
    %3564 = vmatpush1.xpose.msra.mxu0 0.0
    %3565 = vmatprep.subr.mxu0 0.0
    %3566 = vmatpush1.xpose.msra.mxu0 0.0
    %3567 = vmatprep.subr.mxu0 0.0
    %v3568 = vand.u32 %v3383, 4294901760
    %v3569 = vsub.f32 %v3383, %v3568
    %3570 = vmatpush1.xpose.msra.mxu0 %v3569
    %3571 = vmatprep.subr.mxu0 0.0
    %3572 = vmatpush2.xpose.msra.mxu0 0.0
    %3573 = vmatprep.subr.mxu0 0.0
    %3574 = vmatpush2.xpose.msra.mxu0 0.0
    %3575 = vmatprep.subr.mxu0 0.0
    %3576 = vmatpush2.xpose.msra.mxu0 0.0
    %3577 = vmatprep.subr.mxu0 0.0
    %3578 = vmatpush2.xpose.msra.mxu0 0.0
    %3579 = vmatprep.subr.mxu0 0.0
    %3580 = vmatpush2.xpose.msra.mxu0 0.0
    %3581 = vmatprep.subr.mxu0 0.0
    %3582 = vmatpush2.xpose.msra.mxu0 0.0
    %3583 = vmatprep.subr.mxu0 0.0
    %3584 = vmatpush2.xpose.msra.mxu0 0.0
    %3585 = vmatprep.subr.mxu0 0.0
    %3586 = vmatpush2.xpose.msra.mxu0 0.0
    %3587 = vmatprep.subr.mxu0 0.0
    %3588 = vmatpush2.xpose.msra.mxu0 0.0
    %3589 = vmatprep.subr.mxu0 0.0
    %3590 = vmatpush2.xpose.msra.mxu0 0.0
    %3591 = vmatprep.subr.mxu0 0.0
    %3592 = vmatpush2.xpose.msra.mxu0 0.0
    %3593 = vmatprep.subr.mxu0 0.0
    %3594 = vmatpush2.xpose.msra.mxu0 0.0
    %3595 = vmatprep.subr.mxu0 0.0
    %3596 = vmatpush2.xpose.msra.mxu0 0.0
    %3597 = vmatprep.subr.mxu0 0.0
    %3598 = vmatpush2.xpose.msra.mxu0 0.0
    %3599 = vmatprep.subr.mxu0 0.0
    %3600 = vmatpush2.xpose.msra.mxu0 0.0
    %3601 = vmatprep.subr.mxu0 0.0
    %3602 = vmatpush2.xpose.msra.mxu0 0.0
    %3603 = vmatprep.mubr.f32.mxu0 0.0
    %v3604 = vand.u32 %v3381, 4294901760
    %v3605 = vsub.f32 %v3381, %v3604
    %3606 = vmatmul.mubr.f32.gmra.mxu0 %v3605
    %v3607 = vpop.f32.mrf.mxu0
    %v3608 = vadd.f32 %v3534, %v3607
    %v3609 = vpop.f32.mrf.mxu0
    %3610 = vdwg.mxu0
    %3611 = vmatprep.subr.mxu0 0.0
    %3612 = vmatpush1.xpose.msra.mxu0 0.0
    %3613 = vmatprep.subr.mxu0 0.0
    %3614 = vmatpush1.xpose.msra.mxu0 0.0
    %3615 = vmatprep.subr.mxu0 0.0
    %3616 = vmatpush1.xpose.msra.mxu0 0.0
    %3617 = vmatprep.subr.mxu0 0.0
    %3618 = vmatpush1.xpose.msra.mxu0 0.0
    %3619 = vmatprep.subr.mxu0 0.0
    %3620 = vmatpush1.xpose.msra.mxu0 0.0
    %3621 = vmatprep.subr.mxu0 0.0
    %3622 = vmatpush1.xpose.msra.mxu0 0.0
    %3623 = vmatprep.subr.mxu0 0.0
    %3624 = vmatpush1.xpose.msra.mxu0 0.0
    %3625 = vmatprep.subr.mxu0 0.0
    %3626 = vmatpush1.xpose.msra.mxu0 0.0
    %3627 = vmatprep.subr.mxu0 0.0
    %3628 = vmatpush1.xpose.msra.mxu0 0.0
    %3629 = vmatprep.subr.mxu0 0.0
    %3630 = vmatpush1.xpose.msra.mxu0 0.0
    %3631 = vmatprep.subr.mxu0 0.0
    %3632 = vmatpush1.xpose.msra.mxu0 0.0
    %3633 = vmatprep.subr.mxu0 0.0
    %3634 = vmatpush1.xpose.msra.mxu0 0.0
    %3635 = vmatprep.subr.mxu0 0.0
    %3636 = vmatpush1.xpose.msra.mxu0 0.0
    %3637 = vmatprep.subr.mxu0 0.0
    %3638 = vmatpush1.xpose.msra.mxu0 0.0
    %3639 = vmatprep.subr.mxu0 0.0
    %3640 = vmatpush1.xpose.msra.mxu0 0.0
    %3641 = vmatprep.subr.mxu0 0.0
    %v3642 = vand.u32 %v3383, 4294901760
    %3643 = vmatpush1.xpose.msra.mxu0 %v3642
    %3644 = vmatprep.subr.mxu0 0.0
    %3645 = vmatpush2.xpose.msra.mxu0 0.0
    %3646 = vmatprep.subr.mxu0 0.0
    %3647 = vmatpush2.xpose.msra.mxu0 0.0
    %3648 = vmatprep.subr.mxu0 0.0
    %3649 = vmatpush2.xpose.msra.mxu0 0.0
    %3650 = vmatprep.subr.mxu0 0.0
    %3651 = vmatpush2.xpose.msra.mxu0 0.0
    %3652 = vmatprep.subr.mxu0 0.0
    %3653 = vmatpush2.xpose.msra.mxu0 0.0
    %3654 = vmatprep.subr.mxu0 0.0
    %3655 = vmatpush2.xpose.msra.mxu0 0.0
    %3656 = vmatprep.subr.mxu0 0.0
    %3657 = vmatpush2.xpose.msra.mxu0 0.0
    %3658 = vmatprep.subr.mxu0 0.0
    %3659 = vmatpush2.xpose.msra.mxu0 0.0
    %3660 = vmatprep.subr.mxu0 0.0
    %3661 = vmatpush2.xpose.msra.mxu0 0.0
    %3662 = vmatprep.subr.mxu0 0.0
    %3663 = vmatpush2.xpose.msra.mxu0 0.0
    %3664 = vmatprep.subr.mxu0 0.0
    %3665 = vmatpush2.xpose.msra.mxu0 0.0
    %3666 = vmatprep.subr.mxu0 0.0
    %3667 = vmatpush2.xpose.msra.mxu0 0.0
    %3668 = vmatprep.subr.mxu0 0.0
    %3669 = vmatpush2.xpose.msra.mxu0 0.0
    %3670 = vmatprep.subr.mxu0 0.0
    %3671 = vmatpush2.xpose.msra.mxu0 0.0
    %3672 = vmatprep.subr.mxu0 0.0
    %3673 = vmatpush2.xpose.msra.mxu0 0.0
    %3674 = vmatprep.subr.mxu0 0.0
    %3675 = vmatpush2.xpose.msra.mxu0 0.0
    %3676 = vmatprep.mubr.f32.mxu0 0.0
    %v3677 = vand.u32 %v3381, 4294901760
    %v3678 = vsub.f32 %v3381, %v3677
    %v3679 = vand.u32 %v3678, 4294901760
    %3680 = vmatmul.mubr.f32.gmra.mxu0 %v3679
    %v3681 = vpop.f32.mrf.mxu0
    %v3682 = vadd.f32 %v3608, %v3681
    %v3683 = vpop.f32.mrf.mxu0
    %3684 = vdwg.mxu0
    %3685 = vmatprep.subr.mxu0 0.0
    %3686 = vmatpush1.xpose.msra.mxu0 0.0
    %3687 = vmatprep.subr.mxu0 0.0
    %3688 = vmatpush1.xpose.msra.mxu0 0.0
    %3689 = vmatprep.subr.mxu0 0.0
    %3690 = vmatpush1.xpose.msra.mxu0 0.0
    %3691 = vmatprep.subr.mxu0 0.0
    %3692 = vmatpush1.xpose.msra.mxu0 0.0
    %3693 = vmatprep.subr.mxu0 0.0
    %3694 = vmatpush1.xpose.msra.mxu0 0.0
    %3695 = vmatprep.subr.mxu0 0.0
    %3696 = vmatpush1.xpose.msra.mxu0 0.0
    %3697 = vmatprep.subr.mxu0 0.0
    %3698 = vmatpush1.xpose.msra.mxu0 0.0
    %3699 = vmatprep.subr.mxu0 0.0
    %3700 = vmatpush1.xpose.msra.mxu0 0.0
    %3701 = vmatprep.subr.mxu0 0.0
    %3702 = vmatpush1.xpose.msra.mxu0 0.0
    %3703 = vmatprep.subr.mxu0 0.0
    %3704 = vmatpush1.xpose.msra.mxu0 0.0
    %3705 = vmatprep.subr.mxu0 0.0
    %3706 = vmatpush1.xpose.msra.mxu0 0.0
    %3707 = vmatprep.subr.mxu0 0.0
    %3708 = vmatpush1.xpose.msra.mxu0 0.0
    %3709 = vmatprep.subr.mxu0 0.0
    %3710 = vmatpush1.xpose.msra.mxu0 0.0
    %3711 = vmatprep.subr.mxu0 0.0
    %3712 = vmatpush1.xpose.msra.mxu0 0.0
    %3713 = vmatprep.subr.mxu0 0.0
    %3714 = vmatpush1.xpose.msra.mxu0 0.0
    %3715 = vmatprep.subr.mxu0 0.0
    %v3716 = vand.u32 %v3383, 4294901760
    %v3717 = vsub.f32 %v3383, %v3716
    %v3718 = vand.u32 %v3717, 4294901760
    %3719 = vmatpush1.xpose.msra.mxu0 %v3718
    %3720 = vmatprep.subr.mxu0 0.0
    %3721 = vmatpush2.xpose.msra.mxu0 0.0
    %3722 = vmatprep.subr.mxu0 0.0
    %3723 = vmatpush2.xpose.msra.mxu0 0.0
    %3724 = vmatprep.subr.mxu0 0.0
    %3725 = vmatpush2.xpose.msra.mxu0 0.0
    %3726 = vmatprep.subr.mxu0 0.0
    %3727 = vmatpush2.xpose.msra.mxu0 0.0
    %3728 = vmatprep.subr.mxu0 0.0
    %3729 = vmatpush2.xpose.msra.mxu0 0.0
    %3730 = vmatprep.subr.mxu0 0.0
    %3731 = vmatpush2.xpose.msra.mxu0 0.0
    %3732 = vmatprep.subr.mxu0 0.0
    %3733 = vmatpush2.xpose.msra.mxu0 0.0
    %3734 = vmatprep.subr.mxu0 0.0
    %3735 = vmatpush2.xpose.msra.mxu0 0.0
    %3736 = vmatprep.subr.mxu0 0.0
    %3737 = vmatpush2.xpose.msra.mxu0 0.0
    %3738 = vmatprep.subr.mxu0 0.0
    %3739 = vmatpush2.xpose.msra.mxu0 0.0
    %3740 = vmatprep.subr.mxu0 0.0
    %3741 = vmatpush2.xpose.msra.mxu0 0.0
    %3742 = vmatprep.subr.mxu0 0.0
    %3743 = vmatpush2.xpose.msra.mxu0 0.0
    %3744 = vmatprep.subr.mxu0 0.0
    %3745 = vmatpush2.xpose.msra.mxu0 0.0
    %3746 = vmatprep.subr.mxu0 0.0
    %3747 = vmatpush2.xpose.msra.mxu0 0.0
    %3748 = vmatprep.subr.mxu0 0.0
    %3749 = vmatpush2.xpose.msra.mxu0 0.0
    %3750 = vmatprep.subr.mxu0 0.0
    %3751 = vmatpush2.xpose.msra.mxu0 0.0
    %3752 = vmatprep.mubr.f32.mxu0 0.0
    %v3753 = vand.u32 %v3381, 4294901760
    %3754 = vmatmul.mubr.f32.gmra.mxu0 %v3753
    %v3755 = vpop.f32.mrf.mxu0
    %v3756 = vadd.f32 %v3682, %v3755
    %v3757 = vpop.f32.mrf.mxu0
    %3758 = vdwg.mxu0
    %3759 = vmatprep.subr.mxu0 0.0
    %3760 = vmatpush1.xpose.msra.mxu0 0.0
    %3761 = vmatprep.subr.mxu0 0.0
    %3762 = vmatpush1.xpose.msra.mxu0 0.0
    %3763 = vmatprep.subr.mxu0 0.0
    %3764 = vmatpush1.xpose.msra.mxu0 0.0
    %3765 = vmatprep.subr.mxu0 0.0
    %3766 = vmatpush1.xpose.msra.mxu0 0.0
    %3767 = vmatprep.subr.mxu0 0.0
    %3768 = vmatpush1.xpose.msra.mxu0 0.0
    %3769 = vmatprep.subr.mxu0 0.0
    %3770 = vmatpush1.xpose.msra.mxu0 0.0
    %3771 = vmatprep.subr.mxu0 0.0
    %3772 = vmatpush1.xpose.msra.mxu0 0.0
    %3773 = vmatprep.subr.mxu0 0.0
    %3774 = vmatpush1.xpose.msra.mxu0 0.0
    %3775 = vmatprep.subr.mxu0 0.0
    %3776 = vmatpush1.xpose.msra.mxu0 0.0
    %3777 = vmatprep.subr.mxu0 0.0
    %3778 = vmatpush1.xpose.msra.mxu0 0.0
    %3779 = vmatprep.subr.mxu0 0.0
    %3780 = vmatpush1.xpose.msra.mxu0 0.0
    %3781 = vmatprep.subr.mxu0 0.0
    %3782 = vmatpush1.xpose.msra.mxu0 0.0
    %3783 = vmatprep.subr.mxu0 0.0
    %3784 = vmatpush1.xpose.msra.mxu0 0.0
    %3785 = vmatprep.subr.mxu0 0.0
    %3786 = vmatpush1.xpose.msra.mxu0 0.0
    %3787 = vmatprep.subr.mxu0 0.0
    %3788 = vmatpush1.xpose.msra.mxu0 0.0
    %3789 = vmatprep.subr.mxu0 0.0
    %v3790 = vand.u32 %v3383, 4294901760
    %3791 = vmatpush1.xpose.msra.mxu0 %v3790
    %3792 = vmatprep.subr.mxu0 0.0
    %3793 = vmatpush2.xpose.msra.mxu0 0.0
    %3794 = vmatprep.subr.mxu0 0.0
    %3795 = vmatpush2.xpose.msra.mxu0 0.0
    %3796 = vmatprep.subr.mxu0 0.0
    %3797 = vmatpush2.xpose.msra.mxu0 0.0
    %3798 = vmatprep.subr.mxu0 0.0
    %3799 = vmatpush2.xpose.msra.mxu0 0.0
    %3800 = vmatprep.subr.mxu0 0.0
    %3801 = vmatpush2.xpose.msra.mxu0 0.0
    %3802 = vmatprep.subr.mxu0 0.0
    %3803 = vmatpush2.xpose.msra.mxu0 0.0
    %3804 = vmatprep.subr.mxu0 0.0
    %3805 = vmatpush2.xpose.msra.mxu0 0.0
    %3806 = vmatprep.subr.mxu0 0.0
    %3807 = vmatpush2.xpose.msra.mxu0 0.0
    %3808 = vmatprep.subr.mxu0 0.0
    %3809 = vmatpush2.xpose.msra.mxu0 0.0
    %3810 = vmatprep.subr.mxu0 0.0
    %3811 = vmatpush2.xpose.msra.mxu0 0.0
    %3812 = vmatprep.subr.mxu0 0.0
    %3813 = vmatpush2.xpose.msra.mxu0 0.0
    %3814 = vmatprep.subr.mxu0 0.0
    %3815 = vmatpush2.xpose.msra.mxu0 0.0
    %3816 = vmatprep.subr.mxu0 0.0
    %3817 = vmatpush2.xpose.msra.mxu0 0.0
    %3818 = vmatprep.subr.mxu0 0.0
    %3819 = vmatpush2.xpose.msra.mxu0 0.0
    %3820 = vmatprep.subr.mxu0 0.0
    %3821 = vmatpush2.xpose.msra.mxu0 0.0
    %3822 = vmatprep.subr.mxu0 0.0
    %3823 = vmatpush2.xpose.msra.mxu0 0.0
    %3824 = vmatprep.mubr.f32.mxu0 0.0
    %v3825 = vand.u32 %v3381, 4294901760
    %3826 = vmatmul.mubr.f32.gmra.mxu0 %v3825
    %v3827 = vpop.f32.mrf.mxu0
    %v3828 = vadd.f32 %v3756, %v3827
    %v3829 = vpop.f32.mrf.mxu0
    %3830 = vdwg.mxu0
    %v3831 = vmul.f32 %v3828, 0.35355338
    %v3832 = vsel %vm610, %v3831, -inf
    %3833 = vmax.xlane.f32.xlu0 %v3832
    %v3834 = vpop.xlane.xlu0 %3833
    %v3835 = vsub.f32 %v3831, %v3834
    %v3836 = vmul.f32 %v3835, 1.442695
    %v3837 = vpow.pop %v3836
    %v3838 = vsel %vm610, %v3837, 0.0
    %3839 = vadd.xlane.f32.xlu0 %v3838
    %v3840 = vpop.xlane.xlu0 %3839
    %v3841 = vrcp.pop %v3840
    %v3842 = vmul.f32 1.0, %v3841
    %v3843 = vmul.f32 %v3837, %v3842
    %3844 = vrot.lane.b32.xlu0 %v598, 40
    %v3845 = vpop.permute.xlu0 %3844
    %v3848 = vsel %vm610, %v3843, 0
    %3850 = vmatprep.subr.mxu0 0.0
    %3851 = vmatpush1.msra.mxu0 0.0
    %3852 = vmatprep.subr.mxu0 0.0
    %3853 = vmatpush1.msra.mxu0 0.0
    %3854 = vmatprep.subr.mxu0 0.0
    %3855 = vmatpush1.msra.mxu0 0.0
    %3856 = vmatprep.subr.mxu0 0.0
    %3857 = vmatpush1.msra.mxu0 0.0
    %3858 = vmatprep.subr.mxu0 0.0
    %3859 = vmatpush1.msra.mxu0 0.0
    %3860 = vmatprep.subr.mxu0 0.0
    %3861 = vmatpush1.msra.mxu0 0.0
    %3862 = vmatprep.subr.mxu0 0.0
    %3863 = vmatpush1.msra.mxu0 0.0
    %3864 = vmatprep.subr.mxu0 0.0
    %3865 = vmatpush1.msra.mxu0 0.0
    %3866 = vmatprep.subr.mxu0 0.0
    %3867 = vmatpush1.msra.mxu0 0.0
    %3868 = vmatprep.subr.mxu0 0.0
    %3869 = vmatpush1.msra.mxu0 0.0
    %3870 = vmatprep.subr.mxu0 0.0
    %3871 = vmatpush1.msra.mxu0 0.0
    %3872 = vmatprep.subr.mxu0 0.0
    %3873 = vmatpush1.msra.mxu0 0.0
    %3874 = vmatprep.subr.mxu0 0.0
    %3875 = vmatpush1.msra.mxu0 0.0
    %3876 = vmatprep.subr.mxu0 0.0
    %3877 = vmatpush1.msra.mxu0 0.0
    %3878 = vmatprep.subr.mxu0 0.0
    %3879 = vmatpush1.msra.mxu0 0.0
    %3880 = vmatprep.subr.mxu0 0.0
    %v3881 = vand.u32 %v3845, 4294901760
    %3882 = vmatpush1.msra.mxu0 %v3881
    %3883 = vmatprep.subr.mxu0 0.0
    %3884 = vmatpush2.msra.mxu0 0.0
    %3885 = vmatprep.subr.mxu0 0.0
    %3886 = vmatpush2.msra.mxu0 0.0
    %3887 = vmatprep.subr.mxu0 0.0
    %3888 = vmatpush2.msra.mxu0 0.0
    %3889 = vmatprep.subr.mxu0 0.0
    %3890 = vmatpush2.msra.mxu0 0.0
    %3891 = vmatprep.subr.mxu0 0.0
    %3892 = vmatpush2.msra.mxu0 0.0
    %3893 = vmatprep.subr.mxu0 0.0
    %3894 = vmatpush2.msra.mxu0 0.0
    %3895 = vmatprep.subr.mxu0 0.0
    %3896 = vmatpush2.msra.mxu0 0.0
    %3897 = vmatprep.subr.mxu0 0.0
    %3898 = vmatpush2.msra.mxu0 0.0
    %3899 = vmatprep.subr.mxu0 0.0
    %3900 = vmatpush2.msra.mxu0 0.0
    %3901 = vmatprep.subr.mxu0 0.0
    %3902 = vmatpush2.msra.mxu0 0.0
    %3903 = vmatprep.subr.mxu0 0.0
    %3904 = vmatpush2.msra.mxu0 0.0
    %3905 = vmatprep.subr.mxu0 0.0
    %3906 = vmatpush2.msra.mxu0 0.0
    %3907 = vmatprep.subr.mxu0 0.0
    %3908 = vmatpush2.msra.mxu0 0.0
    %3909 = vmatprep.subr.mxu0 0.0
    %3910 = vmatpush2.msra.mxu0 0.0
    %3911 = vmatprep.subr.mxu0 0.0
    %3912 = vmatpush2.msra.mxu0 0.0
    %3913 = vmatprep.subr.mxu0 0.0
    %3914 = vmatpush2.msra.mxu0 0.0
    %3915 = vmatprep.mubr.f32.mxu0 0.0
    %v3916 = vand.u32 %v3848, 4294901760
    %v3917 = vsub.f32 %v3848, %v3916
    %v3918 = vand.u32 %v3917, 4294901760
    %v3919 = vsub.f32 %v3917, %v3918
    %v3920 = vand.u32 %v3919, 4294901760
    %3921 = vmatmul.mubr.f32.gmra.mxu0 %v3920
    %v3922 = vpop.f32.mrf.mxu0
    %v3923 = vadd.f32 0.0, %v3922
    %v3924 = vpop.f32.mrf.mxu0
    %3925 = vdwg.mxu0
    %3926 = vmatprep.subr.mxu0 0.0
    %3927 = vmatpush1.msra.mxu0 0.0
    %3928 = vmatprep.subr.mxu0 0.0
    %3929 = vmatpush1.msra.mxu0 0.0
    %3930 = vmatprep.subr.mxu0 0.0
    %3931 = vmatpush1.msra.mxu0 0.0
    %3932 = vmatprep.subr.mxu0 0.0
    %3933 = vmatpush1.msra.mxu0 0.0
    %3934 = vmatprep.subr.mxu0 0.0
    %3935 = vmatpush1.msra.mxu0 0.0
    %3936 = vmatprep.subr.mxu0 0.0
    %3937 = vmatpush1.msra.mxu0 0.0
    %3938 = vmatprep.subr.mxu0 0.0
    %3939 = vmatpush1.msra.mxu0 0.0
    %3940 = vmatprep.subr.mxu0 0.0
    %3941 = vmatpush1.msra.mxu0 0.0
    %3942 = vmatprep.subr.mxu0 0.0
    %3943 = vmatpush1.msra.mxu0 0.0
    %3944 = vmatprep.subr.mxu0 0.0
    %3945 = vmatpush1.msra.mxu0 0.0
    %3946 = vmatprep.subr.mxu0 0.0
    %3947 = vmatpush1.msra.mxu0 0.0
    %3948 = vmatprep.subr.mxu0 0.0
    %3949 = vmatpush1.msra.mxu0 0.0
    %3950 = vmatprep.subr.mxu0 0.0
    %3951 = vmatpush1.msra.mxu0 0.0
    %3952 = vmatprep.subr.mxu0 0.0
    %3953 = vmatpush1.msra.mxu0 0.0
    %3954 = vmatprep.subr.mxu0 0.0
    %3955 = vmatpush1.msra.mxu0 0.0
    %3956 = vmatprep.subr.mxu0 0.0
    %v3957 = vand.u32 %v3845, 4294901760
    %v3958 = vsub.f32 %v3845, %v3957
    %v3959 = vand.u32 %v3958, 4294901760
    %v3960 = vsub.f32 %v3958, %v3959
    %v3961 = vand.u32 %v3960, 4294901760
    %3962 = vmatpush1.msra.mxu0 %v3961
    %3963 = vmatprep.subr.mxu0 0.0
    %3964 = vmatpush2.msra.mxu0 0.0
    %3965 = vmatprep.subr.mxu0 0.0
    %3966 = vmatpush2.msra.mxu0 0.0
    %3967 = vmatprep.subr.mxu0 0.0
    %3968 = vmatpush2.msra.mxu0 0.0
    %3969 = vmatprep.subr.mxu0 0.0
    %3970 = vmatpush2.msra.mxu0 0.0
    %3971 = vmatprep.subr.mxu0 0.0
    %3972 = vmatpush2.msra.mxu0 0.0
    %3973 = vmatprep.subr.mxu0 0.0
    %3974 = vmatpush2.msra.mxu0 0.0
    %3975 = vmatprep.subr.mxu0 0.0
    %3976 = vmatpush2.msra.mxu0 0.0
    %3977 = vmatprep.subr.mxu0 0.0
    %3978 = vmatpush2.msra.mxu0 0.0
    %3979 = vmatprep.subr.mxu0 0.0
    %3980 = vmatpush2.msra.mxu0 0.0
    %3981 = vmatprep.subr.mxu0 0.0
    %3982 = vmatpush2.msra.mxu0 0.0
    %3983 = vmatprep.subr.mxu0 0.0
    %3984 = vmatpush2.msra.mxu0 0.0
    %3985 = vmatprep.subr.mxu0 0.0
    %3986 = vmatpush2.msra.mxu0 0.0
    %3987 = vmatprep.subr.mxu0 0.0
    %3988 = vmatpush2.msra.mxu0 0.0
    %3989 = vmatprep.subr.mxu0 0.0
    %3990 = vmatpush2.msra.mxu0 0.0
    %3991 = vmatprep.subr.mxu0 0.0
    %3992 = vmatpush2.msra.mxu0 0.0
    %3993 = vmatprep.subr.mxu0 0.0
    %3994 = vmatpush2.msra.mxu0 0.0
    %3995 = vmatprep.mubr.f32.mxu0 0.0
    %v3996 = vand.u32 %v3848, 4294901760
    %3997 = vmatmul.mubr.f32.gmra.mxu0 %v3996
    %v3998 = vpop.f32.mrf.mxu0
    %v3999 = vadd.f32 %v3923, %v3998
    %v4000 = vpop.f32.mrf.mxu0
    %4001 = vdwg.mxu0
    %4002 = vmatprep.subr.mxu0 0.0
    %4003 = vmatpush1.msra.mxu0 0.0
    %4004 = vmatprep.subr.mxu0 0.0
    %4005 = vmatpush1.msra.mxu0 0.0
    %4006 = vmatprep.subr.mxu0 0.0
    %4007 = vmatpush1.msra.mxu0 0.0
    %4008 = vmatprep.subr.mxu0 0.0
    %4009 = vmatpush1.msra.mxu0 0.0
    %4010 = vmatprep.subr.mxu0 0.0
    %4011 = vmatpush1.msra.mxu0 0.0
    %4012 = vmatprep.subr.mxu0 0.0
    %4013 = vmatpush1.msra.mxu0 0.0
    %4014 = vmatprep.subr.mxu0 0.0
    %4015 = vmatpush1.msra.mxu0 0.0
    %4016 = vmatprep.subr.mxu0 0.0
    %4017 = vmatpush1.msra.mxu0 0.0
    %4018 = vmatprep.subr.mxu0 0.0
    %4019 = vmatpush1.msra.mxu0 0.0
    %4020 = vmatprep.subr.mxu0 0.0
    %4021 = vmatpush1.msra.mxu0 0.0
    %4022 = vmatprep.subr.mxu0 0.0
    %4023 = vmatpush1.msra.mxu0 0.0
    %4024 = vmatprep.subr.mxu0 0.0
    %4025 = vmatpush1.msra.mxu0 0.0
    %4026 = vmatprep.subr.mxu0 0.0
    %4027 = vmatpush1.msra.mxu0 0.0
    %4028 = vmatprep.subr.mxu0 0.0
    %4029 = vmatpush1.msra.mxu0 0.0
    %4030 = vmatprep.subr.mxu0 0.0
    %4031 = vmatpush1.msra.mxu0 0.0
    %4032 = vmatprep.subr.mxu0 0.0
    %v4033 = vand.u32 %v3845, 4294901760
    %v4034 = vsub.f32 %v3845, %v4033
    %4035 = vmatpush1.msra.mxu0 %v4034
    %4036 = vmatprep.subr.mxu0 0.0
    %4037 = vmatpush2.msra.mxu0 0.0
    %4038 = vmatprep.subr.mxu0 0.0
    %4039 = vmatpush2.msra.mxu0 0.0
    %4040 = vmatprep.subr.mxu0 0.0
    %4041 = vmatpush2.msra.mxu0 0.0
    %4042 = vmatprep.subr.mxu0 0.0
    %4043 = vmatpush2.msra.mxu0 0.0
    %4044 = vmatprep.subr.mxu0 0.0
    %4045 = vmatpush2.msra.mxu0 0.0
    %4046 = vmatprep.subr.mxu0 0.0
    %4047 = vmatpush2.msra.mxu0 0.0
    %4048 = vmatprep.subr.mxu0 0.0
    %4049 = vmatpush2.msra.mxu0 0.0
    %4050 = vmatprep.subr.mxu0 0.0
    %4051 = vmatpush2.msra.mxu0 0.0
    %4052 = vmatprep.subr.mxu0 0.0
    %4053 = vmatpush2.msra.mxu0 0.0
    %4054 = vmatprep.subr.mxu0 0.0
    %4055 = vmatpush2.msra.mxu0 0.0
    %4056 = vmatprep.subr.mxu0 0.0
    %4057 = vmatpush2.msra.mxu0 0.0
    %4058 = vmatprep.subr.mxu0 0.0
    %4059 = vmatpush2.msra.mxu0 0.0
    %4060 = vmatprep.subr.mxu0 0.0
    %4061 = vmatpush2.msra.mxu0 0.0
    %4062 = vmatprep.subr.mxu0 0.0
    %4063 = vmatpush2.msra.mxu0 0.0
    %4064 = vmatprep.subr.mxu0 0.0
    %4065 = vmatpush2.msra.mxu0 0.0
    %4066 = vmatprep.subr.mxu0 0.0
    %4067 = vmatpush2.msra.mxu0 0.0
    %4068 = vmatprep.mubr.f32.mxu0 0.0
    %v4069 = vand.u32 %v3848, 4294901760
    %v4070 = vsub.f32 %v3848, %v4069
    %4071 = vmatmul.mubr.f32.gmra.mxu0 %v4070
    %v4072 = vpop.f32.mrf.mxu0
    %v4073 = vadd.f32 %v3999, %v4072
    %v4074 = vpop.f32.mrf.mxu0
    %4075 = vdwg.mxu0
    %4076 = vmatprep.subr.mxu0 0.0
    %4077 = vmatpush1.msra.mxu0 0.0
    %4078 = vmatprep.subr.mxu0 0.0
    %4079 = vmatpush1.msra.mxu0 0.0
    %4080 = vmatprep.subr.mxu0 0.0
    %4081 = vmatpush1.msra.mxu0 0.0
    %4082 = vmatprep.subr.mxu0 0.0
    %4083 = vmatpush1.msra.mxu0 0.0
    %4084 = vmatprep.subr.mxu0 0.0
    %4085 = vmatpush1.msra.mxu0 0.0
    %4086 = vmatprep.subr.mxu0 0.0
    %4087 = vmatpush1.msra.mxu0 0.0
    %4088 = vmatprep.subr.mxu0 0.0
    %4089 = vmatpush1.msra.mxu0 0.0
    %4090 = vmatprep.subr.mxu0 0.0
    %4091 = vmatpush1.msra.mxu0 0.0
    %4092 = vmatprep.subr.mxu0 0.0
    %4093 = vmatpush1.msra.mxu0 0.0
    %4094 = vmatprep.subr.mxu0 0.0
    %4095 = vmatpush1.msra.mxu0 0.0
    %4096 = vmatprep.subr.mxu0 0.0
    %4097 = vmatpush1.msra.mxu0 0.0
    %4098 = vmatprep.subr.mxu0 0.0
    %4099 = vmatpush1.msra.mxu0 0.0
    %4100 = vmatprep.subr.mxu0 0.0
    %4101 = vmatpush1.msra.mxu0 0.0
    %4102 = vmatprep.subr.mxu0 0.0
    %4103 = vmatpush1.msra.mxu0 0.0
    %4104 = vmatprep.subr.mxu0 0.0
    %4105 = vmatpush1.msra.mxu0 0.0
    %4106 = vmatprep.subr.mxu0 0.0
    %v4107 = vand.u32 %v3845, 4294901760
    %4108 = vmatpush1.msra.mxu0 %v4107
    %4109 = vmatprep.subr.mxu0 0.0
    %4110 = vmatpush2.msra.mxu0 0.0
    %4111 = vmatprep.subr.mxu0 0.0
    %4112 = vmatpush2.msra.mxu0 0.0
    %4113 = vmatprep.subr.mxu0 0.0
    %4114 = vmatpush2.msra.mxu0 0.0
    %4115 = vmatprep.subr.mxu0 0.0
    %4116 = vmatpush2.msra.mxu0 0.0
    %4117 = vmatprep.subr.mxu0 0.0
    %4118 = vmatpush2.msra.mxu0 0.0
    %4119 = vmatprep.subr.mxu0 0.0
    %4120 = vmatpush2.msra.mxu0 0.0
    %4121 = vmatprep.subr.mxu0 0.0
    %4122 = vmatpush2.msra.mxu0 0.0
    %4123 = vmatprep.subr.mxu0 0.0
    %4124 = vmatpush2.msra.mxu0 0.0
    %4125 = vmatprep.subr.mxu0 0.0
    %4126 = vmatpush2.msra.mxu0 0.0
    %4127 = vmatprep.subr.mxu0 0.0
    %4128 = vmatpush2.msra.mxu0 0.0
    %4129 = vmatprep.subr.mxu0 0.0
    %4130 = vmatpush2.msra.mxu0 0.0
    %4131 = vmatprep.subr.mxu0 0.0
    %4132 = vmatpush2.msra.mxu0 0.0
    %4133 = vmatprep.subr.mxu0 0.0
    %4134 = vmatpush2.msra.mxu0 0.0
    %4135 = vmatprep.subr.mxu0 0.0
    %4136 = vmatpush2.msra.mxu0 0.0
    %4137 = vmatprep.subr.mxu0 0.0
    %4138 = vmatpush2.msra.mxu0 0.0
    %4139 = vmatprep.subr.mxu0 0.0
    %4140 = vmatpush2.msra.mxu0 0.0
    %4141 = vmatprep.mubr.f32.mxu0 0.0
    %v4142 = vand.u32 %v3848, 4294901760
    %v4143 = vsub.f32 %v3848, %v4142
    %v4144 = vand.u32 %v4143, 4294901760
    %4145 = vmatmul.mubr.f32.gmra.mxu0 %v4144
    %v4146 = vpop.f32.mrf.mxu0
    %v4147 = vadd.f32 %v4073, %v4146
    %v4148 = vpop.f32.mrf.mxu0
    %4149 = vdwg.mxu0
    %4150 = vmatprep.subr.mxu0 0.0
    %4151 = vmatpush1.msra.mxu0 0.0
    %4152 = vmatprep.subr.mxu0 0.0
    %4153 = vmatpush1.msra.mxu0 0.0
    %4154 = vmatprep.subr.mxu0 0.0
    %4155 = vmatpush1.msra.mxu0 0.0
    %4156 = vmatprep.subr.mxu0 0.0
    %4157 = vmatpush1.msra.mxu0 0.0
    %4158 = vmatprep.subr.mxu0 0.0
    %4159 = vmatpush1.msra.mxu0 0.0
    %4160 = vmatprep.subr.mxu0 0.0
    %4161 = vmatpush1.msra.mxu0 0.0
    %4162 = vmatprep.subr.mxu0 0.0
    %4163 = vmatpush1.msra.mxu0 0.0
    %4164 = vmatprep.subr.mxu0 0.0
    %4165 = vmatpush1.msra.mxu0 0.0
    %4166 = vmatprep.subr.mxu0 0.0
    %4167 = vmatpush1.msra.mxu0 0.0
    %4168 = vmatprep.subr.mxu0 0.0
    %4169 = vmatpush1.msra.mxu0 0.0
    %4170 = vmatprep.subr.mxu0 0.0
    %4171 = vmatpush1.msra.mxu0 0.0
    %4172 = vmatprep.subr.mxu0 0.0
    %4173 = vmatpush1.msra.mxu0 0.0
    %4174 = vmatprep.subr.mxu0 0.0
    %4175 = vmatpush1.msra.mxu0 0.0
    %4176 = vmatprep.subr.mxu0 0.0
    %4177 = vmatpush1.msra.mxu0 0.0
    %4178 = vmatprep.subr.mxu0 0.0
    %4179 = vmatpush1.msra.mxu0 0.0
    %4180 = vmatprep.subr.mxu0 0.0
    %v4181 = vand.u32 %v3845, 4294901760
    %v4182 = vsub.f32 %v3845, %v4181
    %v4183 = vand.u32 %v4182, 4294901760
    %4184 = vmatpush1.msra.mxu0 %v4183
    %4185 = vmatprep.subr.mxu0 0.0
    %4186 = vmatpush2.msra.mxu0 0.0
    %4187 = vmatprep.subr.mxu0 0.0
    %4188 = vmatpush2.msra.mxu0 0.0
    %4189 = vmatprep.subr.mxu0 0.0
    %4190 = vmatpush2.msra.mxu0 0.0
    %4191 = vmatprep.subr.mxu0 0.0
    %4192 = vmatpush2.msra.mxu0 0.0
    %4193 = vmatprep.subr.mxu0 0.0
    %4194 = vmatpush2.msra.mxu0 0.0
    %4195 = vmatprep.subr.mxu0 0.0
    %4196 = vmatpush2.msra.mxu0 0.0
    %4197 = vmatprep.subr.mxu0 0.0
    %4198 = vmatpush2.msra.mxu0 0.0
    %4199 = vmatprep.subr.mxu0 0.0
    %4200 = vmatpush2.msra.mxu0 0.0
    %4201 = vmatprep.subr.mxu0 0.0
    %4202 = vmatpush2.msra.mxu0 0.0
    %4203 = vmatprep.subr.mxu0 0.0
    %4204 = vmatpush2.msra.mxu0 0.0
    %4205 = vmatprep.subr.mxu0 0.0
    %4206 = vmatpush2.msra.mxu0 0.0
    %4207 = vmatprep.subr.mxu0 0.0
    %4208 = vmatpush2.msra.mxu0 0.0
    %4209 = vmatprep.subr.mxu0 0.0
    %4210 = vmatpush2.msra.mxu0 0.0
    %4211 = vmatprep.subr.mxu0 0.0
    %4212 = vmatpush2.msra.mxu0 0.0
    %4213 = vmatprep.subr.mxu0 0.0
    %4214 = vmatpush2.msra.mxu0 0.0
    %4215 = vmatprep.subr.mxu0 0.0
    %4216 = vmatpush2.msra.mxu0 0.0
    %4217 = vmatprep.mubr.f32.mxu0 0.0
    %v4218 = vand.u32 %v3848, 4294901760
    %4219 = vmatmul.mubr.f32.gmra.mxu0 %v4218
    %v4220 = vpop.f32.mrf.mxu0
    %v4221 = vadd.f32 %v4147, %v4220
    %v4222 = vpop.f32.mrf.mxu0
    %4223 = vdwg.mxu0
    %4224 = vmatprep.subr.mxu0 0.0
    %4225 = vmatpush1.msra.mxu0 0.0
    %4226 = vmatprep.subr.mxu0 0.0
    %4227 = vmatpush1.msra.mxu0 0.0
    %4228 = vmatprep.subr.mxu0 0.0
    %4229 = vmatpush1.msra.mxu0 0.0
    %4230 = vmatprep.subr.mxu0 0.0
    %4231 = vmatpush1.msra.mxu0 0.0
    %4232 = vmatprep.subr.mxu0 0.0
    %4233 = vmatpush1.msra.mxu0 0.0
    %4234 = vmatprep.subr.mxu0 0.0
    %4235 = vmatpush1.msra.mxu0 0.0
    %4236 = vmatprep.subr.mxu0 0.0
    %4237 = vmatpush1.msra.mxu0 0.0
    %4238 = vmatprep.subr.mxu0 0.0
    %4239 = vmatpush1.msra.mxu0 0.0
    %4240 = vmatprep.subr.mxu0 0.0
    %4241 = vmatpush1.msra.mxu0 0.0
    %4242 = vmatprep.subr.mxu0 0.0
    %4243 = vmatpush1.msra.mxu0 0.0
    %4244 = vmatprep.subr.mxu0 0.0
    %4245 = vmatpush1.msra.mxu0 0.0
    %4246 = vmatprep.subr.mxu0 0.0
    %4247 = vmatpush1.msra.mxu0 0.0
    %4248 = vmatprep.subr.mxu0 0.0
    %4249 = vmatpush1.msra.mxu0 0.0
    %4250 = vmatprep.subr.mxu0 0.0
    %4251 = vmatpush1.msra.mxu0 0.0
    %4252 = vmatprep.subr.mxu0 0.0
    %4253 = vmatpush1.msra.mxu0 0.0
    %4254 = vmatprep.subr.mxu0 0.0
    %v4255 = vand.u32 %v3845, 4294901760
    %4256 = vmatpush1.msra.mxu0 %v4255
    %4257 = vmatprep.subr.mxu0 0.0
    %4258 = vmatpush2.msra.mxu0 0.0
    %4259 = vmatprep.subr.mxu0 0.0
    %4260 = vmatpush2.msra.mxu0 0.0
    %4261 = vmatprep.subr.mxu0 0.0
    %4262 = vmatpush2.msra.mxu0 0.0
    %4263 = vmatprep.subr.mxu0 0.0
    %4264 = vmatpush2.msra.mxu0 0.0
    %4265 = vmatprep.subr.mxu0 0.0
    %4266 = vmatpush2.msra.mxu0 0.0
    %4267 = vmatprep.subr.mxu0 0.0
    %4268 = vmatpush2.msra.mxu0 0.0
    %4269 = vmatprep.subr.mxu0 0.0
    %4270 = vmatpush2.msra.mxu0 0.0
    %4271 = vmatprep.subr.mxu0 0.0
    %4272 = vmatpush2.msra.mxu0 0.0
    %4273 = vmatprep.subr.mxu0 0.0
    %4274 = vmatpush2.msra.mxu0 0.0
    %4275 = vmatprep.subr.mxu0 0.0
    %4276 = vmatpush2.msra.mxu0 0.0
    %4277 = vmatprep.subr.mxu0 0.0
    %4278 = vmatpush2.msra.mxu0 0.0
    %4279 = vmatprep.subr.mxu0 0.0
    %4280 = vmatpush2.msra.mxu0 0.0
    %4281 = vmatprep.subr.mxu0 0.0
    %4282 = vmatpush2.msra.mxu0 0.0
    %4283 = vmatprep.subr.mxu0 0.0
    %4284 = vmatpush2.msra.mxu0 0.0
    %4285 = vmatprep.subr.mxu0 0.0
    %4286 = vmatpush2.msra.mxu0 0.0
    %4287 = vmatprep.subr.mxu0 0.0
    %4288 = vmatpush2.msra.mxu0 0.0
    %4289 = vmatprep.mubr.f32.mxu0 0.0
    %v4290 = vand.u32 %v3848, 4294901760
    %4291 = vmatmul.mubr.f32.gmra.mxu0 %v4290
    %v4292 = vpop.f32.mrf.mxu0
    %v4293 = vadd.f32 %v4221, %v4292
    %v4294 = vpop.f32.mrf.mxu0
    %4295 = vdwg.mxu0
    %4297 = vrot.lane.b32.xlu0 %v4293, 24
    %v4298 = vpop.permute.xlu0 %4297
    %vm4300 = vcmask 261312
    %4301 = vst.msk [vmem:[#allocation2] sm:$0xff] %vm4300, %v4298
    %4303 = vrot.lane.b32.xlu0 %v604, 96
    %v4304 = vpop.permute.xlu0 %4303
    %v4305 = vsel %vm610, %v604, 0
    %v4307 = vsel %vm610, %v4304, 0
    %4309 = vmatprep.subr.mxu0 0.0
    %4310 = vmatpush1.xpose.msra.mxu0 0.0
    %4311 = vmatprep.subr.mxu0 0.0
    %4312 = vmatpush1.xpose.msra.mxu0 0.0
    %4313 = vmatprep.subr.mxu0 0.0
    %4314 = vmatpush1.xpose.msra.mxu0 0.0
    %4315 = vmatprep.subr.mxu0 0.0
    %4316 = vmatpush1.xpose.msra.mxu0 0.0
    %4317 = vmatprep.subr.mxu0 0.0
    %4318 = vmatpush1.xpose.msra.mxu0 0.0
    %4319 = vmatprep.subr.mxu0 0.0
    %4320 = vmatpush1.xpose.msra.mxu0 0.0
    %4321 = vmatprep.subr.mxu0 0.0
    %4322 = vmatpush1.xpose.msra.mxu0 0.0
    %4323 = vmatprep.subr.mxu0 0.0
    %4324 = vmatpush1.xpose.msra.mxu0 0.0
    %4325 = vmatprep.subr.mxu0 0.0
    %4326 = vmatpush1.xpose.msra.mxu0 0.0
    %4327 = vmatprep.subr.mxu0 0.0
    %4328 = vmatpush1.xpose.msra.mxu0 0.0
    %4329 = vmatprep.subr.mxu0 0.0
    %4330 = vmatpush1.xpose.msra.mxu0 0.0
    %4331 = vmatprep.subr.mxu0 0.0
    %4332 = vmatpush1.xpose.msra.mxu0 0.0
    %4333 = vmatprep.subr.mxu0 0.0
    %4334 = vmatpush1.xpose.msra.mxu0 0.0
    %4335 = vmatprep.subr.mxu0 0.0
    %4336 = vmatpush1.xpose.msra.mxu0 0.0
    %4337 = vmatprep.subr.mxu0 0.0
    %4338 = vmatpush1.xpose.msra.mxu0 0.0
    %4339 = vmatprep.subr.mxu0 0.0
    %v4340 = vand.u32 %v4307, 4294901760
    %4341 = vmatpush1.xpose.msra.mxu0 %v4340
    %4342 = vmatprep.subr.mxu0 0.0
    %4343 = vmatpush2.xpose.msra.mxu0 0.0
    %4344 = vmatprep.subr.mxu0 0.0
    %4345 = vmatpush2.xpose.msra.mxu0 0.0
    %4346 = vmatprep.subr.mxu0 0.0
    %4347 = vmatpush2.xpose.msra.mxu0 0.0
    %4348 = vmatprep.subr.mxu0 0.0
    %4349 = vmatpush2.xpose.msra.mxu0 0.0
    %4350 = vmatprep.subr.mxu0 0.0
    %4351 = vmatpush2.xpose.msra.mxu0 0.0
    %4352 = vmatprep.subr.mxu0 0.0
    %4353 = vmatpush2.xpose.msra.mxu0 0.0
    %4354 = vmatprep.subr.mxu0 0.0
    %4355 = vmatpush2.xpose.msra.mxu0 0.0
    %4356 = vmatprep.subr.mxu0 0.0
    %4357 = vmatpush2.xpose.msra.mxu0 0.0
    %4358 = vmatprep.subr.mxu0 0.0
    %4359 = vmatpush2.xpose.msra.mxu0 0.0
    %4360 = vmatprep.subr.mxu0 0.0
    %4361 = vmatpush2.xpose.msra.mxu0 0.0
    %4362 = vmatprep.subr.mxu0 0.0
    %4363 = vmatpush2.xpose.msra.mxu0 0.0
    %4364 = vmatprep.subr.mxu0 0.0
    %4365 = vmatpush2.xpose.msra.mxu0 0.0
    %4366 = vmatprep.subr.mxu0 0.0
    %4367 = vmatpush2.xpose.msra.mxu0 0.0
    %4368 = vmatprep.subr.mxu0 0.0
    %4369 = vmatpush2.xpose.msra.mxu0 0.0
    %4370 = vmatprep.subr.mxu0 0.0
    %4371 = vmatpush2.xpose.msra.mxu0 0.0
    %4372 = vmatprep.subr.mxu0 0.0
    %4373 = vmatpush2.xpose.msra.mxu0 0.0
    %4374 = vmatprep.mubr.f32.mxu0 0.0
    %v4375 = vand.u32 %v4305, 4294901760
    %v4376 = vsub.f32 %v4305, %v4375
    %v4377 = vand.u32 %v4376, 4294901760
    %v4378 = vsub.f32 %v4376, %v4377
    %v4379 = vand.u32 %v4378, 4294901760
    %4380 = vmatmul.mubr.f32.gmra.mxu0 %v4379
    %v4381 = vpop.f32.mrf.mxu0
    %v4382 = vadd.f32 0.0, %v4381
    %v4383 = vpop.f32.mrf.mxu0
    %4384 = vdwg.mxu0
    %4385 = vmatprep.subr.mxu0 0.0
    %4386 = vmatpush1.xpose.msra.mxu0 0.0
    %4387 = vmatprep.subr.mxu0 0.0
    %4388 = vmatpush1.xpose.msra.mxu0 0.0
    %4389 = vmatprep.subr.mxu0 0.0
    %4390 = vmatpush1.xpose.msra.mxu0 0.0
    %4391 = vmatprep.subr.mxu0 0.0
    %4392 = vmatpush1.xpose.msra.mxu0 0.0
    %4393 = vmatprep.subr.mxu0 0.0
    %4394 = vmatpush1.xpose.msra.mxu0 0.0
    %4395 = vmatprep.subr.mxu0 0.0
    %4396 = vmatpush1.xpose.msra.mxu0 0.0
    %4397 = vmatprep.subr.mxu0 0.0
    %4398 = vmatpush1.xpose.msra.mxu0 0.0
    %4399 = vmatprep.subr.mxu0 0.0
    %4400 = vmatpush1.xpose.msra.mxu0 0.0
    %4401 = vmatprep.subr.mxu0 0.0
    %4402 = vmatpush1.xpose.msra.mxu0 0.0
    %4403 = vmatprep.subr.mxu0 0.0
    %4404 = vmatpush1.xpose.msra.mxu0 0.0
    %4405 = vmatprep.subr.mxu0 0.0
    %4406 = vmatpush1.xpose.msra.mxu0 0.0
    %4407 = vmatprep.subr.mxu0 0.0
    %4408 = vmatpush1.xpose.msra.mxu0 0.0
    %4409 = vmatprep.subr.mxu0 0.0
    %4410 = vmatpush1.xpose.msra.mxu0 0.0
    %4411 = vmatprep.subr.mxu0 0.0
    %4412 = vmatpush1.xpose.msra.mxu0 0.0
    %4413 = vmatprep.subr.mxu0 0.0
    %4414 = vmatpush1.xpose.msra.mxu0 0.0
    %4415 = vmatprep.subr.mxu0 0.0
    %v4416 = vand.u32 %v4307, 4294901760
    %v4417 = vsub.f32 %v4307, %v4416
    %v4418 = vand.u32 %v4417, 4294901760
    %v4419 = vsub.f32 %v4417, %v4418
    %v4420 = vand.u32 %v4419, 4294901760
    %4421 = vmatpush1.xpose.msra.mxu0 %v4420
    %4422 = vmatprep.subr.mxu0 0.0
    %4423 = vmatpush2.xpose.msra.mxu0 0.0
    %4424 = vmatprep.subr.mxu0 0.0
    %4425 = vmatpush2.xpose.msra.mxu0 0.0
    %4426 = vmatprep.subr.mxu0 0.0
    %4427 = vmatpush2.xpose.msra.mxu0 0.0
    %4428 = vmatprep.subr.mxu0 0.0
    %4429 = vmatpush2.xpose.msra.mxu0 0.0
    %4430 = vmatprep.subr.mxu0 0.0
    %4431 = vmatpush2.xpose.msra.mxu0 0.0
    %4432 = vmatprep.subr.mxu0 0.0
    %4433 = vmatpush2.xpose.msra.mxu0 0.0
    %4434 = vmatprep.subr.mxu0 0.0
    %4435 = vmatpush2.xpose.msra.mxu0 0.0
    %4436 = vmatprep.subr.mxu0 0.0
    %4437 = vmatpush2.xpose.msra.mxu0 0.0
    %4438 = vmatprep.subr.mxu0 0.0
    %4439 = vmatpush2.xpose.msra.mxu0 0.0
    %4440 = vmatprep.subr.mxu0 0.0
    %4441 = vmatpush2.xpose.msra.mxu0 0.0
    %4442 = vmatprep.subr.mxu0 0.0
    %4443 = vmatpush2.xpose.msra.mxu0 0.0
    %4444 = vmatprep.subr.mxu0 0.0
    %4445 = vmatpush2.xpose.msra.mxu0 0.0
    %4446 = vmatprep.subr.mxu0 0.0
    %4447 = vmatpush2.xpose.msra.mxu0 0.0
    %4448 = vmatprep.subr.mxu0 0.0
    %4449 = vmatpush2.xpose.msra.mxu0 0.0
    %4450 = vmatprep.subr.mxu0 0.0
    %4451 = vmatpush2.xpose.msra.mxu0 0.0
    %4452 = vmatprep.subr.mxu0 0.0
    %4453 = vmatpush2.xpose.msra.mxu0 0.0
    %4454 = vmatprep.mubr.f32.mxu0 0.0
    %v4455 = vand.u32 %v4305, 4294901760
    %4456 = vmatmul.mubr.f32.gmra.mxu0 %v4455
    %v4457 = vpop.f32.mrf.mxu0
    %v4458 = vadd.f32 %v4382, %v4457
    %v4459 = vpop.f32.mrf.mxu0
    %4460 = vdwg.mxu0
    %4461 = vmatprep.subr.mxu0 0.0
    %4462 = vmatpush1.xpose.msra.mxu0 0.0
    %4463 = vmatprep.subr.mxu0 0.0
    %4464 = vmatpush1.xpose.msra.mxu0 0.0
    %4465 = vmatprep.subr.mxu0 0.0
    %4466 = vmatpush1.xpose.msra.mxu0 0.0
    %4467 = vmatprep.subr.mxu0 0.0
    %4468 = vmatpush1.xpose.msra.mxu0 0.0
    %4469 = vmatprep.subr.mxu0 0.0
    %4470 = vmatpush1.xpose.msra.mxu0 0.0
    %4471 = vmatprep.subr.mxu0 0.0
    %4472 = vmatpush1.xpose.msra.mxu0 0.0
    %4473 = vmatprep.subr.mxu0 0.0
    %4474 = vmatpush1.xpose.msra.mxu0 0.0
    %4475 = vmatprep.subr.mxu0 0.0
    %4476 = vmatpush1.xpose.msra.mxu0 0.0
    %4477 = vmatprep.subr.mxu0 0.0
    %4478 = vmatpush1.xpose.msra.mxu0 0.0
    %4479 = vmatprep.subr.mxu0 0.0
    %4480 = vmatpush1.xpose.msra.mxu0 0.0
    %4481 = vmatprep.subr.mxu0 0.0
    %4482 = vmatpush1.xpose.msra.mxu0 0.0
    %4483 = vmatprep.subr.mxu0 0.0
    %4484 = vmatpush1.xpose.msra.mxu0 0.0
    %4485 = vmatprep.subr.mxu0 0.0
    %4486 = vmatpush1.xpose.msra.mxu0 0.0
    %4487 = vmatprep.subr.mxu0 0.0
    %4488 = vmatpush1.xpose.msra.mxu0 0.0
    %4489 = vmatprep.subr.mxu0 0.0
    %4490 = vmatpush1.xpose.msra.mxu0 0.0
    %4491 = vmatprep.subr.mxu0 0.0
    %v4492 = vand.u32 %v4307, 4294901760
    %v4493 = vsub.f32 %v4307, %v4492
    %4494 = vmatpush1.xpose.msra.mxu0 %v4493
    %4495 = vmatprep.subr.mxu0 0.0
    %4496 = vmatpush2.xpose.msra.mxu0 0.0
    %4497 = vmatprep.subr.mxu0 0.0
    %4498 = vmatpush2.xpose.msra.mxu0 0.0
    %4499 = vmatprep.subr.mxu0 0.0
    %4500 = vmatpush2.xpose.msra.mxu0 0.0
    %4501 = vmatprep.subr.mxu0 0.0
    %4502 = vmatpush2.xpose.msra.mxu0 0.0
    %4503 = vmatprep.subr.mxu0 0.0
    %4504 = vmatpush2.xpose.msra.mxu0 0.0
    %4505 = vmatprep.subr.mxu0 0.0
    %4506 = vmatpush2.xpose.msra.mxu0 0.0
    %4507 = vmatprep.subr.mxu0 0.0
    %4508 = vmatpush2.xpose.msra.mxu0 0.0
    %4509 = vmatprep.subr.mxu0 0.0
    %4510 = vmatpush2.xpose.msra.mxu0 0.0
    %4511 = vmatprep.subr.mxu0 0.0
    %4512 = vmatpush2.xpose.msra.mxu0 0.0
    %4513 = vmatprep.subr.mxu0 0.0
    %4514 = vmatpush2.xpose.msra.mxu0 0.0
    %4515 = vmatprep.subr.mxu0 0.0
    %4516 = vmatpush2.xpose.msra.mxu0 0.0
    %4517 = vmatprep.subr.mxu0 0.0
    %4518 = vmatpush2.xpose.msra.mxu0 0.0
    %4519 = vmatprep.subr.mxu0 0.0
    %4520 = vmatpush2.xpose.msra.mxu0 0.0
    %4521 = vmatprep.subr.mxu0 0.0
    %4522 = vmatpush2.xpose.msra.mxu0 0.0
    %4523 = vmatprep.subr.mxu0 0.0
    %4524 = vmatpush2.xpose.msra.mxu0 0.0
    %4525 = vmatprep.subr.mxu0 0.0
    %4526 = vmatpush2.xpose.msra.mxu0 0.0
    %4527 = vmatprep.mubr.f32.mxu0 0.0
    %v4528 = vand.u32 %v4305, 4294901760
    %v4529 = vsub.f32 %v4305, %v4528
    %4530 = vmatmul.mubr.f32.gmra.mxu0 %v4529
    %v4531 = vpop.f32.mrf.mxu0
    %v4532 = vadd.f32 %v4458, %v4531
    %v4533 = vpop.f32.mrf.mxu0
    %4534 = vdwg.mxu0
    %4535 = vmatprep.subr.mxu0 0.0
    %4536 = vmatpush1.xpose.msra.mxu0 0.0
    %4537 = vmatprep.subr.mxu0 0.0
    %4538 = vmatpush1.xpose.msra.mxu0 0.0
    %4539 = vmatprep.subr.mxu0 0.0
    %4540 = vmatpush1.xpose.msra.mxu0 0.0
    %4541 = vmatprep.subr.mxu0 0.0
    %4542 = vmatpush1.xpose.msra.mxu0 0.0
    %4543 = vmatprep.subr.mxu0 0.0
    %4544 = vmatpush1.xpose.msra.mxu0 0.0
    %4545 = vmatprep.subr.mxu0 0.0
    %4546 = vmatpush1.xpose.msra.mxu0 0.0
    %4547 = vmatprep.subr.mxu0 0.0
    %4548 = vmatpush1.xpose.msra.mxu0 0.0
    %4549 = vmatprep.subr.mxu0 0.0
    %4550 = vmatpush1.xpose.msra.mxu0 0.0
    %4551 = vmatprep.subr.mxu0 0.0
    %4552 = vmatpush1.xpose.msra.mxu0 0.0
    %4553 = vmatprep.subr.mxu0 0.0
    %4554 = vmatpush1.xpose.msra.mxu0 0.0
    %4555 = vmatprep.subr.mxu0 0.0
    %4556 = vmatpush1.xpose.msra.mxu0 0.0
    %4557 = vmatprep.subr.mxu0 0.0
    %4558 = vmatpush1.xpose.msra.mxu0 0.0
    %4559 = vmatprep.subr.mxu0 0.0
    %4560 = vmatpush1.xpose.msra.mxu0 0.0
    %4561 = vmatprep.subr.mxu0 0.0
    %4562 = vmatpush1.xpose.msra.mxu0 0.0
    %4563 = vmatprep.subr.mxu0 0.0
    %4564 = vmatpush1.xpose.msra.mxu0 0.0
    %4565 = vmatprep.subr.mxu0 0.0
    %v4566 = vand.u32 %v4307, 4294901760
    %4567 = vmatpush1.xpose.msra.mxu0 %v4566
    %4568 = vmatprep.subr.mxu0 0.0
    %4569 = vmatpush2.xpose.msra.mxu0 0.0
    %4570 = vmatprep.subr.mxu0 0.0
    %4571 = vmatpush2.xpose.msra.mxu0 0.0
    %4572 = vmatprep.subr.mxu0 0.0
    %4573 = vmatpush2.xpose.msra.mxu0 0.0
    %4574 = vmatprep.subr.mxu0 0.0
    %4575 = vmatpush2.xpose.msra.mxu0 0.0
    %4576 = vmatprep.subr.mxu0 0.0
    %4577 = vmatpush2.xpose.msra.mxu0 0.0
    %4578 = vmatprep.subr.mxu0 0.0
    %4579 = vmatpush2.xpose.msra.mxu0 0.0
    %4580 = vmatprep.subr.mxu0 0.0
    %4581 = vmatpush2.xpose.msra.mxu0 0.0
    %4582 = vmatprep.subr.mxu0 0.0
    %4583 = vmatpush2.xpose.msra.mxu0 0.0
    %4584 = vmatprep.subr.mxu0 0.0
    %4585 = vmatpush2.xpose.msra.mxu0 0.0
    %4586 = vmatprep.subr.mxu0 0.0
    %4587 = vmatpush2.xpose.msra.mxu0 0.0
    %4588 = vmatprep.subr.mxu0 0.0
    %4589 = vmatpush2.xpose.msra.mxu0 0.0
    %4590 = vmatprep.subr.mxu0 0.0
    %4591 = vmatpush2.xpose.msra.mxu0 0.0
    %4592 = vmatprep.subr.mxu0 0.0
    %4593 = vmatpush2.xpose.msra.mxu0 0.0
    %4594 = vmatprep.subr.mxu0 0.0
    %4595 = vmatpush2.xpose.msra.mxu0 0.0
    %4596 = vmatprep.subr.mxu0 0.0
    %4597 = vmatpush2.xpose.msra.mxu0 0.0
    %4598 = vmatprep.subr.mxu0 0.0
    %4599 = vmatpush2.xpose.msra.mxu0 0.0
    %4600 = vmatprep.mubr.f32.mxu0 0.0
    %v4601 = vand.u32 %v4305, 4294901760
    %v4602 = vsub.f32 %v4305, %v4601
    %v4603 = vand.u32 %v4602, 4294901760
    %4604 = vmatmul.mubr.f32.gmra.mxu0 %v4603
    %v4605 = vpop.f32.mrf.mxu0
    %v4606 = vadd.f32 %v4532, %v4605
    %v4607 = vpop.f32.mrf.mxu0
    %4608 = vdwg.mxu0
    %4609 = vmatprep.subr.mxu0 0.0
    %4610 = vmatpush1.xpose.msra.mxu0 0.0
    %4611 = vmatprep.subr.mxu0 0.0
    %4612 = vmatpush1.xpose.msra.mxu0 0.0
    %4613 = vmatprep.subr.mxu0 0.0
    %4614 = vmatpush1.xpose.msra.mxu0 0.0
    %4615 = vmatprep.subr.mxu0 0.0
    %4616 = vmatpush1.xpose.msra.mxu0 0.0
    %4617 = vmatprep.subr.mxu0 0.0
    %4618 = vmatpush1.xpose.msra.mxu0 0.0
    %4619 = vmatprep.subr.mxu0 0.0
    %4620 = vmatpush1.xpose.msra.mxu0 0.0
    %4621 = vmatprep.subr.mxu0 0.0
    %4622 = vmatpush1.xpose.msra.mxu0 0.0
    %4623 = vmatprep.subr.mxu0 0.0
    %4624 = vmatpush1.xpose.msra.mxu0 0.0
    %4625 = vmatprep.subr.mxu0 0.0
    %4626 = vmatpush1.xpose.msra.mxu0 0.0
    %4627 = vmatprep.subr.mxu0 0.0
    %4628 = vmatpush1.xpose.msra.mxu0 0.0
    %4629 = vmatprep.subr.mxu0 0.0
    %4630 = vmatpush1.xpose.msra.mxu0 0.0
    %4631 = vmatprep.subr.mxu0 0.0
    %4632 = vmatpush1.xpose.msra.mxu0 0.0
    %4633 = vmatprep.subr.mxu0 0.0
    %4634 = vmatpush1.xpose.msra.mxu0 0.0
    %4635 = vmatprep.subr.mxu0 0.0
    %4636 = vmatpush1.xpose.msra.mxu0 0.0
    %4637 = vmatprep.subr.mxu0 0.0
    %4638 = vmatpush1.xpose.msra.mxu0 0.0
    %4639 = vmatprep.subr.mxu0 0.0
    %v4640 = vand.u32 %v4307, 4294901760
    %v4641 = vsub.f32 %v4307, %v4640
    %v4642 = vand.u32 %v4641, 4294901760
    %4643 = vmatpush1.xpose.msra.mxu0 %v4642
    %4644 = vmatprep.subr.mxu0 0.0
    %4645 = vmatpush2.xpose.msra.mxu0 0.0
    %4646 = vmatprep.subr.mxu0 0.0
    %4647 = vmatpush2.xpose.msra.mxu0 0.0
    %4648 = vmatprep.subr.mxu0 0.0
    %4649 = vmatpush2.xpose.msra.mxu0 0.0
    %4650 = vmatprep.subr.mxu0 0.0
    %4651 = vmatpush2.xpose.msra.mxu0 0.0
    %4652 = vmatprep.subr.mxu0 0.0
    %4653 = vmatpush2.xpose.msra.mxu0 0.0
    %4654 = vmatprep.subr.mxu0 0.0
    %4655 = vmatpush2.xpose.msra.mxu0 0.0
    %4656 = vmatprep.subr.mxu0 0.0
    %4657 = vmatpush2.xpose.msra.mxu0 0.0
    %4658 = vmatprep.subr.mxu0 0.0
    %4659 = vmatpush2.xpose.msra.mxu0 0.0
    %4660 = vmatprep.subr.mxu0 0.0
    %4661 = vmatpush2.xpose.msra.mxu0 0.0
    %4662 = vmatprep.subr.mxu0 0.0
    %4663 = vmatpush2.xpose.msra.mxu0 0.0
    %4664 = vmatprep.subr.mxu0 0.0
    %4665 = vmatpush2.xpose.msra.mxu0 0.0
    %4666 = vmatprep.subr.mxu0 0.0
    %4667 = vmatpush2.xpose.msra.mxu0 0.0
    %4668 = vmatprep.subr.mxu0 0.0
    %4669 = vmatpush2.xpose.msra.mxu0 0.0
    %4670 = vmatprep.subr.mxu0 0.0
    %4671 = vmatpush2.xpose.msra.mxu0 0.0
    %4672 = vmatprep.subr.mxu0 0.0
    %4673 = vmatpush2.xpose.msra.mxu0 0.0
    %4674 = vmatprep.subr.mxu0 0.0
    %4675 = vmatpush2.xpose.msra.mxu0 0.0
    %4676 = vmatprep.mubr.f32.mxu0 0.0
    %v4677 = vand.u32 %v4305, 4294901760
    %4678 = vmatmul.mubr.f32.gmra.mxu0 %v4677
    %v4679 = vpop.f32.mrf.mxu0
    %v4680 = vadd.f32 %v4606, %v4679
    %v4681 = vpop.f32.mrf.mxu0
    %4682 = vdwg.mxu0
    %4683 = vmatprep.subr.mxu0 0.0
    %4684 = vmatpush1.xpose.msra.mxu0 0.0
    %4685 = vmatprep.subr.mxu0 0.0
    %4686 = vmatpush1.xpose.msra.mxu0 0.0
    %4687 = vmatprep.subr.mxu0 0.0
    %4688 = vmatpush1.xpose.msra.mxu0 0.0
    %4689 = vmatprep.subr.mxu0 0.0
    %4690 = vmatpush1.xpose.msra.mxu0 0.0
    %4691 = vmatprep.subr.mxu0 0.0
    %4692 = vmatpush1.xpose.msra.mxu0 0.0
    %4693 = vmatprep.subr.mxu0 0.0
    %4694 = vmatpush1.xpose.msra.mxu0 0.0
    %4695 = vmatprep.subr.mxu0 0.0
    %4696 = vmatpush1.xpose.msra.mxu0 0.0
    %4697 = vmatprep.subr.mxu0 0.0
    %4698 = vmatpush1.xpose.msra.mxu0 0.0
    %4699 = vmatprep.subr.mxu0 0.0
    %4700 = vmatpush1.xpose.msra.mxu0 0.0
    %4701 = vmatprep.subr.mxu0 0.0
    %4702 = vmatpush1.xpose.msra.mxu0 0.0
    %4703 = vmatprep.subr.mxu0 0.0
    %4704 = vmatpush1.xpose.msra.mxu0 0.0
    %4705 = vmatprep.subr.mxu0 0.0
    %4706 = vmatpush1.xpose.msra.mxu0 0.0
    %4707 = vmatprep.subr.mxu0 0.0
    %4708 = vmatpush1.xpose.msra.mxu0 0.0
    %4709 = vmatprep.subr.mxu0 0.0
    %4710 = vmatpush1.xpose.msra.mxu0 0.0
    %4711 = vmatprep.subr.mxu0 0.0
    %4712 = vmatpush1.xpose.msra.mxu0 0.0
    %4713 = vmatprep.subr.mxu0 0.0
    %v4714 = vand.u32 %v4307, 4294901760
    %4715 = vmatpush1.xpose.msra.mxu0 %v4714
    %4716 = vmatprep.subr.mxu0 0.0
    %4717 = vmatpush2.xpose.msra.mxu0 0.0
    %4718 = vmatprep.subr.mxu0 0.0
    %4719 = vmatpush2.xpose.msra.mxu0 0.0
    %4720 = vmatprep.subr.mxu0 0.0
    %4721 = vmatpush2.xpose.msra.mxu0 0.0
    %4722 = vmatprep.subr.mxu0 0.0
    %4723 = vmatpush2.xpose.msra.mxu0 0.0
    %4724 = vmatprep.subr.mxu0 0.0
    %4725 = vmatpush2.xpose.msra.mxu0 0.0
    %4726 = vmatprep.subr.mxu0 0.0
    %4727 = vmatpush2.xpose.msra.mxu0 0.0
    %4728 = vmatprep.subr.mxu0 0.0
    %4729 = vmatpush2.xpose.msra.mxu0 0.0
    %4730 = vmatprep.subr.mxu0 0.0
    %4731 = vmatpush2.xpose.msra.mxu0 0.0
    %4732 = vmatprep.subr.mxu0 0.0
    %4733 = vmatpush2.xpose.msra.mxu0 0.0
    %4734 = vmatprep.subr.mxu0 0.0
    %4735 = vmatpush2.xpose.msra.mxu0 0.0
    %4736 = vmatprep.subr.mxu0 0.0
    %4737 = vmatpush2.xpose.msra.mxu0 0.0
    %4738 = vmatprep.subr.mxu0 0.0
    %4739 = vmatpush2.xpose.msra.mxu0 0.0
    %4740 = vmatprep.subr.mxu0 0.0
    %4741 = vmatpush2.xpose.msra.mxu0 0.0
    %4742 = vmatprep.subr.mxu0 0.0
    %4743 = vmatpush2.xpose.msra.mxu0 0.0
    %4744 = vmatprep.subr.mxu0 0.0
    %4745 = vmatpush2.xpose.msra.mxu0 0.0
    %4746 = vmatprep.subr.mxu0 0.0
    %4747 = vmatpush2.xpose.msra.mxu0 0.0
    %4748 = vmatprep.mubr.f32.mxu0 0.0
    %v4749 = vand.u32 %v4305, 4294901760
    %4750 = vmatmul.mubr.f32.gmra.mxu0 %v4749
    %v4751 = vpop.f32.mrf.mxu0
    %v4752 = vadd.f32 %v4680, %v4751
    %v4753 = vpop.f32.mrf.mxu0
    %4754 = vdwg.mxu0
    %v4755 = vmul.f32 %v4752, 0.35355338
    %v4756 = vsel %vm610, %v4755, -inf
    %4757 = vmax.xlane.f32.xlu0 %v4756
    %v4758 = vpop.xlane.xlu0 %4757
    %v4759 = vsub.f32 %v4755, %v4758
    %v4760 = vmul.f32 %v4759, 1.442695
    %v4761 = vpow.pop %v4760
    %v4762 = vsel %vm610, %v4761, 0.0
    %4763 = vadd.xlane.f32.xlu0 %v4762
    %v4764 = vpop.xlane.xlu0 %4763
    %v4765 = vrcp.pop %v4764
    %v4766 = vmul.f32 1.0, %v4765
    %v4767 = vmul.f32 %v4761, %v4766
    %4768 = vrot.lane.b32.xlu0 %v604, 64
    %v4769 = vpop.permute.xlu0 %4768
    %v4772 = vsel %vm610, %v4767, 0
    %4774 = vmatprep.subr.mxu0 0.0
    %4775 = vmatpush1.msra.mxu0 0.0
    %4776 = vmatprep.subr.mxu0 0.0
    %4777 = vmatpush1.msra.mxu0 0.0
    %4778 = vmatprep.subr.mxu0 0.0
    %4779 = vmatpush1.msra.mxu0 0.0
    %4780 = vmatprep.subr.mxu0 0.0
    %4781 = vmatpush1.msra.mxu0 0.0
    %4782 = vmatprep.subr.mxu0 0.0
    %4783 = vmatpush1.msra.mxu0 0.0
    %4784 = vmatprep.subr.mxu0 0.0
    %4785 = vmatpush1.msra.mxu0 0.0
    %4786 = vmatprep.subr.mxu0 0.0
    %4787 = vmatpush1.msra.mxu0 0.0
    %4788 = vmatprep.subr.mxu0 0.0
    %4789 = vmatpush1.msra.mxu0 0.0
    %4790 = vmatprep.subr.mxu0 0.0
    %4791 = vmatpush1.msra.mxu0 0.0
    %4792 = vmatprep.subr.mxu0 0.0
    %4793 = vmatpush1.msra.mxu0 0.0
    %4794 = vmatprep.subr.mxu0 0.0
    %4795 = vmatpush1.msra.mxu0 0.0
    %4796 = vmatprep.subr.mxu0 0.0
    %4797 = vmatpush1.msra.mxu0 0.0
    %4798 = vmatprep.subr.mxu0 0.0
    %4799 = vmatpush1.msra.mxu0 0.0
    %4800 = vmatprep.subr.mxu0 0.0
    %4801 = vmatpush1.msra.mxu0 0.0
    %4802 = vmatprep.subr.mxu0 0.0
    %4803 = vmatpush1.msra.mxu0 0.0
    %4804 = vmatprep.subr.mxu0 0.0
    %v4805 = vand.u32 %v4769, 4294901760
    %4806 = vmatpush1.msra.mxu0 %v4805
    %4807 = vmatprep.subr.mxu0 0.0
    %4808 = vmatpush2.msra.mxu0 0.0
    %4809 = vmatprep.subr.mxu0 0.0
    %4810 = vmatpush2.msra.mxu0 0.0
    %4811 = vmatprep.subr.mxu0 0.0
    %4812 = vmatpush2.msra.mxu0 0.0
    %4813 = vmatprep.subr.mxu0 0.0
    %4814 = vmatpush2.msra.mxu0 0.0
    %4815 = vmatprep.subr.mxu0 0.0
    %4816 = vmatpush2.msra.mxu0 0.0
    %4817 = vmatprep.subr.mxu0 0.0
    %4818 = vmatpush2.msra.mxu0 0.0
    %4819 = vmatprep.subr.mxu0 0.0
    %4820 = vmatpush2.msra.mxu0 0.0
    %4821 = vmatprep.subr.mxu0 0.0
    %4822 = vmatpush2.msra.mxu0 0.0
    %4823 = vmatprep.subr.mxu0 0.0
    %4824 = vmatpush2.msra.mxu0 0.0
    %4825 = vmatprep.subr.mxu0 0.0
    %4826 = vmatpush2.msra.mxu0 0.0
    %4827 = vmatprep.subr.mxu0 0.0
    %4828 = vmatpush2.msra.mxu0 0.0
    %4829 = vmatprep.subr.mxu0 0.0
    %4830 = vmatpush2.msra.mxu0 0.0
    %4831 = vmatprep.subr.mxu0 0.0
    %4832 = vmatpush2.msra.mxu0 0.0
    %4833 = vmatprep.subr.mxu0 0.0
    %4834 = vmatpush2.msra.mxu0 0.0
    %4835 = vmatprep.subr.mxu0 0.0
    %4836 = vmatpush2.msra.mxu0 0.0
    %4837 = vmatprep.subr.mxu0 0.0
    %4838 = vmatpush2.msra.mxu0 0.0
    %4839 = vmatprep.mubr.f32.mxu0 0.0
    %v4840 = vand.u32 %v4772, 4294901760
    %v4841 = vsub.f32 %v4772, %v4840
    %v4842 = vand.u32 %v4841, 4294901760
    %v4843 = vsub.f32 %v4841, %v4842
    %v4844 = vand.u32 %v4843, 4294901760
    %4845 = vmatmul.mubr.f32.gmra.mxu0 %v4844
    %v4846 = vpop.f32.mrf.mxu0
    %v4847 = vadd.f32 0.0, %v4846
    %v4848 = vpop.f32.mrf.mxu0
    %4849 = vdwg.mxu0
    %4850 = vmatprep.subr.mxu0 0.0
    %4851 = vmatpush1.msra.mxu0 0.0
    %4852 = vmatprep.subr.mxu0 0.0
    %4853 = vmatpush1.msra.mxu0 0.0
    %4854 = vmatprep.subr.mxu0 0.0
    %4855 = vmatpush1.msra.mxu0 0.0
    %4856 = vmatprep.subr.mxu0 0.0
    %4857 = vmatpush1.msra.mxu0 0.0
    %4858 = vmatprep.subr.mxu0 0.0
    %4859 = vmatpush1.msra.mxu0 0.0
    %4860 = vmatprep.subr.mxu0 0.0
    %4861 = vmatpush1.msra.mxu0 0.0
    %4862 = vmatprep.subr.mxu0 0.0
    %4863 = vmatpush1.msra.mxu0 0.0
    %4864 = vmatprep.subr.mxu0 0.0
    %4865 = vmatpush1.msra.mxu0 0.0
    %4866 = vmatprep.subr.mxu0 0.0
    %4867 = vmatpush1.msra.mxu0 0.0
    %4868 = vmatprep.subr.mxu0 0.0
    %4869 = vmatpush1.msra.mxu0 0.0
    %4870 = vmatprep.subr.mxu0 0.0
    %4871 = vmatpush1.msra.mxu0 0.0
    %4872 = vmatprep.subr.mxu0 0.0
    %4873 = vmatpush1.msra.mxu0 0.0
    %4874 = vmatprep.subr.mxu0 0.0
    %4875 = vmatpush1.msra.mxu0 0.0
    %4876 = vmatprep.subr.mxu0 0.0
    %4877 = vmatpush1.msra.mxu0 0.0
    %4878 = vmatprep.subr.mxu0 0.0
    %4879 = vmatpush1.msra.mxu0 0.0
    %4880 = vmatprep.subr.mxu0 0.0
    %v4881 = vand.u32 %v4769, 4294901760
    %v4882 = vsub.f32 %v4769, %v4881
    %v4883 = vand.u32 %v4882, 4294901760
    %v4884 = vsub.f32 %v4882, %v4883
    %v4885 = vand.u32 %v4884, 4294901760
    %4886 = vmatpush1.msra.mxu0 %v4885
    %4887 = vmatprep.subr.mxu0 0.0
    %4888 = vmatpush2.msra.mxu0 0.0
    %4889 = vmatprep.subr.mxu0 0.0
    %4890 = vmatpush2.msra.mxu0 0.0
    %4891 = vmatprep.subr.mxu0 0.0
    %4892 = vmatpush2.msra.mxu0 0.0
    %4893 = vmatprep.subr.mxu0 0.0
    %4894 = vmatpush2.msra.mxu0 0.0
    %4895 = vmatprep.subr.mxu0 0.0
    %4896 = vmatpush2.msra.mxu0 0.0
    %4897 = vmatprep.subr.mxu0 0.0
    %4898 = vmatpush2.msra.mxu0 0.0
    %4899 = vmatprep.subr.mxu0 0.0
    %4900 = vmatpush2.msra.mxu0 0.0
    %4901 = vmatprep.subr.mxu0 0.0
    %4902 = vmatpush2.msra.mxu0 0.0
    %4903 = vmatprep.subr.mxu0 0.0
    %4904 = vmatpush2.msra.mxu0 0.0
    %4905 = vmatprep.subr.mxu0 0.0
    %4906 = vmatpush2.msra.mxu0 0.0
    %4907 = vmatprep.subr.mxu0 0.0
    %4908 = vmatpush2.msra.mxu0 0.0
    %4909 = vmatprep.subr.mxu0 0.0
    %4910 = vmatpush2.msra.mxu0 0.0
    %4911 = vmatprep.subr.mxu0 0.0
    %4912 = vmatpush2.msra.mxu0 0.0
    %4913 = vmatprep.subr.mxu0 0.0
    %4914 = vmatpush2.msra.mxu0 0.0
    %4915 = vmatprep.subr.mxu0 0.0
    %4916 = vmatpush2.msra.mxu0 0.0
    %4917 = vmatprep.subr.mxu0 0.0
    %4918 = vmatpush2.msra.mxu0 0.0
    %4919 = vmatprep.mubr.f32.mxu0 0.0
    %v4920 = vand.u32 %v4772, 4294901760
    %4921 = vmatmul.mubr.f32.gmra.mxu0 %v4920
    %v4922 = vpop.f32.mrf.mxu0
    %v4923 = vadd.f32 %v4847, %v4922
    %v4924 = vpop.f32.mrf.mxu0
    %4925 = vdwg.mxu0
    %4926 = vmatprep.subr.mxu0 0.0
    %4927 = vmatpush1.msra.mxu0 0.0
    %4928 = vmatprep.subr.mxu0 0.0
    %4929 = vmatpush1.msra.mxu0 0.0
    %4930 = vmatprep.subr.mxu0 0.0
    %4931 = vmatpush1.msra.mxu0 0.0
    %4932 = vmatprep.subr.mxu0 0.0
    %4933 = vmatpush1.msra.mxu0 0.0
    %4934 = vmatprep.subr.mxu0 0.0
    %4935 = vmatpush1.msra.mxu0 0.0
    %4936 = vmatprep.subr.mxu0 0.0
    %4937 = vmatpush1.msra.mxu0 0.0
    %4938 = vmatprep.subr.mxu0 0.0
    %4939 = vmatpush1.msra.mxu0 0.0
    %4940 = vmatprep.subr.mxu0 0.0
    %4941 = vmatpush1.msra.mxu0 0.0
    %4942 = vmatprep.subr.mxu0 0.0
    %4943 = vmatpush1.msra.mxu0 0.0
    %4944 = vmatprep.subr.mxu0 0.0
    %4945 = vmatpush1.msra.mxu0 0.0
    %4946 = vmatprep.subr.mxu0 0.0
    %4947 = vmatpush1.msra.mxu0 0.0
    %4948 = vmatprep.subr.mxu0 0.0
    %4949 = vmatpush1.msra.mxu0 0.0
    %4950 = vmatprep.subr.mxu0 0.0
    %4951 = vmatpush1.msra.mxu0 0.0
    %4952 = vmatprep.subr.mxu0 0.0
    %4953 = vmatpush1.msra.mxu0 0.0
    %4954 = vmatprep.subr.mxu0 0.0
    %4955 = vmatpush1.msra.mxu0 0.0
    %4956 = vmatprep.subr.mxu0 0.0
    %v4957 = vand.u32 %v4769, 4294901760
    %v4958 = vsub.f32 %v4769, %v4957
    %4959 = vmatpush1.msra.mxu0 %v4958
    %4960 = vmatprep.subr.mxu0 0.0
    %4961 = vmatpush2.msra.mxu0 0.0
    %4962 = vmatprep.subr.mxu0 0.0
    %4963 = vmatpush2.msra.mxu0 0.0
    %4964 = vmatprep.subr.mxu0 0.0
    %4965 = vmatpush2.msra.mxu0 0.0
    %4966 = vmatprep.subr.mxu0 0.0
    %4967 = vmatpush2.msra.mxu0 0.0
    %4968 = vmatprep.subr.mxu0 0.0
    %4969 = vmatpush2.msra.mxu0 0.0
    %4970 = vmatprep.subr.mxu0 0.0
    %4971 = vmatpush2.msra.mxu0 0.0
    %4972 = vmatprep.subr.mxu0 0.0
    %4973 = vmatpush2.msra.mxu0 0.0
    %4974 = vmatprep.subr.mxu0 0.0
    %4975 = vmatpush2.msra.mxu0 0.0
    %4976 = vmatprep.subr.mxu0 0.0
    %4977 = vmatpush2.msra.mxu0 0.0
    %4978 = vmatprep.subr.mxu0 0.0
    %4979 = vmatpush2.msra.mxu0 0.0
    %4980 = vmatprep.subr.mxu0 0.0
    %4981 = vmatpush2.msra.mxu0 0.0
    %4982 = vmatprep.subr.mxu0 0.0
    %4983 = vmatpush2.msra.mxu0 0.0
    %4984 = vmatprep.subr.mxu0 0.0
    %4985 = vmatpush2.msra.mxu0 0.0
    %4986 = vmatprep.subr.mxu0 0.0
    %4987 = vmatpush2.msra.mxu0 0.0
    %4988 = vmatprep.subr.mxu0 0.0
    %4989 = vmatpush2.msra.mxu0 0.0
    %4990 = vmatprep.subr.mxu0 0.0
    %4991 = vmatpush2.msra.mxu0 0.0
    %4992 = vmatprep.mubr.f32.mxu0 0.0
    %v4993 = vand.u32 %v4772, 4294901760
    %v4994 = vsub.f32 %v4772, %v4993
    %4995 = vmatmul.mubr.f32.gmra.mxu0 %v4994
    %v4996 = vpop.f32.mrf.mxu0
    %v4997 = vadd.f32 %v4923, %v4996
    %v4998 = vpop.f32.mrf.mxu0
    %4999 = vdwg.mxu0
    %5000 = vmatprep.subr.mxu0 0.0
    %5001 = vmatpush1.msra.mxu0 0.0
    %5002 = vmatprep.subr.mxu0 0.0
    %5003 = vmatpush1.msra.mxu0 0.0
    %5004 = vmatprep.subr.mxu0 0.0
    %5005 = vmatpush1.msra.mxu0 0.0
    %5006 = vmatprep.subr.mxu0 0.0
    %5007 = vmatpush1.msra.mxu0 0.0
    %5008 = vmatprep.subr.mxu0 0.0
    %5009 = vmatpush1.msra.mxu0 0.0
    %5010 = vmatprep.subr.mxu0 0.0
    %5011 = vmatpush1.msra.mxu0 0.0
    %5012 = vmatprep.subr.mxu0 0.0
    %5013 = vmatpush1.msra.mxu0 0.0
    %5014 = vmatprep.subr.mxu0 0.0
    %5015 = vmatpush1.msra.mxu0 0.0
    %5016 = vmatprep.subr.mxu0 0.0
    %5017 = vmatpush1.msra.mxu0 0.0
    %5018 = vmatprep.subr.mxu0 0.0
    %5019 = vmatpush1.msra.mxu0 0.0
    %5020 = vmatprep.subr.mxu0 0.0
    %5021 = vmatpush1.msra.mxu0 0.0
    %5022 = vmatprep.subr.mxu0 0.0
    %5023 = vmatpush1.msra.mxu0 0.0
    %5024 = vmatprep.subr.mxu0 0.0
    %5025 = vmatpush1.msra.mxu0 0.0
    %5026 = vmatprep.subr.mxu0 0.0
    %5027 = vmatpush1.msra.mxu0 0.0
    %5028 = vmatprep.subr.mxu0 0.0
    %5029 = vmatpush1.msra.mxu0 0.0
    %5030 = vmatprep.subr.mxu0 0.0
    %v5031 = vand.u32 %v4769, 4294901760
    %5032 = vmatpush1.msra.mxu0 %v5031
    %5033 = vmatprep.subr.mxu0 0.0
    %5034 = vmatpush2.msra.mxu0 0.0
    %5035 = vmatprep.subr.mxu0 0.0
    %5036 = vmatpush2.msra.mxu0 0.0
    %5037 = vmatprep.subr.mxu0 0.0
    %5038 = vmatpush2.msra.mxu0 0.0
    %5039 = vmatprep.subr.mxu0 0.0
    %5040 = vmatpush2.msra.mxu0 0.0
    %5041 = vmatprep.subr.mxu0 0.0
    %5042 = vmatpush2.msra.mxu0 0.0
    %5043 = vmatprep.subr.mxu0 0.0
    %5044 = vmatpush2.msra.mxu0 0.0
    %5045 = vmatprep.subr.mxu0 0.0
    %5046 = vmatpush2.msra.mxu0 0.0
    %5047 = vmatprep.subr.mxu0 0.0
    %5048 = vmatpush2.msra.mxu0 0.0
    %5049 = vmatprep.subr.mxu0 0.0
    %5050 = vmatpush2.msra.mxu0 0.0
    %5051 = vmatprep.subr.mxu0 0.0
    %5052 = vmatpush2.msra.mxu0 0.0
    %5053 = vmatprep.subr.mxu0 0.0
    %5054 = vmatpush2.msra.mxu0 0.0
    %5055 = vmatprep.subr.mxu0 0.0
    %5056 = vmatpush2.msra.mxu0 0.0
    %5057 = vmatprep.subr.mxu0 0.0
    %5058 = vmatpush2.msra.mxu0 0.0
    %5059 = vmatprep.subr.mxu0 0.0
    %5060 = vmatpush2.msra.mxu0 0.0
    %5061 = vmatprep.subr.mxu0 0.0
    %5062 = vmatpush2.msra.mxu0 0.0
    %5063 = vmatprep.subr.mxu0 0.0
    %5064 = vmatpush2.msra.mxu0 0.0
    %5065 = vmatprep.mubr.f32.mxu0 0.0
    %v5066 = vand.u32 %v4772, 4294901760
    %v5067 = vsub.f32 %v4772, %v5066
    %v5068 = vand.u32 %v5067, 4294901760
    %5069 = vmatmul.mubr.f32.gmra.mxu0 %v5068
    %v5070 = vpop.f32.mrf.mxu0
    %v5071 = vadd.f32 %v4997, %v5070
    %v5072 = vpop.f32.mrf.mxu0
    %5073 = vdwg.mxu0
    %5074 = vmatprep.subr.mxu0 0.0
    %5075 = vmatpush1.msra.mxu0 0.0
    %5076 = vmatprep.subr.mxu0 0.0
    %5077 = vmatpush1.msra.mxu0 0.0
    %5078 = vmatprep.subr.mxu0 0.0
    %5079 = vmatpush1.msra.mxu0 0.0
    %5080 = vmatprep.subr.mxu0 0.0
    %5081 = vmatpush1.msra.mxu0 0.0
    %5082 = vmatprep.subr.mxu0 0.0
    %5083 = vmatpush1.msra.mxu0 0.0
    %5084 = vmatprep.subr.mxu0 0.0
    %5085 = vmatpush1.msra.mxu0 0.0
    %5086 = vmatprep.subr.mxu0 0.0
    %5087 = vmatpush1.msra.mxu0 0.0
    %5088 = vmatprep.subr.mxu0 0.0
    %5089 = vmatpush1.msra.mxu0 0.0
    %5090 = vmatprep.subr.mxu0 0.0
    %5091 = vmatpush1.msra.mxu0 0.0
    %5092 = vmatprep.subr.mxu0 0.0
    %5093 = vmatpush1.msra.mxu0 0.0
    %5094 = vmatprep.subr.mxu0 0.0
    %5095 = vmatpush1.msra.mxu0 0.0
    %5096 = vmatprep.subr.mxu0 0.0
    %5097 = vmatpush1.msra.mxu0 0.0
    %5098 = vmatprep.subr.mxu0 0.0
    %5099 = vmatpush1.msra.mxu0 0.0
    %5100 = vmatprep.subr.mxu0 0.0
    %5101 = vmatpush1.msra.mxu0 0.0
    %5102 = vmatprep.subr.mxu0 0.0
    %5103 = vmatpush1.msra.mxu0 0.0
    %5104 = vmatprep.subr.mxu0 0.0
    %v5105 = vand.u32 %v4769, 4294901760
    %v5106 = vsub.f32 %v4769, %v5105
    %v5107 = vand.u32 %v5106, 4294901760
    %5108 = vmatpush1.msra.mxu0 %v5107
    %5109 = vmatprep.subr.mxu0 0.0
    %5110 = vmatpush2.msra.mxu0 0.0
    %5111 = vmatprep.subr.mxu0 0.0
    %5112 = vmatpush2.msra.mxu0 0.0
    %5113 = vmatprep.subr.mxu0 0.0
    %5114 = vmatpush2.msra.mxu0 0.0
    %5115 = vmatprep.subr.mxu0 0.0
    %5116 = vmatpush2.msra.mxu0 0.0
    %5117 = vmatprep.subr.mxu0 0.0
    %5118 = vmatpush2.msra.mxu0 0.0
    %5119 = vmatprep.subr.mxu0 0.0
    %5120 = vmatpush2.msra.mxu0 0.0
    %5121 = vmatprep.subr.mxu0 0.0
    %5122 = vmatpush2.msra.mxu0 0.0
    %5123 = vmatprep.subr.mxu0 0.0
    %5124 = vmatpush2.msra.mxu0 0.0
    %5125 = vmatprep.subr.mxu0 0.0
    %5126 = vmatpush2.msra.mxu0 0.0
    %5127 = vmatprep.subr.mxu0 0.0
    %5128 = vmatpush2.msra.mxu0 0.0
    %5129 = vmatprep.subr.mxu0 0.0
    %5130 = vmatpush2.msra.mxu0 0.0
    %5131 = vmatprep.subr.mxu0 0.0
    %5132 = vmatpush2.msra.mxu0 0.0
    %5133 = vmatprep.subr.mxu0 0.0
    %5134 = vmatpush2.msra.mxu0 0.0
    %5135 = vmatprep.subr.mxu0 0.0
    %5136 = vmatpush2.msra.mxu0 0.0
    %5137 = vmatprep.subr.mxu0 0.0
    %5138 = vmatpush2.msra.mxu0 0.0
    %5139 = vmatprep.subr.mxu0 0.0
    %5140 = vmatpush2.msra.mxu0 0.0
    %5141 = vmatprep.mubr.f32.mxu0 0.0
    %v5142 = vand.u32 %v4772, 4294901760
    %5143 = vmatmul.mubr.f32.gmra.mxu0 %v5142
    %v5144 = vpop.f32.mrf.mxu0
    %v5145 = vadd.f32 %v5071, %v5144
    %v5146 = vpop.f32.mrf.mxu0
    %5147 = vdwg.mxu0
    %5148 = vmatprep.subr.mxu0 0.0
    %5149 = vmatpush1.msra.mxu0 0.0
    %5150 = vmatprep.subr.mxu0 0.0
    %5151 = vmatpush1.msra.mxu0 0.0
    %5152 = vmatprep.subr.mxu0 0.0
    %5153 = vmatpush1.msra.mxu0 0.0
    %5154 = vmatprep.subr.mxu0 0.0
    %5155 = vmatpush1.msra.mxu0 0.0
    %5156 = vmatprep.subr.mxu0 0.0
    %5157 = vmatpush1.msra.mxu0 0.0
    %5158 = vmatprep.subr.mxu0 0.0
    %5159 = vmatpush1.msra.mxu0 0.0
    %5160 = vmatprep.subr.mxu0 0.0
    %5161 = vmatpush1.msra.mxu0 0.0
    %5162 = vmatprep.subr.mxu0 0.0
    %5163 = vmatpush1.msra.mxu0 0.0
    %5164 = vmatprep.subr.mxu0 0.0
    %5165 = vmatpush1.msra.mxu0 0.0
    %5166 = vmatprep.subr.mxu0 0.0
    %5167 = vmatpush1.msra.mxu0 0.0
    %5168 = vmatprep.subr.mxu0 0.0
    %5169 = vmatpush1.msra.mxu0 0.0
    %5170 = vmatprep.subr.mxu0 0.0
    %5171 = vmatpush1.msra.mxu0 0.0
    %5172 = vmatprep.subr.mxu0 0.0
    %5173 = vmatpush1.msra.mxu0 0.0
    %5174 = vmatprep.subr.mxu0 0.0
    %5175 = vmatpush1.msra.mxu0 0.0
    %5176 = vmatprep.subr.mxu0 0.0
    %5177 = vmatpush1.msra.mxu0 0.0
    %5178 = vmatprep.subr.mxu0 0.0
    %v5179 = vand.u32 %v4769, 4294901760
    %5180 = vmatpush1.msra.mxu0 %v5179
    %5181 = vmatprep.subr.mxu0 0.0
    %5182 = vmatpush2.msra.mxu0 0.0
    %5183 = vmatprep.subr.mxu0 0.0
    %5184 = vmatpush2.msra.mxu0 0.0
    %5185 = vmatprep.subr.mxu0 0.0
    %5186 = vmatpush2.msra.mxu0 0.0
    %5187 = vmatprep.subr.mxu0 0.0
    %5188 = vmatpush2.msra.mxu0 0.0
    %5189 = vmatprep.subr.mxu0 0.0
    %5190 = vmatpush2.msra.mxu0 0.0
    %5191 = vmatprep.subr.mxu0 0.0
    %5192 = vmatpush2.msra.mxu0 0.0
    %5193 = vmatprep.subr.mxu0 0.0
    %5194 = vmatpush2.msra.mxu0 0.0
    %5195 = vmatprep.subr.mxu0 0.0
    %5196 = vmatpush2.msra.mxu0 0.0
    %5197 = vmatprep.subr.mxu0 0.0
    %5198 = vmatpush2.msra.mxu0 0.0
    %5199 = vmatprep.subr.mxu0 0.0
    %5200 = vmatpush2.msra.mxu0 0.0
    %5201 = vmatprep.subr.mxu0 0.0
    %5202 = vmatpush2.msra.mxu0 0.0
    %5203 = vmatprep.subr.mxu0 0.0
    %5204 = vmatpush2.msra.mxu0 0.0
    %5205 = vmatprep.subr.mxu0 0.0
    %5206 = vmatpush2.msra.mxu0 0.0
    %5207 = vmatprep.subr.mxu0 0.0
    %5208 = vmatpush2.msra.mxu0 0.0
    %5209 = vmatprep.subr.mxu0 0.0
    %5210 = vmatpush2.msra.mxu0 0.0
    %5211 = vmatprep.subr.mxu0 0.0
    %5212 = vmatpush2.msra.mxu0 0.0
    %5213 = vmatprep.mubr.f32.mxu0 0.0
    %v5214 = vand.u32 %v4772, 4294901760
    %5215 = vmatmul.mubr.f32.gmra.mxu0 %v5214
    %v5216 = vpop.f32.mrf.mxu0
    %v5217 = vadd.f32 %v5145, %v5216
    %v5218 = vpop.f32.mrf.mxu0
    %5219 = vdwg.mxu0
    %5220 = vst.msk [vmem:[#allocation2 + $0x8] sm:$0xff] %vm610, %v5217
    %5221 = vrot.lane.b32.xlu0 %v604, 120
    %v5222 = vpop.permute.xlu0 %5221
    %5223 = vrot.lane.b32.xlu0 %v604, 88
    %v5224 = vpop.permute.xlu0 %5223
    %v5225 = vsel %vm610, %v5222, 0
    %v5227 = vsel %vm610, %v5224, 0
    %5229 = vmatprep.subr.mxu0 0.0
    %5230 = vmatpush1.xpose.msra.mxu0 0.0
    %5231 = vmatprep.subr.mxu0 0.0
    %5232 = vmatpush1.xpose.msra.mxu0 0.0
    %5233 = vmatprep.subr.mxu0 0.0
    %5234 = vmatpush1.xpose.msra.mxu0 0.0
    %5235 = vmatprep.subr.mxu0 0.0
    %5236 = vmatpush1.xpose.msra.mxu0 0.0
    %5237 = vmatprep.subr.mxu0 0.0
    %5238 = vmatpush1.xpose.msra.mxu0 0.0
    %5239 = vmatprep.subr.mxu0 0.0
    %5240 = vmatpush1.xpose.msra.mxu0 0.0
    %5241 = vmatprep.subr.mxu0 0.0
    %5242 = vmatpush1.xpose.msra.mxu0 0.0
    %5243 = vmatprep.subr.mxu0 0.0
    %5244 = vmatpush1.xpose.msra.mxu0 0.0
    %5245 = vmatprep.subr.mxu0 0.0
    %5246 = vmatpush1.xpose.msra.mxu0 0.0
    %5247 = vmatprep.subr.mxu0 0.0
    %5248 = vmatpush1.xpose.msra.mxu0 0.0
    %5249 = vmatprep.subr.mxu0 0.0
    %5250 = vmatpush1.xpose.msra.mxu0 0.0
    %5251 = vmatprep.subr.mxu0 0.0
    %5252 = vmatpush1.xpose.msra.mxu0 0.0
    %5253 = vmatprep.subr.mxu0 0.0
    %5254 = vmatpush1.xpose.msra.mxu0 0.0
    %5255 = vmatprep.subr.mxu0 0.0
    %5256 = vmatpush1.xpose.msra.mxu0 0.0
    %5257 = vmatprep.subr.mxu0 0.0
    %5258 = vmatpush1.xpose.msra.mxu0 0.0
    %5259 = vmatprep.subr.mxu0 0.0
    %v5260 = vand.u32 %v5227, 4294901760
    %5261 = vmatpush1.xpose.msra.mxu0 %v5260
    %5262 = vmatprep.subr.mxu0 0.0
    %5263 = vmatpush2.xpose.msra.mxu0 0.0
    %5264 = vmatprep.subr.mxu0 0.0
    %5265 = vmatpush2.xpose.msra.mxu0 0.0
    %5266 = vmatprep.subr.mxu0 0.0
    %5267 = vmatpush2.xpose.msra.mxu0 0.0
    %5268 = vmatprep.subr.mxu0 0.0
    %5269 = vmatpush2.xpose.msra.mxu0 0.0
    %5270 = vmatprep.subr.mxu0 0.0
    %5271 = vmatpush2.xpose.msra.mxu0 0.0
    %5272 = vmatprep.subr.mxu0 0.0
    %5273 = vmatpush2.xpose.msra.mxu0 0.0
    %5274 = vmatprep.subr.mxu0 0.0
    %5275 = vmatpush2.xpose.msra.mxu0 0.0
    %5276 = vmatprep.subr.mxu0 0.0
    %5277 = vmatpush2.xpose.msra.mxu0 0.0
    %5278 = vmatprep.subr.mxu0 0.0
    %5279 = vmatpush2.xpose.msra.mxu0 0.0
    %5280 = vmatprep.subr.mxu0 0.0
    %5281 = vmatpush2.xpose.msra.mxu0 0.0
    %5282 = vmatprep.subr.mxu0 0.0
    %5283 = vmatpush2.xpose.msra.mxu0 0.0
    %5284 = vmatprep.subr.mxu0 0.0
    %5285 = vmatpush2.xpose.msra.mxu0 0.0
    %5286 = vmatprep.subr.mxu0 0.0
    %5287 = vmatpush2.xpose.msra.mxu0 0.0
    %5288 = vmatprep.subr.mxu0 0.0
    %5289 = vmatpush2.xpose.msra.mxu0 0.0
    %5290 = vmatprep.subr.mxu0 0.0
    %5291 = vmatpush2.xpose.msra.mxu0 0.0
    %5292 = vmatprep.subr.mxu0 0.0
    %5293 = vmatpush2.xpose.msra.mxu0 0.0
    %5294 = vmatprep.mubr.f32.mxu0 0.0
    %v5295 = vand.u32 %v5225, 4294901760
    %v5296 = vsub.f32 %v5225, %v5295
    %v5297 = vand.u32 %v5296, 4294901760
    %v5298 = vsub.f32 %v5296, %v5297
    %v5299 = vand.u32 %v5298, 4294901760
    %5300 = vmatmul.mubr.f32.gmra.mxu0 %v5299
    %v5301 = vpop.f32.mrf.mxu0
    %v5302 = vadd.f32 0.0, %v5301
    %v5303 = vpop.f32.mrf.mxu0
    %5304 = vdwg.mxu0
    %5305 = vmatprep.subr.mxu0 0.0
    %5306 = vmatpush1.xpose.msra.mxu0 0.0
    %5307 = vmatprep.subr.mxu0 0.0
    %5308 = vmatpush1.xpose.msra.mxu0 0.0
    %5309 = vmatprep.subr.mxu0 0.0
    %5310 = vmatpush1.xpose.msra.mxu0 0.0
    %5311 = vmatprep.subr.mxu0 0.0
    %5312 = vmatpush1.xpose.msra.mxu0 0.0
    %5313 = vmatprep.subr.mxu0 0.0
    %5314 = vmatpush1.xpose.msra.mxu0 0.0
    %5315 = vmatprep.subr.mxu0 0.0
    %5316 = vmatpush1.xpose.msra.mxu0 0.0
    %5317 = vmatprep.subr.mxu0 0.0
    %5318 = vmatpush1.xpose.msra.mxu0 0.0
    %5319 = vmatprep.subr.mxu0 0.0
    %5320 = vmatpush1.xpose.msra.mxu0 0.0
    %5321 = vmatprep.subr.mxu0 0.0
    %5322 = vmatpush1.xpose.msra.mxu0 0.0
    %5323 = vmatprep.subr.mxu0 0.0
    %5324 = vmatpush1.xpose.msra.mxu0 0.0
    %5325 = vmatprep.subr.mxu0 0.0
    %5326 = vmatpush1.xpose.msra.mxu0 0.0
    %5327 = vmatprep.subr.mxu0 0.0
    %5328 = vmatpush1.xpose.msra.mxu0 0.0
    %5329 = vmatprep.subr.mxu0 0.0
    %5330 = vmatpush1.xpose.msra.mxu0 0.0
    %5331 = vmatprep.subr.mxu0 0.0
    %5332 = vmatpush1.xpose.msra.mxu0 0.0
    %5333 = vmatprep.subr.mxu0 0.0
    %5334 = vmatpush1.xpose.msra.mxu0 0.0
    %5335 = vmatprep.subr.mxu0 0.0
    %v5336 = vand.u32 %v5227, 4294901760
    %v5337 = vsub.f32 %v5227, %v5336
    %v5338 = vand.u32 %v5337, 4294901760
    %v5339 = vsub.f32 %v5337, %v5338
    %v5340 = vand.u32 %v5339, 4294901760
    %5341 = vmatpush1.xpose.msra.mxu0 %v5340
    %5342 = vmatprep.subr.mxu0 0.0
    %5343 = vmatpush2.xpose.msra.mxu0 0.0
    %5344 = vmatprep.subr.mxu0 0.0
    %5345 = vmatpush2.xpose.msra.mxu0 0.0
    %5346 = vmatprep.subr.mxu0 0.0
    %5347 = vmatpush2.xpose.msra.mxu0 0.0
    %5348 = vmatprep.subr.mxu0 0.0
    %5349 = vmatpush2.xpose.msra.mxu0 0.0
    %5350 = vmatprep.subr.mxu0 0.0
    %5351 = vmatpush2.xpose.msra.mxu0 0.0
    %5352 = vmatprep.subr.mxu0 0.0
    %5353 = vmatpush2.xpose.msra.mxu0 0.0
    %5354 = vmatprep.subr.mxu0 0.0
    %5355 = vmatpush2.xpose.msra.mxu0 0.0
    %5356 = vmatprep.subr.mxu0 0.0
    %5357 = vmatpush2.xpose.msra.mxu0 0.0
    %5358 = vmatprep.subr.mxu0 0.0
    %5359 = vmatpush2.xpose.msra.mxu0 0.0
    %5360 = vmatprep.subr.mxu0 0.0
    %5361 = vmatpush2.xpose.msra.mxu0 0.0
    %5362 = vmatprep.subr.mxu0 0.0
    %5363 = vmatpush2.xpose.msra.mxu0 0.0
    %5364 = vmatprep.subr.mxu0 0.0
    %5365 = vmatpush2.xpose.msra.mxu0 0.0
    %5366 = vmatprep.subr.mxu0 0.0
    %5367 = vmatpush2.xpose.msra.mxu0 0.0
    %5368 = vmatprep.subr.mxu0 0.0
    %5369 = vmatpush2.xpose.msra.mxu0 0.0
    %5370 = vmatprep.subr.mxu0 0.0
    %5371 = vmatpush2.xpose.msra.mxu0 0.0
    %5372 = vmatprep.subr.mxu0 0.0
    %5373 = vmatpush2.xpose.msra.mxu0 0.0
    %5374 = vmatprep.mubr.f32.mxu0 0.0
    %v5375 = vand.u32 %v5225, 4294901760
    %5376 = vmatmul.mubr.f32.gmra.mxu0 %v5375
    %v5377 = vpop.f32.mrf.mxu0
    %v5378 = vadd.f32 %v5302, %v5377
    %v5379 = vpop.f32.mrf.mxu0
    %5380 = vdwg.mxu0
    %5381 = vmatprep.subr.mxu0 0.0
    %5382 = vmatpush1.xpose.msra.mxu0 0.0
    %5383 = vmatprep.subr.mxu0 0.0
    %5384 = vmatpush1.xpose.msra.mxu0 0.0
    %5385 = vmatprep.subr.mxu0 0.0
    %5386 = vmatpush1.xpose.msra.mxu0 0.0
    %5387 = vmatprep.subr.mxu0 0.0
    %5388 = vmatpush1.xpose.msra.mxu0 0.0
    %5389 = vmatprep.subr.mxu0 0.0
    %5390 = vmatpush1.xpose.msra.mxu0 0.0
    %5391 = vmatprep.subr.mxu0 0.0
    %5392 = vmatpush1.xpose.msra.mxu0 0.0
    %5393 = vmatprep.subr.mxu0 0.0
    %5394 = vmatpush1.xpose.msra.mxu0 0.0
    %5395 = vmatprep.subr.mxu0 0.0
    %5396 = vmatpush1.xpose.msra.mxu0 0.0
    %5397 = vmatprep.subr.mxu0 0.0
    %5398 = vmatpush1.xpose.msra.mxu0 0.0
    %5399 = vmatprep.subr.mxu0 0.0
    %5400 = vmatpush1.xpose.msra.mxu0 0.0
    %5401 = vmatprep.subr.mxu0 0.0
    %5402 = vmatpush1.xpose.msra.mxu0 0.0
    %5403 = vmatprep.subr.mxu0 0.0
    %5404 = vmatpush1.xpose.msra.mxu0 0.0
    %5405 = vmatprep.subr.mxu0 0.0
    %5406 = vmatpush1.xpose.msra.mxu0 0.0
    %5407 = vmatprep.subr.mxu0 0.0
    %5408 = vmatpush1.xpose.msra.mxu0 0.0
    %5409 = vmatprep.subr.mxu0 0.0
    %5410 = vmatpush1.xpose.msra.mxu0 0.0
    %5411 = vmatprep.subr.mxu0 0.0
    %v5412 = vand.u32 %v5227, 4294901760
    %v5413 = vsub.f32 %v5227, %v5412
    %5414 = vmatpush1.xpose.msra.mxu0 %v5413
    %5415 = vmatprep.subr.mxu0 0.0
    %5416 = vmatpush2.xpose.msra.mxu0 0.0
    %5417 = vmatprep.subr.mxu0 0.0
    %5418 = vmatpush2.xpose.msra.mxu0 0.0
    %5419 = vmatprep.subr.mxu0 0.0
    %5420 = vmatpush2.xpose.msra.mxu0 0.0
    %5421 = vmatprep.subr.mxu0 0.0
    %5422 = vmatpush2.xpose.msra.mxu0 0.0
    %5423 = vmatprep.subr.mxu0 0.0
    %5424 = vmatpush2.xpose.msra.mxu0 0.0
    %5425 = vmatprep.subr.mxu0 0.0
    %5426 = vmatpush2.xpose.msra.mxu0 0.0
    %5427 = vmatprep.subr.mxu0 0.0
    %5428 = vmatpush2.xpose.msra.mxu0 0.0
    %5429 = vmatprep.subr.mxu0 0.0
    %5430 = vmatpush2.xpose.msra.mxu0 0.0
    %5431 = vmatprep.subr.mxu0 0.0
    %5432 = vmatpush2.xpose.msra.mxu0 0.0
    %5433 = vmatprep.subr.mxu0 0.0
    %5434 = vmatpush2.xpose.msra.mxu0 0.0
    %5435 = vmatprep.subr.mxu0 0.0
    %5436 = vmatpush2.xpose.msra.mxu0 0.0
    %5437 = vmatprep.subr.mxu0 0.0
    %5438 = vmatpush2.xpose.msra.mxu0 0.0
    %5439 = vmatprep.subr.mxu0 0.0
    %5440 = vmatpush2.xpose.msra.mxu0 0.0
    %5441 = vmatprep.subr.mxu0 0.0
    %5442 = vmatpush2.xpose.msra.mxu0 0.0
    %5443 = vmatprep.subr.mxu0 0.0
    %5444 = vmatpush2.xpose.msra.mxu0 0.0
    %5445 = vmatprep.subr.mxu0 0.0
    %5446 = vmatpush2.xpose.msra.mxu0 0.0
    %5447 = vmatprep.mubr.f32.mxu0 0.0
    %v5448 = vand.u32 %v5225, 4294901760
    %v5449 = vsub.f32 %v5225, %v5448
    %5450 = vmatmul.mubr.f32.gmra.mxu0 %v5449
    %v5451 = vpop.f32.mrf.mxu0
    %v5452 = vadd.f32 %v5378, %v5451
    %v5453 = vpop.f32.mrf.mxu0
    %5454 = vdwg.mxu0
    %5455 = vmatprep.subr.mxu0 0.0
    %5456 = vmatpush1.xpose.msra.mxu0 0.0
    %5457 = vmatprep.subr.mxu0 0.0
    %5458 = vmatpush1.xpose.msra.mxu0 0.0
    %5459 = vmatprep.subr.mxu0 0.0
    %5460 = vmatpush1.xpose.msra.mxu0 0.0
    %5461 = vmatprep.subr.mxu0 0.0
    %5462 = vmatpush1.xpose.msra.mxu0 0.0
    %5463 = vmatprep.subr.mxu0 0.0
    %5464 = vmatpush1.xpose.msra.mxu0 0.0
    %5465 = vmatprep.subr.mxu0 0.0
    %5466 = vmatpush1.xpose.msra.mxu0 0.0
    %5467 = vmatprep.subr.mxu0 0.0
    %5468 = vmatpush1.xpose.msra.mxu0 0.0
    %5469 = vmatprep.subr.mxu0 0.0
    %5470 = vmatpush1.xpose.msra.mxu0 0.0
    %5471 = vmatprep.subr.mxu0 0.0
    %5472 = vmatpush1.xpose.msra.mxu0 0.0
    %5473 = vmatprep.subr.mxu0 0.0
    %5474 = vmatpush1.xpose.msra.mxu0 0.0
    %5475 = vmatprep.subr.mxu0 0.0
    %5476 = vmatpush1.xpose.msra.mxu0 0.0
    %5477 = vmatprep.subr.mxu0 0.0
    %5478 = vmatpush1.xpose.msra.mxu0 0.0
    %5479 = vmatprep.subr.mxu0 0.0
    %5480 = vmatpush1.xpose.msra.mxu0 0.0
    %5481 = vmatprep.subr.mxu0 0.0
    %5482 = vmatpush1.xpose.msra.mxu0 0.0
    %5483 = vmatprep.subr.mxu0 0.0
    %5484 = vmatpush1.xpose.msra.mxu0 0.0
    %5485 = vmatprep.subr.mxu0 0.0
    %v5486 = vand.u32 %v5227, 4294901760
    %5487 = vmatpush1.xpose.msra.mxu0 %v5486
    %5488 = vmatprep.subr.mxu0 0.0
    %5489 = vmatpush2.xpose.msra.mxu0 0.0
    %5490 = vmatprep.subr.mxu0 0.0
    %5491 = vmatpush2.xpose.msra.mxu0 0.0
    %5492 = vmatprep.subr.mxu0 0.0
    %5493 = vmatpush2.xpose.msra.mxu0 0.0
    %5494 = vmatprep.subr.mxu0 0.0
    %5495 = vmatpush2.xpose.msra.mxu0 0.0
    %5496 = vmatprep.subr.mxu0 0.0
    %5497 = vmatpush2.xpose.msra.mxu0 0.0
    %5498 = vmatprep.subr.mxu0 0.0
    %5499 = vmatpush2.xpose.msra.mxu0 0.0
    %5500 = vmatprep.subr.mxu0 0.0
    %5501 = vmatpush2.xpose.msra.mxu0 0.0
    %5502 = vmatprep.subr.mxu0 0.0
    %5503 = vmatpush2.xpose.msra.mxu0 0.0
    %5504 = vmatprep.subr.mxu0 0.0
    %5505 = vmatpush2.xpose.msra.mxu0 0.0
    %5506 = vmatprep.subr.mxu0 0.0
    %5507 = vmatpush2.xpose.msra.mxu0 0.0
    %5508 = vmatprep.subr.mxu0 0.0
    %5509 = vmatpush2.xpose.msra.mxu0 0.0
    %5510 = vmatprep.subr.mxu0 0.0
    %5511 = vmatpush2.xpose.msra.mxu0 0.0
    %5512 = vmatprep.subr.mxu0 0.0
    %5513 = vmatpush2.xpose.msra.mxu0 0.0
    %5514 = vmatprep.subr.mxu0 0.0
    %5515 = vmatpush2.xpose.msra.mxu0 0.0
    %5516 = vmatprep.subr.mxu0 0.0
    %5517 = vmatpush2.xpose.msra.mxu0 0.0
    %5518 = vmatprep.subr.mxu0 0.0
    %5519 = vmatpush2.xpose.msra.mxu0 0.0
    %5520 = vmatprep.mubr.f32.mxu0 0.0
    %v5521 = vand.u32 %v5225, 4294901760
    %v5522 = vsub.f32 %v5225, %v5521
    %v5523 = vand.u32 %v5522, 4294901760
    %5524 = vmatmul.mubr.f32.gmra.mxu0 %v5523
    %v5525 = vpop.f32.mrf.mxu0
    %v5526 = vadd.f32 %v5452, %v5525
    %v5527 = vpop.f32.mrf.mxu0
    %5528 = vdwg.mxu0
    %5529 = vmatprep.subr.mxu0 0.0
    %5530 = vmatpush1.xpose.msra.mxu0 0.0
    %5531 = vmatprep.subr.mxu0 0.0
    %5532 = vmatpush1.xpose.msra.mxu0 0.0
    %5533 = vmatprep.subr.mxu0 0.0
    %5534 = vmatpush1.xpose.msra.mxu0 0.0
    %5535 = vmatprep.subr.mxu0 0.0
    %5536 = vmatpush1.xpose.msra.mxu0 0.0
    %5537 = vmatprep.subr.mxu0 0.0
    %5538 = vmatpush1.xpose.msra.mxu0 0.0
    %5539 = vmatprep.subr.mxu0 0.0
    %5540 = vmatpush1.xpose.msra.mxu0 0.0
    %5541 = vmatprep.subr.mxu0 0.0
    %5542 = vmatpush1.xpose.msra.mxu0 0.0
    %5543 = vmatprep.subr.mxu0 0.0
    %5544 = vmatpush1.xpose.msra.mxu0 0.0
    %5545 = vmatprep.subr.mxu0 0.0
    %5546 = vmatpush1.xpose.msra.mxu0 0.0
    %5547 = vmatprep.subr.mxu0 0.0
    %5548 = vmatpush1.xpose.msra.mxu0 0.0
    %5549 = vmatprep.subr.mxu0 0.0
    %5550 = vmatpush1.xpose.msra.mxu0 0.0
    %5551 = vmatprep.subr.mxu0 0.0
    %5552 = vmatpush1.xpose.msra.mxu0 0.0
    %5553 = vmatprep.subr.mxu0 0.0
    %5554 = vmatpush1.xpose.msra.mxu0 0.0
    %5555 = vmatprep.subr.mxu0 0.0
    %5556 = vmatpush1.xpose.msra.mxu0 0.0
    %5557 = vmatprep.subr.mxu0 0.0
    %5558 = vmatpush1.xpose.msra.mxu0 0.0
    %5559 = vmatprep.subr.mxu0 0.0
    %v5560 = vand.u32 %v5227, 4294901760
    %v5561 = vsub.f32 %v5227, %v5560
    %v5562 = vand.u32 %v5561, 4294901760
    %5563 = vmatpush1.xpose.msra.mxu0 %v5562
    %5564 = vmatprep.subr.mxu0 0.0
    %5565 = vmatpush2.xpose.msra.mxu0 0.0
    %5566 = vmatprep.subr.mxu0 0.0
    %5567 = vmatpush2.xpose.msra.mxu0 0.0
    %5568 = vmatprep.subr.mxu0 0.0
    %5569 = vmatpush2.xpose.msra.mxu0 0.0
    %5570 = vmatprep.subr.mxu0 0.0
    %5571 = vmatpush2.xpose.msra.mxu0 0.0
    %5572 = vmatprep.subr.mxu0 0.0
    %5573 = vmatpush2.xpose.msra.mxu0 0.0
    %5574 = vmatprep.subr.mxu0 0.0
    %5575 = vmatpush2.xpose.msra.mxu0 0.0
    %5576 = vmatprep.subr.mxu0 0.0
    %5577 = vmatpush2.xpose.msra.mxu0 0.0
    %5578 = vmatprep.subr.mxu0 0.0
    %5579 = vmatpush2.xpose.msra.mxu0 0.0
    %5580 = vmatprep.subr.mxu0 0.0
    %5581 = vmatpush2.xpose.msra.mxu0 0.0
    %5582 = vmatprep.subr.mxu0 0.0
    %5583 = vmatpush2.xpose.msra.mxu0 0.0
    %5584 = vmatprep.subr.mxu0 0.0
    %5585 = vmatpush2.xpose.msra.mxu0 0.0
    %5586 = vmatprep.subr.mxu0 0.0
    %5587 = vmatpush2.xpose.msra.mxu0 0.0
    %5588 = vmatprep.subr.mxu0 0.0
    %5589 = vmatpush2.xpose.msra.mxu0 0.0
    %5590 = vmatprep.subr.mxu0 0.0
    %5591 = vmatpush2.xpose.msra.mxu0 0.0
    %5592 = vmatprep.subr.mxu0 0.0
    %5593 = vmatpush2.xpose.msra.mxu0 0.0
    %5594 = vmatprep.subr.mxu0 0.0
    %5595 = vmatpush2.xpose.msra.mxu0 0.0
    %5596 = vmatprep.mubr.f32.mxu0 0.0
    %v5597 = vand.u32 %v5225, 4294901760
    %5598 = vmatmul.mubr.f32.gmra.mxu0 %v5597
    %v5599 = vpop.f32.mrf.mxu0
    %v5600 = vadd.f32 %v5526, %v5599
    %v5601 = vpop.f32.mrf.mxu0
    %5602 = vdwg.mxu0
    %5603 = vmatprep.subr.mxu0 0.0
    %5604 = vmatpush1.xpose.msra.mxu0 0.0
    %5605 = vmatprep.subr.mxu0 0.0
    %5606 = vmatpush1.xpose.msra.mxu0 0.0
    %5607 = vmatprep.subr.mxu0 0.0
    %5608 = vmatpush1.xpose.msra.mxu0 0.0
    %5609 = vmatprep.subr.mxu0 0.0
    %5610 = vmatpush1.xpose.msra.mxu0 0.0
    %5611 = vmatprep.subr.mxu0 0.0
    %5612 = vmatpush1.xpose.msra.mxu0 0.0
    %5613 = vmatprep.subr.mxu0 0.0
    %5614 = vmatpush1.xpose.msra.mxu0 0.0
    %5615 = vmatprep.subr.mxu0 0.0
    %5616 = vmatpush1.xpose.msra.mxu0 0.0
    %5617 = vmatprep.subr.mxu0 0.0
    %5618 = vmatpush1.xpose.msra.mxu0 0.0
    %5619 = vmatprep.subr.mxu0 0.0
    %5620 = vmatpush1.xpose.msra.mxu0 0.0
    %5621 = vmatprep.subr.mxu0 0.0
    %5622 = vmatpush1.xpose.msra.mxu0 0.0
    %5623 = vmatprep.subr.mxu0 0.0
    %5624 = vmatpush1.xpose.msra.mxu0 0.0
    %5625 = vmatprep.subr.mxu0 0.0
    %5626 = vmatpush1.xpose.msra.mxu0 0.0
    %5627 = vmatprep.subr.mxu0 0.0
    %5628 = vmatpush1.xpose.msra.mxu0 0.0
    %5629 = vmatprep.subr.mxu0 0.0
    %5630 = vmatpush1.xpose.msra.mxu0 0.0
    %5631 = vmatprep.subr.mxu0 0.0
    %5632 = vmatpush1.xpose.msra.mxu0 0.0
    %5633 = vmatprep.subr.mxu0 0.0
    %v5634 = vand.u32 %v5227, 4294901760
    %5635 = vmatpush1.xpose.msra.mxu0 %v5634
    %5636 = vmatprep.subr.mxu0 0.0
    %5637 = vmatpush2.xpose.msra.mxu0 0.0
    %5638 = vmatprep.subr.mxu0 0.0
    %5639 = vmatpush2.xpose.msra.mxu0 0.0
    %5640 = vmatprep.subr.mxu0 0.0
    %5641 = vmatpush2.xpose.msra.mxu0 0.0
    %5642 = vmatprep.subr.mxu0 0.0
    %5643 = vmatpush2.xpose.msra.mxu0 0.0
    %5644 = vmatprep.subr.mxu0 0.0
    %5645 = vmatpush2.xpose.msra.mxu0 0.0
    %5646 = vmatprep.subr.mxu0 0.0
    %5647 = vmatpush2.xpose.msra.mxu0 0.0
    %5648 = vmatprep.subr.mxu0 0.0
    %5649 = vmatpush2.xpose.msra.mxu0 0.0
    %5650 = vmatprep.subr.mxu0 0.0
    %5651 = vmatpush2.xpose.msra.mxu0 0.0
    %5652 = vmatprep.subr.mxu0 0.0
    %5653 = vmatpush2.xpose.msra.mxu0 0.0
    %5654 = vmatprep.subr.mxu0 0.0
    %5655 = vmatpush2.xpose.msra.mxu0 0.0
    %5656 = vmatprep.subr.mxu0 0.0
    %5657 = vmatpush2.xpose.msra.mxu0 0.0
    %5658 = vmatprep.subr.mxu0 0.0
    %5659 = vmatpush2.xpose.msra.mxu0 0.0
    %5660 = vmatprep.subr.mxu0 0.0
    %5661 = vmatpush2.xpose.msra.mxu0 0.0
    %5662 = vmatprep.subr.mxu0 0.0
    %5663 = vmatpush2.xpose.msra.mxu0 0.0
    %5664 = vmatprep.subr.mxu0 0.0
    %5665 = vmatpush2.xpose.msra.mxu0 0.0
    %5666 = vmatprep.subr.mxu0 0.0
    %5667 = vmatpush2.xpose.msra.mxu0 0.0
    %5668 = vmatprep.mubr.f32.mxu0 0.0
    %v5669 = vand.u32 %v5225, 4294901760
    %5670 = vmatmul.mubr.f32.gmra.mxu0 %v5669
    %v5671 = vpop.f32.mrf.mxu0
    %v5672 = vadd.f32 %v5600, %v5671
    %v5673 = vpop.f32.mrf.mxu0
    %5674 = vdwg.mxu0
    %v5675 = vmul.f32 %v5672, 0.35355338
    %v5676 = vsel %vm610, %v5675, -inf
    %5677 = vmax.xlane.f32.xlu0 %v5676
    %v5678 = vpop.xlane.xlu0 %5677
    %v5679 = vsub.f32 %v5675, %v5678
    %v5680 = vmul.f32 %v5679, 1.442695
    %v5681 = vpow.pop %v5680
    %v5682 = vsel %vm610, %v5681, 0.0
    %5683 = vadd.xlane.f32.xlu0 %v5682
    %v5684 = vpop.xlane.xlu0 %5683
    %v5685 = vrcp.pop %v5684
    %v5686 = vmul.f32 1.0, %v5685
    %v5687 = vmul.f32 %v5681, %v5686
    %5688 = vrot.lane.b32.xlu0 %v604, 56
    %v5689 = vpop.permute.xlu0 %5688
    %v5692 = vsel %vm610, %v5687, 0
    %5694 = vmatprep.subr.mxu0 0.0
    %5695 = vmatpush1.msra.mxu0 0.0
    %5696 = vmatprep.subr.mxu0 0.0
    %5697 = vmatpush1.msra.mxu0 0.0
    %5698 = vmatprep.subr.mxu0 0.0
    %5699 = vmatpush1.msra.mxu0 0.0
    %5700 = vmatprep.subr.mxu0 0.0
    %5701 = vmatpush1.msra.mxu0 0.0
    %5702 = vmatprep.subr.mxu0 0.0
    %5703 = vmatpush1.msra.mxu0 0.0
    %5704 = vmatprep.subr.mxu0 0.0
    %5705 = vmatpush1.msra.mxu0 0.0
    %5706 = vmatprep.subr.mxu0 0.0
    %5707 = vmatpush1.msra.mxu0 0.0
    %5708 = vmatprep.subr.mxu0 0.0
    %5709 = vmatpush1.msra.mxu0 0.0
    %5710 = vmatprep.subr.mxu0 0.0
    %5711 = vmatpush1.msra.mxu0 0.0
    %5712 = vmatprep.subr.mxu0 0.0
    %5713 = vmatpush1.msra.mxu0 0.0
    %5714 = vmatprep.subr.mxu0 0.0
    %5715 = vmatpush1.msra.mxu0 0.0
    %5716 = vmatprep.subr.mxu0 0.0
    %5717 = vmatpush1.msra.mxu0 0.0
    %5718 = vmatprep.subr.mxu0 0.0
    %5719 = vmatpush1.msra.mxu0 0.0
    %5720 = vmatprep.subr.mxu0 0.0
    %5721 = vmatpush1.msra.mxu0 0.0
    %5722 = vmatprep.subr.mxu0 0.0
    %5723 = vmatpush1.msra.mxu0 0.0
    %5724 = vmatprep.subr.mxu0 0.0
    %v5725 = vand.u32 %v5689, 4294901760
    %5726 = vmatpush1.msra.mxu0 %v5725
    %5727 = vmatprep.subr.mxu0 0.0
    %5728 = vmatpush2.msra.mxu0 0.0
    %5729 = vmatprep.subr.mxu0 0.0
    %5730 = vmatpush2.msra.mxu0 0.0
    %5731 = vmatprep.subr.mxu0 0.0
    %5732 = vmatpush2.msra.mxu0 0.0
    %5733 = vmatprep.subr.mxu0 0.0
    %5734 = vmatpush2.msra.mxu0 0.0
    %5735 = vmatprep.subr.mxu0 0.0
    %5736 = vmatpush2.msra.mxu0 0.0
    %5737 = vmatprep.subr.mxu0 0.0
    %5738 = vmatpush2.msra.mxu0 0.0
    %5739 = vmatprep.subr.mxu0 0.0
    %5740 = vmatpush2.msra.mxu0 0.0
    %5741 = vmatprep.subr.mxu0 0.0
    %5742 = vmatpush2.msra.mxu0 0.0
    %5743 = vmatprep.subr.mxu0 0.0
    %5744 = vmatpush2.msra.mxu0 0.0
    %5745 = vmatprep.subr.mxu0 0.0
    %5746 = vmatpush2.msra.mxu0 0.0
    %5747 = vmatprep.subr.mxu0 0.0
    %5748 = vmatpush2.msra.mxu0 0.0
    %5749 = vmatprep.subr.mxu0 0.0
    %5750 = vmatpush2.msra.mxu0 0.0
    %5751 = vmatprep.subr.mxu0 0.0
    %5752 = vmatpush2.msra.mxu0 0.0
    %5753 = vmatprep.subr.mxu0 0.0
    %5754 = vmatpush2.msra.mxu0 0.0
    %5755 = vmatprep.subr.mxu0 0.0
    %5756 = vmatpush2.msra.mxu0 0.0
    %5757 = vmatprep.subr.mxu0 0.0
    %5758 = vmatpush2.msra.mxu0 0.0
    %5759 = vmatprep.mubr.f32.mxu0 0.0
    %v5760 = vand.u32 %v5692, 4294901760
    %v5761 = vsub.f32 %v5692, %v5760
    %v5762 = vand.u32 %v5761, 4294901760
    %v5763 = vsub.f32 %v5761, %v5762
    %v5764 = vand.u32 %v5763, 4294901760
    %5765 = vmatmul.mubr.f32.gmra.mxu0 %v5764
    %v5766 = vpop.f32.mrf.mxu0
    %v5767 = vadd.f32 0.0, %v5766
    %v5768 = vpop.f32.mrf.mxu0
    %5769 = vdwg.mxu0
    %5770 = vmatprep.subr.mxu0 0.0
    %5771 = vmatpush1.msra.mxu0 0.0
    %5772 = vmatprep.subr.mxu0 0.0
    %5773 = vmatpush1.msra.mxu0 0.0
    %5774 = vmatprep.subr.mxu0 0.0
    %5775 = vmatpush1.msra.mxu0 0.0
    %5776 = vmatprep.subr.mxu0 0.0
    %5777 = vmatpush1.msra.mxu0 0.0
    %5778 = vmatprep.subr.mxu0 0.0
    %5779 = vmatpush1.msra.mxu0 0.0
    %5780 = vmatprep.subr.mxu0 0.0
    %5781 = vmatpush1.msra.mxu0 0.0
    %5782 = vmatprep.subr.mxu0 0.0
    %5783 = vmatpush1.msra.mxu0 0.0
    %5784 = vmatprep.subr.mxu0 0.0
    %5785 = vmatpush1.msra.mxu0 0.0
    %5786 = vmatprep.subr.mxu0 0.0
    %5787 = vmatpush1.msra.mxu0 0.0
    %5788 = vmatprep.subr.mxu0 0.0
    %5789 = vmatpush1.msra.mxu0 0.0
    %5790 = vmatprep.subr.mxu0 0.0
    %5791 = vmatpush1.msra.mxu0 0.0
    %5792 = vmatprep.subr.mxu0 0.0
    %5793 = vmatpush1.msra.mxu0 0.0
    %5794 = vmatprep.subr.mxu0 0.0
    %5795 = vmatpush1.msra.mxu0 0.0
    %5796 = vmatprep.subr.mxu0 0.0
    %5797 = vmatpush1.msra.mxu0 0.0
    %5798 = vmatprep.subr.mxu0 0.0
    %5799 = vmatpush1.msra.mxu0 0.0
    %5800 = vmatprep.subr.mxu0 0.0
    %v5801 = vand.u32 %v5689, 4294901760
    %v5802 = vsub.f32 %v5689, %v5801
    %v5803 = vand.u32 %v5802, 4294901760
    %v5804 = vsub.f32 %v5802, %v5803
    %v5805 = vand.u32 %v5804, 4294901760
    %5806 = vmatpush1.msra.mxu0 %v5805
    %5807 = vmatprep.subr.mxu0 0.0
    %5808 = vmatpush2.msra.mxu0 0.0
    %5809 = vmatprep.subr.mxu0 0.0
    %5810 = vmatpush2.msra.mxu0 0.0
    %5811 = vmatprep.subr.mxu0 0.0
    %5812 = vmatpush2.msra.mxu0 0.0
    %5813 = vmatprep.subr.mxu0 0.0
    %5814 = vmatpush2.msra.mxu0 0.0
    %5815 = vmatprep.subr.mxu0 0.0
    %5816 = vmatpush2.msra.mxu0 0.0
    %5817 = vmatprep.subr.mxu0 0.0
    %5818 = vmatpush2.msra.mxu0 0.0
    %5819 = vmatprep.subr.mxu0 0.0
    %5820 = vmatpush2.msra.mxu0 0.0
    %5821 = vmatprep.subr.mxu0 0.0
    %5822 = vmatpush2.msra.mxu0 0.0
    %5823 = vmatprep.subr.mxu0 0.0
    %5824 = vmatpush2.msra.mxu0 0.0
    %5825 = vmatprep.subr.mxu0 0.0
    %5826 = vmatpush2.msra.mxu0 0.0
    %5827 = vmatprep.subr.mxu0 0.0
    %5828 = vmatpush2.msra.mxu0 0.0
    %5829 = vmatprep.subr.mxu0 0.0
    %5830 = vmatpush2.msra.mxu0 0.0
    %5831 = vmatprep.subr.mxu0 0.0
    %5832 = vmatpush2.msra.mxu0 0.0
    %5833 = vmatprep.subr.mxu0 0.0
    %5834 = vmatpush2.msra.mxu0 0.0
    %5835 = vmatprep.subr.mxu0 0.0
    %5836 = vmatpush2.msra.mxu0 0.0
    %5837 = vmatprep.subr.mxu0 0.0
    %5838 = vmatpush2.msra.mxu0 0.0
    %5839 = vmatprep.mubr.f32.mxu0 0.0
    %v5840 = vand.u32 %v5692, 4294901760
    %5841 = vmatmul.mubr.f32.gmra.mxu0 %v5840
    %v5842 = vpop.f32.mrf.mxu0
    %v5843 = vadd.f32 %v5767, %v5842
    %v5844 = vpop.f32.mrf.mxu0
    %5845 = vdwg.mxu0
    %5846 = vmatprep.subr.mxu0 0.0
    %5847 = vmatpush1.msra.mxu0 0.0
    %5848 = vmatprep.subr.mxu0 0.0
    %5849 = vmatpush1.msra.mxu0 0.0
    %5850 = vmatprep.subr.mxu0 0.0
    %5851 = vmatpush1.msra.mxu0 0.0
    %5852 = vmatprep.subr.mxu0 0.0
    %5853 = vmatpush1.msra.mxu0 0.0
    %5854 = vmatprep.subr.mxu0 0.0
    %5855 = vmatpush1.msra.mxu0 0.0
    %5856 = vmatprep.subr.mxu0 0.0
    %5857 = vmatpush1.msra.mxu0 0.0
    %5858 = vmatprep.subr.mxu0 0.0
    %5859 = vmatpush1.msra.mxu0 0.0
    %5860 = vmatprep.subr.mxu0 0.0
    %5861 = vmatpush1.msra.mxu0 0.0
    %5862 = vmatprep.subr.mxu0 0.0
    %5863 = vmatpush1.msra.mxu0 0.0
    %5864 = vmatprep.subr.mxu0 0.0
    %5865 = vmatpush1.msra.mxu0 0.0
    %5866 = vmatprep.subr.mxu0 0.0
    %5867 = vmatpush1.msra.mxu0 0.0
    %5868 = vmatprep.subr.mxu0 0.0
    %5869 = vmatpush1.msra.mxu0 0.0
    %5870 = vmatprep.subr.mxu0 0.0
    %5871 = vmatpush1.msra.mxu0 0.0
    %5872 = vmatprep.subr.mxu0 0.0
    %5873 = vmatpush1.msra.mxu0 0.0
    %5874 = vmatprep.subr.mxu0 0.0
    %5875 = vmatpush1.msra.mxu0 0.0
    %5876 = vmatprep.subr.mxu0 0.0
    %v5877 = vand.u32 %v5689, 4294901760
    %v5878 = vsub.f32 %v5689, %v5877
    %5879 = vmatpush1.msra.mxu0 %v5878
    %5880 = vmatprep.subr.mxu0 0.0
    %5881 = vmatpush2.msra.mxu0 0.0
    %5882 = vmatprep.subr.mxu0 0.0
    %5883 = vmatpush2.msra.mxu0 0.0
    %5884 = vmatprep.subr.mxu0 0.0
    %5885 = vmatpush2.msra.mxu0 0.0
    %5886 = vmatprep.subr.mxu0 0.0
    %5887 = vmatpush2.msra.mxu0 0.0
    %5888 = vmatprep.subr.mxu0 0.0
    %5889 = vmatpush2.msra.mxu0 0.0
    %5890 = vmatprep.subr.mxu0 0.0
    %5891 = vmatpush2.msra.mxu0 0.0
    %5892 = vmatprep.subr.mxu0 0.0
    %5893 = vmatpush2.msra.mxu0 0.0
    %5894 = vmatprep.subr.mxu0 0.0
    %5895 = vmatpush2.msra.mxu0 0.0
    %5896 = vmatprep.subr.mxu0 0.0
    %5897 = vmatpush2.msra.mxu0 0.0
    %5898 = vmatprep.subr.mxu0 0.0
    %5899 = vmatpush2.msra.mxu0 0.0
    %5900 = vmatprep.subr.mxu0 0.0
    %5901 = vmatpush2.msra.mxu0 0.0
    %5902 = vmatprep.subr.mxu0 0.0
    %5903 = vmatpush2.msra.mxu0 0.0
    %5904 = vmatprep.subr.mxu0 0.0
    %5905 = vmatpush2.msra.mxu0 0.0
    %5906 = vmatprep.subr.mxu0 0.0
    %5907 = vmatpush2.msra.mxu0 0.0
    %5908 = vmatprep.subr.mxu0 0.0
    %5909 = vmatpush2.msra.mxu0 0.0
    %5910 = vmatprep.subr.mxu0 0.0
    %5911 = vmatpush2.msra.mxu0 0.0
    %5912 = vmatprep.mubr.f32.mxu0 0.0
    %v5913 = vand.u32 %v5692, 4294901760
    %v5914 = vsub.f32 %v5692, %v5913
    %5915 = vmatmul.mubr.f32.gmra.mxu0 %v5914
    %v5916 = vpop.f32.mrf.mxu0
    %v5917 = vadd.f32 %v5843, %v5916
    %v5918 = vpop.f32.mrf.mxu0
    %5919 = vdwg.mxu0
    %5920 = vmatprep.subr.mxu0 0.0
    %5921 = vmatpush1.msra.mxu0 0.0
    %5922 = vmatprep.subr.mxu0 0.0
    %5923 = vmatpush1.msra.mxu0 0.0
    %5924 = vmatprep.subr.mxu0 0.0
    %5925 = vmatpush1.msra.mxu0 0.0
    %5926 = vmatprep.subr.mxu0 0.0
    %5927 = vmatpush1.msra.mxu0 0.0
    %5928 = vmatprep.subr.mxu0 0.0
    %5929 = vmatpush1.msra.mxu0 0.0
    %5930 = vmatprep.subr.mxu0 0.0
    %5931 = vmatpush1.msra.mxu0 0.0
    %5932 = vmatprep.subr.mxu0 0.0
    %5933 = vmatpush1.msra.mxu0 0.0
    %5934 = vmatprep.subr.mxu0 0.0
    %5935 = vmatpush1.msra.mxu0 0.0
    %5936 = vmatprep.subr.mxu0 0.0
    %5937 = vmatpush1.msra.mxu0 0.0
    %5938 = vmatprep.subr.mxu0 0.0
    %5939 = vmatpush1.msra.mxu0 0.0
    %5940 = vmatprep.subr.mxu0 0.0
    %5941 = vmatpush1.msra.mxu0 0.0
    %5942 = vmatprep.subr.mxu0 0.0
    %5943 = vmatpush1.msra.mxu0 0.0
    %5944 = vmatprep.subr.mxu0 0.0
    %5945 = vmatpush1.msra.mxu0 0.0
    %5946 = vmatprep.subr.mxu0 0.0
    %5947 = vmatpush1.msra.mxu0 0.0
    %5948 = vmatprep.subr.mxu0 0.0
    %5949 = vmatpush1.msra.mxu0 0.0
    %5950 = vmatprep.subr.mxu0 0.0
    %v5951 = vand.u32 %v5689, 4294901760
    %5952 = vmatpush1.msra.mxu0 %v5951
    %5953 = vmatprep.subr.mxu0 0.0
    %5954 = vmatpush2.msra.mxu0 0.0
    %5955 = vmatprep.subr.mxu0 0.0
    %5956 = vmatpush2.msra.mxu0 0.0
    %5957 = vmatprep.subr.mxu0 0.0
    %5958 = vmatpush2.msra.mxu0 0.0
    %5959 = vmatprep.subr.mxu0 0.0
    %5960 = vmatpush2.msra.mxu0 0.0
    %5961 = vmatprep.subr.mxu0 0.0
    %5962 = vmatpush2.msra.mxu0 0.0
    %5963 = vmatprep.subr.mxu0 0.0
    %5964 = vmatpush2.msra.mxu0 0.0
    %5965 = vmatprep.subr.mxu0 0.0
    %5966 = vmatpush2.msra.mxu0 0.0
    %5967 = vmatprep.subr.mxu0 0.0
    %5968 = vmatpush2.msra.mxu0 0.0
    %5969 = vmatprep.subr.mxu0 0.0
    %5970 = vmatpush2.msra.mxu0 0.0
    %5971 = vmatprep.subr.mxu0 0.0
    %5972 = vmatpush2.msra.mxu0 0.0
    %5973 = vmatprep.subr.mxu0 0.0
    %5974 = vmatpush2.msra.mxu0 0.0
    %5975 = vmatprep.subr.mxu0 0.0
    %5976 = vmatpush2.msra.mxu0 0.0
    %5977 = vmatprep.subr.mxu0 0.0
    %5978 = vmatpush2.msra.mxu0 0.0
    %5979 = vmatprep.subr.mxu0 0.0
    %5980 = vmatpush2.msra.mxu0 0.0
    %5981 = vmatprep.subr.mxu0 0.0
    %5982 = vmatpush2.msra.mxu0 0.0
    %5983 = vmatprep.subr.mxu0 0.0
    %5984 = vmatpush2.msra.mxu0 0.0
    %5985 = vmatprep.mubr.f32.mxu0 0.0
    %v5986 = vand.u32 %v5692, 4294901760
    %v5987 = vsub.f32 %v5692, %v5986
    %v5988 = vand.u32 %v5987, 4294901760
    %5989 = vmatmul.mubr.f32.gmra.mxu0 %v5988
    %v5990 = vpop.f32.mrf.mxu0
    %v5991 = vadd.f32 %v5917, %v5990
    %v5992 = vpop.f32.mrf.mxu0
    %5993 = vdwg.mxu0
    %5994 = vmatprep.subr.mxu0 0.0
    %5995 = vmatpush1.msra.mxu0 0.0
    %5996 = vmatprep.subr.mxu0 0.0
    %5997 = vmatpush1.msra.mxu0 0.0
    %5998 = vmatprep.subr.mxu0 0.0
    %5999 = vmatpush1.msra.mxu0 0.0
    %6000 = vmatprep.subr.mxu0 0.0
    %6001 = vmatpush1.msra.mxu0 0.0
    %6002 = vmatprep.subr.mxu0 0.0
    %6003 = vmatpush1.msra.mxu0 0.0
    %6004 = vmatprep.subr.mxu0 0.0
    %6005 = vmatpush1.msra.mxu0 0.0
    %6006 = vmatprep.subr.mxu0 0.0
    %6007 = vmatpush1.msra.mxu0 0.0
    %6008 = vmatprep.subr.mxu0 0.0
    %6009 = vmatpush1.msra.mxu0 0.0
    %6010 = vmatprep.subr.mxu0 0.0
    %6011 = vmatpush1.msra.mxu0 0.0
    %6012 = vmatprep.subr.mxu0 0.0
    %6013 = vmatpush1.msra.mxu0 0.0
    %6014 = vmatprep.subr.mxu0 0.0
    %6015 = vmatpush1.msra.mxu0 0.0
    %6016 = vmatprep.subr.mxu0 0.0
    %6017 = vmatpush1.msra.mxu0 0.0
    %6018 = vmatprep.subr.mxu0 0.0
    %6019 = vmatpush1.msra.mxu0 0.0
    %6020 = vmatprep.subr.mxu0 0.0
    %6021 = vmatpush1.msra.mxu0 0.0
    %6022 = vmatprep.subr.mxu0 0.0
    %6023 = vmatpush1.msra.mxu0 0.0
    %6024 = vmatprep.subr.mxu0 0.0
    %v6025 = vand.u32 %v5689, 4294901760
    %v6026 = vsub.f32 %v5689, %v6025
    %v6027 = vand.u32 %v6026, 4294901760
    %6028 = vmatpush1.msra.mxu0 %v6027
    %6029 = vmatprep.subr.mxu0 0.0
    %6030 = vmatpush2.msra.mxu0 0.0
    %6031 = vmatprep.subr.mxu0 0.0
    %6032 = vmatpush2.msra.mxu0 0.0
    %6033 = vmatprep.subr.mxu0 0.0
    %6034 = vmatpush2.msra.mxu0 0.0
    %6035 = vmatprep.subr.mxu0 0.0
    %6036 = vmatpush2.msra.mxu0 0.0
    %6037 = vmatprep.subr.mxu0 0.0
    %6038 = vmatpush2.msra.mxu0 0.0
    %6039 = vmatprep.subr.mxu0 0.0
    %6040 = vmatpush2.msra.mxu0 0.0
    %6041 = vmatprep.subr.mxu0 0.0
    %6042 = vmatpush2.msra.mxu0 0.0
    %6043 = vmatprep.subr.mxu0 0.0
    %6044 = vmatpush2.msra.mxu0 0.0
    %6045 = vmatprep.subr.mxu0 0.0
    %6046 = vmatpush2.msra.mxu0 0.0
    %6047 = vmatprep.subr.mxu0 0.0
    %6048 = vmatpush2.msra.mxu0 0.0
    %6049 = vmatprep.subr.mxu0 0.0
    %6050 = vmatpush2.msra.mxu0 0.0
    %6051 = vmatprep.subr.mxu0 0.0
    %6052 = vmatpush2.msra.mxu0 0.0
    %6053 = vmatprep.subr.mxu0 0.0
    %6054 = vmatpush2.msra.mxu0 0.0
    %6055 = vmatprep.subr.mxu0 0.0
    %6056 = vmatpush2.msra.mxu0 0.0
    %6057 = vmatprep.subr.mxu0 0.0
    %6058 = vmatpush2.msra.mxu0 0.0
    %6059 = vmatprep.subr.mxu0 0.0
    %6060 = vmatpush2.msra.mxu0 0.0
    %6061 = vmatprep.mubr.f32.mxu0 0.0
    %v6062 = vand.u32 %v5692, 4294901760
    %6063 = vmatmul.mubr.f32.gmra.mxu0 %v6062
    %v6064 = vpop.f32.mrf.mxu0
    %v6065 = vadd.f32 %v5991, %v6064
    %v6066 = vpop.f32.mrf.mxu0
    %6067 = vdwg.mxu0
    %6068 = vmatprep.subr.mxu0 0.0
    %6069 = vmatpush1.msra.mxu0 0.0
    %6070 = vmatprep.subr.mxu0 0.0
    %6071 = vmatpush1.msra.mxu0 0.0
    %6072 = vmatprep.subr.mxu0 0.0
    %6073 = vmatpush1.msra.mxu0 0.0
    %6074 = vmatprep.subr.mxu0 0.0
    %6075 = vmatpush1.msra.mxu0 0.0
    %6076 = vmatprep.subr.mxu0 0.0
    %6077 = vmatpush1.msra.mxu0 0.0
    %6078 = vmatprep.subr.mxu0 0.0
    %6079 = vmatpush1.msra.mxu0 0.0
    %6080 = vmatprep.subr.mxu0 0.0
    %6081 = vmatpush1.msra.mxu0 0.0
    %6082 = vmatprep.subr.mxu0 0.0
    %6083 = vmatpush1.msra.mxu0 0.0
    %6084 = vmatprep.subr.mxu0 0.0
    %6085 = vmatpush1.msra.mxu0 0.0
    %6086 = vmatprep.subr.mxu0 0.0
    %6087 = vmatpush1.msra.mxu0 0.0
    %6088 = vmatprep.subr.mxu0 0.0
    %6089 = vmatpush1.msra.mxu0 0.0
    %6090 = vmatprep.subr.mxu0 0.0
    %6091 = vmatpush1.msra.mxu0 0.0
    %6092 = vmatprep.subr.mxu0 0.0
    %6093 = vmatpush1.msra.mxu0 0.0
    %6094 = vmatprep.subr.mxu0 0.0
    %6095 = vmatpush1.msra.mxu0 0.0
    %6096 = vmatprep.subr.mxu0 0.0
    %6097 = vmatpush1.msra.mxu0 0.0
    %6098 = vmatprep.subr.mxu0 0.0
    %v6099 = vand.u32 %v5689, 4294901760
    %6100 = vmatpush1.msra.mxu0 %v6099
    %6101 = vmatprep.subr.mxu0 0.0
    %6102 = vmatpush2.msra.mxu0 0.0
    %6103 = vmatprep.subr.mxu0 0.0
    %6104 = vmatpush2.msra.mxu0 0.0
    %6105 = vmatprep.subr.mxu0 0.0
    %6106 = vmatpush2.msra.mxu0 0.0
    %6107 = vmatprep.subr.mxu0 0.0
    %6108 = vmatpush2.msra.mxu0 0.0
    %6109 = vmatprep.subr.mxu0 0.0
    %6110 = vmatpush2.msra.mxu0 0.0
    %6111 = vmatprep.subr.mxu0 0.0
    %6112 = vmatpush2.msra.mxu0 0.0
    %6113 = vmatprep.subr.mxu0 0.0
    %6114 = vmatpush2.msra.mxu0 0.0
    %6115 = vmatprep.subr.mxu0 0.0
    %6116 = vmatpush2.msra.mxu0 0.0
    %6117 = vmatprep.subr.mxu0 0.0
    %6118 = vmatpush2.msra.mxu0 0.0
    %6119 = vmatprep.subr.mxu0 0.0
    %6120 = vmatpush2.msra.mxu0 0.0
    %6121 = vmatprep.subr.mxu0 0.0
    %6122 = vmatpush2.msra.mxu0 0.0
    %6123 = vmatprep.subr.mxu0 0.0
    %6124 = vmatpush2.msra.mxu0 0.0
    %6125 = vmatprep.subr.mxu0 0.0
    %6126 = vmatpush2.msra.mxu0 0.0
    %6127 = vmatprep.subr.mxu0 0.0
    %6128 = vmatpush2.msra.mxu0 0.0
    %6129 = vmatprep.subr.mxu0 0.0
    %6130 = vmatpush2.msra.mxu0 0.0
    %6131 = vmatprep.subr.mxu0 0.0
    %6132 = vmatpush2.msra.mxu0 0.0
    %6133 = vmatprep.mubr.f32.mxu0 0.0
    %v6134 = vand.u32 %v5692, 4294901760
    %6135 = vmatmul.mubr.f32.gmra.mxu0 %v6134
    %v6136 = vpop.f32.mrf.mxu0
    %v6137 = vadd.f32 %v6065, %v6136
    %v6138 = vpop.f32.mrf.mxu0
    %6139 = vdwg.mxu0
    %6141 = vrot.lane.b32.xlu0 %v6137, 8
    %v6142 = vpop.permute.xlu0 %6141
    %6144 = vst.msk [vmem:[#allocation2 + $0x8] sm:$0xff] %vm2450, %v6142
    %6145 = vrot.lane.b32.xlu0 %v604, 112
    %v6146 = vpop.permute.xlu0 %6145
    %6147 = vrot.lane.b32.xlu0 %v604, 80
    %v6148 = vpop.permute.xlu0 %6147
    %v6149 = vsel %vm610, %v6146, 0
    %v6151 = vsel %vm610, %v6148, 0
    %6153 = vmatprep.subr.mxu0 0.0
    %6154 = vmatpush1.xpose.msra.mxu0 0.0
    %6155 = vmatprep.subr.mxu0 0.0
    %6156 = vmatpush1.xpose.msra.mxu0 0.0
    %6157 = vmatprep.subr.mxu0 0.0
    %6158 = vmatpush1.xpose.msra.mxu0 0.0
    %6159 = vmatprep.subr.mxu0 0.0
    %6160 = vmatpush1.xpose.msra.mxu0 0.0
    %6161 = vmatprep.subr.mxu0 0.0
    %6162 = vmatpush1.xpose.msra.mxu0 0.0
    %6163 = vmatprep.subr.mxu0 0.0
    %6164 = vmatpush1.xpose.msra.mxu0 0.0
    %6165 = vmatprep.subr.mxu0 0.0
    %6166 = vmatpush1.xpose.msra.mxu0 0.0
    %6167 = vmatprep.subr.mxu0 0.0
    %6168 = vmatpush1.xpose.msra.mxu0 0.0
    %6169 = vmatprep.subr.mxu0 0.0
    %6170 = vmatpush1.xpose.msra.mxu0 0.0
    %6171 = vmatprep.subr.mxu0 0.0
    %6172 = vmatpush1.xpose.msra.mxu0 0.0
    %6173 = vmatprep.subr.mxu0 0.0
    %6174 = vmatpush1.xpose.msra.mxu0 0.0
    %6175 = vmatprep.subr.mxu0 0.0
    %6176 = vmatpush1.xpose.msra.mxu0 0.0
    %6177 = vmatprep.subr.mxu0 0.0
    %6178 = vmatpush1.xpose.msra.mxu0 0.0
    %6179 = vmatprep.subr.mxu0 0.0
    %6180 = vmatpush1.xpose.msra.mxu0 0.0
    %6181 = vmatprep.subr.mxu0 0.0
    %6182 = vmatpush1.xpose.msra.mxu0 0.0
    %6183 = vmatprep.subr.mxu0 0.0
    %v6184 = vand.u32 %v6151, 4294901760
    %6185 = vmatpush1.xpose.msra.mxu0 %v6184
    %6186 = vmatprep.subr.mxu0 0.0
    %6187 = vmatpush2.xpose.msra.mxu0 0.0
    %6188 = vmatprep.subr.mxu0 0.0
    %6189 = vmatpush2.xpose.msra.mxu0 0.0
    %6190 = vmatprep.subr.mxu0 0.0
    %6191 = vmatpush2.xpose.msra.mxu0 0.0
    %6192 = vmatprep.subr.mxu0 0.0
    %6193 = vmatpush2.xpose.msra.mxu0 0.0
    %6194 = vmatprep.subr.mxu0 0.0
    %6195 = vmatpush2.xpose.msra.mxu0 0.0
    %6196 = vmatprep.subr.mxu0 0.0
    %6197 = vmatpush2.xpose.msra.mxu0 0.0
    %6198 = vmatprep.subr.mxu0 0.0
    %6199 = vmatpush2.xpose.msra.mxu0 0.0
    %6200 = vmatprep.subr.mxu0 0.0
    %6201 = vmatpush2.xpose.msra.mxu0 0.0
    %6202 = vmatprep.subr.mxu0 0.0
    %6203 = vmatpush2.xpose.msra.mxu0 0.0
    %6204 = vmatprep.subr.mxu0 0.0
    %6205 = vmatpush2.xpose.msra.mxu0 0.0
    %6206 = vmatprep.subr.mxu0 0.0
    %6207 = vmatpush2.xpose.msra.mxu0 0.0
    %6208 = vmatprep.subr.mxu0 0.0
    %6209 = vmatpush2.xpose.msra.mxu0 0.0
    %6210 = vmatprep.subr.mxu0 0.0
    %6211 = vmatpush2.xpose.msra.mxu0 0.0
    %6212 = vmatprep.subr.mxu0 0.0
    %6213 = vmatpush2.xpose.msra.mxu0 0.0
    %6214 = vmatprep.subr.mxu0 0.0
    %6215 = vmatpush2.xpose.msra.mxu0 0.0
    %6216 = vmatprep.subr.mxu0 0.0
    %6217 = vmatpush2.xpose.msra.mxu0 0.0
    %6218 = vmatprep.mubr.f32.mxu0 0.0
    %v6219 = vand.u32 %v6149, 4294901760
    %v6220 = vsub.f32 %v6149, %v6219
    %v6221 = vand.u32 %v6220, 4294901760
    %v6222 = vsub.f32 %v6220, %v6221
    %v6223 = vand.u32 %v6222, 4294901760
    %6224 = vmatmul.mubr.f32.gmra.mxu0 %v6223
    %v6225 = vpop.f32.mrf.mxu0
    %v6226 = vadd.f32 0.0, %v6225
    %v6227 = vpop.f32.mrf.mxu0
    %6228 = vdwg.mxu0
    %6229 = vmatprep.subr.mxu0 0.0
    %6230 = vmatpush1.xpose.msra.mxu0 0.0
    %6231 = vmatprep.subr.mxu0 0.0
    %6232 = vmatpush1.xpose.msra.mxu0 0.0
    %6233 = vmatprep.subr.mxu0 0.0
    %6234 = vmatpush1.xpose.msra.mxu0 0.0
    %6235 = vmatprep.subr.mxu0 0.0
    %6236 = vmatpush1.xpose.msra.mxu0 0.0
    %6237 = vmatprep.subr.mxu0 0.0
    %6238 = vmatpush1.xpose.msra.mxu0 0.0
    %6239 = vmatprep.subr.mxu0 0.0
    %6240 = vmatpush1.xpose.msra.mxu0 0.0
    %6241 = vmatprep.subr.mxu0 0.0
    %6242 = vmatpush1.xpose.msra.mxu0 0.0
    %6243 = vmatprep.subr.mxu0 0.0
    %6244 = vmatpush1.xpose.msra.mxu0 0.0
    %6245 = vmatprep.subr.mxu0 0.0
    %6246 = vmatpush1.xpose.msra.mxu0 0.0
    %6247 = vmatprep.subr.mxu0 0.0
    %6248 = vmatpush1.xpose.msra.mxu0 0.0
    %6249 = vmatprep.subr.mxu0 0.0
    %6250 = vmatpush1.xpose.msra.mxu0 0.0
    %6251 = vmatprep.subr.mxu0 0.0
    %6252 = vmatpush1.xpose.msra.mxu0 0.0
    %6253 = vmatprep.subr.mxu0 0.0
    %6254 = vmatpush1.xpose.msra.mxu0 0.0
    %6255 = vmatprep.subr.mxu0 0.0
    %6256 = vmatpush1.xpose.msra.mxu0 0.0
    %6257 = vmatprep.subr.mxu0 0.0
    %6258 = vmatpush1.xpose.msra.mxu0 0.0
    %6259 = vmatprep.subr.mxu0 0.0
    %v6260 = vand.u32 %v6151, 4294901760
    %v6261 = vsub.f32 %v6151, %v6260
    %v6262 = vand.u32 %v6261, 4294901760
    %v6263 = vsub.f32 %v6261, %v6262
    %v6264 = vand.u32 %v6263, 4294901760
    %6265 = vmatpush1.xpose.msra.mxu0 %v6264
    %6266 = vmatprep.subr.mxu0 0.0
    %6267 = vmatpush2.xpose.msra.mxu0 0.0
    %6268 = vmatprep.subr.mxu0 0.0
    %6269 = vmatpush2.xpose.msra.mxu0 0.0
    %6270 = vmatprep.subr.mxu0 0.0
    %6271 = vmatpush2.xpose.msra.mxu0 0.0
    %6272 = vmatprep.subr.mxu0 0.0
    %6273 = vmatpush2.xpose.msra.mxu0 0.0
    %6274 = vmatprep.subr.mxu0 0.0
    %6275 = vmatpush2.xpose.msra.mxu0 0.0
    %6276 = vmatprep.subr.mxu0 0.0
    %6277 = vmatpush2.xpose.msra.mxu0 0.0
    %6278 = vmatprep.subr.mxu0 0.0
    %6279 = vmatpush2.xpose.msra.mxu0 0.0
    %6280 = vmatprep.subr.mxu0 0.0
    %6281 = vmatpush2.xpose.msra.mxu0 0.0
    %6282 = vmatprep.subr.mxu0 0.0
    %6283 = vmatpush2.xpose.msra.mxu0 0.0
    %6284 = vmatprep.subr.mxu0 0.0
    %6285 = vmatpush2.xpose.msra.mxu0 0.0
    %6286 = vmatprep.subr.mxu0 0.0
    %6287 = vmatpush2.xpose.msra.mxu0 0.0
    %6288 = vmatprep.subr.mxu0 0.0
    %6289 = vmatpush2.xpose.msra.mxu0 0.0
    %6290 = vmatprep.subr.mxu0 0.0
    %6291 = vmatpush2.xpose.msra.mxu0 0.0
    %6292 = vmatprep.subr.mxu0 0.0
    %6293 = vmatpush2.xpose.msra.mxu0 0.0
    %6294 = vmatprep.subr.mxu0 0.0
    %6295 = vmatpush2.xpose.msra.mxu0 0.0
    %6296 = vmatprep.subr.mxu0 0.0
    %6297 = vmatpush2.xpose.msra.mxu0 0.0
    %6298 = vmatprep.mubr.f32.mxu0 0.0
    %v6299 = vand.u32 %v6149, 4294901760
    %6300 = vmatmul.mubr.f32.gmra.mxu0 %v6299
    %v6301 = vpop.f32.mrf.mxu0
    %v6302 = vadd.f32 %v6226, %v6301
    %v6303 = vpop.f32.mrf.mxu0
    %6304 = vdwg.mxu0
    %6305 = vmatprep.subr.mxu0 0.0
    %6306 = vmatpush1.xpose.msra.mxu0 0.0
    %6307 = vmatprep.subr.mxu0 0.0
    %6308 = vmatpush1.xpose.msra.mxu0 0.0
    %6309 = vmatprep.subr.mxu0 0.0
    %6310 = vmatpush1.xpose.msra.mxu0 0.0
    %6311 = vmatprep.subr.mxu0 0.0
    %6312 = vmatpush1.xpose.msra.mxu0 0.0
    %6313 = vmatprep.subr.mxu0 0.0
    %6314 = vmatpush1.xpose.msra.mxu0 0.0
    %6315 = vmatprep.subr.mxu0 0.0
    %6316 = vmatpush1.xpose.msra.mxu0 0.0
    %6317 = vmatprep.subr.mxu0 0.0
    %6318 = vmatpush1.xpose.msra.mxu0 0.0
    %6319 = vmatprep.subr.mxu0 0.0
    %6320 = vmatpush1.xpose.msra.mxu0 0.0
    %6321 = vmatprep.subr.mxu0 0.0
    %6322 = vmatpush1.xpose.msra.mxu0 0.0
    %6323 = vmatprep.subr.mxu0 0.0
    %6324 = vmatpush1.xpose.msra.mxu0 0.0
    %6325 = vmatprep.subr.mxu0 0.0
    %6326 = vmatpush1.xpose.msra.mxu0 0.0
    %6327 = vmatprep.subr.mxu0 0.0
    %6328 = vmatpush1.xpose.msra.mxu0 0.0
    %6329 = vmatprep.subr.mxu0 0.0
    %6330 = vmatpush1.xpose.msra.mxu0 0.0
    %6331 = vmatprep.subr.mxu0 0.0
    %6332 = vmatpush1.xpose.msra.mxu0 0.0
    %6333 = vmatprep.subr.mxu0 0.0
    %6334 = vmatpush1.xpose.msra.mxu0 0.0
    %6335 = vmatprep.subr.mxu0 0.0
    %v6336 = vand.u32 %v6151, 4294901760
    %v6337 = vsub.f32 %v6151, %v6336
    %6338 = vmatpush1.xpose.msra.mxu0 %v6337
    %6339 = vmatprep.subr.mxu0 0.0
    %6340 = vmatpush2.xpose.msra.mxu0 0.0
    %6341 = vmatprep.subr.mxu0 0.0
    %6342 = vmatpush2.xpose.msra.mxu0 0.0
    %6343 = vmatprep.subr.mxu0 0.0
    %6344 = vmatpush2.xpose.msra.mxu0 0.0
    %6345 = vmatprep.subr.mxu0 0.0
    %6346 = vmatpush2.xpose.msra.mxu0 0.0
    %6347 = vmatprep.subr.mxu0 0.0
    %6348 = vmatpush2.xpose.msra.mxu0 0.0
    %6349 = vmatprep.subr.mxu0 0.0
    %6350 = vmatpush2.xpose.msra.mxu0 0.0
    %6351 = vmatprep.subr.mxu0 0.0
    %6352 = vmatpush2.xpose.msra.mxu0 0.0
    %6353 = vmatprep.subr.mxu0 0.0
    %6354 = vmatpush2.xpose.msra.mxu0 0.0
    %6355 = vmatprep.subr.mxu0 0.0
    %6356 = vmatpush2.xpose.msra.mxu0 0.0
    %6357 = vmatprep.subr.mxu0 0.0
    %6358 = vmatpush2.xpose.msra.mxu0 0.0
    %6359 = vmatprep.subr.mxu0 0.0
    %6360 = vmatpush2.xpose.msra.mxu0 0.0
    %6361 = vmatprep.subr.mxu0 0.0
    %6362 = vmatpush2.xpose.msra.mxu0 0.0
    %6363 = vmatprep.subr.mxu0 0.0
    %6364 = vmatpush2.xpose.msra.mxu0 0.0
    %6365 = vmatprep.subr.mxu0 0.0
    %6366 = vmatpush2.xpose.msra.mxu0 0.0
    %6367 = vmatprep.subr.mxu0 0.0
    %6368 = vmatpush2.xpose.msra.mxu0 0.0
    %6369 = vmatprep.subr.mxu0 0.0
    %6370 = vmatpush2.xpose.msra.mxu0 0.0
    %6371 = vmatprep.mubr.f32.mxu0 0.0
    %v6372 = vand.u32 %v6149, 4294901760
    %v6373 = vsub.f32 %v6149, %v6372
    %6374 = vmatmul.mubr.f32.gmra.mxu0 %v6373
    %v6375 = vpop.f32.mrf.mxu0
    %v6376 = vadd.f32 %v6302, %v6375
    %v6377 = vpop.f32.mrf.mxu0
    %6378 = vdwg.mxu0
    %6379 = vmatprep.subr.mxu0 0.0
    %6380 = vmatpush1.xpose.msra.mxu0 0.0
    %6381 = vmatprep.subr.mxu0 0.0
    %6382 = vmatpush1.xpose.msra.mxu0 0.0
    %6383 = vmatprep.subr.mxu0 0.0
    %6384 = vmatpush1.xpose.msra.mxu0 0.0
    %6385 = vmatprep.subr.mxu0 0.0
    %6386 = vmatpush1.xpose.msra.mxu0 0.0
    %6387 = vmatprep.subr.mxu0 0.0
    %6388 = vmatpush1.xpose.msra.mxu0 0.0
    %6389 = vmatprep.subr.mxu0 0.0
    %6390 = vmatpush1.xpose.msra.mxu0 0.0
    %6391 = vmatprep.subr.mxu0 0.0
    %6392 = vmatpush1.xpose.msra.mxu0 0.0
    %6393 = vmatprep.subr.mxu0 0.0
    %6394 = vmatpush1.xpose.msra.mxu0 0.0
    %6395 = vmatprep.subr.mxu0 0.0
    %6396 = vmatpush1.xpose.msra.mxu0 0.0
    %6397 = vmatprep.subr.mxu0 0.0
    %6398 = vmatpush1.xpose.msra.mxu0 0.0
    %6399 = vmatprep.subr.mxu0 0.0
    %6400 = vmatpush1.xpose.msra.mxu0 0.0
    %6401 = vmatprep.subr.mxu0 0.0
    %6402 = vmatpush1.xpose.msra.mxu0 0.0
    %6403 = vmatprep.subr.mxu0 0.0
    %6404 = vmatpush1.xpose.msra.mxu0 0.0
    %6405 = vmatprep.subr.mxu0 0.0
    %6406 = vmatpush1.xpose.msra.mxu0 0.0
    %6407 = vmatprep.subr.mxu0 0.0
    %6408 = vmatpush1.xpose.msra.mxu0 0.0
    %6409 = vmatprep.subr.mxu0 0.0
    %v6410 = vand.u32 %v6151, 4294901760
    %6411 = vmatpush1.xpose.msra.mxu0 %v6410
    %6412 = vmatprep.subr.mxu0 0.0
    %6413 = vmatpush2.xpose.msra.mxu0 0.0
    %6414 = vmatprep.subr.mxu0 0.0
    %6415 = vmatpush2.xpose.msra.mxu0 0.0
    %6416 = vmatprep.subr.mxu0 0.0
    %6417 = vmatpush2.xpose.msra.mxu0 0.0
    %6418 = vmatprep.subr.mxu0 0.0
    %6419 = vmatpush2.xpose.msra.mxu0 0.0
    %6420 = vmatprep.subr.mxu0 0.0
    %6421 = vmatpush2.xpose.msra.mxu0 0.0
    %6422 = vmatprep.subr.mxu0 0.0
    %6423 = vmatpush2.xpose.msra.mxu0 0.0
    %6424 = vmatprep.subr.mxu0 0.0
    %6425 = vmatpush2.xpose.msra.mxu0 0.0
    %6426 = vmatprep.subr.mxu0 0.0
    %6427 = vmatpush2.xpose.msra.mxu0 0.0
    %6428 = vmatprep.subr.mxu0 0.0
    %6429 = vmatpush2.xpose.msra.mxu0 0.0
    %6430 = vmatprep.subr.mxu0 0.0
    %6431 = vmatpush2.xpose.msra.mxu0 0.0
    %6432 = vmatprep.subr.mxu0 0.0
    %6433 = vmatpush2.xpose.msra.mxu0 0.0
    %6434 = vmatprep.subr.mxu0 0.0
    %6435 = vmatpush2.xpose.msra.mxu0 0.0
    %6436 = vmatprep.subr.mxu0 0.0
    %6437 = vmatpush2.xpose.msra.mxu0 0.0
    %6438 = vmatprep.subr.mxu0 0.0
    %6439 = vmatpush2.xpose.msra.mxu0 0.0
    %6440 = vmatprep.subr.mxu0 0.0
    %6441 = vmatpush2.xpose.msra.mxu0 0.0
    %6442 = vmatprep.subr.mxu0 0.0
    %6443 = vmatpush2.xpose.msra.mxu0 0.0
    %6444 = vmatprep.mubr.f32.mxu0 0.0
    %v6445 = vand.u32 %v6149, 4294901760
    %v6446 = vsub.f32 %v6149, %v6445
    %v6447 = vand.u32 %v6446, 4294901760
    %6448 = vmatmul.mubr.f32.gmra.mxu0 %v6447
    %v6449 = vpop.f32.mrf.mxu0
    %v6450 = vadd.f32 %v6376, %v6449
    %v6451 = vpop.f32.mrf.mxu0
    %6452 = vdwg.mxu0
    %6453 = vmatprep.subr.mxu0 0.0
    %6454 = vmatpush1.xpose.msra.mxu0 0.0
    %6455 = vmatprep.subr.mxu0 0.0
    %6456 = vmatpush1.xpose.msra.mxu0 0.0
    %6457 = vmatprep.subr.mxu0 0.0
    %6458 = vmatpush1.xpose.msra.mxu0 0.0
    %6459 = vmatprep.subr.mxu0 0.0
    %6460 = vmatpush1.xpose.msra.mxu0 0.0
    %6461 = vmatprep.subr.mxu0 0.0
    %6462 = vmatpush1.xpose.msra.mxu0 0.0
    %6463 = vmatprep.subr.mxu0 0.0
    %6464 = vmatpush1.xpose.msra.mxu0 0.0
    %6465 = vmatprep.subr.mxu0 0.0
    %6466 = vmatpush1.xpose.msra.mxu0 0.0
    %6467 = vmatprep.subr.mxu0 0.0
    %6468 = vmatpush1.xpose.msra.mxu0 0.0
    %6469 = vmatprep.subr.mxu0 0.0
    %6470 = vmatpush1.xpose.msra.mxu0 0.0
    %6471 = vmatprep.subr.mxu0 0.0
    %6472 = vmatpush1.xpose.msra.mxu0 0.0
    %6473 = vmatprep.subr.mxu0 0.0
    %6474 = vmatpush1.xpose.msra.mxu0 0.0
    %6475 = vmatprep.subr.mxu0 0.0
    %6476 = vmatpush1.xpose.msra.mxu0 0.0
    %6477 = vmatprep.subr.mxu0 0.0
    %6478 = vmatpush1.xpose.msra.mxu0 0.0
    %6479 = vmatprep.subr.mxu0 0.0
    %6480 = vmatpush1.xpose.msra.mxu0 0.0
    %6481 = vmatprep.subr.mxu0 0.0
    %6482 = vmatpush1.xpose.msra.mxu0 0.0
    %6483 = vmatprep.subr.mxu0 0.0
    %v6484 = vand.u32 %v6151, 4294901760
    %v6485 = vsub.f32 %v6151, %v6484
    %v6486 = vand.u32 %v6485, 4294901760
    %6487 = vmatpush1.xpose.msra.mxu0 %v6486
    %6488 = vmatprep.subr.mxu0 0.0
    %6489 = vmatpush2.xpose.msra.mxu0 0.0
    %6490 = vmatprep.subr.mxu0 0.0
    %6491 = vmatpush2.xpose.msra.mxu0 0.0
    %6492 = vmatprep.subr.mxu0 0.0
    %6493 = vmatpush2.xpose.msra.mxu0 0.0
    %6494 = vmatprep.subr.mxu0 0.0
    %6495 = vmatpush2.xpose.msra.mxu0 0.0
    %6496 = vmatprep.subr.mxu0 0.0
    %6497 = vmatpush2.xpose.msra.mxu0 0.0
    %6498 = vmatprep.subr.mxu0 0.0
    %6499 = vmatpush2.xpose.msra.mxu0 0.0
    %6500 = vmatprep.subr.mxu0 0.0
    %6501 = vmatpush2.xpose.msra.mxu0 0.0
    %6502 = vmatprep.subr.mxu0 0.0
    %6503 = vmatpush2.xpose.msra.mxu0 0.0
    %6504 = vmatprep.subr.mxu0 0.0
    %6505 = vmatpush2.xpose.msra.mxu0 0.0
    %6506 = vmatprep.subr.mxu0 0.0
    %6507 = vmatpush2.xpose.msra.mxu0 0.0
    %6508 = vmatprep.subr.mxu0 0.0
    %6509 = vmatpush2.xpose.msra.mxu0 0.0
    %6510 = vmatprep.subr.mxu0 0.0
    %6511 = vmatpush2.xpose.msra.mxu0 0.0
    %6512 = vmatprep.subr.mxu0 0.0
    %6513 = vmatpush2.xpose.msra.mxu0 0.0
    %6514 = vmatprep.subr.mxu0 0.0
    %6515 = vmatpush2.xpose.msra.mxu0 0.0
    %6516 = vmatprep.subr.mxu0 0.0
    %6517 = vmatpush2.xpose.msra.mxu0 0.0
    %6518 = vmatprep.subr.mxu0 0.0
    %6519 = vmatpush2.xpose.msra.mxu0 0.0
    %6520 = vmatprep.mubr.f32.mxu0 0.0
    %v6521 = vand.u32 %v6149, 4294901760
    %6522 = vmatmul.mubr.f32.gmra.mxu0 %v6521
    %v6523 = vpop.f32.mrf.mxu0
    %v6524 = vadd.f32 %v6450, %v6523
    %v6525 = vpop.f32.mrf.mxu0
    %6526 = vdwg.mxu0
    %6527 = vmatprep.subr.mxu0 0.0
    %6528 = vmatpush1.xpose.msra.mxu0 0.0
    %6529 = vmatprep.subr.mxu0 0.0
    %6530 = vmatpush1.xpose.msra.mxu0 0.0
    %6531 = vmatprep.subr.mxu0 0.0
    %6532 = vmatpush1.xpose.msra.mxu0 0.0
    %6533 = vmatprep.subr.mxu0 0.0
    %6534 = vmatpush1.xpose.msra.mxu0 0.0
    %6535 = vmatprep.subr.mxu0 0.0
    %6536 = vmatpush1.xpose.msra.mxu0 0.0
    %6537 = vmatprep.subr.mxu0 0.0
    %6538 = vmatpush1.xpose.msra.mxu0 0.0
    %6539 = vmatprep.subr.mxu0 0.0
    %6540 = vmatpush1.xpose.msra.mxu0 0.0
    %6541 = vmatprep.subr.mxu0 0.0
    %6542 = vmatpush1.xpose.msra.mxu0 0.0
    %6543 = vmatprep.subr.mxu0 0.0
    %6544 = vmatpush1.xpose.msra.mxu0 0.0
    %6545 = vmatprep.subr.mxu0 0.0
    %6546 = vmatpush1.xpose.msra.mxu0 0.0
    %6547 = vmatprep.subr.mxu0 0.0
    %6548 = vmatpush1.xpose.msra.mxu0 0.0
    %6549 = vmatprep.subr.mxu0 0.0
    %6550 = vmatpush1.xpose.msra.mxu0 0.0
    %6551 = vmatprep.subr.mxu0 0.0
    %6552 = vmatpush1.xpose.msra.mxu0 0.0
    %6553 = vmatprep.subr.mxu0 0.0
    %6554 = vmatpush1.xpose.msra.mxu0 0.0
    %6555 = vmatprep.subr.mxu0 0.0
    %6556 = vmatpush1.xpose.msra.mxu0 0.0
    %6557 = vmatprep.subr.mxu0 0.0
    %v6558 = vand.u32 %v6151, 4294901760
    %6559 = vmatpush1.xpose.msra.mxu0 %v6558
    %6560 = vmatprep.subr.mxu0 0.0
    %6561 = vmatpush2.xpose.msra.mxu0 0.0
    %6562 = vmatprep.subr.mxu0 0.0
    %6563 = vmatpush2.xpose.msra.mxu0 0.0
    %6564 = vmatprep.subr.mxu0 0.0
    %6565 = vmatpush2.xpose.msra.mxu0 0.0
    %6566 = vmatprep.subr.mxu0 0.0
    %6567 = vmatpush2.xpose.msra.mxu0 0.0
    %6568 = vmatprep.subr.mxu0 0.0
    %6569 = vmatpush2.xpose.msra.mxu0 0.0
    %6570 = vmatprep.subr.mxu0 0.0
    %6571 = vmatpush2.xpose.msra.mxu0 0.0
    %6572 = vmatprep.subr.mxu0 0.0
    %6573 = vmatpush2.xpose.msra.mxu0 0.0
    %6574 = vmatprep.subr.mxu0 0.0
    %6575 = vmatpush2.xpose.msra.mxu0 0.0
    %6576 = vmatprep.subr.mxu0 0.0
    %6577 = vmatpush2.xpose.msra.mxu0 0.0
    %6578 = vmatprep.subr.mxu0 0.0
    %6579 = vmatpush2.xpose.msra.mxu0 0.0
    %6580 = vmatprep.subr.mxu0 0.0
    %6581 = vmatpush2.xpose.msra.mxu0 0.0
    %6582 = vmatprep.subr.mxu0 0.0
    %6583 = vmatpush2.xpose.msra.mxu0 0.0
    %6584 = vmatprep.subr.mxu0 0.0
    %6585 = vmatpush2.xpose.msra.mxu0 0.0
    %6586 = vmatprep.subr.mxu0 0.0
    %6587 = vmatpush2.xpose.msra.mxu0 0.0
    %6588 = vmatprep.subr.mxu0 0.0
    %6589 = vmatpush2.xpose.msra.mxu0 0.0
    %6590 = vmatprep.subr.mxu0 0.0
    %6591 = vmatpush2.xpose.msra.mxu0 0.0
    %6592 = vmatprep.mubr.f32.mxu0 0.0
    %v6593 = vand.u32 %v6149, 4294901760
    %6594 = vmatmul.mubr.f32.gmra.mxu0 %v6593
    %v6595 = vpop.f32.mrf.mxu0
    %v6596 = vadd.f32 %v6524, %v6595
    %v6597 = vpop.f32.mrf.mxu0
    %6598 = vdwg.mxu0
    %v6599 = vmul.f32 %v6596, 0.35355338
    %v6600 = vsel %vm610, %v6599, -inf
    %6601 = vmax.xlane.f32.xlu0 %v6600
    %v6602 = vpop.xlane.xlu0 %6601
    %v6603 = vsub.f32 %v6599, %v6602
    %v6604 = vmul.f32 %v6603, 1.442695
    %v6605 = vpow.pop %v6604
    %v6606 = vsel %vm610, %v6605, 0.0
    %6607 = vadd.xlane.f32.xlu0 %v6606
    %v6608 = vpop.xlane.xlu0 %6607
    %v6609 = vrcp.pop %v6608
    %v6610 = vmul.f32 1.0, %v6609
    %v6611 = vmul.f32 %v6605, %v6610
    %6612 = vrot.lane.b32.xlu0 %v604, 48
    %v6613 = vpop.permute.xlu0 %6612
    %v6616 = vsel %vm610, %v6611, 0
    %6618 = vmatprep.subr.mxu0 0.0
    %6619 = vmatpush1.msra.mxu0 0.0
    %6620 = vmatprep.subr.mxu0 0.0
    %6621 = vmatpush1.msra.mxu0 0.0
    %6622 = vmatprep.subr.mxu0 0.0
    %6623 = vmatpush1.msra.mxu0 0.0
    %6624 = vmatprep.subr.mxu0 0.0
    %6625 = vmatpush1.msra.mxu0 0.0
    %6626 = vmatprep.subr.mxu0 0.0
    %6627 = vmatpush1.msra.mxu0 0.0
    %6628 = vmatprep.subr.mxu0 0.0
    %6629 = vmatpush1.msra.mxu0 0.0
    %6630 = vmatprep.subr.mxu0 0.0
    %6631 = vmatpush1.msra.mxu0 0.0
    %6632 = vmatprep.subr.mxu0 0.0
    %6633 = vmatpush1.msra.mxu0 0.0
    %6634 = vmatprep.subr.mxu0 0.0
    %6635 = vmatpush1.msra.mxu0 0.0
    %6636 = vmatprep.subr.mxu0 0.0
    %6637 = vmatpush1.msra.mxu0 0.0
    %6638 = vmatprep.subr.mxu0 0.0
    %6639 = vmatpush1.msra.mxu0 0.0
    %6640 = vmatprep.subr.mxu0 0.0
    %6641 = vmatpush1.msra.mxu0 0.0
    %6642 = vmatprep.subr.mxu0 0.0
    %6643 = vmatpush1.msra.mxu0 0.0
    %6644 = vmatprep.subr.mxu0 0.0
    %6645 = vmatpush1.msra.mxu0 0.0
    %6646 = vmatprep.subr.mxu0 0.0
    %6647 = vmatpush1.msra.mxu0 0.0
    %6648 = vmatprep.subr.mxu0 0.0
    %v6649 = vand.u32 %v6613, 4294901760
    %6650 = vmatpush1.msra.mxu0 %v6649
    %6651 = vmatprep.subr.mxu0 0.0
    %6652 = vmatpush2.msra.mxu0 0.0
    %6653 = vmatprep.subr.mxu0 0.0
    %6654 = vmatpush2.msra.mxu0 0.0
    %6655 = vmatprep.subr.mxu0 0.0
    %6656 = vmatpush2.msra.mxu0 0.0
    %6657 = vmatprep.subr.mxu0 0.0
    %6658 = vmatpush2.msra.mxu0 0.0
    %6659 = vmatprep.subr.mxu0 0.0
    %6660 = vmatpush2.msra.mxu0 0.0
    %6661 = vmatprep.subr.mxu0 0.0
    %6662 = vmatpush2.msra.mxu0 0.0
    %6663 = vmatprep.subr.mxu0 0.0
    %6664 = vmatpush2.msra.mxu0 0.0
    %6665 = vmatprep.subr.mxu0 0.0
    %6666 = vmatpush2.msra.mxu0 0.0
    %6667 = vmatprep.subr.mxu0 0.0
    %6668 = vmatpush2.msra.mxu0 0.0
    %6669 = vmatprep.subr.mxu0 0.0
    %6670 = vmatpush2.msra.mxu0 0.0
    %6671 = vmatprep.subr.mxu0 0.0
    %6672 = vmatpush2.msra.mxu0 0.0
    %6673 = vmatprep.subr.mxu0 0.0
    %6674 = vmatpush2.msra.mxu0 0.0
    %6675 = vmatprep.subr.mxu0 0.0
    %6676 = vmatpush2.msra.mxu0 0.0
    %6677 = vmatprep.subr.mxu0 0.0
    %6678 = vmatpush2.msra.mxu0 0.0
    %6679 = vmatprep.subr.mxu0 0.0
    %6680 = vmatpush2.msra.mxu0 0.0
    %6681 = vmatprep.subr.mxu0 0.0
    %6682 = vmatpush2.msra.mxu0 0.0
    %6683 = vmatprep.mubr.f32.mxu0 0.0
    %v6684 = vand.u32 %v6616, 4294901760
    %v6685 = vsub.f32 %v6616, %v6684
    %v6686 = vand.u32 %v6685, 4294901760
    %v6687 = vsub.f32 %v6685, %v6686
    %v6688 = vand.u32 %v6687, 4294901760
    %6689 = vmatmul.mubr.f32.gmra.mxu0 %v6688
    %v6690 = vpop.f32.mrf.mxu0
    %v6691 = vadd.f32 0.0, %v6690
    %v6692 = vpop.f32.mrf.mxu0
    %6693 = vdwg.mxu0
    %6694 = vmatprep.subr.mxu0 0.0
    %6695 = vmatpush1.msra.mxu0 0.0
    %6696 = vmatprep.subr.mxu0 0.0
    %6697 = vmatpush1.msra.mxu0 0.0
    %6698 = vmatprep.subr.mxu0 0.0
    %6699 = vmatpush1.msra.mxu0 0.0
    %6700 = vmatprep.subr.mxu0 0.0
    %6701 = vmatpush1.msra.mxu0 0.0
    %6702 = vmatprep.subr.mxu0 0.0
    %6703 = vmatpush1.msra.mxu0 0.0
    %6704 = vmatprep.subr.mxu0 0.0
    %6705 = vmatpush1.msra.mxu0 0.0
    %6706 = vmatprep.subr.mxu0 0.0
    %6707 = vmatpush1.msra.mxu0 0.0
    %6708 = vmatprep.subr.mxu0 0.0
    %6709 = vmatpush1.msra.mxu0 0.0
    %6710 = vmatprep.subr.mxu0 0.0
    %6711 = vmatpush1.msra.mxu0 0.0
    %6712 = vmatprep.subr.mxu0 0.0
    %6713 = vmatpush1.msra.mxu0 0.0
    %6714 = vmatprep.subr.mxu0 0.0
    %6715 = vmatpush1.msra.mxu0 0.0
    %6716 = vmatprep.subr.mxu0 0.0
    %6717 = vmatpush1.msra.mxu0 0.0
    %6718 = vmatprep.subr.mxu0 0.0
    %6719 = vmatpush1.msra.mxu0 0.0
    %6720 = vmatprep.subr.mxu0 0.0
    %6721 = vmatpush1.msra.mxu0 0.0
    %6722 = vmatprep.subr.mxu0 0.0
    %6723 = vmatpush1.msra.mxu0 0.0
    %6724 = vmatprep.subr.mxu0 0.0
    %v6725 = vand.u32 %v6613, 4294901760
    %v6726 = vsub.f32 %v6613, %v6725
    %v6727 = vand.u32 %v6726, 4294901760
    %v6728 = vsub.f32 %v6726, %v6727
    %v6729 = vand.u32 %v6728, 4294901760
    %6730 = vmatpush1.msra.mxu0 %v6729
    %6731 = vmatprep.subr.mxu0 0.0
    %6732 = vmatpush2.msra.mxu0 0.0
    %6733 = vmatprep.subr.mxu0 0.0
    %6734 = vmatpush2.msra.mxu0 0.0
    %6735 = vmatprep.subr.mxu0 0.0
    %6736 = vmatpush2.msra.mxu0 0.0
    %6737 = vmatprep.subr.mxu0 0.0
    %6738 = vmatpush2.msra.mxu0 0.0
    %6739 = vmatprep.subr.mxu0 0.0
    %6740 = vmatpush2.msra.mxu0 0.0
    %6741 = vmatprep.subr.mxu0 0.0
    %6742 = vmatpush2.msra.mxu0 0.0
    %6743 = vmatprep.subr.mxu0 0.0
    %6744 = vmatpush2.msra.mxu0 0.0
    %6745 = vmatprep.subr.mxu0 0.0
    %6746 = vmatpush2.msra.mxu0 0.0
    %6747 = vmatprep.subr.mxu0 0.0
    %6748 = vmatpush2.msra.mxu0 0.0
    %6749 = vmatprep.subr.mxu0 0.0
    %6750 = vmatpush2.msra.mxu0 0.0
    %6751 = vmatprep.subr.mxu0 0.0
    %6752 = vmatpush2.msra.mxu0 0.0
    %6753 = vmatprep.subr.mxu0 0.0
    %6754 = vmatpush2.msra.mxu0 0.0
    %6755 = vmatprep.subr.mxu0 0.0
    %6756 = vmatpush2.msra.mxu0 0.0
    %6757 = vmatprep.subr.mxu0 0.0
    %6758 = vmatpush2.msra.mxu0 0.0
    %6759 = vmatprep.subr.mxu0 0.0
    %6760 = vmatpush2.msra.mxu0 0.0
    %6761 = vmatprep.subr.mxu0 0.0
    %6762 = vmatpush2.msra.mxu0 0.0
    %6763 = vmatprep.mubr.f32.mxu0 0.0
    %v6764 = vand.u32 %v6616, 4294901760
    %6765 = vmatmul.mubr.f32.gmra.mxu0 %v6764
    %v6766 = vpop.f32.mrf.mxu0
    %v6767 = vadd.f32 %v6691, %v6766
    %v6768 = vpop.f32.mrf.mxu0
    %6769 = vdwg.mxu0
    %6770 = vmatprep.subr.mxu0 0.0
    %6771 = vmatpush1.msra.mxu0 0.0
    %6772 = vmatprep.subr.mxu0 0.0
    %6773 = vmatpush1.msra.mxu0 0.0
    %6774 = vmatprep.subr.mxu0 0.0
    %6775 = vmatpush1.msra.mxu0 0.0
    %6776 = vmatprep.subr.mxu0 0.0
    %6777 = vmatpush1.msra.mxu0 0.0
    %6778 = vmatprep.subr.mxu0 0.0
    %6779 = vmatpush1.msra.mxu0 0.0
    %6780 = vmatprep.subr.mxu0 0.0
    %6781 = vmatpush1.msra.mxu0 0.0
    %6782 = vmatprep.subr.mxu0 0.0
    %6783 = vmatpush1.msra.mxu0 0.0
    %6784 = vmatprep.subr.mxu0 0.0
    %6785 = vmatpush1.msra.mxu0 0.0
    %6786 = vmatprep.subr.mxu0 0.0
    %6787 = vmatpush1.msra.mxu0 0.0
    %6788 = vmatprep.subr.mxu0 0.0
    %6789 = vmatpush1.msra.mxu0 0.0
    %6790 = vmatprep.subr.mxu0 0.0
    %6791 = vmatpush1.msra.mxu0 0.0
    %6792 = vmatprep.subr.mxu0 0.0
    %6793 = vmatpush1.msra.mxu0 0.0
    %6794 = vmatprep.subr.mxu0 0.0
    %6795 = vmatpush1.msra.mxu0 0.0
    %6796 = vmatprep.subr.mxu0 0.0
    %6797 = vmatpush1.msra.mxu0 0.0
    %6798 = vmatprep.subr.mxu0 0.0
    %6799 = vmatpush1.msra.mxu0 0.0
    %6800 = vmatprep.subr.mxu0 0.0
    %v6801 = vand.u32 %v6613, 4294901760
    %v6802 = vsub.f32 %v6613, %v6801
    %6803 = vmatpush1.msra.mxu0 %v6802
    %6804 = vmatprep.subr.mxu0 0.0
    %6805 = vmatpush2.msra.mxu0 0.0
    %6806 = vmatprep.subr.mxu0 0.0
    %6807 = vmatpush2.msra.mxu0 0.0
    %6808 = vmatprep.subr.mxu0 0.0
    %6809 = vmatpush2.msra.mxu0 0.0
    %6810 = vmatprep.subr.mxu0 0.0
    %6811 = vmatpush2.msra.mxu0 0.0
    %6812 = vmatprep.subr.mxu0 0.0
    %6813 = vmatpush2.msra.mxu0 0.0
    %6814 = vmatprep.subr.mxu0 0.0
    %6815 = vmatpush2.msra.mxu0 0.0
    %6816 = vmatprep.subr.mxu0 0.0
    %6817 = vmatpush2.msra.mxu0 0.0
    %6818 = vmatprep.subr.mxu0 0.0
    %6819 = vmatpush2.msra.mxu0 0.0
    %6820 = vmatprep.subr.mxu0 0.0
    %6821 = vmatpush2.msra.mxu0 0.0
    %6822 = vmatprep.subr.mxu0 0.0
    %6823 = vmatpush2.msra.mxu0 0.0
    %6824 = vmatprep.subr.mxu0 0.0
    %6825 = vmatpush2.msra.mxu0 0.0
    %6826 = vmatprep.subr.mxu0 0.0
    %6827 = vmatpush2.msra.mxu0 0.0
    %6828 = vmatprep.subr.mxu0 0.0
    %6829 = vmatpush2.msra.mxu0 0.0
    %6830 = vmatprep.subr.mxu0 0.0
    %6831 = vmatpush2.msra.mxu0 0.0
    %6832 = vmatprep.subr.mxu0 0.0
    %6833 = vmatpush2.msra.mxu0 0.0
    %6834 = vmatprep.subr.mxu0 0.0
    %6835 = vmatpush2.msra.mxu0 0.0
    %6836 = vmatprep.mubr.f32.mxu0 0.0
    %v6837 = vand.u32 %v6616, 4294901760
    %v6838 = vsub.f32 %v6616, %v6837
    %6839 = vmatmul.mubr.f32.gmra.mxu0 %v6838
    %v6840 = vpop.f32.mrf.mxu0
    %v6841 = vadd.f32 %v6767, %v6840
    %v6842 = vpop.f32.mrf.mxu0
    %6843 = vdwg.mxu0
    %6844 = vmatprep.subr.mxu0 0.0
    %6845 = vmatpush1.msra.mxu0 0.0
    %6846 = vmatprep.subr.mxu0 0.0
    %6847 = vmatpush1.msra.mxu0 0.0
    %6848 = vmatprep.subr.mxu0 0.0
    %6849 = vmatpush1.msra.mxu0 0.0
    %6850 = vmatprep.subr.mxu0 0.0
    %6851 = vmatpush1.msra.mxu0 0.0
    %6852 = vmatprep.subr.mxu0 0.0
    %6853 = vmatpush1.msra.mxu0 0.0
    %6854 = vmatprep.subr.mxu0 0.0
    %6855 = vmatpush1.msra.mxu0 0.0
    %6856 = vmatprep.subr.mxu0 0.0
    %6857 = vmatpush1.msra.mxu0 0.0
    %6858 = vmatprep.subr.mxu0 0.0
    %6859 = vmatpush1.msra.mxu0 0.0
    %6860 = vmatprep.subr.mxu0 0.0
    %6861 = vmatpush1.msra.mxu0 0.0
    %6862 = vmatprep.subr.mxu0 0.0
    %6863 = vmatpush1.msra.mxu0 0.0
    %6864 = vmatprep.subr.mxu0 0.0
    %6865 = vmatpush1.msra.mxu0 0.0
    %6866 = vmatprep.subr.mxu0 0.0
    %6867 = vmatpush1.msra.mxu0 0.0
    %6868 = vmatprep.subr.mxu0 0.0
    %6869 = vmatpush1.msra.mxu0 0.0
    %6870 = vmatprep.subr.mxu0 0.0
    %6871 = vmatpush1.msra.mxu0 0.0
    %6872 = vmatprep.subr.mxu0 0.0
    %6873 = vmatpush1.msra.mxu0 0.0
    %6874 = vmatprep.subr.mxu0 0.0
    %v6875 = vand.u32 %v6613, 4294901760
    %6876 = vmatpush1.msra.mxu0 %v6875
    %6877 = vmatprep.subr.mxu0 0.0
    %6878 = vmatpush2.msra.mxu0 0.0
    %6879 = vmatprep.subr.mxu0 0.0
    %6880 = vmatpush2.msra.mxu0 0.0
    %6881 = vmatprep.subr.mxu0 0.0
    %6882 = vmatpush2.msra.mxu0 0.0
    %6883 = vmatprep.subr.mxu0 0.0
    %6884 = vmatpush2.msra.mxu0 0.0
    %6885 = vmatprep.subr.mxu0 0.0
    %6886 = vmatpush2.msra.mxu0 0.0
    %6887 = vmatprep.subr.mxu0 0.0
    %6888 = vmatpush2.msra.mxu0 0.0
    %6889 = vmatprep.subr.mxu0 0.0
    %6890 = vmatpush2.msra.mxu0 0.0
    %6891 = vmatprep.subr.mxu0 0.0
    %6892 = vmatpush2.msra.mxu0 0.0
    %6893 = vmatprep.subr.mxu0 0.0
    %6894 = vmatpush2.msra.mxu0 0.0
    %6895 = vmatprep.subr.mxu0 0.0
    %6896 = vmatpush2.msra.mxu0 0.0
    %6897 = vmatprep.subr.mxu0 0.0
    %6898 = vmatpush2.msra.mxu0 0.0
    %6899 = vmatprep.subr.mxu0 0.0
    %6900 = vmatpush2.msra.mxu0 0.0
    %6901 = vmatprep.subr.mxu0 0.0
    %6902 = vmatpush2.msra.mxu0 0.0
    %6903 = vmatprep.subr.mxu0 0.0
    %6904 = vmatpush2.msra.mxu0 0.0
    %6905 = vmatprep.subr.mxu0 0.0
    %6906 = vmatpush2.msra.mxu0 0.0
    %6907 = vmatprep.subr.mxu0 0.0
    %6908 = vmatpush2.msra.mxu0 0.0
    %6909 = vmatprep.mubr.f32.mxu0 0.0
    %v6910 = vand.u32 %v6616, 4294901760
    %v6911 = vsub.f32 %v6616, %v6910
    %v6912 = vand.u32 %v6911, 4294901760
    %6913 = vmatmul.mubr.f32.gmra.mxu0 %v6912
    %v6914 = vpop.f32.mrf.mxu0
    %v6915 = vadd.f32 %v6841, %v6914
    %v6916 = vpop.f32.mrf.mxu0
    %6917 = vdwg.mxu0
    %6918 = vmatprep.subr.mxu0 0.0
    %6919 = vmatpush1.msra.mxu0 0.0
    %6920 = vmatprep.subr.mxu0 0.0
    %6921 = vmatpush1.msra.mxu0 0.0
    %6922 = vmatprep.subr.mxu0 0.0
    %6923 = vmatpush1.msra.mxu0 0.0
    %6924 = vmatprep.subr.mxu0 0.0
    %6925 = vmatpush1.msra.mxu0 0.0
    %6926 = vmatprep.subr.mxu0 0.0
    %6927 = vmatpush1.msra.mxu0 0.0
    %6928 = vmatprep.subr.mxu0 0.0
    %6929 = vmatpush1.msra.mxu0 0.0
    %6930 = vmatprep.subr.mxu0 0.0
    %6931 = vmatpush1.msra.mxu0 0.0
    %6932 = vmatprep.subr.mxu0 0.0
    %6933 = vmatpush1.msra.mxu0 0.0
    %6934 = vmatprep.subr.mxu0 0.0
    %6935 = vmatpush1.msra.mxu0 0.0
    %6936 = vmatprep.subr.mxu0 0.0
    %6937 = vmatpush1.msra.mxu0 0.0
    %6938 = vmatprep.subr.mxu0 0.0
    %6939 = vmatpush1.msra.mxu0 0.0
    %6940 = vmatprep.subr.mxu0 0.0
    %6941 = vmatpush1.msra.mxu0 0.0
    %6942 = vmatprep.subr.mxu0 0.0
    %6943 = vmatpush1.msra.mxu0 0.0
    %6944 = vmatprep.subr.mxu0 0.0
    %6945 = vmatpush1.msra.mxu0 0.0
    %6946 = vmatprep.subr.mxu0 0.0
    %6947 = vmatpush1.msra.mxu0 0.0
    %6948 = vmatprep.subr.mxu0 0.0
    %v6949 = vand.u32 %v6613, 4294901760
    %v6950 = vsub.f32 %v6613, %v6949
    %v6951 = vand.u32 %v6950, 4294901760
    %6952 = vmatpush1.msra.mxu0 %v6951
    %6953 = vmatprep.subr.mxu0 0.0
    %6954 = vmatpush2.msra.mxu0 0.0
    %6955 = vmatprep.subr.mxu0 0.0
    %6956 = vmatpush2.msra.mxu0 0.0
    %6957 = vmatprep.subr.mxu0 0.0
    %6958 = vmatpush2.msra.mxu0 0.0
    %6959 = vmatprep.subr.mxu0 0.0
    %6960 = vmatpush2.msra.mxu0 0.0
    %6961 = vmatprep.subr.mxu0 0.0
    %6962 = vmatpush2.msra.mxu0 0.0
    %6963 = vmatprep.subr.mxu0 0.0
    %6964 = vmatpush2.msra.mxu0 0.0
    %6965 = vmatprep.subr.mxu0 0.0
    %6966 = vmatpush2.msra.mxu0 0.0
    %6967 = vmatprep.subr.mxu0 0.0
    %6968 = vmatpush2.msra.mxu0 0.0
    %6969 = vmatprep.subr.mxu0 0.0
    %6970 = vmatpush2.msra.mxu0 0.0
    %6971 = vmatprep.subr.mxu0 0.0
    %6972 = vmatpush2.msra.mxu0 0.0
    %6973 = vmatprep.subr.mxu0 0.0
    %6974 = vmatpush2.msra.mxu0 0.0
    %6975 = vmatprep.subr.mxu0 0.0
    %6976 = vmatpush2.msra.mxu0 0.0
    %6977 = vmatprep.subr.mxu0 0.0
    %6978 = vmatpush2.msra.mxu0 0.0
    %6979 = vmatprep.subr.mxu0 0.0
    %6980 = vmatpush2.msra.mxu0 0.0
    %6981 = vmatprep.subr.mxu0 0.0
    %6982 = vmatpush2.msra.mxu0 0.0
    %6983 = vmatprep.subr.mxu0 0.0
    %6984 = vmatpush2.msra.mxu0 0.0
    %6985 = vmatprep.mubr.f32.mxu0 0.0
    %v6986 = vand.u32 %v6616, 4294901760
    %6987 = vmatmul.mubr.f32.gmra.mxu0 %v6986
    %v6988 = vpop.f32.mrf.mxu0
    %v6989 = vadd.f32 %v6915, %v6988
    %v6990 = vpop.f32.mrf.mxu0
    %6991 = vdwg.mxu0
    %6992 = vmatprep.subr.mxu0 0.0
    %6993 = vmatpush1.msra.mxu0 0.0
    %6994 = vmatprep.subr.mxu0 0.0
    %6995 = vmatpush1.msra.mxu0 0.0
    %6996 = vmatprep.subr.mxu0 0.0
    %6997 = vmatpush1.msra.mxu0 0.0
    %6998 = vmatprep.subr.mxu0 0.0
    %6999 = vmatpush1.msra.mxu0 0.0
    %7000 = vmatprep.subr.mxu0 0.0
    %7001 = vmatpush1.msra.mxu0 0.0
    %7002 = vmatprep.subr.mxu0 0.0
    %7003 = vmatpush1.msra.mxu0 0.0
    %7004 = vmatprep.subr.mxu0 0.0
    %7005 = vmatpush1.msra.mxu0 0.0
    %7006 = vmatprep.subr.mxu0 0.0
    %7007 = vmatpush1.msra.mxu0 0.0
    %7008 = vmatprep.subr.mxu0 0.0
    %7009 = vmatpush1.msra.mxu0 0.0
    %7010 = vmatprep.subr.mxu0 0.0
    %7011 = vmatpush1.msra.mxu0 0.0
    %7012 = vmatprep.subr.mxu0 0.0
    %7013 = vmatpush1.msra.mxu0 0.0
    %7014 = vmatprep.subr.mxu0 0.0
    %7015 = vmatpush1.msra.mxu0 0.0
    %7016 = vmatprep.subr.mxu0 0.0
    %7017 = vmatpush1.msra.mxu0 0.0
    %7018 = vmatprep.subr.mxu0 0.0
    %7019 = vmatpush1.msra.mxu0 0.0
    %7020 = vmatprep.subr.mxu0 0.0
    %7021 = vmatpush1.msra.mxu0 0.0
    %7022 = vmatprep.subr.mxu0 0.0
    %v7023 = vand.u32 %v6613, 4294901760
    %7024 = vmatpush1.msra.mxu0 %v7023
    %7025 = vmatprep.subr.mxu0 0.0
    %7026 = vmatpush2.msra.mxu0 0.0
    %7027 = vmatprep.subr.mxu0 0.0
    %7028 = vmatpush2.msra.mxu0 0.0
    %7029 = vmatprep.subr.mxu0 0.0
    %7030 = vmatpush2.msra.mxu0 0.0
    %7031 = vmatprep.subr.mxu0 0.0
    %7032 = vmatpush2.msra.mxu0 0.0
    %7033 = vmatprep.subr.mxu0 0.0
    %7034 = vmatpush2.msra.mxu0 0.0
    %7035 = vmatprep.subr.mxu0 0.0
    %7036 = vmatpush2.msra.mxu0 0.0
    %7037 = vmatprep.subr.mxu0 0.0
    %7038 = vmatpush2.msra.mxu0 0.0
    %7039 = vmatprep.subr.mxu0 0.0
    %7040 = vmatpush2.msra.mxu0 0.0
    %7041 = vmatprep.subr.mxu0 0.0
    %7042 = vmatpush2.msra.mxu0 0.0
    %7043 = vmatprep.subr.mxu0 0.0
    %7044 = vmatpush2.msra.mxu0 0.0
    %7045 = vmatprep.subr.mxu0 0.0
    %7046 = vmatpush2.msra.mxu0 0.0
    %7047 = vmatprep.subr.mxu0 0.0
    %7048 = vmatpush2.msra.mxu0 0.0
    %7049 = vmatprep.subr.mxu0 0.0
    %7050 = vmatpush2.msra.mxu0 0.0
    %7051 = vmatprep.subr.mxu0 0.0
    %7052 = vmatpush2.msra.mxu0 0.0
    %7053 = vmatprep.subr.mxu0 0.0
    %7054 = vmatpush2.msra.mxu0 0.0
    %7055 = vmatprep.subr.mxu0 0.0
    %7056 = vmatpush2.msra.mxu0 0.0
    %7057 = vmatprep.mubr.f32.mxu0 0.0
    %v7058 = vand.u32 %v6616, 4294901760
    %7059 = vmatmul.mubr.f32.gmra.mxu0 %v7058
    %v7060 = vpop.f32.mrf.mxu0
    %v7061 = vadd.f32 %v6989, %v7060
    %v7062 = vpop.f32.mrf.mxu0
    %7063 = vdwg.mxu0
    %7065 = vrot.lane.b32.xlu0 %v7061, 16
    %v7066 = vpop.permute.xlu0 %7065
    %7068 = vst.msk [vmem:[#allocation2 + $0x8] sm:$0xff] %vm3375, %v7066
    %7069 = vrot.lane.b32.xlu0 %v604, 104
    %v7070 = vpop.permute.xlu0 %7069
    %7071 = vrot.lane.b32.xlu0 %v604, 72
    %v7072 = vpop.permute.xlu0 %7071
    %v7073 = vsel %vm610, %v7070, 0
    %v7075 = vsel %vm610, %v7072, 0
    %7077 = vmatprep.subr.mxu0 0.0
    %7078 = vmatpush1.xpose.msra.mxu0 0.0
    %7079 = vmatprep.subr.mxu0 0.0
    %7080 = vmatpush1.xpose.msra.mxu0 0.0
    %7081 = vmatprep.subr.mxu0 0.0
    %7082 = vmatpush1.xpose.msra.mxu0 0.0
    %7083 = vmatprep.subr.mxu0 0.0
    %7084 = vmatpush1.xpose.msra.mxu0 0.0
    %7085 = vmatprep.subr.mxu0 0.0
    %7086 = vmatpush1.xpose.msra.mxu0 0.0
    %7087 = vmatprep.subr.mxu0 0.0
    %7088 = vmatpush1.xpose.msra.mxu0 0.0
    %7089 = vmatprep.subr.mxu0 0.0
    %7090 = vmatpush1.xpose.msra.mxu0 0.0
    %7091 = vmatprep.subr.mxu0 0.0
    %7092 = vmatpush1.xpose.msra.mxu0 0.0
    %7093 = vmatprep.subr.mxu0 0.0
    %7094 = vmatpush1.xpose.msra.mxu0 0.0
    %7095 = vmatprep.subr.mxu0 0.0
    %7096 = vmatpush1.xpose.msra.mxu0 0.0
    %7097 = vmatprep.subr.mxu0 0.0
    %7098 = vmatpush1.xpose.msra.mxu0 0.0
    %7099 = vmatprep.subr.mxu0 0.0
    %7100 = vmatpush1.xpose.msra.mxu0 0.0
    %7101 = vmatprep.subr.mxu0 0.0
    %7102 = vmatpush1.xpose.msra.mxu0 0.0
    %7103 = vmatprep.subr.mxu0 0.0
    %7104 = vmatpush1.xpose.msra.mxu0 0.0
    %7105 = vmatprep.subr.mxu0 0.0
    %7106 = vmatpush1.xpose.msra.mxu0 0.0
    %7107 = vmatprep.subr.mxu0 0.0
    %v7108 = vand.u32 %v7075, 4294901760
    %7109 = vmatpush1.xpose.msra.mxu0 %v7108
    %7110 = vmatprep.subr.mxu0 0.0
    %7111 = vmatpush2.xpose.msra.mxu0 0.0
    %7112 = vmatprep.subr.mxu0 0.0
    %7113 = vmatpush2.xpose.msra.mxu0 0.0
    %7114 = vmatprep.subr.mxu0 0.0
    %7115 = vmatpush2.xpose.msra.mxu0 0.0
    %7116 = vmatprep.subr.mxu0 0.0
    %7117 = vmatpush2.xpose.msra.mxu0 0.0
    %7118 = vmatprep.subr.mxu0 0.0
    %7119 = vmatpush2.xpose.msra.mxu0 0.0
    %7120 = vmatprep.subr.mxu0 0.0
    %7121 = vmatpush2.xpose.msra.mxu0 0.0
    %7122 = vmatprep.subr.mxu0 0.0
    %7123 = vmatpush2.xpose.msra.mxu0 0.0
    %7124 = vmatprep.subr.mxu0 0.0
    %7125 = vmatpush2.xpose.msra.mxu0 0.0
    %7126 = vmatprep.subr.mxu0 0.0
    %7127 = vmatpush2.xpose.msra.mxu0 0.0
    %7128 = vmatprep.subr.mxu0 0.0
    %7129 = vmatpush2.xpose.msra.mxu0 0.0
    %7130 = vmatprep.subr.mxu0 0.0
    %7131 = vmatpush2.xpose.msra.mxu0 0.0
    %7132 = vmatprep.subr.mxu0 0.0
    %7133 = vmatpush2.xpose.msra.mxu0 0.0
    %7134 = vmatprep.subr.mxu0 0.0
    %7135 = vmatpush2.xpose.msra.mxu0 0.0
    %7136 = vmatprep.subr.mxu0 0.0
    %7137 = vmatpush2.xpose.msra.mxu0 0.0
    %7138 = vmatprep.subr.mxu0 0.0
    %7139 = vmatpush2.xpose.msra.mxu0 0.0
    %7140 = vmatprep.subr.mxu0 0.0
    %7141 = vmatpush2.xpose.msra.mxu0 0.0
    %7142 = vmatprep.mubr.f32.mxu0 0.0
    %v7143 = vand.u32 %v7073, 4294901760
    %v7144 = vsub.f32 %v7073, %v7143
    %v7145 = vand.u32 %v7144, 4294901760
    %v7146 = vsub.f32 %v7144, %v7145
    %v7147 = vand.u32 %v7146, 4294901760
    %7148 = vmatmul.mubr.f32.gmra.mxu0 %v7147
    %v7149 = vpop.f32.mrf.mxu0
    %v7150 = vadd.f32 0.0, %v7149
    %v7151 = vpop.f32.mrf.mxu0
    %7152 = vdwg.mxu0
    %7153 = vmatprep.subr.mxu0 0.0
    %7154 = vmatpush1.xpose.msra.mxu0 0.0
    %7155 = vmatprep.subr.mxu0 0.0
    %7156 = vmatpush1.xpose.msra.mxu0 0.0
    %7157 = vmatprep.subr.mxu0 0.0
    %7158 = vmatpush1.xpose.msra.mxu0 0.0
    %7159 = vmatprep.subr.mxu0 0.0
    %7160 = vmatpush1.xpose.msra.mxu0 0.0
    %7161 = vmatprep.subr.mxu0 0.0
    %7162 = vmatpush1.xpose.msra.mxu0 0.0
    %7163 = vmatprep.subr.mxu0 0.0
    %7164 = vmatpush1.xpose.msra.mxu0 0.0
    %7165 = vmatprep.subr.mxu0 0.0
    %7166 = vmatpush1.xpose.msra.mxu0 0.0
    %7167 = vmatprep.subr.mxu0 0.0
    %7168 = vmatpush1.xpose.msra.mxu0 0.0
    %7169 = vmatprep.subr.mxu0 0.0
    %7170 = vmatpush1.xpose.msra.mxu0 0.0
    %7171 = vmatprep.subr.mxu0 0.0
    %7172 = vmatpush1.xpose.msra.mxu0 0.0
    %7173 = vmatprep.subr.mxu0 0.0
    %7174 = vmatpush1.xpose.msra.mxu0 0.0
    %7175 = vmatprep.subr.mxu0 0.0
    %7176 = vmatpush1.xpose.msra.mxu0 0.0
    %7177 = vmatprep.subr.mxu0 0.0
    %7178 = vmatpush1.xpose.msra.mxu0 0.0
    %7179 = vmatprep.subr.mxu0 0.0
    %7180 = vmatpush1.xpose.msra.mxu0 0.0
    %7181 = vmatprep.subr.mxu0 0.0
    %7182 = vmatpush1.xpose.msra.mxu0 0.0
    %7183 = vmatprep.subr.mxu0 0.0
    %v7184 = vand.u32 %v7075, 4294901760
    %v7185 = vsub.f32 %v7075, %v7184
    %v7186 = vand.u32 %v7185, 4294901760
    %v7187 = vsub.f32 %v7185, %v7186
    %v7188 = vand.u32 %v7187, 4294901760
    %7189 = vmatpush1.xpose.msra.mxu0 %v7188
    %7190 = vmatprep.subr.mxu0 0.0
    %7191 = vmatpush2.xpose.msra.mxu0 0.0
    %7192 = vmatprep.subr.mxu0 0.0
    %7193 = vmatpush2.xpose.msra.mxu0 0.0
    %7194 = vmatprep.subr.mxu0 0.0
    %7195 = vmatpush2.xpose.msra.mxu0 0.0
    %7196 = vmatprep.subr.mxu0 0.0
    %7197 = vmatpush2.xpose.msra.mxu0 0.0
    %7198 = vmatprep.subr.mxu0 0.0
    %7199 = vmatpush2.xpose.msra.mxu0 0.0
    %7200 = vmatprep.subr.mxu0 0.0
    %7201 = vmatpush2.xpose.msra.mxu0 0.0
    %7202 = vmatprep.subr.mxu0 0.0
    %7203 = vmatpush2.xpose.msra.mxu0 0.0
    %7204 = vmatprep.subr.mxu0 0.0
    %7205 = vmatpush2.xpose.msra.mxu0 0.0
    %7206 = vmatprep.subr.mxu0 0.0
    %7207 = vmatpush2.xpose.msra.mxu0 0.0
    %7208 = vmatprep.subr.mxu0 0.0
    %7209 = vmatpush2.xpose.msra.mxu0 0.0
    %7210 = vmatprep.subr.mxu0 0.0
    %7211 = vmatpush2.xpose.msra.mxu0 0.0
    %7212 = vmatprep.subr.mxu0 0.0
    %7213 = vmatpush2.xpose.msra.mxu0 0.0
    %7214 = vmatprep.subr.mxu0 0.0
    %7215 = vmatpush2.xpose.msra.mxu0 0.0
    %7216 = vmatprep.subr.mxu0 0.0
    %7217 = vmatpush2.xpose.msra.mxu0 0.0
    %7218 = vmatprep.subr.mxu0 0.0
    %7219 = vmatpush2.xpose.msra.mxu0 0.0
    %7220 = vmatprep.subr.mxu0 0.0
    %7221 = vmatpush2.xpose.msra.mxu0 0.0
    %7222 = vmatprep.mubr.f32.mxu0 0.0
    %v7223 = vand.u32 %v7073, 4294901760
    %7224 = vmatmul.mubr.f32.gmra.mxu0 %v7223
    %v7225 = vpop.f32.mrf.mxu0
    %v7226 = vadd.f32 %v7150, %v7225
    %v7227 = vpop.f32.mrf.mxu0
    %7228 = vdwg.mxu0
    %7229 = vmatprep.subr.mxu0 0.0
    %7230 = vmatpush1.xpose.msra.mxu0 0.0
    %7231 = vmatprep.subr.mxu0 0.0
    %7232 = vmatpush1.xpose.msra.mxu0 0.0
    %7233 = vmatprep.subr.mxu0 0.0
    %7234 = vmatpush1.xpose.msra.mxu0 0.0
    %7235 = vmatprep.subr.mxu0 0.0
    %7236 = vmatpush1.xpose.msra.mxu0 0.0
    %7237 = vmatprep.subr.mxu0 0.0
    %7238 = vmatpush1.xpose.msra.mxu0 0.0
    %7239 = vmatprep.subr.mxu0 0.0
    %7240 = vmatpush1.xpose.msra.mxu0 0.0
    %7241 = vmatprep.subr.mxu0 0.0
    %7242 = vmatpush1.xpose.msra.mxu0 0.0
    %7243 = vmatprep.subr.mxu0 0.0
    %7244 = vmatpush1.xpose.msra.mxu0 0.0
    %7245 = vmatprep.subr.mxu0 0.0
    %7246 = vmatpush1.xpose.msra.mxu0 0.0
    %7247 = vmatprep.subr.mxu0 0.0
    %7248 = vmatpush1.xpose.msra.mxu0 0.0
    %7249 = vmatprep.subr.mxu0 0.0
    %7250 = vmatpush1.xpose.msra.mxu0 0.0
    %7251 = vmatprep.subr.mxu0 0.0
    %7252 = vmatpush1.xpose.msra.mxu0 0.0
    %7253 = vmatprep.subr.mxu0 0.0
    %7254 = vmatpush1.xpose.msra.mxu0 0.0
    %7255 = vmatprep.subr.mxu0 0.0
    %7256 = vmatpush1.xpose.msra.mxu0 0.0
    %7257 = vmatprep.subr.mxu0 0.0
    %7258 = vmatpush1.xpose.msra.mxu0 0.0
    %7259 = vmatprep.subr.mxu0 0.0
    %v7260 = vand.u32 %v7075, 4294901760
    %v7261 = vsub.f32 %v7075, %v7260
    %7262 = vmatpush1.xpose.msra.mxu0 %v7261
    %7263 = vmatprep.subr.mxu0 0.0
    %7264 = vmatpush2.xpose.msra.mxu0 0.0
    %7265 = vmatprep.subr.mxu0 0.0
    %7266 = vmatpush2.xpose.msra.mxu0 0.0
    %7267 = vmatprep.subr.mxu0 0.0
    %7268 = vmatpush2.xpose.msra.mxu0 0.0
    %7269 = vmatprep.subr.mxu0 0.0
    %7270 = vmatpush2.xpose.msra.mxu0 0.0
    %7271 = vmatprep.subr.mxu0 0.0
    %7272 = vmatpush2.xpose.msra.mxu0 0.0
    %7273 = vmatprep.subr.mxu0 0.0
    %7274 = vmatpush2.xpose.msra.mxu0 0.0
    %7275 = vmatprep.subr.mxu0 0.0
    %7276 = vmatpush2.xpose.msra.mxu0 0.0
    %7277 = vmatprep.subr.mxu0 0.0
    %7278 = vmatpush2.xpose.msra.mxu0 0.0
    %7279 = vmatprep.subr.mxu0 0.0
    %7280 = vmatpush2.xpose.msra.mxu0 0.0
    %7281 = vmatprep.subr.mxu0 0.0
    %7282 = vmatpush2.xpose.msra.mxu0 0.0
    %7283 = vmatprep.subr.mxu0 0.0
    %7284 = vmatpush2.xpose.msra.mxu0 0.0
    %7285 = vmatprep.subr.mxu0 0.0
    %7286 = vmatpush2.xpose.msra.mxu0 0.0
    %7287 = vmatprep.subr.mxu0 0.0
    %7288 = vmatpush2.xpose.msra.mxu0 0.0
    %7289 = vmatprep.subr.mxu0 0.0
    %7290 = vmatpush2.xpose.msra.mxu0 0.0
    %7291 = vmatprep.subr.mxu0 0.0
    %7292 = vmatpush2.xpose.msra.mxu0 0.0
    %7293 = vmatprep.subr.mxu0 0.0
    %7294 = vmatpush2.xpose.msra.mxu0 0.0
    %7295 = vmatprep.mubr.f32.mxu0 0.0
    %v7296 = vand.u32 %v7073, 4294901760
    %v7297 = vsub.f32 %v7073, %v7296
    %7298 = vmatmul.mubr.f32.gmra.mxu0 %v7297
    %v7299 = vpop.f32.mrf.mxu0
    %v7300 = vadd.f32 %v7226, %v7299
    %v7301 = vpop.f32.mrf.mxu0
    %7302 = vdwg.mxu0
    %7303 = vmatprep.subr.mxu0 0.0
    %7304 = vmatpush1.xpose.msra.mxu0 0.0
    %7305 = vmatprep.subr.mxu0 0.0
    %7306 = vmatpush1.xpose.msra.mxu0 0.0
    %7307 = vmatprep.subr.mxu0 0.0
    %7308 = vmatpush1.xpose.msra.mxu0 0.0
    %7309 = vmatprep.subr.mxu0 0.0
    %7310 = vmatpush1.xpose.msra.mxu0 0.0
    %7311 = vmatprep.subr.mxu0 0.0
    %7312 = vmatpush1.xpose.msra.mxu0 0.0
    %7313 = vmatprep.subr.mxu0 0.0
    %7314 = vmatpush1.xpose.msra.mxu0 0.0
    %7315 = vmatprep.subr.mxu0 0.0
    %7316 = vmatpush1.xpose.msra.mxu0 0.0
    %7317 = vmatprep.subr.mxu0 0.0
    %7318 = vmatpush1.xpose.msra.mxu0 0.0
    %7319 = vmatprep.subr.mxu0 0.0
    %7320 = vmatpush1.xpose.msra.mxu0 0.0
    %7321 = vmatprep.subr.mxu0 0.0
    %7322 = vmatpush1.xpose.msra.mxu0 0.0
    %7323 = vmatprep.subr.mxu0 0.0
    %7324 = vmatpush1.xpose.msra.mxu0 0.0
    %7325 = vmatprep.subr.mxu0 0.0
    %7326 = vmatpush1.xpose.msra.mxu0 0.0
    %7327 = vmatprep.subr.mxu0 0.0
    %7328 = vmatpush1.xpose.msra.mxu0 0.0
    %7329 = vmatprep.subr.mxu0 0.0
    %7330 = vmatpush1.xpose.msra.mxu0 0.0
    %7331 = vmatprep.subr.mxu0 0.0
    %7332 = vmatpush1.xpose.msra.mxu0 0.0
    %7333 = vmatprep.subr.mxu0 0.0
    %v7334 = vand.u32 %v7075, 4294901760
    %7335 = vmatpush1.xpose.msra.mxu0 %v7334
    %7336 = vmatprep.subr.mxu0 0.0
    %7337 = vmatpush2.xpose.msra.mxu0 0.0
    %7338 = vmatprep.subr.mxu0 0.0
    %7339 = vmatpush2.xpose.msra.mxu0 0.0
    %7340 = vmatprep.subr.mxu0 0.0
    %7341 = vmatpush2.xpose.msra.mxu0 0.0
    %7342 = vmatprep.subr.mxu0 0.0
    %7343 = vmatpush2.xpose.msra.mxu0 0.0
    %7344 = vmatprep.subr.mxu0 0.0
    %7345 = vmatpush2.xpose.msra.mxu0 0.0
    %7346 = vmatprep.subr.mxu0 0.0
    %7347 = vmatpush2.xpose.msra.mxu0 0.0
    %7348 = vmatprep.subr.mxu0 0.0
    %7349 = vmatpush2.xpose.msra.mxu0 0.0
    %7350 = vmatprep.subr.mxu0 0.0
    %7351 = vmatpush2.xpose.msra.mxu0 0.0
    %7352 = vmatprep.subr.mxu0 0.0
    %7353 = vmatpush2.xpose.msra.mxu0 0.0
    %7354 = vmatprep.subr.mxu0 0.0
    %7355 = vmatpush2.xpose.msra.mxu0 0.0
    %7356 = vmatprep.subr.mxu0 0.0
    %7357 = vmatpush2.xpose.msra.mxu0 0.0
    %7358 = vmatprep.subr.mxu0 0.0
    %7359 = vmatpush2.xpose.msra.mxu0 0.0
    %7360 = vmatprep.subr.mxu0 0.0
    %7361 = vmatpush2.xpose.msra.mxu0 0.0
    %7362 = vmatprep.subr.mxu0 0.0
    %7363 = vmatpush2.xpose.msra.mxu0 0.0
    %7364 = vmatprep.subr.mxu0 0.0
    %7365 = vmatpush2.xpose.msra.mxu0 0.0
    %7366 = vmatprep.subr.mxu0 0.0
    %7367 = vmatpush2.xpose.msra.mxu0 0.0
    %7368 = vmatprep.mubr.f32.mxu0 0.0
    %v7369 = vand.u32 %v7073, 4294901760
    %v7370 = vsub.f32 %v7073, %v7369
    %v7371 = vand.u32 %v7370, 4294901760
    %7372 = vmatmul.mubr.f32.gmra.mxu0 %v7371
    %v7373 = vpop.f32.mrf.mxu0
    %v7374 = vadd.f32 %v7300, %v7373
    %v7375 = vpop.f32.mrf.mxu0
    %7376 = vdwg.mxu0
    %7377 = vmatprep.subr.mxu0 0.0
    %7378 = vmatpush1.xpose.msra.mxu0 0.0
    %7379 = vmatprep.subr.mxu0 0.0
    %7380 = vmatpush1.xpose.msra.mxu0 0.0
    %7381 = vmatprep.subr.mxu0 0.0
    %7382 = vmatpush1.xpose.msra.mxu0 0.0
    %7383 = vmatprep.subr.mxu0 0.0
    %7384 = vmatpush1.xpose.msra.mxu0 0.0
    %7385 = vmatprep.subr.mxu0 0.0
    %7386 = vmatpush1.xpose.msra.mxu0 0.0
    %7387 = vmatprep.subr.mxu0 0.0
    %7388 = vmatpush1.xpose.msra.mxu0 0.0
    %7389 = vmatprep.subr.mxu0 0.0
    %7390 = vmatpush1.xpose.msra.mxu0 0.0
    %7391 = vmatprep.subr.mxu0 0.0
    %7392 = vmatpush1.xpose.msra.mxu0 0.0
    %7393 = vmatprep.subr.mxu0 0.0
    %7394 = vmatpush1.xpose.msra.mxu0 0.0
    %7395 = vmatprep.subr.mxu0 0.0
    %7396 = vmatpush1.xpose.msra.mxu0 0.0
    %7397 = vmatprep.subr.mxu0 0.0
    %7398 = vmatpush1.xpose.msra.mxu0 0.0
    %7399 = vmatprep.subr.mxu0 0.0
    %7400 = vmatpush1.xpose.msra.mxu0 0.0
    %7401 = vmatprep.subr.mxu0 0.0
    %7402 = vmatpush1.xpose.msra.mxu0 0.0
    %7403 = vmatprep.subr.mxu0 0.0
    %7404 = vmatpush1.xpose.msra.mxu0 0.0
    %7405 = vmatprep.subr.mxu0 0.0
    %7406 = vmatpush1.xpose.msra.mxu0 0.0
    %7407 = vmatprep.subr.mxu0 0.0
    %v7408 = vand.u32 %v7075, 4294901760
    %v7409 = vsub.f32 %v7075, %v7408
    %v7410 = vand.u32 %v7409, 4294901760
    %7411 = vmatpush1.xpose.msra.mxu0 %v7410
    %7412 = vmatprep.subr.mxu0 0.0
    %7413 = vmatpush2.xpose.msra.mxu0 0.0
    %7414 = vmatprep.subr.mxu0 0.0
    %7415 = vmatpush2.xpose.msra.mxu0 0.0
    %7416 = vmatprep.subr.mxu0 0.0
    %7417 = vmatpush2.xpose.msra.mxu0 0.0
    %7418 = vmatprep.subr.mxu0 0.0
    %7419 = vmatpush2.xpose.msra.mxu0 0.0
    %7420 = vmatprep.subr.mxu0 0.0
    %7421 = vmatpush2.xpose.msra.mxu0 0.0
    %7422 = vmatprep.subr.mxu0 0.0
    %7423 = vmatpush2.xpose.msra.mxu0 0.0
    %7424 = vmatprep.subr.mxu0 0.0
    %7425 = vmatpush2.xpose.msra.mxu0 0.0
    %7426 = vmatprep.subr.mxu0 0.0
    %7427 = vmatpush2.xpose.msra.mxu0 0.0
    %7428 = vmatprep.subr.mxu0 0.0
    %7429 = vmatpush2.xpose.msra.mxu0 0.0
    %7430 = vmatprep.subr.mxu0 0.0
    %7431 = vmatpush2.xpose.msra.mxu0 0.0
    %7432 = vmatprep.subr.mxu0 0.0
    %7433 = vmatpush2.xpose.msra.mxu0 0.0
    %7434 = vmatprep.subr.mxu0 0.0
    %7435 = vmatpush2.xpose.msra.mxu0 0.0
    %7436 = vmatprep.subr.mxu0 0.0
    %7437 = vmatpush2.xpose.msra.mxu0 0.0
    %7438 = vmatprep.subr.mxu0 0.0
    %7439 = vmatpush2.xpose.msra.mxu0 0.0
    %7440 = vmatprep.subr.mxu0 0.0
    %7441 = vmatpush2.xpose.msra.mxu0 0.0
    %7442 = vmatprep.subr.mxu0 0.0
    %7443 = vmatpush2.xpose.msra.mxu0 0.0
    %7444 = vmatprep.mubr.f32.mxu0 0.0
    %v7445 = vand.u32 %v7073, 4294901760
    %7446 = vmatmul.mubr.f32.gmra.mxu0 %v7445
    %v7447 = vpop.f32.mrf.mxu0
    %v7448 = vadd.f32 %v7374, %v7447
    %v7449 = vpop.f32.mrf.mxu0
    %7450 = vdwg.mxu0
    %7451 = vmatprep.subr.mxu0 0.0
    %7452 = vmatpush1.xpose.msra.mxu0 0.0
    %7453 = vmatprep.subr.mxu0 0.0
    %7454 = vmatpush1.xpose.msra.mxu0 0.0
    %7455 = vmatprep.subr.mxu0 0.0
    %7456 = vmatpush1.xpose.msra.mxu0 0.0
    %7457 = vmatprep.subr.mxu0 0.0
    %7458 = vmatpush1.xpose.msra.mxu0 0.0
    %7459 = vmatprep.subr.mxu0 0.0
    %7460 = vmatpush1.xpose.msra.mxu0 0.0
    %7461 = vmatprep.subr.mxu0 0.0
    %7462 = vmatpush1.xpose.msra.mxu0 0.0
    %7463 = vmatprep.subr.mxu0 0.0
    %7464 = vmatpush1.xpose.msra.mxu0 0.0
    %7465 = vmatprep.subr.mxu0 0.0
    %7466 = vmatpush1.xpose.msra.mxu0 0.0
    %7467 = vmatprep.subr.mxu0 0.0
    %7468 = vmatpush1.xpose.msra.mxu0 0.0
    %7469 = vmatprep.subr.mxu0 0.0
    %7470 = vmatpush1.xpose.msra.mxu0 0.0
    %7471 = vmatprep.subr.mxu0 0.0
    %7472 = vmatpush1.xpose.msra.mxu0 0.0
    %7473 = vmatprep.subr.mxu0 0.0
    %7474 = vmatpush1.xpose.msra.mxu0 0.0
    %7475 = vmatprep.subr.mxu0 0.0
    %7476 = vmatpush1.xpose.msra.mxu0 0.0
    %7477 = vmatprep.subr.mxu0 0.0
    %7478 = vmatpush1.xpose.msra.mxu0 0.0
    %7479 = vmatprep.subr.mxu0 0.0
    %7480 = vmatpush1.xpose.msra.mxu0 0.0
    %7481 = vmatprep.subr.mxu0 0.0
    %v7482 = vand.u32 %v7075, 4294901760
    %7483 = vmatpush1.xpose.msra.mxu0 %v7482
    %7484 = vmatprep.subr.mxu0 0.0
    %7485 = vmatpush2.xpose.msra.mxu0 0.0
    %7486 = vmatprep.subr.mxu0 0.0
    %7487 = vmatpush2.xpose.msra.mxu0 0.0
    %7488 = vmatprep.subr.mxu0 0.0
    %7489 = vmatpush2.xpose.msra.mxu0 0.0
    %7490 = vmatprep.subr.mxu0 0.0
    %7491 = vmatpush2.xpose.msra.mxu0 0.0
    %7492 = vmatprep.subr.mxu0 0.0
    %7493 = vmatpush2.xpose.msra.mxu0 0.0
    %7494 = vmatprep.subr.mxu0 0.0
    %7495 = vmatpush2.xpose.msra.mxu0 0.0
    %7496 = vmatprep.subr.mxu0 0.0
    %7497 = vmatpush2.xpose.msra.mxu0 0.0
    %7498 = vmatprep.subr.mxu0 0.0
    %7499 = vmatpush2.xpose.msra.mxu0 0.0
    %7500 = vmatprep.subr.mxu0 0.0
    %7501 = vmatpush2.xpose.msra.mxu0 0.0
    %7502 = vmatprep.subr.mxu0 0.0
    %7503 = vmatpush2.xpose.msra.mxu0 0.0
    %7504 = vmatprep.subr.mxu0 0.0
    %7505 = vmatpush2.xpose.msra.mxu0 0.0
    %7506 = vmatprep.subr.mxu0 0.0
    %7507 = vmatpush2.xpose.msra.mxu0 0.0
    %7508 = vmatprep.subr.mxu0 0.0
    %7509 = vmatpush2.xpose.msra.mxu0 0.0
    %7510 = vmatprep.subr.mxu0 0.0
    %7511 = vmatpush2.xpose.msra.mxu0 0.0
    %7512 = vmatprep.subr.mxu0 0.0
    %7513 = vmatpush2.xpose.msra.mxu0 0.0
    %7514 = vmatprep.subr.mxu0 0.0
    %7515 = vmatpush2.xpose.msra.mxu0 0.0
    %7516 = vmatprep.mubr.f32.mxu0 0.0
    %v7517 = vand.u32 %v7073, 4294901760
    %7518 = vmatmul.mubr.f32.gmra.mxu0 %v7517
    %v7519 = vpop.f32.mrf.mxu0
    %v7520 = vadd.f32 %v7448, %v7519
    %v7521 = vpop.f32.mrf.mxu0
    %7522 = vdwg.mxu0
    %v7523 = vmul.f32 %v7520, 0.35355338
    %v7524 = vsel %vm610, %v7523, -inf
    %7525 = vmax.xlane.f32.xlu0 %v7524
    %v7526 = vpop.xlane.xlu0 %7525
    %v7527 = vsub.f32 %v7523, %v7526
    %v7528 = vmul.f32 %v7527, 1.442695
    %v7529 = vpow.pop %v7528
    %v7530 = vsel %vm610, %v7529, 0.0
    %7531 = vadd.xlane.f32.xlu0 %v7530
    %v7532 = vpop.xlane.xlu0 %7531
    %v7533 = vrcp.pop %v7532
    %v7534 = vmul.f32 1.0, %v7533
    %v7535 = vmul.f32 %v7529, %v7534
    %7536 = vrot.lane.b32.xlu0 %v604, 40
    %v7537 = vpop.permute.xlu0 %7536
    %v7540 = vsel %vm610, %v7535, 0
    %7542 = vmatprep.subr.mxu0 0.0
    %7543 = vmatpush1.msra.mxu0 0.0
    %7544 = vmatprep.subr.mxu0 0.0
    %7545 = vmatpush1.msra.mxu0 0.0
    %7546 = vmatprep.subr.mxu0 0.0
    %7547 = vmatpush1.msra.mxu0 0.0
    %7548 = vmatprep.subr.mxu0 0.0
    %7549 = vmatpush1.msra.mxu0 0.0
    %7550 = vmatprep.subr.mxu0 0.0
    %7551 = vmatpush1.msra.mxu0 0.0
    %7552 = vmatprep.subr.mxu0 0.0
    %7553 = vmatpush1.msra.mxu0 0.0
    %7554 = vmatprep.subr.mxu0 0.0
    %7555 = vmatpush1.msra.mxu0 0.0
    %7556 = vmatprep.subr.mxu0 0.0
    %7557 = vmatpush1.msra.mxu0 0.0
    %7558 = vmatprep.subr.mxu0 0.0
    %7559 = vmatpush1.msra.mxu0 0.0
    %7560 = vmatprep.subr.mxu0 0.0
    %7561 = vmatpush1.msra.mxu0 0.0
    %7562 = vmatprep.subr.mxu0 0.0
    %7563 = vmatpush1.msra.mxu0 0.0
    %7564 = vmatprep.subr.mxu0 0.0
    %7565 = vmatpush1.msra.mxu0 0.0
    %7566 = vmatprep.subr.mxu0 0.0
    %7567 = vmatpush1.msra.mxu0 0.0
    %7568 = vmatprep.subr.mxu0 0.0
    %7569 = vmatpush1.msra.mxu0 0.0
    %7570 = vmatprep.subr.mxu0 0.0
    %7571 = vmatpush1.msra.mxu0 0.0
    %7572 = vmatprep.subr.mxu0 0.0
    %v7573 = vand.u32 %v7537, 4294901760
    %7574 = vmatpush1.msra.mxu0 %v7573
    %7575 = vmatprep.subr.mxu0 0.0
    %7576 = vmatpush2.msra.mxu0 0.0
    %7577 = vmatprep.subr.mxu0 0.0
    %7578 = vmatpush2.msra.mxu0 0.0
    %7579 = vmatprep.subr.mxu0 0.0
    %7580 = vmatpush2.msra.mxu0 0.0
    %7581 = vmatprep.subr.mxu0 0.0
    %7582 = vmatpush2.msra.mxu0 0.0
    %7583 = vmatprep.subr.mxu0 0.0
    %7584 = vmatpush2.msra.mxu0 0.0
    %7585 = vmatprep.subr.mxu0 0.0
    %7586 = vmatpush2.msra.mxu0 0.0
    %7587 = vmatprep.subr.mxu0 0.0
    %7588 = vmatpush2.msra.mxu0 0.0
    %7589 = vmatprep.subr.mxu0 0.0
    %7590 = vmatpush2.msra.mxu0 0.0
    %7591 = vmatprep.subr.mxu0 0.0
    %7592 = vmatpush2.msra.mxu0 0.0
    %7593 = vmatprep.subr.mxu0 0.0
    %7594 = vmatpush2.msra.mxu0 0.0
    %7595 = vmatprep.subr.mxu0 0.0
    %7596 = vmatpush2.msra.mxu0 0.0
    %7597 = vmatprep.subr.mxu0 0.0
    %7598 = vmatpush2.msra.mxu0 0.0
    %7599 = vmatprep.subr.mxu0 0.0
    %7600 = vmatpush2.msra.mxu0 0.0
    %7601 = vmatprep.subr.mxu0 0.0
    %7602 = vmatpush2.msra.mxu0 0.0
    %7603 = vmatprep.subr.mxu0 0.0
    %7604 = vmatpush2.msra.mxu0 0.0
    %7605 = vmatprep.subr.mxu0 0.0
    %7606 = vmatpush2.msra.mxu0 0.0
    %7607 = vmatprep.mubr.f32.mxu0 0.0
    %v7608 = vand.u32 %v7540, 4294901760
    %v7609 = vsub.f32 %v7540, %v7608
    %v7610 = vand.u32 %v7609, 4294901760
    %v7611 = vsub.f32 %v7609, %v7610
    %v7612 = vand.u32 %v7611, 4294901760
    %7613 = vmatmul.mubr.f32.gmra.mxu0 %v7612
    %v7614 = vpop.f32.mrf.mxu0
    %v7615 = vadd.f32 0.0, %v7614
    %v7616 = vpop.f32.mrf.mxu0
    %7617 = vdwg.mxu0
    %7618 = vmatprep.subr.mxu0 0.0
    %7619 = vmatpush1.msra.mxu0 0.0
    %7620 = vmatprep.subr.mxu0 0.0
    %7621 = vmatpush1.msra.mxu0 0.0
    %7622 = vmatprep.subr.mxu0 0.0
    %7623 = vmatpush1.msra.mxu0 0.0
    %7624 = vmatprep.subr.mxu0 0.0
    %7625 = vmatpush1.msra.mxu0 0.0
    %7626 = vmatprep.subr.mxu0 0.0
    %7627 = vmatpush1.msra.mxu0 0.0
    %7628 = vmatprep.subr.mxu0 0.0
    %7629 = vmatpush1.msra.mxu0 0.0
    %7630 = vmatprep.subr.mxu0 0.0
    %7631 = vmatpush1.msra.mxu0 0.0
    %7632 = vmatprep.subr.mxu0 0.0
    %7633 = vmatpush1.msra.mxu0 0.0
    %7634 = vmatprep.subr.mxu0 0.0
    %7635 = vmatpush1.msra.mxu0 0.0
    %7636 = vmatprep.subr.mxu0 0.0
    %7637 = vmatpush1.msra.mxu0 0.0
    %7638 = vmatprep.subr.mxu0 0.0
    %7639 = vmatpush1.msra.mxu0 0.0
    %7640 = vmatprep.subr.mxu0 0.0
    %7641 = vmatpush1.msra.mxu0 0.0
    %7642 = vmatprep.subr.mxu0 0.0
    %7643 = vmatpush1.msra.mxu0 0.0
    %7644 = vmatprep.subr.mxu0 0.0
    %7645 = vmatpush1.msra.mxu0 0.0
    %7646 = vmatprep.subr.mxu0 0.0
    %7647 = vmatpush1.msra.mxu0 0.0
    %7648 = vmatprep.subr.mxu0 0.0
    %v7649 = vand.u32 %v7537, 4294901760
    %v7650 = vsub.f32 %v7537, %v7649
    %v7651 = vand.u32 %v7650, 4294901760
    %v7652 = vsub.f32 %v7650, %v7651
    %v7653 = vand.u32 %v7652, 4294901760
    %7654 = vmatpush1.msra.mxu0 %v7653
    %7655 = vmatprep.subr.mxu0 0.0
    %7656 = vmatpush2.msra.mxu0 0.0
    %7657 = vmatprep.subr.mxu0 0.0
    %7658 = vmatpush2.msra.mxu0 0.0
    %7659 = vmatprep.subr.mxu0 0.0
    %7660 = vmatpush2.msra.mxu0 0.0
    %7661 = vmatprep.subr.mxu0 0.0
    %7662 = vmatpush2.msra.mxu0 0.0
    %7663 = vmatprep.subr.mxu0 0.0
    %7664 = vmatpush2.msra.mxu0 0.0
    %7665 = vmatprep.subr.mxu0 0.0
    %7666 = vmatpush2.msra.mxu0 0.0
    %7667 = vmatprep.subr.mxu0 0.0
    %7668 = vmatpush2.msra.mxu0 0.0
    %7669 = vmatprep.subr.mxu0 0.0
    %7670 = vmatpush2.msra.mxu0 0.0
    %7671 = vmatprep.subr.mxu0 0.0
    %7672 = vmatpush2.msra.mxu0 0.0
    %7673 = vmatprep.subr.mxu0 0.0
    %7674 = vmatpush2.msra.mxu0 0.0
    %7675 = vmatprep.subr.mxu0 0.0
    %7676 = vmatpush2.msra.mxu0 0.0
    %7677 = vmatprep.subr.mxu0 0.0
    %7678 = vmatpush2.msra.mxu0 0.0
    %7679 = vmatprep.subr.mxu0 0.0
    %7680 = vmatpush2.msra.mxu0 0.0
    %7681 = vmatprep.subr.mxu0 0.0
    %7682 = vmatpush2.msra.mxu0 0.0
    %7683 = vmatprep.subr.mxu0 0.0
    %7684 = vmatpush2.msra.mxu0 0.0
    %7685 = vmatprep.subr.mxu0 0.0
    %7686 = vmatpush2.msra.mxu0 0.0
    %7687 = vmatprep.mubr.f32.mxu0 0.0
    %v7688 = vand.u32 %v7540, 4294901760
    %7689 = vmatmul.mubr.f32.gmra.mxu0 %v7688
    %v7690 = vpop.f32.mrf.mxu0
    %v7691 = vadd.f32 %v7615, %v7690
    %v7692 = vpop.f32.mrf.mxu0
    %7693 = vdwg.mxu0
    %7694 = vmatprep.subr.mxu0 0.0
    %7695 = vmatpush1.msra.mxu0 0.0
    %7696 = vmatprep.subr.mxu0 0.0
    %7697 = vmatpush1.msra.mxu0 0.0
    %7698 = vmatprep.subr.mxu0 0.0
    %7699 = vmatpush1.msra.mxu0 0.0
    %7700 = vmatprep.subr.mxu0 0.0
    %7701 = vmatpush1.msra.mxu0 0.0
    %7702 = vmatprep.subr.mxu0 0.0
    %7703 = vmatpush1.msra.mxu0 0.0
    %7704 = vmatprep.subr.mxu0 0.0
    %7705 = vmatpush1.msra.mxu0 0.0
    %7706 = vmatprep.subr.mxu0 0.0
    %7707 = vmatpush1.msra.mxu0 0.0
    %7708 = vmatprep.subr.mxu0 0.0
    %7709 = vmatpush1.msra.mxu0 0.0
    %7710 = vmatprep.subr.mxu0 0.0
    %7711 = vmatpush1.msra.mxu0 0.0
    %7712 = vmatprep.subr.mxu0 0.0
    %7713 = vmatpush1.msra.mxu0 0.0
    %7714 = vmatprep.subr.mxu0 0.0
    %7715 = vmatpush1.msra.mxu0 0.0
    %7716 = vmatprep.subr.mxu0 0.0
    %7717 = vmatpush1.msra.mxu0 0.0
    %7718 = vmatprep.subr.mxu0 0.0
    %7719 = vmatpush1.msra.mxu0 0.0
    %7720 = vmatprep.subr.mxu0 0.0
    %7721 = vmatpush1.msra.mxu0 0.0
    %7722 = vmatprep.subr.mxu0 0.0
    %7723 = vmatpush1.msra.mxu0 0.0
    %7724 = vmatprep.subr.mxu0 0.0
    %v7725 = vand.u32 %v7537, 4294901760
    %v7726 = vsub.f32 %v7537, %v7725
    %7727 = vmatpush1.msra.mxu0 %v7726
    %7728 = vmatprep.subr.mxu0 0.0
    %7729 = vmatpush2.msra.mxu0 0.0
    %7730 = vmatprep.subr.mxu0 0.0
    %7731 = vmatpush2.msra.mxu0 0.0
    %7732 = vmatprep.subr.mxu0 0.0
    %7733 = vmatpush2.msra.mxu0 0.0
    %7734 = vmatprep.subr.mxu0 0.0
    %7735 = vmatpush2.msra.mxu0 0.0
    %7736 = vmatprep.subr.mxu0 0.0
    %7737 = vmatpush2.msra.mxu0 0.0
    %7738 = vmatprep.subr.mxu0 0.0
    %7739 = vmatpush2.msra.mxu0 0.0
    %7740 = vmatprep.subr.mxu0 0.0
    %7741 = vmatpush2.msra.mxu0 0.0
    %7742 = vmatprep.subr.mxu0 0.0
    %7743 = vmatpush2.msra.mxu0 0.0
    %7744 = vmatprep.subr.mxu0 0.0
    %7745 = vmatpush2.msra.mxu0 0.0
    %7746 = vmatprep.subr.mxu0 0.0
    %7747 = vmatpush2.msra.mxu0 0.0
    %7748 = vmatprep.subr.mxu0 0.0
    %7749 = vmatpush2.msra.mxu0 0.0
    %7750 = vmatprep.subr.mxu0 0.0
    %7751 = vmatpush2.msra.mxu0 0.0
    %7752 = vmatprep.subr.mxu0 0.0
    %7753 = vmatpush2.msra.mxu0 0.0
    %7754 = vmatprep.subr.mxu0 0.0
    %7755 = vmatpush2.msra.mxu0 0.0
    %7756 = vmatprep.subr.mxu0 0.0
    %7757 = vmatpush2.msra.mxu0 0.0
    %7758 = vmatprep.subr.mxu0 0.0
    %7759 = vmatpush2.msra.mxu0 0.0
    %7760 = vmatprep.mubr.f32.mxu0 0.0
    %v7761 = vand.u32 %v7540, 4294901760
    %v7762 = vsub.f32 %v7540, %v7761
    %7763 = vmatmul.mubr.f32.gmra.mxu0 %v7762
    %v7764 = vpop.f32.mrf.mxu0
    %v7765 = vadd.f32 %v7691, %v7764
    %v7766 = vpop.f32.mrf.mxu0
    %7767 = vdwg.mxu0
    %7768 = vmatprep.subr.mxu0 0.0
    %7769 = vmatpush1.msra.mxu0 0.0
    %7770 = vmatprep.subr.mxu0 0.0
    %7771 = vmatpush1.msra.mxu0 0.0
    %7772 = vmatprep.subr.mxu0 0.0
    %7773 = vmatpush1.msra.mxu0 0.0
    %7774 = vmatprep.subr.mxu0 0.0
    %7775 = vmatpush1.msra.mxu0 0.0
    %7776 = vmatprep.subr.mxu0 0.0
    %7777 = vmatpush1.msra.mxu0 0.0
    %7778 = vmatprep.subr.mxu0 0.0
    %7779 = vmatpush1.msra.mxu0 0.0
    %7780 = vmatprep.subr.mxu0 0.0
    %7781 = vmatpush1.msra.mxu0 0.0
    %7782 = vmatprep.subr.mxu0 0.0
    %7783 = vmatpush1.msra.mxu0 0.0
    %7784 = vmatprep.subr.mxu0 0.0
    %7785 = vmatpush1.msra.mxu0 0.0
    %7786 = vmatprep.subr.mxu0 0.0
    %7787 = vmatpush1.msra.mxu0 0.0
    %7788 = vmatprep.subr.mxu0 0.0
    %7789 = vmatpush1.msra.mxu0 0.0
    %7790 = vmatprep.subr.mxu0 0.0
    %7791 = vmatpush1.msra.mxu0 0.0
    %7792 = vmatprep.subr.mxu0 0.0
    %7793 = vmatpush1.msra.mxu0 0.0
    %7794 = vmatprep.subr.mxu0 0.0
    %7795 = vmatpush1.msra.mxu0 0.0
    %7796 = vmatprep.subr.mxu0 0.0
    %7797 = vmatpush1.msra.mxu0 0.0
    %7798 = vmatprep.subr.mxu0 0.0
    %v7799 = vand.u32 %v7537, 4294901760
    %7800 = vmatpush1.msra.mxu0 %v7799
    %7801 = vmatprep.subr.mxu0 0.0
    %7802 = vmatpush2.msra.mxu0 0.0
    %7803 = vmatprep.subr.mxu0 0.0
    %7804 = vmatpush2.msra.mxu0 0.0
    %7805 = vmatprep.subr.mxu0 0.0
    %7806 = vmatpush2.msra.mxu0 0.0
    %7807 = vmatprep.subr.mxu0 0.0
    %7808 = vmatpush2.msra.mxu0 0.0
    %7809 = vmatprep.subr.mxu0 0.0
    %7810 = vmatpush2.msra.mxu0 0.0
    %7811 = vmatprep.subr.mxu0 0.0
    %7812 = vmatpush2.msra.mxu0 0.0
    %7813 = vmatprep.subr.mxu0 0.0
    %7814 = vmatpush2.msra.mxu0 0.0
    %7815 = vmatprep.subr.mxu0 0.0
    %7816 = vmatpush2.msra.mxu0 0.0
    %7817 = vmatprep.subr.mxu0 0.0
    %7818 = vmatpush2.msra.mxu0 0.0
    %7819 = vmatprep.subr.mxu0 0.0
    %7820 = vmatpush2.msra.mxu0 0.0
    %7821 = vmatprep.subr.mxu0 0.0
    %7822 = vmatpush2.msra.mxu0 0.0
    %7823 = vmatprep.subr.mxu0 0.0
    %7824 = vmatpush2.msra.mxu0 0.0
    %7825 = vmatprep.subr.mxu0 0.0
    %7826 = vmatpush2.msra.mxu0 0.0
    %7827 = vmatprep.subr.mxu0 0.0
    %7828 = vmatpush2.msra.mxu0 0.0
    %7829 = vmatprep.subr.mxu0 0.0
    %7830 = vmatpush2.msra.mxu0 0.0
    %7831 = vmatprep.subr.mxu0 0.0
    %7832 = vmatpush2.msra.mxu0 0.0
    %7833 = vmatprep.mubr.f32.mxu0 0.0
    %v7834 = vand.u32 %v7540, 4294901760
    %v7835 = vsub.f32 %v7540, %v7834
    %v7836 = vand.u32 %v7835, 4294901760
    %7837 = vmatmul.mubr.f32.gmra.mxu0 %v7836
    %v7838 = vpop.f32.mrf.mxu0
    %v7839 = vadd.f32 %v7765, %v7838
    %v7840 = vpop.f32.mrf.mxu0
    %7841 = vdwg.mxu0
    %7842 = vmatprep.subr.mxu0 0.0
    %7843 = vmatpush1.msra.mxu0 0.0
    %7844 = vmatprep.subr.mxu0 0.0
    %7845 = vmatpush1.msra.mxu0 0.0
    %7846 = vmatprep.subr.mxu0 0.0
    %7847 = vmatpush1.msra.mxu0 0.0
    %7848 = vmatprep.subr.mxu0 0.0
    %7849 = vmatpush1.msra.mxu0 0.0
    %7850 = vmatprep.subr.mxu0 0.0
    %7851 = vmatpush1.msra.mxu0 0.0
    %7852 = vmatprep.subr.mxu0 0.0
    %7853 = vmatpush1.msra.mxu0 0.0
    %7854 = vmatprep.subr.mxu0 0.0
    %7855 = vmatpush1.msra.mxu0 0.0
    %7856 = vmatprep.subr.mxu0 0.0
    %7857 = vmatpush1.msra.mxu0 0.0
    %7858 = vmatprep.subr.mxu0 0.0
    %7859 = vmatpush1.msra.mxu0 0.0
    %7860 = vmatprep.subr.mxu0 0.0
    %7861 = vmatpush1.msra.mxu0 0.0
    %7862 = vmatprep.subr.mxu0 0.0
    %7863 = vmatpush1.msra.mxu0 0.0
    %7864 = vmatprep.subr.mxu0 0.0
    %7865 = vmatpush1.msra.mxu0 0.0
    %7866 = vmatprep.subr.mxu0 0.0
    %7867 = vmatpush1.msra.mxu0 0.0
    %7868 = vmatprep.subr.mxu0 0.0
    %7869 = vmatpush1.msra.mxu0 0.0
    %7870 = vmatprep.subr.mxu0 0.0
    %7871 = vmatpush1.msra.mxu0 0.0
    %7872 = vmatprep.subr.mxu0 0.0
    %v7873 = vand.u32 %v7537, 4294901760
    %v7874 = vsub.f32 %v7537, %v7873
    %v7875 = vand.u32 %v7874, 4294901760
    %7876 = vmatpush1.msra.mxu0 %v7875
    %7877 = vmatprep.subr.mxu0 0.0
    %7878 = vmatpush2.msra.mxu0 0.0
    %7879 = vmatprep.subr.mxu0 0.0
    %7880 = vmatpush2.msra.mxu0 0.0
    %7881 = vmatprep.subr.mxu0 0.0
    %7882 = vmatpush2.msra.mxu0 0.0
    %7883 = vmatprep.subr.mxu0 0.0
    %7884 = vmatpush2.msra.mxu0 0.0
    %7885 = vmatprep.subr.mxu0 0.0
    %7886 = vmatpush2.msra.mxu0 0.0
    %7887 = vmatprep.subr.mxu0 0.0
    %7888 = vmatpush2.msra.mxu0 0.0
    %7889 = vmatprep.subr.mxu0 0.0
    %7890 = vmatpush2.msra.mxu0 0.0
    %7891 = vmatprep.subr.mxu0 0.0
    %7892 = vmatpush2.msra.mxu0 0.0
    %7893 = vmatprep.subr.mxu0 0.0
    %7894 = vmatpush2.msra.mxu0 0.0
    %7895 = vmatprep.subr.mxu0 0.0
    %7896 = vmatpush2.msra.mxu0 0.0
    %7897 = vmatprep.subr.mxu0 0.0
    %7898 = vmatpush2.msra.mxu0 0.0
    %7899 = vmatprep.subr.mxu0 0.0
    %7900 = vmatpush2.msra.mxu0 0.0
    %7901 = vmatprep.subr.mxu0 0.0
    %7902 = vmatpush2.msra.mxu0 0.0
    %7903 = vmatprep.subr.mxu0 0.0
    %7904 = vmatpush2.msra.mxu0 0.0
    %7905 = vmatprep.subr.mxu0 0.0
    %7906 = vmatpush2.msra.mxu0 0.0
    %7907 = vmatprep.subr.mxu0 0.0
    %7908 = vmatpush2.msra.mxu0 0.0
    %7909 = vmatprep.mubr.f32.mxu0 0.0
    %v7910 = vand.u32 %v7540, 4294901760
    %7911 = vmatmul.mubr.f32.gmra.mxu0 %v7910
    %v7912 = vpop.f32.mrf.mxu0
    %v7913 = vadd.f32 %v7839, %v7912
    %v7914 = vpop.f32.mrf.mxu0
    %7915 = vdwg.mxu0
    %7916 = vmatprep.subr.mxu0 0.0
    %7917 = vmatpush1.msra.mxu0 0.0
    %7918 = vmatprep.subr.mxu0 0.0
    %7919 = vmatpush1.msra.mxu0 0.0
    %7920 = vmatprep.subr.mxu0 0.0
    %7921 = vmatpush1.msra.mxu0 0.0
    %7922 = vmatprep.subr.mxu0 0.0
    %7923 = vmatpush1.msra.mxu0 0.0
    %7924 = vmatprep.subr.mxu0 0.0
    %7925 = vmatpush1.msra.mxu0 0.0
    %7926 = vmatprep.subr.mxu0 0.0
    %7927 = vmatpush1.msra.mxu0 0.0
    %7928 = vmatprep.subr.mxu0 0.0
    %7929 = vmatpush1.msra.mxu0 0.0
    %7930 = vmatprep.subr.mxu0 0.0
    %7931 = vmatpush1.msra.mxu0 0.0
    %7932 = vmatprep.subr.mxu0 0.0
    %7933 = vmatpush1.msra.mxu0 0.0
    %7934 = vmatprep.subr.mxu0 0.0
    %7935 = vmatpush1.msra.mxu0 0.0
    %7936 = vmatprep.subr.mxu0 0.0
    %7937 = vmatpush1.msra.mxu0 0.0
    %7938 = vmatprep.subr.mxu0 0.0
    %7939 = vmatpush1.msra.mxu0 0.0
    %7940 = vmatprep.subr.mxu0 0.0
    %7941 = vmatpush1.msra.mxu0 0.0
    %7942 = vmatprep.subr.mxu0 0.0
    %7943 = vmatpush1.msra.mxu0 0.0
    %7944 = vmatprep.subr.mxu0 0.0
    %7945 = vmatpush1.msra.mxu0 0.0
    %7946 = vmatprep.subr.mxu0 0.0
    %v7947 = vand.u32 %v7537, 4294901760
    %7948 = vmatpush1.msra.mxu0 %v7947
    %7949 = vmatprep.subr.mxu0 0.0
    %7950 = vmatpush2.msra.mxu0 0.0
    %7951 = vmatprep.subr.mxu0 0.0
    %7952 = vmatpush2.msra.mxu0 0.0
    %7953 = vmatprep.subr.mxu0 0.0
    %7954 = vmatpush2.msra.mxu0 0.0
    %7955 = vmatprep.subr.mxu0 0.0
    %7956 = vmatpush2.msra.mxu0 0.0
    %7957 = vmatprep.subr.mxu0 0.0
    %7958 = vmatpush2.msra.mxu0 0.0
    %7959 = vmatprep.subr.mxu0 0.0
    %7960 = vmatpush2.msra.mxu0 0.0
    %7961 = vmatprep.subr.mxu0 0.0
    %7962 = vmatpush2.msra.mxu0 0.0
    %7963 = vmatprep.subr.mxu0 0.0
    %7964 = vmatpush2.msra.mxu0 0.0
    %7965 = vmatprep.subr.mxu0 0.0
    %7966 = vmatpush2.msra.mxu0 0.0
    %7967 = vmatprep.subr.mxu0 0.0
    %7968 = vmatpush2.msra.mxu0 0.0
    %7969 = vmatprep.subr.mxu0 0.0
    %7970 = vmatpush2.msra.mxu0 0.0
    %7971 = vmatprep.subr.mxu0 0.0
    %7972 = vmatpush2.msra.mxu0 0.0
    %7973 = vmatprep.subr.mxu0 0.0
    %7974 = vmatpush2.msra.mxu0 0.0
    %7975 = vmatprep.subr.mxu0 0.0
    %7976 = vmatpush2.msra.mxu0 0.0
    %7977 = vmatprep.subr.mxu0 0.0
    %7978 = vmatpush2.msra.mxu0 0.0
    %7979 = vmatprep.subr.mxu0 0.0
    %7980 = vmatpush2.msra.mxu0 0.0
    %7981 = vmatprep.mubr.f32.mxu0 0.0
    %v7982 = vand.u32 %v7540, 4294901760
    %7983 = vmatmul.mubr.f32.gmra.mxu0 %v7982
    %v7984 = vpop.f32.mrf.mxu0
    %v7985 = vadd.f32 %v7913, %v7984
    %v7986 = vpop.f32.mrf.mxu0
    %7987 = vdwg.mxu0
    %7989 = vrot.lane.b32.xlu0 %v7985, 24
    %v7990 = vpop.permute.xlu0 %7989
    %7992 = vst.msk [vmem:[#allocation2 + $0x8] sm:$0xff] %vm4300, %v7990
    %v7993 = vld [vmem:[#allocation2] sm:$0xff]
    %v7994 = vld [vmem:[#allocation2 + $0x8] sm:$0xff]
    %v7995 = vld [vmem:[%s3] sm:$0xff]
    %v7996 = vld [vmem:[%s3 + $0x8] sm:$0xff]
    %v7997 = vld [vmem:[%s3 + $0x10] sm:$0xff]
    %v7998 = vld [vmem:[%s3 + $0x18] sm:$0xff]
    %v7999 = vld [vmem:[%s4] sm:$0x1]
    %v8001 = vlaneseq
    %v8002 = vshrl.u32 %v8001, 7
    %v8003 = vsub.s32 0, %v8002
    %v8004 = vrot.slane %v7999, %v8003
    %v8007 = vsel %vm72, %v7993, 0
    %v8010 = vsel %vm72, %v7994, 0
    %8012 = vmatprep.subr.mxu0 0.0
    %8013 = vmatpush1.msra.mxu0 0.0
    %8014 = vmatprep.subr.mxu0 0.0
    %8015 = vmatpush1.msra.mxu0 0.0
    %8016 = vmatprep.subr.mxu0 0.0
    %8017 = vmatpush1.msra.mxu0 0.0
    %8018 = vmatprep.subr.mxu0 0.0
    %8019 = vmatpush1.msra.mxu0 0.0
    %8020 = vmatprep.subr.mxu0 0.0
    %8021 = vmatpush1.msra.mxu0 0.0
    %8022 = vmatprep.subr.mxu0 0.0
    %8023 = vmatpush1.msra.mxu0 0.0
    %8024 = vmatprep.subr.mxu0 0.0
    %8025 = vmatpush1.msra.mxu0 0.0
    %8026 = vmatprep.subr.mxu0 0.0
    %8027 = vmatpush1.msra.mxu0 0.0
    %8028 = vmatprep.subr.mxu0 0.0
    %8029 = vmatpush1.msra.mxu0 0.0
    %8030 = vmatprep.subr.mxu0 0.0
    %8031 = vmatpush1.msra.mxu0 0.0
    %8032 = vmatprep.subr.mxu0 0.0
    %8033 = vmatpush1.msra.mxu0 0.0
    %8034 = vmatprep.subr.mxu0 0.0
    %8035 = vmatpush1.msra.mxu0 0.0
    %8036 = vmatprep.subr.mxu0 0.0
    %v8037 = vand.u32 %v7998, 4294901760
    %8038 = vmatpush1.msra.mxu0 %v8037
    %8039 = vmatprep.subr.mxu0 0.0
    %v8040 = vand.u32 %v7997, 4294901760
    %8041 = vmatpush1.msra.mxu0 %v8040
    %8042 = vmatprep.subr.mxu0 0.0
    %v8043 = vand.u32 %v7996, 4294901760
    %8044 = vmatpush1.msra.mxu0 %v8043
    %8045 = vmatprep.subr.mxu0 0.0
    %v8046 = vand.u32 %v7995, 4294901760
    %8047 = vmatpush1.msra.mxu0 %v8046
    %8048 = vmatprep.subr.mxu0 0.0
    %8049 = vmatpush2.msra.mxu0 0.0
    %8050 = vmatprep.subr.mxu0 0.0
    %8051 = vmatpush2.msra.mxu0 0.0
    %8052 = vmatprep.subr.mxu0 0.0
    %8053 = vmatpush2.msra.mxu0 0.0
    %8054 = vmatprep.subr.mxu0 0.0
    %8055 = vmatpush2.msra.mxu0 0.0
    %8056 = vmatprep.subr.mxu0 0.0
    %8057 = vmatpush2.msra.mxu0 0.0
    %8058 = vmatprep.subr.mxu0 0.0
    %8059 = vmatpush2.msra.mxu0 0.0
    %8060 = vmatprep.subr.mxu0 0.0
    %8061 = vmatpush2.msra.mxu0 0.0
    %8062 = vmatprep.subr.mxu0 0.0
    %8063 = vmatpush2.msra.mxu0 0.0
    %8064 = vmatprep.subr.mxu0 0.0
    %8065 = vmatpush2.msra.mxu0 0.0
    %8066 = vmatprep.subr.mxu0 0.0
    %8067 = vmatpush2.msra.mxu0 0.0
    %8068 = vmatprep.subr.mxu0 0.0
    %8069 = vmatpush2.msra.mxu0 0.0
    %8070 = vmatprep.subr.mxu0 0.0
    %8071 = vmatpush2.msra.mxu0 0.0
    %8072 = vmatprep.subr.mxu0 0.0
    %8073 = vmatpush2.msra.mxu0 0.0
    %8074 = vmatprep.subr.mxu0 0.0
    %8075 = vmatpush2.msra.mxu0 0.0
    %8076 = vmatprep.subr.mxu0 0.0
    %8077 = vmatpush2.msra.mxu0 0.0
    %8078 = vmatprep.subr.mxu0 0.0
    %8079 = vmatpush2.msra.mxu0 0.0
    %8080 = vmatprep.mubr.f32.mxu0 0.0
    %v8081 = vand.u32 %v8007, 4294901760
    %v8082 = vsub.f32 %v8007, %v8081
    %v8083 = vand.u32 %v8082, 4294901760
    %v8084 = vsub.f32 %v8082, %v8083
    %v8085 = vand.u32 %v8084, 4294901760
    %8086 = vmatmul.mubr.f32.gmra.mxu0 %v8085
    %v8087 = vpop.f32.mrf.mxu0
    %v8088 = vadd.f32 %v8004, %v8087
    %v8089 = vpop.f32.mrf.mxu0
    %8090 = vmatprep.mubr.f32.mxu0 0.0
    %v8091 = vand.u32 %v8010, 4294901760
    %v8092 = vsub.f32 %v8010, %v8091
    %v8093 = vand.u32 %v8092, 4294901760
    %v8094 = vsub.f32 %v8092, %v8093
    %v8095 = vand.u32 %v8094, 4294901760
    %8096 = vmatmul.mubr.f32.gmra.mxu0 %v8095
    %v8097 = vpop.f32.mrf.mxu0
    %v8098 = vadd.f32 %v8004, %v8097
    %v8099 = vpop.f32.mrf.mxu0
    %8100 = vdwg.mxu0
    %8101 = vmatprep.subr.mxu0 0.0
    %8102 = vmatpush1.msra.mxu0 0.0
    %8103 = vmatprep.subr.mxu0 0.0
    %8104 = vmatpush1.msra.mxu0 0.0
    %8105 = vmatprep.subr.mxu0 0.0
    %8106 = vmatpush1.msra.mxu0 0.0
    %8107 = vmatprep.subr.mxu0 0.0
    %8108 = vmatpush1.msra.mxu0 0.0
    %8109 = vmatprep.subr.mxu0 0.0
    %8110 = vmatpush1.msra.mxu0 0.0
    %8111 = vmatprep.subr.mxu0 0.0
    %8112 = vmatpush1.msra.mxu0 0.0
    %8113 = vmatprep.subr.mxu0 0.0
    %8114 = vmatpush1.msra.mxu0 0.0
    %8115 = vmatprep.subr.mxu0 0.0
    %8116 = vmatpush1.msra.mxu0 0.0
    %8117 = vmatprep.subr.mxu0 0.0
    %8118 = vmatpush1.msra.mxu0 0.0
    %8119 = vmatprep.subr.mxu0 0.0
    %8120 = vmatpush1.msra.mxu0 0.0
    %8121 = vmatprep.subr.mxu0 0.0
    %8122 = vmatpush1.msra.mxu0 0.0
    %8123 = vmatprep.subr.mxu0 0.0
    %8124 = vmatpush1.msra.mxu0 0.0
    %8125 = vmatprep.subr.mxu0 0.0
    %v8126 = vand.u32 %v7998, 4294901760
    %v8127 = vsub.f32 %v7998, %v8126
    %v8128 = vand.u32 %v8127, 4294901760
    %v8129 = vsub.f32 %v8127, %v8128
    %v8130 = vand.u32 %v8129, 4294901760
    %8131 = vmatpush1.msra.mxu0 %v8130
    %8132 = vmatprep.subr.mxu0 0.0
    %v8133 = vand.u32 %v7997, 4294901760
    %v8134 = vsub.f32 %v7997, %v8133
    %v8135 = vand.u32 %v8134, 4294901760
    %v8136 = vsub.f32 %v8134, %v8135
    %v8137 = vand.u32 %v8136, 4294901760
    %8138 = vmatpush1.msra.mxu0 %v8137
    %8139 = vmatprep.subr.mxu0 0.0
    %v8140 = vand.u32 %v7996, 4294901760
    %v8141 = vsub.f32 %v7996, %v8140
    %v8142 = vand.u32 %v8141, 4294901760
    %v8143 = vsub.f32 %v8141, %v8142
    %v8144 = vand.u32 %v8143, 4294901760
    %8145 = vmatpush1.msra.mxu0 %v8144
    %8146 = vmatprep.subr.mxu0 0.0
    %v8147 = vand.u32 %v7995, 4294901760
    %v8148 = vsub.f32 %v7995, %v8147
    %v8149 = vand.u32 %v8148, 4294901760
    %v8150 = vsub.f32 %v8148, %v8149
    %v8151 = vand.u32 %v8150, 4294901760
    %8152 = vmatpush1.msra.mxu0 %v8151
    %8153 = vmatprep.subr.mxu0 0.0
    %8154 = vmatpush2.msra.mxu0 0.0
    %8155 = vmatprep.subr.mxu0 0.0
    %8156 = vmatpush2.msra.mxu0 0.0
    %8157 = vmatprep.subr.mxu0 0.0
    %8158 = vmatpush2.msra.mxu0 0.0
    %8159 = vmatprep.subr.mxu0 0.0
    %8160 = vmatpush2.msra.mxu0 0.0
    %8161 = vmatprep.subr.mxu0 0.0
    %8162 = vmatpush2.msra.mxu0 0.0
    %8163 = vmatprep.subr.mxu0 0.0
    %8164 = vmatpush2.msra.mxu0 0.0
    %8165 = vmatprep.subr.mxu0 0.0
    %8166 = vmatpush2.msra.mxu0 0.0
    %8167 = vmatprep.subr.mxu0 0.0
    %8168 = vmatpush2.msra.mxu0 0.0
    %8169 = vmatprep.subr.mxu0 0.0
    %8170 = vmatpush2.msra.mxu0 0.0
    %8171 = vmatprep.subr.mxu0 0.0
    %8172 = vmatpush2.msra.mxu0 0.0
    %8173 = vmatprep.subr.mxu0 0.0
    %8174 = vmatpush2.msra.mxu0 0.0
    %8175 = vmatprep.subr.mxu0 0.0
    %8176 = vmatpush2.msra.mxu0 0.0
    %8177 = vmatprep.subr.mxu0 0.0
    %8178 = vmatpush2.msra.mxu0 0.0
    %8179 = vmatprep.subr.mxu0 0.0
    %8180 = vmatpush2.msra.mxu0 0.0
    %8181 = vmatprep.subr.mxu0 0.0
    %8182 = vmatpush2.msra.mxu0 0.0
    %8183 = vmatprep.subr.mxu0 0.0
    %8184 = vmatpush2.msra.mxu0 0.0
    %8185 = vmatprep.mubr.f32.mxu0 0.0
    %v8186 = vand.u32 %v8007, 4294901760
    %8187 = vmatmul.mubr.f32.gmra.mxu0 %v8186
    %v8188 = vpop.f32.mrf.mxu0
    %v8189 = vadd.f32 %v8088, %v8188
    %v8190 = vpop.f32.mrf.mxu0
    %8191 = vmatprep.mubr.f32.mxu0 0.0
    %v8192 = vand.u32 %v8010, 4294901760
    %8193 = vmatmul.mubr.f32.gmra.mxu0 %v8192
    %v8194 = vpop.f32.mrf.mxu0
    %v8195 = vadd.f32 %v8098, %v8194
    %v8196 = vpop.f32.mrf.mxu0
    %8197 = vdwg.mxu0
    %8198 = vmatprep.subr.mxu0 0.0
    %8199 = vmatpush1.msra.mxu0 0.0
    %8200 = vmatprep.subr.mxu0 0.0
    %8201 = vmatpush1.msra.mxu0 0.0
    %8202 = vmatprep.subr.mxu0 0.0
    %8203 = vmatpush1.msra.mxu0 0.0
    %8204 = vmatprep.subr.mxu0 0.0
    %8205 = vmatpush1.msra.mxu0 0.0
    %8206 = vmatprep.subr.mxu0 0.0
    %8207 = vmatpush1.msra.mxu0 0.0
    %8208 = vmatprep.subr.mxu0 0.0
    %8209 = vmatpush1.msra.mxu0 0.0
    %8210 = vmatprep.subr.mxu0 0.0
    %8211 = vmatpush1.msra.mxu0 0.0
    %8212 = vmatprep.subr.mxu0 0.0
    %8213 = vmatpush1.msra.mxu0 0.0
    %8214 = vmatprep.subr.mxu0 0.0
    %8215 = vmatpush1.msra.mxu0 0.0
    %8216 = vmatprep.subr.mxu0 0.0
    %8217 = vmatpush1.msra.mxu0 0.0
    %8218 = vmatprep.subr.mxu0 0.0
    %8219 = vmatpush1.msra.mxu0 0.0
    %8220 = vmatprep.subr.mxu0 0.0
    %8221 = vmatpush1.msra.mxu0 0.0
    %8222 = vmatprep.subr.mxu0 0.0
    %v8223 = vand.u32 %v7998, 4294901760
    %v8224 = vsub.f32 %v7998, %v8223
    %8225 = vmatpush1.msra.mxu0 %v8224
    %8226 = vmatprep.subr.mxu0 0.0
    %v8227 = vand.u32 %v7997, 4294901760
    %v8228 = vsub.f32 %v7997, %v8227
    %8229 = vmatpush1.msra.mxu0 %v8228
    %8230 = vmatprep.subr.mxu0 0.0
    %v8231 = vand.u32 %v7996, 4294901760
    %v8232 = vsub.f32 %v7996, %v8231
    %8233 = vmatpush1.msra.mxu0 %v8232
    %8234 = vmatprep.subr.mxu0 0.0
    %v8235 = vand.u32 %v7995, 4294901760
    %v8236 = vsub.f32 %v7995, %v8235
    %8237 = vmatpush1.msra.mxu0 %v8236
    %8238 = vmatprep.subr.mxu0 0.0
    %8239 = vmatpush2.msra.mxu0 0.0
    %8240 = vmatprep.subr.mxu0 0.0
    %8241 = vmatpush2.msra.mxu0 0.0
    %8242 = vmatprep.subr.mxu0 0.0
    %8243 = vmatpush2.msra.mxu0 0.0
    %8244 = vmatprep.subr.mxu0 0.0
    %8245 = vmatpush2.msra.mxu0 0.0
    %8246 = vmatprep.subr.mxu0 0.0
    %8247 = vmatpush2.msra.mxu0 0.0
    %8248 = vmatprep.subr.mxu0 0.0
    %8249 = vmatpush2.msra.mxu0 0.0
    %8250 = vmatprep.subr.mxu0 0.0
    %8251 = vmatpush2.msra.mxu0 0.0
    %8252 = vmatprep.subr.mxu0 0.0
    %8253 = vmatpush2.msra.mxu0 0.0
    %8254 = vmatprep.subr.mxu0 0.0
    %8255 = vmatpush2.msra.mxu0 0.0
    %8256 = vmatprep.subr.mxu0 0.0
    %8257 = vmatpush2.msra.mxu0 0.0
    %8258 = vmatprep.subr.mxu0 0.0
    %8259 = vmatpush2.msra.mxu0 0.0
    %8260 = vmatprep.subr.mxu0 0.0
    %8261 = vmatpush2.msra.mxu0 0.0
    %8262 = vmatprep.subr.mxu0 0.0
    %8263 = vmatpush2.msra.mxu0 0.0
    %8264 = vmatprep.subr.mxu0 0.0
    %8265 = vmatpush2.msra.mxu0 0.0
    %8266 = vmatprep.subr.mxu0 0.0
    %8267 = vmatpush2.msra.mxu0 0.0
    %8268 = vmatprep.subr.mxu0 0.0
    %8269 = vmatpush2.msra.mxu0 0.0
    %8270 = vmatprep.mubr.f32.mxu0 0.0
    %v8271 = vand.u32 %v8007, 4294901760
    %v8272 = vsub.f32 %v8007, %v8271
    %8273 = vmatmul.mubr.f32.gmra.mxu0 %v8272
    %v8274 = vpop.f32.mrf.mxu0
    %v8275 = vadd.f32 %v8189, %v8274
    %v8276 = vpop.f32.mrf.mxu0
    %8277 = vmatprep.mubr.f32.mxu0 0.0
    %v8278 = vand.u32 %v8010, 4294901760
    %v8279 = vsub.f32 %v8010, %v8278
    %8280 = vmatmul.mubr.f32.gmra.mxu0 %v8279
    %v8281 = vpop.f32.mrf.mxu0
    %v8282 = vadd.f32 %v8195, %v8281
    %v8283 = vpop.f32.mrf.mxu0
    %8284 = vdwg.mxu0
    %8285 = vmatprep.subr.mxu0 0.0
    %8286 = vmatpush1.msra.mxu0 0.0
    %8287 = vmatprep.subr.mxu0 0.0
    %8288 = vmatpush1.msra.mxu0 0.0
    %8289 = vmatprep.subr.mxu0 0.0
    %8290 = vmatpush1.msra.mxu0 0.0
    %8291 = vmatprep.subr.mxu0 0.0
    %8292 = vmatpush1.msra.mxu0 0.0
    %8293 = vmatprep.subr.mxu0 0.0
    %8294 = vmatpush1.msra.mxu0 0.0
    %8295 = vmatprep.subr.mxu0 0.0
    %8296 = vmatpush1.msra.mxu0 0.0
    %8297 = vmatprep.subr.mxu0 0.0
    %8298 = vmatpush1.msra.mxu0 0.0
    %8299 = vmatprep.subr.mxu0 0.0
    %8300 = vmatpush1.msra.mxu0 0.0
    %8301 = vmatprep.subr.mxu0 0.0
    %8302 = vmatpush1.msra.mxu0 0.0
    %8303 = vmatprep.subr.mxu0 0.0
    %8304 = vmatpush1.msra.mxu0 0.0
    %8305 = vmatprep.subr.mxu0 0.0
    %8306 = vmatpush1.msra.mxu0 0.0
    %8307 = vmatprep.subr.mxu0 0.0
    %8308 = vmatpush1.msra.mxu0 0.0
    %8309 = vmatprep.subr.mxu0 0.0
    %v8310 = vand.u32 %v7998, 4294901760
    %8311 = vmatpush1.msra.mxu0 %v8310
    %8312 = vmatprep.subr.mxu0 0.0
    %v8313 = vand.u32 %v7997, 4294901760
    %8314 = vmatpush1.msra.mxu0 %v8313
    %8315 = vmatprep.subr.mxu0 0.0
    %v8316 = vand.u32 %v7996, 4294901760
    %8317 = vmatpush1.msra.mxu0 %v8316
    %8318 = vmatprep.subr.mxu0 0.0
    %v8319 = vand.u32 %v7995, 4294901760
    %8320 = vmatpush1.msra.mxu0 %v8319
    %8321 = vmatprep.subr.mxu0 0.0
    %8322 = vmatpush2.msra.mxu0 0.0
    %8323 = vmatprep.subr.mxu0 0.0
    %8324 = vmatpush2.msra.mxu0 0.0
    %8325 = vmatprep.subr.mxu0 0.0
    %8326 = vmatpush2.msra.mxu0 0.0
    %8327 = vmatprep.subr.mxu0 0.0
    %8328 = vmatpush2.msra.mxu0 0.0
    %8329 = vmatprep.subr.mxu0 0.0
    %8330 = vmatpush2.msra.mxu0 0.0
    %8331 = vmatprep.subr.mxu0 0.0
    %8332 = vmatpush2.msra.mxu0 0.0
    %8333 = vmatprep.subr.mxu0 0.0
    %8334 = vmatpush2.msra.mxu0 0.0
    %8335 = vmatprep.subr.mxu0 0.0
    %8336 = vmatpush2.msra.mxu0 0.0
    %8337 = vmatprep.subr.mxu0 0.0
    %8338 = vmatpush2.msra.mxu0 0.0
    %8339 = vmatprep.subr.mxu0 0.0
    %8340 = vmatpush2.msra.mxu0 0.0
    %8341 = vmatprep.subr.mxu0 0.0
    %8342 = vmatpush2.msra.mxu0 0.0
    %8343 = vmatprep.subr.mxu0 0.0
    %8344 = vmatpush2.msra.mxu0 0.0
    %8345 = vmatprep.subr.mxu0 0.0
    %8346 = vmatpush2.msra.mxu0 0.0
    %8347 = vmatprep.subr.mxu0 0.0
    %8348 = vmatpush2.msra.mxu0 0.0
    %8349 = vmatprep.subr.mxu0 0.0
    %8350 = vmatpush2.msra.mxu0 0.0
    %8351 = vmatprep.subr.mxu0 0.0
    %8352 = vmatpush2.msra.mxu0 0.0
    %8353 = vmatprep.mubr.f32.mxu0 0.0
    %v8354 = vand.u32 %v8007, 4294901760
    %v8355 = vsub.f32 %v8007, %v8354
    %v8356 = vand.u32 %v8355, 4294901760
    %8357 = vmatmul.mubr.f32.gmra.mxu0 %v8356
    %v8358 = vpop.f32.mrf.mxu0
    %v8359 = vadd.f32 %v8275, %v8358
    %v8360 = vpop.f32.mrf.mxu0
    %8361 = vmatprep.mubr.f32.mxu0 0.0
    %v8362 = vand.u32 %v8010, 4294901760
    %v8363 = vsub.f32 %v8010, %v8362
    %v8364 = vand.u32 %v8363, 4294901760
    %8365 = vmatmul.mubr.f32.gmra.mxu0 %v8364
    %v8366 = vpop.f32.mrf.mxu0
    %v8367 = vadd.f32 %v8282, %v8366
    %v8368 = vpop.f32.mrf.mxu0
    %8369 = vdwg.mxu0
    %8370 = vmatprep.subr.mxu0 0.0
    %8371 = vmatpush1.msra.mxu0 0.0
    %8372 = vmatprep.subr.mxu0 0.0
    %8373 = vmatpush1.msra.mxu0 0.0
    %8374 = vmatprep.subr.mxu0 0.0
    %8375 = vmatpush1.msra.mxu0 0.0
    %8376 = vmatprep.subr.mxu0 0.0
    %8377 = vmatpush1.msra.mxu0 0.0
    %8378 = vmatprep.subr.mxu0 0.0
    %8379 = vmatpush1.msra.mxu0 0.0
    %8380 = vmatprep.subr.mxu0 0.0
    %8381 = vmatpush1.msra.mxu0 0.0
    %8382 = vmatprep.subr.mxu0 0.0
    %8383 = vmatpush1.msra.mxu0 0.0
    %8384 = vmatprep.subr.mxu0 0.0
    %8385 = vmatpush1.msra.mxu0 0.0
    %8386 = vmatprep.subr.mxu0 0.0
    %8387 = vmatpush1.msra.mxu0 0.0
    %8388 = vmatprep.subr.mxu0 0.0
    %8389 = vmatpush1.msra.mxu0 0.0
    %8390 = vmatprep.subr.mxu0 0.0
    %8391 = vmatpush1.msra.mxu0 0.0
    %8392 = vmatprep.subr.mxu0 0.0
    %8393 = vmatpush1.msra.mxu0 0.0
    %8394 = vmatprep.subr.mxu0 0.0
    %v8395 = vand.u32 %v7998, 4294901760
    %v8396 = vsub.f32 %v7998, %v8395
    %v8397 = vand.u32 %v8396, 4294901760
    %8398 = vmatpush1.msra.mxu0 %v8397
    %8399 = vmatprep.subr.mxu0 0.0
    %v8400 = vand.u32 %v7997, 4294901760
    %v8401 = vsub.f32 %v7997, %v8400
    %v8402 = vand.u32 %v8401, 4294901760
    %8403 = vmatpush1.msra.mxu0 %v8402
    %8404 = vmatprep.subr.mxu0 0.0
    %v8405 = vand.u32 %v7996, 4294901760
    %v8406 = vsub.f32 %v7996, %v8405
    %v8407 = vand.u32 %v8406, 4294901760
    %8408 = vmatpush1.msra.mxu0 %v8407
    %8409 = vmatprep.subr.mxu0 0.0
    %v8410 = vand.u32 %v7995, 4294901760
    %v8411 = vsub.f32 %v7995, %v8410
    %v8412 = vand.u32 %v8411, 4294901760
    %8413 = vmatpush1.msra.mxu0 %v8412
    %8414 = vmatprep.subr.mxu0 0.0
    %8415 = vmatpush2.msra.mxu0 0.0
    %8416 = vmatprep.subr.mxu0 0.0
    %8417 = vmatpush2.msra.mxu0 0.0
    %8418 = vmatprep.subr.mxu0 0.0
    %8419 = vmatpush2.msra.mxu0 0.0
    %8420 = vmatprep.subr.mxu0 0.0
    %8421 = vmatpush2.msra.mxu0 0.0
    %8422 = vmatprep.subr.mxu0 0.0
    %8423 = vmatpush2.msra.mxu0 0.0
    %8424 = vmatprep.subr.mxu0 0.0
    %8425 = vmatpush2.msra.mxu0 0.0
    %8426 = vmatprep.subr.mxu0 0.0
    %8427 = vmatpush2.msra.mxu0 0.0
    %8428 = vmatprep.subr.mxu0 0.0
    %8429 = vmatpush2.msra.mxu0 0.0
    %8430 = vmatprep.subr.mxu0 0.0
    %8431 = vmatpush2.msra.mxu0 0.0
    %8432 = vmatprep.subr.mxu0 0.0
    %8433 = vmatpush2.msra.mxu0 0.0
    %8434 = vmatprep.subr.mxu0 0.0
    %8435 = vmatpush2.msra.mxu0 0.0
    %8436 = vmatprep.subr.mxu0 0.0
    %8437 = vmatpush2.msra.mxu0 0.0
    %8438 = vmatprep.subr.mxu0 0.0
    %8439 = vmatpush2.msra.mxu0 0.0
    %8440 = vmatprep.subr.mxu0 0.0
    %8441 = vmatpush2.msra.mxu0 0.0
    %8442 = vmatprep.subr.mxu0 0.0
    %8443 = vmatpush2.msra.mxu0 0.0
    %8444 = vmatprep.subr.mxu0 0.0
    %8445 = vmatpush2.msra.mxu0 0.0
    %8446 = vmatprep.mubr.f32.mxu0 0.0
    %v8447 = vand.u32 %v8007, 4294901760
    %8448 = vmatmul.mubr.f32.gmra.mxu0 %v8447
    %v8449 = vpop.f32.mrf.mxu0
    %v8450 = vadd.f32 %v8359, %v8449
    %v8451 = vpop.f32.mrf.mxu0
    %8452 = vmatprep.mubr.f32.mxu0 0.0
    %v8453 = vand.u32 %v8010, 4294901760
    %8454 = vmatmul.mubr.f32.gmra.mxu0 %v8453
    %v8455 = vpop.f32.mrf.mxu0
    %v8456 = vadd.f32 %v8367, %v8455
    %v8457 = vpop.f32.mrf.mxu0
    %8458 = vdwg.mxu0
    %8459 = vmatprep.subr.mxu0 0.0
    %8460 = vmatpush1.msra.mxu0 0.0
    %8461 = vmatprep.subr.mxu0 0.0
    %8462 = vmatpush1.msra.mxu0 0.0
    %8463 = vmatprep.subr.mxu0 0.0
    %8464 = vmatpush1.msra.mxu0 0.0
    %8465 = vmatprep.subr.mxu0 0.0
    %8466 = vmatpush1.msra.mxu0 0.0
    %8467 = vmatprep.subr.mxu0 0.0
    %8468 = vmatpush1.msra.mxu0 0.0
    %8469 = vmatprep.subr.mxu0 0.0
    %8470 = vmatpush1.msra.mxu0 0.0
    %8471 = vmatprep.subr.mxu0 0.0
    %8472 = vmatpush1.msra.mxu0 0.0
    %8473 = vmatprep.subr.mxu0 0.0
    %8474 = vmatpush1.msra.mxu0 0.0
    %8475 = vmatprep.subr.mxu0 0.0
    %8476 = vmatpush1.msra.mxu0 0.0
    %8477 = vmatprep.subr.mxu0 0.0
    %8478 = vmatpush1.msra.mxu0 0.0
    %8479 = vmatprep.subr.mxu0 0.0
    %8480 = vmatpush1.msra.mxu0 0.0
    %8481 = vmatprep.subr.mxu0 0.0
    %8482 = vmatpush1.msra.mxu0 0.0
    %8483 = vmatprep.subr.mxu0 0.0
    %v8484 = vand.u32 %v7998, 4294901760
    %8485 = vmatpush1.msra.mxu0 %v8484
    %8486 = vmatprep.subr.mxu0 0.0
    %v8487 = vand.u32 %v7997, 4294901760
    %8488 = vmatpush1.msra.mxu0 %v8487
    %8489 = vmatprep.subr.mxu0 0.0
    %v8490 = vand.u32 %v7996, 4294901760
    %8491 = vmatpush1.msra.mxu0 %v8490
    %8492 = vmatprep.subr.mxu0 0.0
    %v8493 = vand.u32 %v7995, 4294901760
    %8494 = vmatpush1.msra.mxu0 %v8493
    %8495 = vmatprep.subr.mxu0 0.0
    %8496 = vmatpush2.msra.mxu0 0.0
    %8497 = vmatprep.subr.mxu0 0.0
    %8498 = vmatpush2.msra.mxu0 0.0
    %8499 = vmatprep.subr.mxu0 0.0
    %8500 = vmatpush2.msra.mxu0 0.0
    %8501 = vmatprep.subr.mxu0 0.0
    %8502 = vmatpush2.msra.mxu0 0.0
    %8503 = vmatprep.subr.mxu0 0.0
    %8504 = vmatpush2.msra.mxu0 0.0
    %8505 = vmatprep.subr.mxu0 0.0
    %8506 = vmatpush2.msra.mxu0 0.0
    %8507 = vmatprep.subr.mxu0 0.0
    %8508 = vmatpush2.msra.mxu0 0.0
    %8509 = vmatprep.subr.mxu0 0.0
    %8510 = vmatpush2.msra.mxu0 0.0
    %8511 = vmatprep.subr.mxu0 0.0
    %8512 = vmatpush2.msra.mxu0 0.0
    %8513 = vmatprep.subr.mxu0 0.0
    %8514 = vmatpush2.msra.mxu0 0.0
    %8515 = vmatprep.subr.mxu0 0.0
    %8516 = vmatpush2.msra.mxu0 0.0
    %8517 = vmatprep.subr.mxu0 0.0
    %8518 = vmatpush2.msra.mxu0 0.0
    %8519 = vmatprep.subr.mxu0 0.0
    %8520 = vmatpush2.msra.mxu0 0.0
    %8521 = vmatprep.subr.mxu0 0.0
    %8522 = vmatpush2.msra.mxu0 0.0
    %8523 = vmatprep.subr.mxu0 0.0
    %8524 = vmatpush2.msra.mxu0 0.0
    %8525 = vmatprep.subr.mxu0 0.0
    %8526 = vmatpush2.msra.mxu0 0.0
    %8527 = vmatprep.mubr.f32.mxu0 0.0
    %v8528 = vand.u32 %v8007, 4294901760
    %8529 = vmatmul.mubr.f32.gmra.mxu0 %v8528
    %v8530 = vpop.f32.mrf.mxu0
    %v8531 = vadd.f32 %v8450, %v8530
    %v8532 = vpop.f32.mrf.mxu0
    %8533 = vmatprep.mubr.f32.mxu0 0.0
    %v8534 = vand.u32 %v8010, 4294901760
    %8535 = vmatmul.mubr.f32.gmra.mxu0 %v8534
    %v8536 = vpop.f32.mrf.mxu0
    %v8537 = vadd.f32 %v8456, %v8536
    %v8538 = vpop.f32.mrf.mxu0
    %8539 = vdwg.mxu0
    %v8540 = vadd.f32 %v8531, %v59
    %v8541 = vadd.f32 %v8537, %v60
    %v8542 = vsel %vm72, %v8540, 0.0
    %8543 = vadd.xlane.f32.xlu0 %v8542
    %v8544 = vpop.xlane.xlu0 %8543
    %v8545 = vsel %vm72, %v8541, 0.0
    %8546 = vadd.xlane.f32.xlu0 %v8545
    %v8547 = vpop.xlane.xlu0 %8546
    %v8548 = vrcp.pop 32.0
    %v8549 = vmul.f32 %v8544, %v8548
    %v8550 = vmul.f32 %v8547, %v8548
    %v8551 = vsub.f32 %v8540, %v8549
    %v8552 = vsub.f32 %v8541, %v8550
    %v8553 = vmul.f32 %v8551, %v8551
    %v8554 = vmul.f32 %v8552, %v8552
    %v8555 = vsel %vm72, %v8553, 0.0
    %8556 = vadd.xlane.f32.xlu0 %v8555
    %v8557 = vpop.xlane.xlu0 %8556
    %v8558 = vsel %vm72, %v8554, 0.0
    %8559 = vadd.xlane.f32.xlu0 %v8558
    %v8560 = vpop.xlane.xlu0 %8559
    %v8561 = vmul.f32 %v8557, %v8548
    %v8562 = vmul.f32 %v8560, %v8548
    %v8563 = vld [vmem:[%s5] sm:$0x1]
    %v8564 = vrsqrt.pop %v8561
    %v8565 = vmul.f32 %v8561, %v8564
    %vm8566 = vcmp.eq.f32.partialorder %v8561, inf
    %v8567 = vsel %vm8566, %v8561, %v8565
    %vm8568 = vcmp.eq.f32.partialorder %v8561, 0.0
    %v8569 = vand.u32 %v8561, 2147483648
    %v8570 = vsel %vm8568, %v8569, %v8567
    %v8571 = vrsqrt.pop %v8562
    %v8572 = vmul.f32 %v8562, %v8571
    %vm8573 = vcmp.eq.f32.partialorder %v8562, inf
    %v8574 = vsel %vm8573, %v8562, %v8572
    %vm8575 = vcmp.eq.f32.partialorder %v8562, 0.0
    %v8576 = vand.u32 %v8562, 2147483648
    %v8577 = vsel %vm8575, %v8576, %v8574
    %v8578 = vadd.f32 %v8570, 1e-10
    %v8579 = vadd.f32 %v8577, 1e-10
    %v8580 = vrcp.pop %v8578
    %v8581 = vmul.f32 1.0, %v8580
    %v8582 = vrcp.pop %v8579
    %v8583 = vmul.f32 1.0, %v8582
    %v8584 = vmul.f32 %v8551, %v8581
    %v8585 = vmul.f32 %v8552, %v8583
    %v8587 = vlaneseq
    %v8588 = vshrl.u32 %v8587, 7
    %v8589 = vsub.s32 0, %v8588
    %v8590 = vrot.slane %v8563, %v8589
    %v8592 = vmul.f32 %v8590, %v8584
    %v8593 = vmul.f32 %v8590, %v8585
    %v8594 = vld [vmem:[%s6] sm:$0x1]
    %v8596 = vlaneseq
    %v8597 = vshrl.u32 %v8596, 7
    %v8598 = vsub.s32 0, %v8597
    %v8599 = vrot.slane %v8594, %v8598
    %v8601 = vadd.f32 %v8592, %v8599
    %v8602 = vadd.f32 %v8593, %v8599
    %v8603 = vld [vmem:[%s7] sm:$0xff]
    %v8604 = vld [vmem:[%s7 + $0x8] sm:$0xff]
    %v8605 = vld [vmem:[%s7 + $0x10] sm:$0xff]
    %v8606 = vld [vmem:[%s7 + $0x18] sm:$0xff]
    %v8607 = vld [vmem:[%s8] sm:$0x1]
    %v8609 = vlaneseq
    %v8610 = vshrl.u32 %v8609, 7
    %v8611 = vsub.s32 0, %v8610
    %v8612 = vrot.slane %v8607, %v8611
    %v8615 = vsel %vm72, %v8601, 0
    %v8618 = vsel %vm72, %v8602, 0
    %8620 = vmatprep.subr.mxu0 0.0
    %8621 = vmatpush1.msra.mxu0 0.0
    %8622 = vmatprep.subr.mxu0 0.0
    %8623 = vmatpush1.msra.mxu0 0.0
    %8624 = vmatprep.subr.mxu0 0.0
    %8625 = vmatpush1.msra.mxu0 0.0
    %8626 = vmatprep.subr.mxu0 0.0
    %8627 = vmatpush1.msra.mxu0 0.0
    %8628 = vmatprep.subr.mxu0 0.0
    %8629 = vmatpush1.msra.mxu0 0.0
    %8630 = vmatprep.subr.mxu0 0.0
    %8631 = vmatpush1.msra.mxu0 0.0
    %8632 = vmatprep.subr.mxu0 0.0
    %8633 = vmatpush1.msra.mxu0 0.0
    %8634 = vmatprep.subr.mxu0 0.0
    %8635 = vmatpush1.msra.mxu0 0.0
    %8636 = vmatprep.subr.mxu0 0.0
    %8637 = vmatpush1.msra.mxu0 0.0
    %8638 = vmatprep.subr.mxu0 0.0
    %8639 = vmatpush1.msra.mxu0 0.0
    %8640 = vmatprep.subr.mxu0 0.0
    %8641 = vmatpush1.msra.mxu0 0.0
    %8642 = vmatprep.subr.mxu0 0.0
    %8643 = vmatpush1.msra.mxu0 0.0
    %8644 = vmatprep.subr.mxu0 0.0
    %v8645 = vand.u32 %v8606, 4294901760
    %8646 = vmatpush1.msra.mxu0 %v8645
    %8647 = vmatprep.subr.mxu0 0.0
    %v8648 = vand.u32 %v8605, 4294901760
    %8649 = vmatpush1.msra.mxu0 %v8648
    %8650 = vmatprep.subr.mxu0 0.0
    %v8651 = vand.u32 %v8604, 4294901760
    %8652 = vmatpush1.msra.mxu0 %v8651
    %8653 = vmatprep.subr.mxu0 0.0
    %v8654 = vand.u32 %v8603, 4294901760
    %8655 = vmatpush1.msra.mxu0 %v8654
    %8656 = vmatprep.subr.mxu0 0.0
    %8657 = vmatpush2.msra.mxu0 0.0
    %8658 = vmatprep.subr.mxu0 0.0
    %8659 = vmatpush2.msra.mxu0 0.0
    %8660 = vmatprep.subr.mxu0 0.0
    %8661 = vmatpush2.msra.mxu0 0.0
    %8662 = vmatprep.subr.mxu0 0.0
    %8663 = vmatpush2.msra.mxu0 0.0
    %8664 = vmatprep.subr.mxu0 0.0
    %8665 = vmatpush2.msra.mxu0 0.0
    %8666 = vmatprep.subr.mxu0 0.0
    %8667 = vmatpush2.msra.mxu0 0.0
    %8668 = vmatprep.subr.mxu0 0.0
    %8669 = vmatpush2.msra.mxu0 0.0
    %8670 = vmatprep.subr.mxu0 0.0
    %8671 = vmatpush2.msra.mxu0 0.0
    %8672 = vmatprep.subr.mxu0 0.0
    %8673 = vmatpush2.msra.mxu0 0.0
    %8674 = vmatprep.subr.mxu0 0.0
    %8675 = vmatpush2.msra.mxu0 0.0
    %8676 = vmatprep.subr.mxu0 0.0
    %8677 = vmatpush2.msra.mxu0 0.0
    %8678 = vmatprep.subr.mxu0 0.0
    %8679 = vmatpush2.msra.mxu0 0.0
    %8680 = vmatprep.subr.mxu0 0.0
    %8681 = vmatpush2.msra.mxu0 0.0
    %8682 = vmatprep.subr.mxu0 0.0
    %8683 = vmatpush2.msra.mxu0 0.0
    %8684 = vmatprep.subr.mxu0 0.0
    %8685 = vmatpush2.msra.mxu0 0.0
    %8686 = vmatprep.subr.mxu0 0.0
    %8687 = vmatpush2.msra.mxu0 0.0
    %8688 = vmatprep.mubr.f32.mxu0 0.0
    %v8689 = vand.u32 %v8615, 4294901760
    %v8690 = vsub.f32 %v8615, %v8689
    %v8691 = vand.u32 %v8690, 4294901760
    %v8692 = vsub.f32 %v8690, %v8691
    %v8693 = vand.u32 %v8692, 4294901760
    %8694 = vmatmul.mubr.f32.gmra.mxu0 %v8693
    %v8695 = vpop.f32.mrf.mxu0
    %v8696 = vadd.f32 %v8612, %v8695
    %v8697 = vpop.f32.mrf.mxu0
    %8698 = vmatprep.mubr.f32.mxu0 0.0
    %v8699 = vand.u32 %v8618, 4294901760
    %v8700 = vsub.f32 %v8618, %v8699
    %v8701 = vand.u32 %v8700, 4294901760
    %v8702 = vsub.f32 %v8700, %v8701
    %v8703 = vand.u32 %v8702, 4294901760
    %8704 = vmatmul.mubr.f32.gmra.mxu0 %v8703
    %v8705 = vpop.f32.mrf.mxu0
    %v8706 = vadd.f32 %v8612, %v8705
    %v8707 = vpop.f32.mrf.mxu0
    %8708 = vdwg.mxu0
    %8709 = vmatprep.subr.mxu0 0.0
    %8710 = vmatpush1.msra.mxu0 0.0
    %8711 = vmatprep.subr.mxu0 0.0
    %8712 = vmatpush1.msra.mxu0 0.0
    %8713 = vmatprep.subr.mxu0 0.0
    %8714 = vmatpush1.msra.mxu0 0.0
    %8715 = vmatprep.subr.mxu0 0.0
    %8716 = vmatpush1.msra.mxu0 0.0
    %8717 = vmatprep.subr.mxu0 0.0
    %8718 = vmatpush1.msra.mxu0 0.0
    %8719 = vmatprep.subr.mxu0 0.0
    %8720 = vmatpush1.msra.mxu0 0.0
    %8721 = vmatprep.subr.mxu0 0.0
    %8722 = vmatpush1.msra.mxu0 0.0
    %8723 = vmatprep.subr.mxu0 0.0
    %8724 = vmatpush1.msra.mxu0 0.0
    %8725 = vmatprep.subr.mxu0 0.0
    %8726 = vmatpush1.msra.mxu0 0.0
    %8727 = vmatprep.subr.mxu0 0.0
    %8728 = vmatpush1.msra.mxu0 0.0
    %8729 = vmatprep.subr.mxu0 0.0
    %8730 = vmatpush1.msra.mxu0 0.0
    %8731 = vmatprep.subr.mxu0 0.0
    %8732 = vmatpush1.msra.mxu0 0.0
    %8733 = vmatprep.subr.mxu0 0.0
    %v8734 = vand.u32 %v8606, 4294901760
    %v8735 = vsub.f32 %v8606, %v8734
    %v8736 = vand.u32 %v8735, 4294901760
    %v8737 = vsub.f32 %v8735, %v8736
    %v8738 = vand.u32 %v8737, 4294901760
    %8739 = vmatpush1.msra.mxu0 %v8738
    %8740 = vmatprep.subr.mxu0 0.0
    %v8741 = vand.u32 %v8605, 4294901760
    %v8742 = vsub.f32 %v8605, %v8741
    %v8743 = vand.u32 %v8742, 4294901760
    %v8744 = vsub.f32 %v8742, %v8743
    %v8745 = vand.u32 %v8744, 4294901760
    %8746 = vmatpush1.msra.mxu0 %v8745
    %8747 = vmatprep.subr.mxu0 0.0
    %v8748 = vand.u32 %v8604, 4294901760
    %v8749 = vsub.f32 %v8604, %v8748
    %v8750 = vand.u32 %v8749, 4294901760
    %v8751 = vsub.f32 %v8749, %v8750
    %v8752 = vand.u32 %v8751, 4294901760
    %8753 = vmatpush1.msra.mxu0 %v8752
    %8754 = vmatprep.subr.mxu0 0.0
    %v8755 = vand.u32 %v8603, 4294901760
    %v8756 = vsub.f32 %v8603, %v8755
    %v8757 = vand.u32 %v8756, 4294901760
    %v8758 = vsub.f32 %v8756, %v8757
    %v8759 = vand.u32 %v8758, 4294901760
    %8760 = vmatpush1.msra.mxu0 %v8759
    %8761 = vmatprep.subr.mxu0 0.0
    %8762 = vmatpush2.msra.mxu0 0.0
    %8763 = vmatprep.subr.mxu0 0.0
    %8764 = vmatpush2.msra.mxu0 0.0
    %8765 = vmatprep.subr.mxu0 0.0
    %8766 = vmatpush2.msra.mxu0 0.0
    %8767 = vmatprep.subr.mxu0 0.0
    %8768 = vmatpush2.msra.mxu0 0.0
    %8769 = vmatprep.subr.mxu0 0.0
    %8770 = vmatpush2.msra.mxu0 0.0
    %8771 = vmatprep.subr.mxu0 0.0
    %8772 = vmatpush2.msra.mxu0 0.0
    %8773 = vmatprep.subr.mxu0 0.0
    %8774 = vmatpush2.msra.mxu0 0.0
    %8775 = vmatprep.subr.mxu0 0.0
    %8776 = vmatpush2.msra.mxu0 0.0
    %8777 = vmatprep.subr.mxu0 0.0
    %8778 = vmatpush2.msra.mxu0 0.0
    %8779 = vmatprep.subr.mxu0 0.0
    %8780 = vmatpush2.msra.mxu0 0.0
    %8781 = vmatprep.subr.mxu0 0.0
    %8782 = vmatpush2.msra.mxu0 0.0
    %8783 = vmatprep.subr.mxu0 0.0
    %8784 = vmatpush2.msra.mxu0 0.0
    %8785 = vmatprep.subr.mxu0 0.0
    %8786 = vmatpush2.msra.mxu0 0.0
    %8787 = vmatprep.subr.mxu0 0.0
    %8788 = vmatpush2.msra.mxu0 0.0
    %8789 = vmatprep.subr.mxu0 0.0
    %8790 = vmatpush2.msra.mxu0 0.0
    %8791 = vmatprep.subr.mxu0 0.0
    %8792 = vmatpush2.msra.mxu0 0.0
    %8793 = vmatprep.mubr.f32.mxu0 0.0
    %v8794 = vand.u32 %v8615, 4294901760
    %8795 = vmatmul.mubr.f32.gmra.mxu0 %v8794
    %v8796 = vpop.f32.mrf.mxu0
    %v8797 = vadd.f32 %v8696, %v8796
    %v8798 = vpop.f32.mrf.mxu0
    %8799 = vmatprep.mubr.f32.mxu0 0.0
    %v8800 = vand.u32 %v8618, 4294901760
    %8801 = vmatmul.mubr.f32.gmra.mxu0 %v8800
    %v8802 = vpop.f32.mrf.mxu0
    %v8803 = vadd.f32 %v8706, %v8802
    %v8804 = vpop.f32.mrf.mxu0
    %8805 = vdwg.mxu0
    %8806 = vmatprep.subr.mxu0 0.0
    %8807 = vmatpush1.msra.mxu0 0.0
    %8808 = vmatprep.subr.mxu0 0.0
    %8809 = vmatpush1.msra.mxu0 0.0
    %8810 = vmatprep.subr.mxu0 0.0
    %8811 = vmatpush1.msra.mxu0 0.0
    %8812 = vmatprep.subr.mxu0 0.0
    %8813 = vmatpush1.msra.mxu0 0.0
    %8814 = vmatprep.subr.mxu0 0.0
    %8815 = vmatpush1.msra.mxu0 0.0
    %8816 = vmatprep.subr.mxu0 0.0
    %8817 = vmatpush1.msra.mxu0 0.0
    %8818 = vmatprep.subr.mxu0 0.0
    %8819 = vmatpush1.msra.mxu0 0.0
    %8820 = vmatprep.subr.mxu0 0.0
    %8821 = vmatpush1.msra.mxu0 0.0
    %8822 = vmatprep.subr.mxu0 0.0
    %8823 = vmatpush1.msra.mxu0 0.0
    %8824 = vmatprep.subr.mxu0 0.0
    %8825 = vmatpush1.msra.mxu0 0.0
    %8826 = vmatprep.subr.mxu0 0.0
    %8827 = vmatpush1.msra.mxu0 0.0
    %8828 = vmatprep.subr.mxu0 0.0
    %8829 = vmatpush1.msra.mxu0 0.0
    %8830 = vmatprep.subr.mxu0 0.0
    %v8831 = vand.u32 %v8606, 4294901760
    %v8832 = vsub.f32 %v8606, %v8831
    %8833 = vmatpush1.msra.mxu0 %v8832
    %8834 = vmatprep.subr.mxu0 0.0
    %v8835 = vand.u32 %v8605, 4294901760
    %v8836 = vsub.f32 %v8605, %v8835
    %8837 = vmatpush1.msra.mxu0 %v8836
    %8838 = vmatprep.subr.mxu0 0.0
    %v8839 = vand.u32 %v8604, 4294901760
    %v8840 = vsub.f32 %v8604, %v8839
    %8841 = vmatpush1.msra.mxu0 %v8840
    %8842 = vmatprep.subr.mxu0 0.0
    %v8843 = vand.u32 %v8603, 4294901760
    %v8844 = vsub.f32 %v8603, %v8843
    %8845 = vmatpush1.msra.mxu0 %v8844
    %8846 = vmatprep.subr.mxu0 0.0
    %8847 = vmatpush2.msra.mxu0 0.0
    %8848 = vmatprep.subr.mxu0 0.0
    %8849 = vmatpush2.msra.mxu0 0.0
    %8850 = vmatprep.subr.mxu0 0.0
    %8851 = vmatpush2.msra.mxu0 0.0
    %8852 = vmatprep.subr.mxu0 0.0
    %8853 = vmatpush2.msra.mxu0 0.0
    %8854 = vmatprep.subr.mxu0 0.0
    %8855 = vmatpush2.msra.mxu0 0.0
    %8856 = vmatprep.subr.mxu0 0.0
    %8857 = vmatpush2.msra.mxu0 0.0
    %8858 = vmatprep.subr.mxu0 0.0
    %8859 = vmatpush2.msra.mxu0 0.0
    %8860 = vmatprep.subr.mxu0 0.0
    %8861 = vmatpush2.msra.mxu0 0.0
    %8862 = vmatprep.subr.mxu0 0.0
    %8863 = vmatpush2.msra.mxu0 0.0
    %8864 = vmatprep.subr.mxu0 0.0
    %8865 = vmatpush2.msra.mxu0 0.0
    %8866 = vmatprep.subr.mxu0 0.0
    %8867 = vmatpush2.msra.mxu0 0.0
    %8868 = vmatprep.subr.mxu0 0.0
    %8869 = vmatpush2.msra.mxu0 0.0
    %8870 = vmatprep.subr.mxu0 0.0
    %8871 = vmatpush2.msra.mxu0 0.0
    %8872 = vmatprep.subr.mxu0 0.0
    %8873 = vmatpush2.msra.mxu0 0.0
    %8874 = vmatprep.subr.mxu0 0.0
    %8875 = vmatpush2.msra.mxu0 0.0
    %8876 = vmatprep.subr.mxu0 0.0
    %8877 = vmatpush2.msra.mxu0 0.0
    %8878 = vmatprep.mubr.f32.mxu0 0.0
    %v8879 = vand.u32 %v8615, 4294901760
    %v8880 = vsub.f32 %v8615, %v8879
    %8881 = vmatmul.mubr.f32.gmra.mxu0 %v8880
    %v8882 = vpop.f32.mrf.mxu0
    %v8883 = vadd.f32 %v8797, %v8882
    %v8884 = vpop.f32.mrf.mxu0
    %8885 = vmatprep.mubr.f32.mxu0 0.0
    %v8886 = vand.u32 %v8618, 4294901760
    %v8887 = vsub.f32 %v8618, %v8886
    %8888 = vmatmul.mubr.f32.gmra.mxu0 %v8887
    %v8889 = vpop.f32.mrf.mxu0
    %v8890 = vadd.f32 %v8803, %v8889
    %v8891 = vpop.f32.mrf.mxu0
    %8892 = vdwg.mxu0
    %8893 = vmatprep.subr.mxu0 0.0
    %8894 = vmatpush1.msra.mxu0 0.0
    %8895 = vmatprep.subr.mxu0 0.0
    %8896 = vmatpush1.msra.mxu0 0.0
    %8897 = vmatprep.subr.mxu0 0.0
    %8898 = vmatpush1.msra.mxu0 0.0
    %8899 = vmatprep.subr.mxu0 0.0
    %8900 = vmatpush1.msra.mxu0 0.0
    %8901 = vmatprep.subr.mxu0 0.0
    %8902 = vmatpush1.msra.mxu0 0.0
    %8903 = vmatprep.subr.mxu0 0.0
    %8904 = vmatpush1.msra.mxu0 0.0
    %8905 = vmatprep.subr.mxu0 0.0
    %8906 = vmatpush1.msra.mxu0 0.0
    %8907 = vmatprep.subr.mxu0 0.0
    %8908 = vmatpush1.msra.mxu0 0.0
    %8909 = vmatprep.subr.mxu0 0.0
    %8910 = vmatpush1.msra.mxu0 0.0
    %8911 = vmatprep.subr.mxu0 0.0
    %8912 = vmatpush1.msra.mxu0 0.0
    %8913 = vmatprep.subr.mxu0 0.0
    %8914 = vmatpush1.msra.mxu0 0.0
    %8915 = vmatprep.subr.mxu0 0.0
    %8916 = vmatpush1.msra.mxu0 0.0
    %8917 = vmatprep.subr.mxu0 0.0
    %v8918 = vand.u32 %v8606, 4294901760
    %8919 = vmatpush1.msra.mxu0 %v8918
    %8920 = vmatprep.subr.mxu0 0.0
    %v8921 = vand.u32 %v8605, 4294901760
    %8922 = vmatpush1.msra.mxu0 %v8921
    %8923 = vmatprep.subr.mxu0 0.0
    %v8924 = vand.u32 %v8604, 4294901760
    %8925 = vmatpush1.msra.mxu0 %v8924
    %8926 = vmatprep.subr.mxu0 0.0
    %v8927 = vand.u32 %v8603, 4294901760
    %8928 = vmatpush1.msra.mxu0 %v8927
    %8929 = vmatprep.subr.mxu0 0.0
    %8930 = vmatpush2.msra.mxu0 0.0
    %8931 = vmatprep.subr.mxu0 0.0
    %8932 = vmatpush2.msra.mxu0 0.0
    %8933 = vmatprep.subr.mxu0 0.0
    %8934 = vmatpush2.msra.mxu0 0.0
    %8935 = vmatprep.subr.mxu0 0.0
    %8936 = vmatpush2.msra.mxu0 0.0
    %8937 = vmatprep.subr.mxu0 0.0
    %8938 = vmatpush2.msra.mxu0 0.0
    %8939 = vmatprep.subr.mxu0 0.0
    %8940 = vmatpush2.msra.mxu0 0.0
    %8941 = vmatprep.subr.mxu0 0.0
    %8942 = vmatpush2.msra.mxu0 0.0
    %8943 = vmatprep.subr.mxu0 0.0
    %8944 = vmatpush2.msra.mxu0 0.0
    %8945 = vmatprep.subr.mxu0 0.0
    %8946 = vmatpush2.msra.mxu0 0.0
    %8947 = vmatprep.subr.mxu0 0.0
    %8948 = vmatpush2.msra.mxu0 0.0
    %8949 = vmatprep.subr.mxu0 0.0
    %8950 = vmatpush2.msra.mxu0 0.0
    %8951 = vmatprep.subr.mxu0 0.0
    %8952 = vmatpush2.msra.mxu0 0.0
    %8953 = vmatprep.subr.mxu0 0.0
    %8954 = vmatpush2.msra.mxu0 0.0
    %8955 = vmatprep.subr.mxu0 0.0
    %8956 = vmatpush2.msra.mxu0 0.0
    %8957 = vmatprep.subr.mxu0 0.0
    %8958 = vmatpush2.msra.mxu0 0.0
    %8959 = vmatprep.subr.mxu0 0.0
    %8960 = vmatpush2.msra.mxu0 0.0
    %8961 = vmatprep.mubr.f32.mxu0 0.0
    %v8962 = vand.u32 %v8615, 4294901760
    %v8963 = vsub.f32 %v8615, %v8962
    %v8964 = vand.u32 %v8963, 4294901760
    %8965 = vmatmul.mubr.f32.gmra.mxu0 %v8964
    %v8966 = vpop.f32.mrf.mxu0
    %v8967 = vadd.f32 %v8883, %v8966
    %v8968 = vpop.f32.mrf.mxu0
    %8969 = vmatprep.mubr.f32.mxu0 0.0
    %v8970 = vand.u32 %v8618, 4294901760
    %v8971 = vsub.f32 %v8618, %v8970
    %v8972 = vand.u32 %v8971, 4294901760
    %8973 = vmatmul.mubr.f32.gmra.mxu0 %v8972
    %v8974 = vpop.f32.mrf.mxu0
    %v8975 = vadd.f32 %v8890, %v8974
    %v8976 = vpop.f32.mrf.mxu0
    %8977 = vdwg.mxu0
    %8978 = vmatprep.subr.mxu0 0.0
    %8979 = vmatpush1.msra.mxu0 0.0
    %8980 = vmatprep.subr.mxu0 0.0
    %8981 = vmatpush1.msra.mxu0 0.0
    %8982 = vmatprep.subr.mxu0 0.0
    %8983 = vmatpush1.msra.mxu0 0.0
    %8984 = vmatprep.subr.mxu0 0.0
    %8985 = vmatpush1.msra.mxu0 0.0
    %8986 = vmatprep.subr.mxu0 0.0
    %8987 = vmatpush1.msra.mxu0 0.0
    %8988 = vmatprep.subr.mxu0 0.0
    %8989 = vmatpush1.msra.mxu0 0.0
    %8990 = vmatprep.subr.mxu0 0.0
    %8991 = vmatpush1.msra.mxu0 0.0
    %8992 = vmatprep.subr.mxu0 0.0
    %8993 = vmatpush1.msra.mxu0 0.0
    %8994 = vmatprep.subr.mxu0 0.0
    %8995 = vmatpush1.msra.mxu0 0.0
    %8996 = vmatprep.subr.mxu0 0.0
    %8997 = vmatpush1.msra.mxu0 0.0
    %8998 = vmatprep.subr.mxu0 0.0
    %8999 = vmatpush1.msra.mxu0 0.0
    %9000 = vmatprep.subr.mxu0 0.0
    %9001 = vmatpush1.msra.mxu0 0.0
    %9002 = vmatprep.subr.mxu0 0.0
    %v9003 = vand.u32 %v8606, 4294901760
    %v9004 = vsub.f32 %v8606, %v9003
    %v9005 = vand.u32 %v9004, 4294901760
    %9006 = vmatpush1.msra.mxu0 %v9005
    %9007 = vmatprep.subr.mxu0 0.0
    %v9008 = vand.u32 %v8605, 4294901760
    %v9009 = vsub.f32 %v8605, %v9008
    %v9010 = vand.u32 %v9009, 4294901760
    %9011 = vmatpush1.msra.mxu0 %v9010
    %9012 = vmatprep.subr.mxu0 0.0
    %v9013 = vand.u32 %v8604, 4294901760
    %v9014 = vsub.f32 %v8604, %v9013
    %v9015 = vand.u32 %v9014, 4294901760
    %9016 = vmatpush1.msra.mxu0 %v9015
    %9017 = vmatprep.subr.mxu0 0.0
    %v9018 = vand.u32 %v8603, 4294901760
    %v9019 = vsub.f32 %v8603, %v9018
    %v9020 = vand.u32 %v9019, 4294901760
    %9021 = vmatpush1.msra.mxu0 %v9020
    %9022 = vmatprep.subr.mxu0 0.0
    %9023 = vmatpush2.msra.mxu0 0.0
    %9024 = vmatprep.subr.mxu0 0.0
    %9025 = vmatpush2.msra.mxu0 0.0
    %9026 = vmatprep.subr.mxu0 0.0
    %9027 = vmatpush2.msra.mxu0 0.0
    %9028 = vmatprep.subr.mxu0 0.0
    %9029 = vmatpush2.msra.mxu0 0.0
    %9030 = vmatprep.subr.mxu0 0.0
    %9031 = vmatpush2.msra.mxu0 0.0
    %9032 = vmatprep.subr.mxu0 0.0
    %9033 = vmatpush2.msra.mxu0 0.0
    %9034 = vmatprep.subr.mxu0 0.0
    %9035 = vmatpush2.msra.mxu0 0.0
    %9036 = vmatprep.subr.mxu0 0.0
    %9037 = vmatpush2.msra.mxu0 0.0
    %9038 = vmatprep.subr.mxu0 0.0
    %9039 = vmatpush2.msra.mxu0 0.0
    %9040 = vmatprep.subr.mxu0 0.0
    %9041 = vmatpush2.msra.mxu0 0.0
    %9042 = vmatprep.subr.mxu0 0.0
    %9043 = vmatpush2.msra.mxu0 0.0
    %9044 = vmatprep.subr.mxu0 0.0
    %9045 = vmatpush2.msra.mxu0 0.0
    %9046 = vmatprep.subr.mxu0 0.0
    %9047 = vmatpush2.msra.mxu0 0.0
    %9048 = vmatprep.subr.mxu0 0.0
    %9049 = vmatpush2.msra.mxu0 0.0
    %9050 = vmatprep.subr.mxu0 0.0
    %9051 = vmatpush2.msra.mxu0 0.0
    %9052 = vmatprep.subr.mxu0 0.0
    %9053 = vmatpush2.msra.mxu0 0.0
    %9054 = vmatprep.mubr.f32.mxu0 0.0
    %v9055 = vand.u32 %v8615, 4294901760
    %9056 = vmatmul.mubr.f32.gmra.mxu0 %v9055
    %v9057 = vpop.f32.mrf.mxu0
    %v9058 = vadd.f32 %v8967, %v9057
    %v9059 = vpop.f32.mrf.mxu0
    %9060 = vmatprep.mubr.f32.mxu0 0.0
    %v9061 = vand.u32 %v8618, 4294901760
    %9062 = vmatmul.mubr.f32.gmra.mxu0 %v9061
    %v9063 = vpop.f32.mrf.mxu0
    %v9064 = vadd.f32 %v8975, %v9063
    %v9065 = vpop.f32.mrf.mxu0
    %9066 = vdwg.mxu0
    %9067 = vmatprep.subr.mxu0 0.0
    %9068 = vmatpush1.msra.mxu0 0.0
    %9069 = vmatprep.subr.mxu0 0.0
    %9070 = vmatpush1.msra.mxu0 0.0
    %9071 = vmatprep.subr.mxu0 0.0
    %9072 = vmatpush1.msra.mxu0 0.0
    %9073 = vmatprep.subr.mxu0 0.0
    %9074 = vmatpush1.msra.mxu0 0.0
    %9075 = vmatprep.subr.mxu0 0.0
    %9076 = vmatpush1.msra.mxu0 0.0
    %9077 = vmatprep.subr.mxu0 0.0
    %9078 = vmatpush1.msra.mxu0 0.0
    %9079 = vmatprep.subr.mxu0 0.0
    %9080 = vmatpush1.msra.mxu0 0.0
    %9081 = vmatprep.subr.mxu0 0.0
    %9082 = vmatpush1.msra.mxu0 0.0
    %9083 = vmatprep.subr.mxu0 0.0
    %9084 = vmatpush1.msra.mxu0 0.0
    %9085 = vmatprep.subr.mxu0 0.0
    %9086 = vmatpush1.msra.mxu0 0.0
    %9087 = vmatprep.subr.mxu0 0.0
    %9088 = vmatpush1.msra.mxu0 0.0
    %9089 = vmatprep.subr.mxu0 0.0
    %9090 = vmatpush1.msra.mxu0 0.0
    %9091 = vmatprep.subr.mxu0 0.0
    %v9092 = vand.u32 %v8606, 4294901760
    %9093 = vmatpush1.msra.mxu0 %v9092
    %9094 = vmatprep.subr.mxu0 0.0
    %v9095 = vand.u32 %v8605, 4294901760
    %9096 = vmatpush1.msra.mxu0 %v9095
    %9097 = vmatprep.subr.mxu0 0.0
    %v9098 = vand.u32 %v8604, 4294901760
    %9099 = vmatpush1.msra.mxu0 %v9098
    %9100 = vmatprep.subr.mxu0 0.0
    %v9101 = vand.u32 %v8603, 4294901760
    %9102 = vmatpush1.msra.mxu0 %v9101
    %9103 = vmatprep.subr.mxu0 0.0
    %9104 = vmatpush2.msra.mxu0 0.0
    %9105 = vmatprep.subr.mxu0 0.0
    %9106 = vmatpush2.msra.mxu0 0.0
    %9107 = vmatprep.subr.mxu0 0.0
    %9108 = vmatpush2.msra.mxu0 0.0
    %9109 = vmatprep.subr.mxu0 0.0
    %9110 = vmatpush2.msra.mxu0 0.0
    %9111 = vmatprep.subr.mxu0 0.0
    %9112 = vmatpush2.msra.mxu0 0.0
    %9113 = vmatprep.subr.mxu0 0.0
    %9114 = vmatpush2.msra.mxu0 0.0
    %9115 = vmatprep.subr.mxu0 0.0
    %9116 = vmatpush2.msra.mxu0 0.0
    %9117 = vmatprep.subr.mxu0 0.0
    %9118 = vmatpush2.msra.mxu0 0.0
    %9119 = vmatprep.subr.mxu0 0.0
    %9120 = vmatpush2.msra.mxu0 0.0
    %9121 = vmatprep.subr.mxu0 0.0
    %9122 = vmatpush2.msra.mxu0 0.0
    %9123 = vmatprep.subr.mxu0 0.0
    %9124 = vmatpush2.msra.mxu0 0.0
    %9125 = vmatprep.subr.mxu0 0.0
    %9126 = vmatpush2.msra.mxu0 0.0
    %9127 = vmatprep.subr.mxu0 0.0
    %9128 = vmatpush2.msra.mxu0 0.0
    %9129 = vmatprep.subr.mxu0 0.0
    %9130 = vmatpush2.msra.mxu0 0.0
    %9131 = vmatprep.subr.mxu0 0.0
    %9132 = vmatpush2.msra.mxu0 0.0
    %9133 = vmatprep.subr.mxu0 0.0
    %9134 = vmatpush2.msra.mxu0 0.0
    %9135 = vmatprep.mubr.f32.mxu0 0.0
    %v9136 = vand.u32 %v8615, 4294901760
    %9137 = vmatmul.mubr.f32.gmra.mxu0 %v9136
    %v9138 = vpop.f32.mrf.mxu0
    %v9139 = vadd.f32 %v9058, %v9138
    %v9140 = vpop.f32.mrf.mxu0
    %9141 = vmatprep.mubr.f32.mxu0 0.0
    %v9142 = vand.u32 %v8618, 4294901760
    %9143 = vmatmul.mubr.f32.gmra.mxu0 %v9142
    %v9144 = vpop.f32.mrf.mxu0
    %v9145 = vadd.f32 %v9064, %v9144
    %v9146 = vpop.f32.mrf.mxu0
    %9147 = vdwg.mxu0
    %v9148 = vmax.f32 %v9139, 0.0
    %v9149 = vmax.f32 %v9145, 0.0
    %v9150 = vld [vmem:[%s9] sm:$0xff]
    %v9151 = vld [vmem:[%s9 + $0x8] sm:$0xff]
    %v9152 = vld [vmem:[%s9 + $0x10] sm:$0xff]
    %v9153 = vld [vmem:[%s9 + $0x18] sm:$0xff]
    %v9154 = vld [vmem:[%s9 + $0x20] sm:$0xff]
    %v9155 = vld [vmem:[%s9 + $0x28] sm:$0xff]
    %v9156 = vld [vmem:[%s9 + $0x30] sm:$0xff]
    %v9157 = vld [vmem:[%s9 + $0x38] sm:$0xff]
    %v9158 = vld [vmem:[%s10] sm:$0x1]
    %v9160 = vlaneseq
    %v9161 = vshrl.u32 %v9160, 7
    %v9162 = vsub.s32 0, %v9161
    %v9163 = vrot.slane %v9158, %v9162
    %vm9165 = vcmask 523264
    %v9167 = vsel %vm9165, %v9148, 0
    %v9170 = vsel %vm9165, %v9149, 0
    %9172 = vmatprep.subr.mxu0 0.0
    %9173 = vmatpush1.msra.mxu0 0.0
    %9174 = vmatprep.subr.mxu0 0.0
    %9175 = vmatpush1.msra.mxu0 0.0
    %9176 = vmatprep.subr.mxu0 0.0
    %9177 = vmatpush1.msra.mxu0 0.0
    %9178 = vmatprep.subr.mxu0 0.0
    %9179 = vmatpush1.msra.mxu0 0.0
    %9180 = vmatprep.subr.mxu0 0.0
    %9181 = vmatpush1.msra.mxu0 0.0
    %9182 = vmatprep.subr.mxu0 0.0
    %9183 = vmatpush1.msra.mxu0 0.0
    %9184 = vmatprep.subr.mxu0 0.0
    %9185 = vmatpush1.msra.mxu0 0.0
    %9186 = vmatprep.subr.mxu0 0.0
    %9187 = vmatpush1.msra.mxu0 0.0
    %9188 = vmatprep.subr.mxu0 0.0
    %v9189 = vand.u32 %v9157, 4294901760
    %9190 = vmatpush1.msra.mxu0 %v9189
    %9191 = vmatprep.subr.mxu0 0.0
    %v9192 = vand.u32 %v9156, 4294901760
    %9193 = vmatpush1.msra.mxu0 %v9192
    %9194 = vmatprep.subr.mxu0 0.0
    %v9195 = vand.u32 %v9155, 4294901760
    %9196 = vmatpush1.msra.mxu0 %v9195
    %9197 = vmatprep.subr.mxu0 0.0
    %v9198 = vand.u32 %v9154, 4294901760
    %9199 = vmatpush1.msra.mxu0 %v9198
    %9200 = vmatprep.subr.mxu0 0.0
    %v9201 = vand.u32 %v9153, 4294901760
    %9202 = vmatpush1.msra.mxu0 %v9201
    %9203 = vmatprep.subr.mxu0 0.0
    %v9204 = vand.u32 %v9152, 4294901760
    %9205 = vmatpush1.msra.mxu0 %v9204
    %9206 = vmatprep.subr.mxu0 0.0
    %v9207 = vand.u32 %v9151, 4294901760
    %9208 = vmatpush1.msra.mxu0 %v9207
    %9209 = vmatprep.subr.mxu0 0.0
    %v9210 = vand.u32 %v9150, 4294901760
    %9211 = vmatpush1.msra.mxu0 %v9210
    %9212 = vmatprep.subr.mxu0 0.0
    %9213 = vmatpush2.msra.mxu0 0.0
    %9214 = vmatprep.subr.mxu0 0.0
    %9215 = vmatpush2.msra.mxu0 0.0
    %9216 = vmatprep.subr.mxu0 0.0
    %9217 = vmatpush2.msra.mxu0 0.0
    %9218 = vmatprep.subr.mxu0 0.0
    %9219 = vmatpush2.msra.mxu0 0.0
    %9220 = vmatprep.subr.mxu0 0.0
    %9221 = vmatpush2.msra.mxu0 0.0
    %9222 = vmatprep.subr.mxu0 0.0
    %9223 = vmatpush2.msra.mxu0 0.0
    %9224 = vmatprep.subr.mxu0 0.0
    %9225 = vmatpush2.msra.mxu0 0.0
    %9226 = vmatprep.subr.mxu0 0.0
    %9227 = vmatpush2.msra.mxu0 0.0
    %9228 = vmatprep.subr.mxu0 0.0
    %9229 = vmatpush2.msra.mxu0 0.0
    %9230 = vmatprep.subr.mxu0 0.0
    %9231 = vmatpush2.msra.mxu0 0.0
    %9232 = vmatprep.subr.mxu0 0.0
    %9233 = vmatpush2.msra.mxu0 0.0
    %9234 = vmatprep.subr.mxu0 0.0
    %9235 = vmatpush2.msra.mxu0 0.0
    %9236 = vmatprep.subr.mxu0 0.0
    %9237 = vmatpush2.msra.mxu0 0.0
    %9238 = vmatprep.subr.mxu0 0.0
    %9239 = vmatpush2.msra.mxu0 0.0
    %9240 = vmatprep.subr.mxu0 0.0
    %9241 = vmatpush2.msra.mxu0 0.0
    %9242 = vmatprep.subr.mxu0 0.0
    %9243 = vmatpush2.msra.mxu0 0.0
    %9244 = vmatprep.mubr.f32.mxu0 0.0
    %v9245 = vand.u32 %v9167, 4294901760
    %v9246 = vsub.f32 %v9167, %v9245
    %v9247 = vand.u32 %v9246, 4294901760
    %v9248 = vsub.f32 %v9246, %v9247
    %v9249 = vand.u32 %v9248, 4294901760
    %9250 = vmatmul.mubr.f32.gmra.mxu0 %v9249
    %v9251 = vpop.f32.mrf.mxu0
    %v9252 = vadd.f32 %v9163, %v9251
    %v9253 = vpop.f32.mrf.mxu0
    %9254 = vmatprep.mubr.f32.mxu0 0.0
    %v9255 = vand.u32 %v9170, 4294901760
    %v9256 = vsub.f32 %v9170, %v9255
    %v9257 = vand.u32 %v9256, 4294901760
    %v9258 = vsub.f32 %v9256, %v9257
    %v9259 = vand.u32 %v9258, 4294901760
    %9260 = vmatmul.mubr.f32.gmra.mxu0 %v9259
    %v9261 = vpop.f32.mrf.mxu0
    %v9262 = vadd.f32 %v9163, %v9261
    %v9263 = vpop.f32.mrf.mxu0
    %9264 = vdwg.mxu0
    %9265 = vmatprep.subr.mxu0 0.0
    %9266 = vmatpush1.msra.mxu0 0.0
    %9267 = vmatprep.subr.mxu0 0.0
    %9268 = vmatpush1.msra.mxu0 0.0
    %9269 = vmatprep.subr.mxu0 0.0
    %9270 = vmatpush1.msra.mxu0 0.0
    %9271 = vmatprep.subr.mxu0 0.0
    %9272 = vmatpush1.msra.mxu0 0.0
    %9273 = vmatprep.subr.mxu0 0.0
    %9274 = vmatpush1.msra.mxu0 0.0
    %9275 = vmatprep.subr.mxu0 0.0
    %9276 = vmatpush1.msra.mxu0 0.0
    %9277 = vmatprep.subr.mxu0 0.0
    %9278 = vmatpush1.msra.mxu0 0.0
    %9279 = vmatprep.subr.mxu0 0.0
    %9280 = vmatpush1.msra.mxu0 0.0
    %9281 = vmatprep.subr.mxu0 0.0
    %v9282 = vand.u32 %v9157, 4294901760
    %v9283 = vsub.f32 %v9157, %v9282
    %v9284 = vand.u32 %v9283, 4294901760
    %v9285 = vsub.f32 %v9283, %v9284
    %v9286 = vand.u32 %v9285, 4294901760
    %9287 = vmatpush1.msra.mxu0 %v9286
    %9288 = vmatprep.subr.mxu0 0.0
    %v9289 = vand.u32 %v9156, 4294901760
    %v9290 = vsub.f32 %v9156, %v9289
    %v9291 = vand.u32 %v9290, 4294901760
    %v9292 = vsub.f32 %v9290, %v9291
    %v9293 = vand.u32 %v9292, 4294901760
    %9294 = vmatpush1.msra.mxu0 %v9293
    %9295 = vmatprep.subr.mxu0 0.0
    %v9296 = vand.u32 %v9155, 4294901760
    %v9297 = vsub.f32 %v9155, %v9296
    %v9298 = vand.u32 %v9297, 4294901760
    %v9299 = vsub.f32 %v9297, %v9298
    %v9300 = vand.u32 %v9299, 4294901760
    %9301 = vmatpush1.msra.mxu0 %v9300
    %9302 = vmatprep.subr.mxu0 0.0
    %v9303 = vand.u32 %v9154, 4294901760
    %v9304 = vsub.f32 %v9154, %v9303
    %v9305 = vand.u32 %v9304, 4294901760
    %v9306 = vsub.f32 %v9304, %v9305
    %v9307 = vand.u32 %v9306, 4294901760
    %9308 = vmatpush1.msra.mxu0 %v9307
    %9309 = vmatprep.subr.mxu0 0.0
    %v9310 = vand.u32 %v9153, 4294901760
    %v9311 = vsub.f32 %v9153, %v9310
    %v9312 = vand.u32 %v9311, 4294901760
    %v9313 = vsub.f32 %v9311, %v9312
    %v9314 = vand.u32 %v9313, 4294901760
    %9315 = vmatpush1.msra.mxu0 %v9314
    %9316 = vmatprep.subr.mxu0 0.0
    %v9317 = vand.u32 %v9152, 4294901760
    %v9318 = vsub.f32 %v9152, %v9317
    %v9319 = vand.u32 %v9318, 4294901760
    %v9320 = vsub.f32 %v9318, %v9319
    %v9321 = vand.u32 %v9320, 4294901760
    %9322 = vmatpush1.msra.mxu0 %v9321
    %9323 = vmatprep.subr.mxu0 0.0
    %v9324 = vand.u32 %v9151, 4294901760
    %v9325 = vsub.f32 %v9151, %v9324
    %v9326 = vand.u32 %v9325, 4294901760
    %v9327 = vsub.f32 %v9325, %v9326
    %v9328 = vand.u32 %v9327, 4294901760
    %9329 = vmatpush1.msra.mxu0 %v9328
    %9330 = vmatprep.subr.mxu0 0.0
    %v9331 = vand.u32 %v9150, 4294901760
    %v9332 = vsub.f32 %v9150, %v9331
    %v9333 = vand.u32 %v9332, 4294901760
    %v9334 = vsub.f32 %v9332, %v9333
    %v9335 = vand.u32 %v9334, 4294901760
    %9336 = vmatpush1.msra.mxu0 %v9335
    %9337 = vmatprep.subr.mxu0 0.0
    %9338 = vmatpush2.msra.mxu0 0.0
    %9339 = vmatprep.subr.mxu0 0.0
    %9340 = vmatpush2.msra.mxu0 0.0
    %9341 = vmatprep.subr.mxu0 0.0
    %9342 = vmatpush2.msra.mxu0 0.0
    %9343 = vmatprep.subr.mxu0 0.0
    %9344 = vmatpush2.msra.mxu0 0.0
    %9345 = vmatprep.subr.mxu0 0.0
    %9346 = vmatpush2.msra.mxu0 0.0
    %9347 = vmatprep.subr.mxu0 0.0
    %9348 = vmatpush2.msra.mxu0 0.0
    %9349 = vmatprep.subr.mxu0 0.0
    %9350 = vmatpush2.msra.mxu0 0.0
    %9351 = vmatprep.subr.mxu0 0.0
    %9352 = vmatpush2.msra.mxu0 0.0
    %9353 = vmatprep.subr.mxu0 0.0
    %9354 = vmatpush2.msra.mxu0 0.0
    %9355 = vmatprep.subr.mxu0 0.0
    %9356 = vmatpush2.msra.mxu0 0.0
    %9357 = vmatprep.subr.mxu0 0.0
    %9358 = vmatpush2.msra.mxu0 0.0
    %9359 = vmatprep.subr.mxu0 0.0
    %9360 = vmatpush2.msra.mxu0 0.0
    %9361 = vmatprep.subr.mxu0 0.0
    %9362 = vmatpush2.msra.mxu0 0.0
    %9363 = vmatprep.subr.mxu0 0.0
    %9364 = vmatpush2.msra.mxu0 0.0
    %9365 = vmatprep.subr.mxu0 0.0
    %9366 = vmatpush2.msra.mxu0 0.0
    %9367 = vmatprep.subr.mxu0 0.0
    %9368 = vmatpush2.msra.mxu0 0.0
    %9369 = vmatprep.mubr.f32.mxu0 0.0
    %v9370 = vand.u32 %v9167, 4294901760
    %9371 = vmatmul.mubr.f32.gmra.mxu0 %v9370
    %v9372 = vpop.f32.mrf.mxu0
    %v9373 = vadd.f32 %v9252, %v9372
    %v9374 = vpop.f32.mrf.mxu0
    %9375 = vmatprep.mubr.f32.mxu0 0.0
    %v9376 = vand.u32 %v9170, 4294901760
    %9377 = vmatmul.mubr.f32.gmra.mxu0 %v9376
    %v9378 = vpop.f32.mrf.mxu0
    %v9379 = vadd.f32 %v9262, %v9378
    %v9380 = vpop.f32.mrf.mxu0
    %9381 = vdwg.mxu0
    %9382 = vmatprep.subr.mxu0 0.0
    %9383 = vmatpush1.msra.mxu0 0.0
    %9384 = vmatprep.subr.mxu0 0.0
    %9385 = vmatpush1.msra.mxu0 0.0
    %9386 = vmatprep.subr.mxu0 0.0
    %9387 = vmatpush1.msra.mxu0 0.0
    %9388 = vmatprep.subr.mxu0 0.0
    %9389 = vmatpush1.msra.mxu0 0.0
    %9390 = vmatprep.subr.mxu0 0.0
    %9391 = vmatpush1.msra.mxu0 0.0
    %9392 = vmatprep.subr.mxu0 0.0
    %9393 = vmatpush1.msra.mxu0 0.0
    %9394 = vmatprep.subr.mxu0 0.0
    %9395 = vmatpush1.msra.mxu0 0.0
    %9396 = vmatprep.subr.mxu0 0.0
    %9397 = vmatpush1.msra.mxu0 0.0
    %9398 = vmatprep.subr.mxu0 0.0
    %v9399 = vand.u32 %v9157, 4294901760
    %v9400 = vsub.f32 %v9157, %v9399
    %9401 = vmatpush1.msra.mxu0 %v9400
    %9402 = vmatprep.subr.mxu0 0.0
    %v9403 = vand.u32 %v9156, 4294901760
    %v9404 = vsub.f32 %v9156, %v9403
    %9405 = vmatpush1.msra.mxu0 %v9404
    %9406 = vmatprep.subr.mxu0 0.0
    %v9407 = vand.u32 %v9155, 4294901760
    %v9408 = vsub.f32 %v9155, %v9407
    %9409 = vmatpush1.msra.mxu0 %v9408
    %9410 = vmatprep.subr.mxu0 0.0
    %v9411 = vand.u32 %v9154, 4294901760
    %v9412 = vsub.f32 %v9154, %v9411
    %9413 = vmatpush1.msra.mxu0 %v9412
    %9414 = vmatprep.subr.mxu0 0.0
    %v9415 = vand.u32 %v9153, 4294901760
    %v9416 = vsub.f32 %v9153, %v9415
    %9417 = vmatpush1.msra.mxu0 %v9416
    %9418 = vmatprep.subr.mxu0 0.0
    %v9419 = vand.u32 %v9152, 4294901760
    %v9420 = vsub.f32 %v9152, %v9419
    %9421 = vmatpush1.msra.mxu0 %v9420
    %9422 = vmatprep.subr.mxu0 0.0
    %v9423 = vand.u32 %v9151, 4294901760
    %v9424 = vsub.f32 %v9151, %v9423
    %9425 = vmatpush1.msra.mxu0 %v9424
    %9426 = vmatprep.subr.mxu0 0.0
    %v9427 = vand.u32 %v9150, 4294901760
    %v9428 = vsub.f32 %v9150, %v9427
    %9429 = vmatpush1.msra.mxu0 %v9428
    %9430 = vmatprep.subr.mxu0 0.0
    %9431 = vmatpush2.msra.mxu0 0.0
    %9432 = vmatprep.subr.mxu0 0.0
    %9433 = vmatpush2.msra.mxu0 0.0
    %9434 = vmatprep.subr.mxu0 0.0
    %9435 = vmatpush2.msra.mxu0 0.0
    %9436 = vmatprep.subr.mxu0 0.0
    %9437 = vmatpush2.msra.mxu0 0.0
    %9438 = vmatprep.subr.mxu0 0.0
    %9439 = vmatpush2.msra.mxu0 0.0
    %9440 = vmatprep.subr.mxu0 0.0
    %9441 = vmatpush2.msra.mxu0 0.0
    %9442 = vmatprep.subr.mxu0 0.0
    %9443 = vmatpush2.msra.mxu0 0.0
    %9444 = vmatprep.subr.mxu0 0.0
    %9445 = vmatpush2.msra.mxu0 0.0
    %9446 = vmatprep.subr.mxu0 0.0
    %9447 = vmatpush2.msra.mxu0 0.0
    %9448 = vmatprep.subr.mxu0 0.0
    %9449 = vmatpush2.msra.mxu0 0.0
    %9450 = vmatprep.subr.mxu0 0.0
    %9451 = vmatpush2.msra.mxu0 0.0
    %9452 = vmatprep.subr.mxu0 0.0
    %9453 = vmatpush2.msra.mxu0 0.0
    %9454 = vmatprep.subr.mxu0 0.0
    %9455 = vmatpush2.msra.mxu0 0.0
    %9456 = vmatprep.subr.mxu0 0.0
    %9457 = vmatpush2.msra.mxu0 0.0
    %9458 = vmatprep.subr.mxu0 0.0
    %9459 = vmatpush2.msra.mxu0 0.0
    %9460 = vmatprep.subr.mxu0 0.0
    %9461 = vmatpush2.msra.mxu0 0.0
    %9462 = vmatprep.mubr.f32.mxu0 0.0
    %v9463 = vand.u32 %v9167, 4294901760
    %v9464 = vsub.f32 %v9167, %v9463
    %9465 = vmatmul.mubr.f32.gmra.mxu0 %v9464
    %v9466 = vpop.f32.mrf.mxu0
    %v9467 = vadd.f32 %v9373, %v9466
    %v9468 = vpop.f32.mrf.mxu0
    %9469 = vmatprep.mubr.f32.mxu0 0.0
    %v9470 = vand.u32 %v9170, 4294901760
    %v9471 = vsub.f32 %v9170, %v9470
    %9472 = vmatmul.mubr.f32.gmra.mxu0 %v9471
    %v9473 = vpop.f32.mrf.mxu0
    %v9474 = vadd.f32 %v9379, %v9473
    %v9475 = vpop.f32.mrf.mxu0
    %9476 = vdwg.mxu0
    %9477 = vmatprep.subr.mxu0 0.0
    %9478 = vmatpush1.msra.mxu0 0.0
    %9479 = vmatprep.subr.mxu0 0.0
    %9480 = vmatpush1.msra.mxu0 0.0
    %9481 = vmatprep.subr.mxu0 0.0
    %9482 = vmatpush1.msra.mxu0 0.0
    %9483 = vmatprep.subr.mxu0 0.0
    %9484 = vmatpush1.msra.mxu0 0.0
    %9485 = vmatprep.subr.mxu0 0.0
    %9486 = vmatpush1.msra.mxu0 0.0
    %9487 = vmatprep.subr.mxu0 0.0
    %9488 = vmatpush1.msra.mxu0 0.0
    %9489 = vmatprep.subr.mxu0 0.0
    %9490 = vmatpush1.msra.mxu0 0.0
    %9491 = vmatprep.subr.mxu0 0.0
    %9492 = vmatpush1.msra.mxu0 0.0
    %9493 = vmatprep.subr.mxu0 0.0
    %v9494 = vand.u32 %v9157, 4294901760
    %9495 = vmatpush1.msra.mxu0 %v9494
    %9496 = vmatprep.subr.mxu0 0.0
    %v9497 = vand.u32 %v9156, 4294901760
    %9498 = vmatpush1.msra.mxu0 %v9497
    %9499 = vmatprep.subr.mxu0 0.0
    %v9500 = vand.u32 %v9155, 4294901760
    %9501 = vmatpush1.msra.mxu0 %v9500
    %9502 = vmatprep.subr.mxu0 0.0
    %v9503 = vand.u32 %v9154, 4294901760
    %9504 = vmatpush1.msra.mxu0 %v9503
    %9505 = vmatprep.subr.mxu0 0.0
    %v9506 = vand.u32 %v9153, 4294901760
    %9507 = vmatpush1.msra.mxu0 %v9506
    %9508 = vmatprep.subr.mxu0 0.0
    %v9509 = vand.u32 %v9152, 4294901760
    %9510 = vmatpush1.msra.mxu0 %v9509
    %9511 = vmatprep.subr.mxu0 0.0
    %v9512 = vand.u32 %v9151, 4294901760
    %9513 = vmatpush1.msra.mxu0 %v9512
    %9514 = vmatprep.subr.mxu0 0.0
    %v9515 = vand.u32 %v9150, 4294901760
    %9516 = vmatpush1.msra.mxu0 %v9515
    %9517 = vmatprep.subr.mxu0 0.0
    %9518 = vmatpush2.msra.mxu0 0.0
    %9519 = vmatprep.subr.mxu0 0.0
    %9520 = vmatpush2.msra.mxu0 0.0
    %9521 = vmatprep.subr.mxu0 0.0
    %9522 = vmatpush2.msra.mxu0 0.0
    %9523 = vmatprep.subr.mxu0 0.0
    %9524 = vmatpush2.msra.mxu0 0.0
    %9525 = vmatprep.subr.mxu0 0.0
    %9526 = vmatpush2.msra.mxu0 0.0
    %9527 = vmatprep.subr.mxu0 0.0
    %9528 = vmatpush2.msra.mxu0 0.0
    %9529 = vmatprep.subr.mxu0 0.0
    %9530 = vmatpush2.msra.mxu0 0.0
    %9531 = vmatprep.subr.mxu0 0.0
    %9532 = vmatpush2.msra.mxu0 0.0
    %9533 = vmatprep.subr.mxu0 0.0
    %9534 = vmatpush2.msra.mxu0 0.0
    %9535 = vmatprep.subr.mxu0 0.0
    %9536 = vmatpush2.msra.mxu0 0.0
    %9537 = vmatprep.subr.mxu0 0.0
    %9538 = vmatpush2.msra.mxu0 0.0
    %9539 = vmatprep.subr.mxu0 0.0
    %9540 = vmatpush2.msra.mxu0 0.0
    %9541 = vmatprep.subr.mxu0 0.0
    %9542 = vmatpush2.msra.mxu0 0.0
    %9543 = vmatprep.subr.mxu0 0.0
    %9544 = vmatpush2.msra.mxu0 0.0
    %9545 = vmatprep.subr.mxu0 0.0
    %9546 = vmatpush2.msra.mxu0 0.0
    %9547 = vmatprep.subr.mxu0 0.0
    %9548 = vmatpush2.msra.mxu0 0.0
    %9549 = vmatprep.mubr.f32.mxu0 0.0
    %v9550 = vand.u32 %v9167, 4294901760
    %v9551 = vsub.f32 %v9167, %v9550
    %v9552 = vand.u32 %v9551, 4294901760
    %9553 = vmatmul.mubr.f32.gmra.mxu0 %v9552
    %v9554 = vpop.f32.mrf.mxu0
    %v9555 = vadd.f32 %v9467, %v9554
    %v9556 = vpop.f32.mrf.mxu0
    %9557 = vmatprep.mubr.f32.mxu0 0.0
    %v9558 = vand.u32 %v9170, 4294901760
    %v9559 = vsub.f32 %v9170, %v9558
    %v9560 = vand.u32 %v9559, 4294901760
    %9561 = vmatmul.mubr.f32.gmra.mxu0 %v9560
    %v9562 = vpop.f32.mrf.mxu0
    %v9563 = vadd.f32 %v9474, %v9562
    %v9564 = vpop.f32.mrf.mxu0
    %9565 = vdwg.mxu0
    %9566 = vmatprep.subr.mxu0 0.0
    %9567 = vmatpush1.msra.mxu0 0.0
    %9568 = vmatprep.subr.mxu0 0.0
    %9569 = vmatpush1.msra.mxu0 0.0
    %9570 = vmatprep.subr.mxu0 0.0
    %9571 = vmatpush1.msra.mxu0 0.0
    %9572 = vmatprep.subr.mxu0 0.0
    %9573 = vmatpush1.msra.mxu0 0.0
    %9574 = vmatprep.subr.mxu0 0.0
    %9575 = vmatpush1.msra.mxu0 0.0
    %9576 = vmatprep.subr.mxu0 0.0
    %9577 = vmatpush1.msra.mxu0 0.0
    %9578 = vmatprep.subr.mxu0 0.0
    %9579 = vmatpush1.msra.mxu0 0.0
    %9580 = vmatprep.subr.mxu0 0.0
    %9581 = vmatpush1.msra.mxu0 0.0
    %9582 = vmatprep.subr.mxu0 0.0
    %v9583 = vand.u32 %v9157, 4294901760
    %v9584 = vsub.f32 %v9157, %v9583
    %v9585 = vand.u32 %v9584, 4294901760
    %9586 = vmatpush1.msra.mxu0 %v9585
    %9587 = vmatprep.subr.mxu0 0.0
    %v9588 = vand.u32 %v9156, 4294901760
    %v9589 = vsub.f32 %v9156, %v9588
    %v9590 = vand.u32 %v9589, 4294901760
    %9591 = vmatpush1.msra.mxu0 %v9590
    %9592 = vmatprep.subr.mxu0 0.0
    %v9593 = vand.u32 %v9155, 4294901760
    %v9594 = vsub.f32 %v9155, %v9593
    %v9595 = vand.u32 %v9594, 4294901760
    %9596 = vmatpush1.msra.mxu0 %v9595
    %9597 = vmatprep.subr.mxu0 0.0
    %v9598 = vand.u32 %v9154, 4294901760
    %v9599 = vsub.f32 %v9154, %v9598
    %v9600 = vand.u32 %v9599, 4294901760
    %9601 = vmatpush1.msra.mxu0 %v9600
    %9602 = vmatprep.subr.mxu0 0.0
    %v9603 = vand.u32 %v9153, 4294901760
    %v9604 = vsub.f32 %v9153, %v9603
    %v9605 = vand.u32 %v9604, 4294901760
    %9606 = vmatpush1.msra.mxu0 %v9605
    %9607 = vmatprep.subr.mxu0 0.0
    %v9608 = vand.u32 %v9152, 4294901760
    %v9609 = vsub.f32 %v9152, %v9608
    %v9610 = vand.u32 %v9609, 4294901760
    %9611 = vmatpush1.msra.mxu0 %v9610
    %9612 = vmatprep.subr.mxu0 0.0
    %v9613 = vand.u32 %v9151, 4294901760
    %v9614 = vsub.f32 %v9151, %v9613
    %v9615 = vand.u32 %v9614, 4294901760
    %9616 = vmatpush1.msra.mxu0 %v9615
    %9617 = vmatprep.subr.mxu0 0.0
    %v9618 = vand.u32 %v9150, 4294901760
    %v9619 = vsub.f32 %v9150, %v9618
    %v9620 = vand.u32 %v9619, 4294901760
    %9621 = vmatpush1.msra.mxu0 %v9620
    %9622 = vmatprep.subr.mxu0 0.0
    %9623 = vmatpush2.msra.mxu0 0.0
    %9624 = vmatprep.subr.mxu0 0.0
    %9625 = vmatpush2.msra.mxu0 0.0
    %9626 = vmatprep.subr.mxu0 0.0
    %9627 = vmatpush2.msra.mxu0 0.0
    %9628 = vmatprep.subr.mxu0 0.0
    %9629 = vmatpush2.msra.mxu0 0.0
    %9630 = vmatprep.subr.mxu0 0.0
    %9631 = vmatpush2.msra.mxu0 0.0
    %9632 = vmatprep.subr.mxu0 0.0
    %9633 = vmatpush2.msra.mxu0 0.0
    %9634 = vmatprep.subr.mxu0 0.0
    %9635 = vmatpush2.msra.mxu0 0.0
    %9636 = vmatprep.subr.mxu0 0.0
    %9637 = vmatpush2.msra.mxu0 0.0
    %9638 = vmatprep.subr.mxu0 0.0
    %9639 = vmatpush2.msra.mxu0 0.0
    %9640 = vmatprep.subr.mxu0 0.0
    %9641 = vmatpush2.msra.mxu0 0.0
    %9642 = vmatprep.subr.mxu0 0.0
    %9643 = vmatpush2.msra.mxu0 0.0
    %9644 = vmatprep.subr.mxu0 0.0
    %9645 = vmatpush2.msra.mxu0 0.0
    %9646 = vmatprep.subr.mxu0 0.0
    %9647 = vmatpush2.msra.mxu0 0.0
    %9648 = vmatprep.subr.mxu0 0.0
    %9649 = vmatpush2.msra.mxu0 0.0
    %9650 = vmatprep.subr.mxu0 0.0
    %9651 = vmatpush2.msra.mxu0 0.0
    %9652 = vmatprep.subr.mxu0 0.0
    %9653 = vmatpush2.msra.mxu0 0.0
    %9654 = vmatprep.mubr.f32.mxu0 0.0
    %v9655 = vand.u32 %v9167, 4294901760
    %9656 = vmatmul.mubr.f32.gmra.mxu0 %v9655
    %v9657 = vpop.f32.mrf.mxu0
    %v9658 = vadd.f32 %v9555, %v9657
    %v9659 = vpop.f32.mrf.mxu0
    %9660 = vmatprep.mubr.f32.mxu0 0.0
    %v9661 = vand.u32 %v9170, 4294901760
    %9662 = vmatmul.mubr.f32.gmra.mxu0 %v9661
    %v9663 = vpop.f32.mrf.mxu0
    %v9664 = vadd.f32 %v9563, %v9663
    %v9665 = vpop.f32.mrf.mxu0
    %9666 = vdwg.mxu0
    %9667 = vmatprep.subr.mxu0 0.0
    %9668 = vmatpush1.msra.mxu0 0.0
    %9669 = vmatprep.subr.mxu0 0.0
    %9670 = vmatpush1.msra.mxu0 0.0
    %9671 = vmatprep.subr.mxu0 0.0
    %9672 = vmatpush1.msra.mxu0 0.0
    %9673 = vmatprep.subr.mxu0 0.0
    %9674 = vmatpush1.msra.mxu0 0.0
    %9675 = vmatprep.subr.mxu0 0.0
    %9676 = vmatpush1.msra.mxu0 0.0
    %9677 = vmatprep.subr.mxu0 0.0
    %9678 = vmatpush1.msra.mxu0 0.0
    %9679 = vmatprep.subr.mxu0 0.0
    %9680 = vmatpush1.msra.mxu0 0.0
    %9681 = vmatprep.subr.mxu0 0.0
    %9682 = vmatpush1.msra.mxu0 0.0
    %9683 = vmatprep.subr.mxu0 0.0
    %v9684 = vand.u32 %v9157, 4294901760
    %9685 = vmatpush1.msra.mxu0 %v9684
    %9686 = vmatprep.subr.mxu0 0.0
    %v9687 = vand.u32 %v9156, 4294901760
    %9688 = vmatpush1.msra.mxu0 %v9687
    %9689 = vmatprep.subr.mxu0 0.0
    %v9690 = vand.u32 %v9155, 4294901760
    %9691 = vmatpush1.msra.mxu0 %v9690
    %9692 = vmatprep.subr.mxu0 0.0
    %v9693 = vand.u32 %v9154, 4294901760
    %9694 = vmatpush1.msra.mxu0 %v9693
    %9695 = vmatprep.subr.mxu0 0.0
    %v9696 = vand.u32 %v9153, 4294901760
    %9697 = vmatpush1.msra.mxu0 %v9696
    %9698 = vmatprep.subr.mxu0 0.0
    %v9699 = vand.u32 %v9152, 4294901760
    %9700 = vmatpush1.msra.mxu0 %v9699
    %9701 = vmatprep.subr.mxu0 0.0
    %v9702 = vand.u32 %v9151, 4294901760
    %9703 = vmatpush1.msra.mxu0 %v9702
    %9704 = vmatprep.subr.mxu0 0.0
    %v9705 = vand.u32 %v9150, 4294901760
    %9706 = vmatpush1.msra.mxu0 %v9705
    %9707 = vmatprep.subr.mxu0 0.0
    %9708 = vmatpush2.msra.mxu0 0.0
    %9709 = vmatprep.subr.mxu0 0.0
    %9710 = vmatpush2.msra.mxu0 0.0
    %9711 = vmatprep.subr.mxu0 0.0
    %9712 = vmatpush2.msra.mxu0 0.0
    %9713 = vmatprep.subr.mxu0 0.0
    %9714 = vmatpush2.msra.mxu0 0.0
    %9715 = vmatprep.subr.mxu0 0.0
    %9716 = vmatpush2.msra.mxu0 0.0
    %9717 = vmatprep.subr.mxu0 0.0
    %9718 = vmatpush2.msra.mxu0 0.0
    %9719 = vmatprep.subr.mxu0 0.0
    %9720 = vmatpush2.msra.mxu0 0.0
    %9721 = vmatprep.subr.mxu0 0.0
    %9722 = vmatpush2.msra.mxu0 0.0
    %9723 = vmatprep.subr.mxu0 0.0
    %9724 = vmatpush2.msra.mxu0 0.0
    %9725 = vmatprep.subr.mxu0 0.0
    %9726 = vmatpush2.msra.mxu0 0.0
    %9727 = vmatprep.subr.mxu0 0.0
    %9728 = vmatpush2.msra.mxu0 0.0
    %9729 = vmatprep.subr.mxu0 0.0
    %9730 = vmatpush2.msra.mxu0 0.0
    %9731 = vmatprep.subr.mxu0 0.0
    %9732 = vmatpush2.msra.mxu0 0.0
    %9733 = vmatprep.subr.mxu0 0.0
    %9734 = vmatpush2.msra.mxu0 0.0
    %9735 = vmatprep.subr.mxu0 0.0
    %9736 = vmatpush2.msra.mxu0 0.0
    %9737 = vmatprep.subr.mxu0 0.0
    %9738 = vmatpush2.msra.mxu0 0.0
    %9739 = vmatprep.mubr.f32.mxu0 0.0
    %v9740 = vand.u32 %v9167, 4294901760
    %9741 = vmatmul.mubr.f32.gmra.mxu0 %v9740
    %v9742 = vpop.f32.mrf.mxu0
    %v9743 = vadd.f32 %v9658, %v9742
    %v9744 = vpop.f32.mrf.mxu0
    %9745 = vmatprep.mubr.f32.mxu0 0.0
    %v9746 = vand.u32 %v9170, 4294901760
    %9747 = vmatmul.mubr.f32.gmra.mxu0 %v9746
    %v9748 = vpop.f32.mrf.mxu0
    %v9749 = vadd.f32 %v9664, %v9748
    %v9750 = vpop.f32.mrf.mxu0
    %9751 = vdwg.mxu0
    %v9752 = vadd.f32 %v9743, %v8601
    %v9753 = vadd.f32 %v9749, %v8602
    %v9754 = vsel %vm72, %v9752, 0.0
    %9755 = vadd.xlane.f32.xlu0 %v9754
    %v9756 = vpop.xlane.xlu0 %9755
    %v9757 = vsel %vm72, %v9753, 0.0
    %9758 = vadd.xlane.f32.xlu0 %v9757
    %v9759 = vpop.xlane.xlu0 %9758
    %v9760 = vmul.f32 %v9756, %v8548
    %v9761 = vmul.f32 %v9759, %v8548
    %v9762 = vsub.f32 %v9752, %v9760
    %v9763 = vsub.f32 %v9753, %v9761
    %v9764 = vmul.f32 %v9762, %v9762
    %v9765 = vmul.f32 %v9763, %v9763
    %v9766 = vsel %vm72, %v9764, 0.0
    %9767 = vadd.xlane.f32.xlu0 %v9766
    %v9768 = vpop.xlane.xlu0 %9767
    %v9769 = vsel %vm72, %v9765, 0.0
    %9770 = vadd.xlane.f32.xlu0 %v9769
    %v9771 = vpop.xlane.xlu0 %9770
    %v9772 = vmul.f32 %v9768, %v8548
    %v9773 = vmul.f32 %v9771, %v8548
    %v9774 = vld [vmem:[%s11] sm:$0x1]
    %v9775 = vrsqrt.pop %v9772
    %v9776 = vmul.f32 %v9772, %v9775
    %vm9777 = vcmp.eq.f32.partialorder %v9772, inf
    %v9778 = vsel %vm9777, %v9772, %v9776
    %vm9779 = vcmp.eq.f32.partialorder %v9772, 0.0
    %v9780 = vand.u32 %v9772, 2147483648
    %v9781 = vsel %vm9779, %v9780, %v9778
    %v9782 = vrsqrt.pop %v9773
    %v9783 = vmul.f32 %v9773, %v9782
    %vm9784 = vcmp.eq.f32.partialorder %v9773, inf
    %v9785 = vsel %vm9784, %v9773, %v9783
    %vm9786 = vcmp.eq.f32.partialorder %v9773, 0.0
    %v9787 = vand.u32 %v9773, 2147483648
    %v9788 = vsel %vm9786, %v9787, %v9785
    %v9789 = vadd.f32 %v9781, 1e-10
    %v9790 = vadd.f32 %v9788, 1e-10
    %v9791 = vrcp.pop %v9789
    %v9792 = vmul.f32 1.0, %v9791
    %v9793 = vrcp.pop %v9790
    %v9794 = vmul.f32 1.0, %v9793
    %v9795 = vmul.f32 %v9762, %v9792
    %v9796 = vmul.f32 %v9763, %v9794
    %v9798 = vlaneseq
    %v9799 = vshrl.u32 %v9798, 7
    %v9800 = vsub.s32 0, %v9799
    %v9801 = vrot.slane %v9774, %v9800
    %v9803 = vmul.f32 %v9801, %v9795
    %v9804 = vmul.f32 %v9801, %v9796
    %v9805 = vld [vmem:[%s12] sm:$0x1]
    %v9807 = vlaneseq
    %v9808 = vshrl.u32 %v9807, 7
    %v9809 = vsub.s32 0, %v9808
    %v9810 = vrot.slane %v9805, %v9809
    %v9812 = vadd.f32 %v9803, %v9810
    %v9813 = vadd.f32 %v9804, %v9810
    %9814 = vst.msk [vmem:[#allocation6] sm:$0xff] %vm72, %v9812
    %9815 = vst.msk [vmem:[#allocation6 + $0x8] sm:$0xff] %vm72, %v9813
    // Predicated region
    $region58: #{tpu_custom_call.1} parent=1 // pred_check
      _
    $region59: #{tpu_custom_call.1} parent=1 // pred_check_branch
      %9817 = sbr.rel (0) target = $region61
    $region60: #{tpu_custom_call.1} parent=1 // pred_region
      %s9819 = ssub.s32 256, 256
      %9820 = vsyncadd [#allocation5], %s9819
      %s9821 = sshll.u32 [#allocation6], 4
      %s9822 = int_to_ptr.vmem [resolvable:$true] %s9821
      %9827 = dma.vmem_to_hbm [thread:$0]  %s9822, 256, %s13, [#allocation5], 128, 128, 8
    $region61: #{tpu_custom_call.1} parent=1 // pred_fallthru
      _
    // Predicated region
    $region62: #{tpu_custom_call.1} parent=1 // pred_check
      _
    $region63: #{tpu_custom_call.1} parent=1 // pred_check_branch
      %9829 = sbr.rel (0) target = $region65
    $region64: #{tpu_custom_call.1} parent=1 // pred_region
      %9830 = dma.done [#allocation5], 256
    $region65: #{tpu_custom_call.1} parent=1 // pred_fallthru
      _
    %9831 = vsyncpa [#allocation4], 1
    %9832 = vsyncpa [#allocation5], 1

</llo_original>
